<compile_context>
chip_gen: v6e
topology: v6e:2x2x1
jax: 0.10.0
libtpu: 0.0.40
codegen_flags: <defaults>
</compile_context>

<pallas_src>
import numpy as np
import jax
import jax.numpy as jnp
from jax.experimental import pallas as pl
from jax.experimental.pallas import tpu as pltpu


# ----------------------------------------------------------------------------
# Host-side parameter lowering (done once at init)
# ----------------------------------------------------------------------------

def _fold_bn(gamma, beta, mean, var, eps=1e-5):
    scale = gamma / np.sqrt(var + eps)
    return scale.astype(np.float32), (beta - mean * scale).astype(np.float32)


def _banded_conv_weight(w_oihw, bn_scale, bn_bias, w_logical, win_cols, col_stride):
    """Lower a conv weight (Cout,Cin,kh,kw) + folded BN to fused-K banded form.

    The input slab stores column position x at lanes [x*Cin, (x+1)*Cin); the conv
    output column xo reads input columns col_stride*(xo+dx)  (col_stride=2 folds
    the stride-2 column decimation of a preceding MaxPool into this conv).

    Returns:
      wcat: (kh * win_cols * Cin, wo * Cout)   band dy at rows [dy*band, (dy+1)*band)
      bias: (1, wo * Cout)                     folded BN bias tiled across wo
      wo:   number of output columns
    """
    cout, cin, kh, kw = w_oihw.shape
    wo = w_logical - kw + 1
    band = win_cols * cin
    w = np.asarray(w_oihw, np.float32) * np.asarray(bn_scale, np.float32)[:, None, None, None]
    wcat = np.zeros((kh * band, wo * cout), np.float32)
    for dy in range(kh):
        for dx in range(kw):
            blk = w[:, :, dy, dx].T                      # (cin, cout)
            for xo in range(wo):
                xi = col_stride * (xo + dx)
                r0 = dy * band + xi * cin
                wcat[r0:r0 + cin, xo * cout:(xo + 1) * cout] = blk
    bias = np.tile(np.asarray(bn_bias, np.float32), wo)[None, :]
    return wcat, bias, wo


def init_params(key, num_clust, height, width, batch_tile=8):
    """Synthetic CNNClust params (eval mode), lowered to kernel-ready form."""
    H, W = int(height), int(width)
    bt = int(batch_tile)
    hb = H + 6                    # per-image block rows (conv1 padding = 3)
    wpad = W + 6

    # Spatial dims along the torch module's chain.
    l2h, l2w = H - 1, W - 1                      # conv2 (k2)
    p2h, p2w = l2h // 2, l2w // 2                # maxpool
    l3h, l3w = p2h - 1, p2w - 1                  # conv3 (k2)
    l4h, l4w = l3h - 2, l3w - 2                  # conv4 (k3)
    l5h, l5w = l4h - 2, l4w - 2                  # conv5 (k3)
    p5h, p5w = l5h // 2, l5w // 2                # maxpool
    l6h, l6w = p5h - 2, p5w - 2                  # conv6 (k3)
    fcd = l6h * l6w
    h1 = max(fcd // 2, num_clust)
    h2 = max(fcd // 4, num_clust)
    ncpad = ((num_clust + 127) // 128) * 128     # lane-dense output width

    ks = iter(jax.random.split(key, 20))

    def convw(k, cout, cin, kh, kw):             # kaiming-ish synthetic conv weights
        fan = cin * kh * kw
        return np.asarray(jax.random.normal(k, (cout, cin, kh, kw), jnp.float32)) * np.sqrt(2.0 / fan)

    def bn_stats(k, c):                          # non-trivial eval-mode running stats
        a, b_, c_, d_ = jax.random.split(k, 4)
        gamma = 1.0 + 0.2 * np.asarray(jax.random.normal(a, (c,), jnp.float32))
        beta = 0.1 * np.asarray(jax.random.normal(b_, (c,), jnp.float32))
        mean = 0.1 * np.asarray(jax.random.normal(c_, (c,), jnp.float32))
        var = (1.0 + 0.2 * np.abs(np.asarray(jax.random.normal(d_, (c,), jnp.float32)))) ** 2
        return (gamma.astype(np.float32), beta.astype(np.float32),
                mean.astype(np.float32), var.astype(np.float32))

    def linw(k, out_f, in_f):                    # init_weights: N(0, 0.01), zero bias
        return (np.asarray(0.01 * jax.random.normal(k, (out_f, in_f), jnp.float32)),
                np.zeros((out_f,), np.float32))

    raw = {}
    raw['w1'] = convw(next(ks), 1, 1, 7, 7);   raw['bn1'] = bn_stats(next(ks), 1)
    raw['w2'] = convw(next(ks), 8, 1, 2, 2);   raw['bn2a'] = bn_stats(next(ks), 8)
    raw['bn2b'] = bn_stats(next(ks), 8)
    raw['w3'] = convw(next(ks), 8, 8, 2, 2);   raw['bn3'] = bn_stats(next(ks), 8)
    raw['w4'] = convw(next(ks), 16, 8, 3, 3);  raw['bn4'] = bn_stats(next(ks), 16)
    raw['w5'] = convw(next(ks), 16, 16, 3, 3); raw['bn5a'] = bn_stats(next(ks), 16)
    raw['bn5b'] = bn_stats(next(ks), 16)
    raw['w6'] = convw(next(ks), 1, 16, 3, 3);  raw['bn6'] = bn_stats(next(ks), 1)
    raw['lh1'] = linw(next(ks), h1, fcd);      raw['bnh1'] = bn_stats(next(ks), h1)
    raw['lh2'] = linw(next(ks), h2, h1);       raw['bnh2'] = bn_stats(next(ks), h2)
    raw['final'] = linw(next(ks), num_clust, h2)

    # ---- lower to kernel form ------------------------------------------------
    lowered = []
    rows = bt * hb            # tall-slab rows, shrinks from the bottom only
    flops = 0

    def add_conv(w_oihw, bnp, w_logical, win_cols, col_stride, row_stride):
        nonlocal rows, flops
        s_, t_ = _fold_bn(*bnp)
        wcat, bias, wo = _banded_conv_weight(w_oihw, s_, t_, w_logical, win_cols, col_stride)
        rows = rows - row_stride * (w_oihw.shape[2] - 1)
        flops += 2 * rows * wcat.shape[0] * wcat.shape[1]
        lowered.append(jnp.asarray(wcat, jnp.bfloat16))
        lowered.append(jnp.asarray(bias, jnp.float32))
        return wo

    def add_pool(bnp, wo, c, row_stride):
        nonlocal rows, flops
        s_, t_ = _fold_bn(*bnp)
        rows = rows - row_stride
        row = np.stack([np.tile(s_, wo), np.tile(t_, wo)]).astype(np.float32)
        lowered.append(jnp.asarray(row, jnp.float32))
        flops += 4 * rows * wo * c

    wo1 = add_conv(raw['w1'], raw['bn1'], wpad, wpad, 1, 1)      # conv1 + BN1
    wo2 = add_conv(raw['w2'], raw['bn2a'], wo1, wo1, 1, 1)       # conv2 + BN2a
    add_pool(raw['bn2b'], wo2, 8, 1)                             # maxpool + BN2b
    wo3 = add_conv(raw['w3'], raw['bn3'], p2w, wo2, 2, 2)        # conv3 (col-decimation folded)
    wo4 = add_conv(raw['w4'], raw['bn4'], wo3, wo3, 1, 2)        # conv4
    wo5 = add_conv(raw['w5'], raw['bn5a'], wo4, wo4, 1, 2)       # conv5
    add_pool(raw['bn5b'], wo5, 16, 2)                            # maxpool + BN5b
    wo6 = add_conv(raw['w6'], raw['bn6'], p5w, wo5, 2, 4)        # conv6 (col-decimation folded)

    # lh1 (Linear + BN1d + ReLU) lowered as a banded "conv" over the (l6h,l6w) map.
    w1lin, b1lin = raw['lh1']
    s1, t1 = _fold_bn(*raw['bnh1'])
    w_l = w1lin.reshape(h1, l6h, l6w)[:, None, :, :]             # (h1, 1, l6h, l6w)
    wcat_l, bias_l, _ = _banded_conv_weight(w_l, s1, b1lin * s1 + t1, l6w, wo6, 1)
    rows = rows - 4 * (l6h - 1)
    flops += 2 * rows * wcat_l.shape[0] * wcat_l.shape[1]
    lowered.append(jnp.asarray(wcat_l, jnp.bfloat16))
    lowered.append(jnp.asarray(bias_l, jnp.float32))

    # Per-image row-extraction matrix (one valid head row per image block).
    r_final = rows
    e = np.zeros((bt, r_final), np.float32)
    for i in range(bt):
        e[i, i * hb] = 1.0
    lowered.append(jnp.asarray(e, jnp.bfloat16))

    # lh2 (BN1d folded) and final Linear (padded to ncpad lanes; pad bias -1e30).
    w2lin, b2lin = raw['lh2']
    s2, t2 = _fold_bn(*raw['bnh2'])
    hw2 = (w2lin.T * s2[None, :]).astype(np.float32)
    hb2 = ((b2lin * s2 + t2)[None, :]).astype(np.float32)
    wflin, bflin = raw['final']
    hwf = np.zeros((h2, ncpad), np.float32); hwf[:, :num_clust] = wflin.T
    hbf = np.full((1, ncpad), -1e30, np.float32); hbf[0, :num_clust] = bflin
    lowered += [jnp.asarray(hw2, jnp.bfloat16), jnp.asarray(hb2, jnp.float32),
                jnp.asarray(hwf, jnp.bfloat16), jnp.asarray(hbf, jnp.float32)]
    flops += 2 * (bt * r_final * h1 + bt * h1 * h2 + bt * h2 * ncpad)

    meta = dict(batch_tile=bt, block_rows=hb, padded_width=wpad,
                num_clust=int(num_clust), ncpad=ncpad, h1=h1,
                kh=(7, 2, 2, 3, 3, 3, l6h),
                row_stride=(1, 1, 2, 2, 2, 4, 4),     # folded row decimation (dilation)
                pool_row_stride=(1, 2),
                pool_channels=(8, 16),
                flops_per_step=int(flops))
    return {'weights': lowered, 'raw': raw, 'meta': meta}


# ----------------------------------------------------------------------------
# Kernel (whole network for one tile of batch_tile images, all VMEM-resident)
# ----------------------------------------------------------------------------

def _build_kernel(meta):
    kh = meta['kh']
    rs = meta['row_stride']
    prs = meta['pool_row_stride']
    pch = meta['pool_channels']

    def conv(x, w_ref, b_ref, k, s):
        """Fused-K banded conv (+BN folded) + bias + ReLU on a tall bf16 slab."""
        m = x.shape[0] - s * (k - 1)
        parts = [x[s * dy:s * dy + m, :] for dy in range(k)]
        xc = parts[0] if k == 1 else jnp.concatenate(parts, axis=1)
        acc = jnp.dot(xc, w_ref[...], preferred_element_type=jnp.float32)
        return jnp.maximum(acc + b_ref[...], 0.0).astype(jnp.bfloat16)

    def pool(z, c, s, bn_ref):
        """MaxPool2d((2,2),(2,2)) + BatchNorm + ReLU, no selection matmuls.

        Column-neighbour max = lane rotation by one channel group (VPU/XLU);
        row-neighbour max = shifted-slice max.  The stride-2 decimation is
        folded into the following conv's banded weights / row dilation.
        """
        zc = jnp.maximum(z, jnp.concatenate([z[:, c:], z[:, :c]], axis=1))
        m = zc.shape[0] - s
        zr = jnp.maximum(zc[0:m, :], zc[s:s + m, :])
        out = jnp.maximum(zr.astype(jnp.float32) * bn_ref[0:1, :] + bn_ref[1:2, :], 0.0)
        return out.astype(jnp.bfloat16)

    def kernel(x_ref, w1, b1, w2, b2, p2, w3, b3, w4, b4, w5, b5, p5,
               w6, b6, lw, lb, e_ref, hw2, hb2, hwf, hbf, o_ref, z1_ref):
        a = x_ref[0]                                   # (bt*38, W+6) bf16 slab
        a = conv(a, w1, b1, kh[0], rs[0])              # conv1 + BN1 + ReLU
        a = conv(a, w2, b2, kh[1], rs[1])              # conv2 + BN2a + ReLU
        a = pool(a, pch[0], prs[0], p2)                # maxpool + BN2b + ReLU
        a = conv(a, w3, b3, kh[2], rs[2])              # conv3 + BN3 + ReLU
        a = conv(a, w4, b4, kh[3], rs[3])              # conv4 + BN4 + ReLU
        a = conv(a, w5, b5, kh[4], rs[4])              # conv5 + BN5a + ReLU
        a = pool(a, pch[1], prs[1], p5)                # maxpool + BN5b + ReLU
        a = conv(a, w6, b6, kh[5], rs[5])              # conv6 + BN6 + ReLU
        a = conv(a, lw, lb, kh[6], rs[6])              # lh1 (Linear+BN1d+ReLU) as banded conv

        # Per-image extraction (one valid row per image block), then batched head.
        z1 = jnp.dot(e_ref[...], a, preferred_element_type=jnp.float32)   # (bt, h1)
        z1_ref[0] = z1                                                     # embedding/debug
        z2 = jnp.dot(z1.astype(jnp.bfloat16), hw2[...],
                     preferred_element_type=jnp.float32) + hb2[...]
        z2 = jnp.maximum(z2, 0.0)                                          # lh2
        z3 = jnp.dot(z2.astype(jnp.bfloat16), hwf[...],
                     preferred_element_type=jnp.float32) + hbf[...]        # final (lane-padded)
        m_ = jnp.max(z3, axis=-1, keepdims=True)
        e_ = jnp.exp(z3 - m_)
        inv = pl.reciprocal(jnp.sum(e_, axis=-1, keepdims=True), approx=True)
        o_ref[0] = e_ * inv                                                # softmax

    return kernel


# ----------------------------------------------------------------------------
# Forward wrapper
# ----------------------------------------------------------------------------

def cnn_clust_forward(x_nchw, params):
    """Returns (softmax probabilities (B, num_clust), lh1 activations (B, h1))."""
    meta, weights = params['meta'], params['weights']
    bt, hb, wpad = meta['batch_tile'], meta['block_rows'], meta['padded_width']
    nc, ncpad, h1 = meta['num_clust'], meta['ncpad'], meta['h1']

    b = x_nchw.shape[0]
    bpad = ((b + bt - 1) // bt) * bt
    nsteps = bpad // bt

    # Pad once for conv1's padding=(3,3), stack batch tiles into tall slabs.
    x = x_nchw[:, 0].astype(jnp.float32)
    x = jnp.pad(x, ((0, bpad - b), (3, 3), (3, 3)))
    x = x.reshape(nsteps, bt * hb, wpad).astype(jnp.bfloat16)

    in_specs = [pl.BlockSpec((1, bt * hb, wpad), lambda i: (i, 0, 0))]
    in_specs += [pl.BlockSpec(w.shape, lambda i: (0, 0)) for w in weights]
    out_shape = (jax.ShapeDtypeStruct((nsteps, bt, ncpad), jnp.float32),
                 jax.ShapeDtypeStruct((nsteps, bt, h1), jnp.float32))
    out_specs = (pl.BlockSpec((1, bt, ncpad), lambda i: (i, 0, 0)),
                 pl.BlockSpec((1, bt, h1), lambda i: (i, 0, 0)))

    wbytes = sum(int(w.size) * w.dtype.itemsize for w in weights)
    cost = pl.CostEstimate(
        flops=int(nsteps * meta['flops_per_step']),
        transcendentals=int(nsteps * bt * ncpad),
        bytes_accessed=int(x.size * 2 + wbytes + nsteps * bt * (ncpad + h1) * 4))

    probs, z1 = pl.pallas_call(
        _build_kernel(meta),
        grid=(nsteps,),
        in_specs=in_specs,
        out_specs=out_specs,
        out_shape=out_shape,
        compiler_params=pltpu.CompilerParams(
            dimension_semantics=("parallel",),          # >=2 steps -> megacore on v7x
            vmem_limit_bytes=16 * 1024 * 1024),
        cost_estimate=cost,
    )(x, *weights)

    probs = probs.reshape(bpad, ncpad)[:b, :nc]
    z1 = z1.reshape(bpad, h1)[:b]
    return probs, z1


# ----------------------------------------------------------------------------
# Pure-JAX reference (original module semantics, f32) for validation
# ----------------------------------------------------------------------------

def reference_forward(x_nchw, raw):
    x = x_nchw.astype(jnp.float32)

    def conv(t, w, pad=0):
        return jax.lax.conv_general_dilated(
            t, jnp.asarray(w, jnp.float32), window_strides=(1, 1),
            padding=((pad, pad), (pad, pad)),
            dimension_numbers=('NCHW', 'OIHW', 'NCHW'))

    def bn2d(t, p):
        s, sh = _fold_bn(*p)
        return t * jnp.asarray(s)[None, :, None, None] + jnp.asarray(sh)[None, :, None, None]

    def bn1d(t, p):
        s, sh = _fold_bn(*p)
        return t * jnp.asarray(s)[None, :] + jnp.asarray(sh)[None, :]

    relu = lambda t: jnp.maximum(t, 0.0)
    pool = lambda t: jax.lax.reduce_window(t, -jnp.inf, jax.lax.max,
                                           (1, 1, 2, 2), (1, 1, 2, 2), 'VALID')

    x = relu(bn2d(conv(x, raw['w1'], pad=3), raw['bn1']))
    x = relu(bn2d(conv(x, raw['w2']), raw['bn2a']))
    x = relu(bn2d(pool(x), raw['bn2b']))
    x = relu(bn2d(conv(x, raw['w3']), raw['bn3']))
    x = relu(bn2d(conv(x, raw['w4']), raw['bn4']))
    x = relu(bn2d(conv(x, raw['w5']), raw['bn5a']))
    x = relu(bn2d(pool(x), raw['bn5b']))
    x = relu(bn2d(conv(x, raw['w6']), raw['bn6']))
    z = x.reshape(x.shape[0], -1)
    w, b_ = raw['lh1']; z1 = relu(bn1d(z @ jnp.asarray(w).T + jnp.asarray(b_), raw['bnh1']))
    w, b_ = raw['lh2']; z2 = relu(bn1d(z1 @ jnp.asarray(w).T + jnp.asarray(b_), raw['bnh2']))
    w, b_ = raw['final']; z3 = z2 @ jnp.asarray(w).T + jnp.asarray(b_)
    return jax.nn.softmax(z3, axis=1), z1


if __name__ == "__main__":
    B, H, W = 16, 32, 32          # smallest spatial size the architecture supports is ~23
    NUM_CLUST = 7

    key = jax.random.PRNGKey(0)
    kx, kp = jax.random.split(key)
    x = jax.random.normal(kx, (B, 1, H, W), jnp.float32)       # NCHW, 1 input channel
    params = init_params(kp, NUM_CLUST, H, W, batch_tile=8)    # 2 grid steps at B=16

    fwd = jax.jit(lambda xx: cnn_clust_forward(xx, params))
    probs, z1 = jax.block_until_ready(fwd(x))

    assert probs.shape == (B, NUM_CLUST), probs.shape
    assert bool(jnp.all(jnp.isfinite(probs)))
    # softmax rows sum to ~1 (approximate reciprocal in the kernel -> loose tol)
    assert bool(jnp.allclose(jnp.sum(probs, axis=1), 1.0, atol=3e-2))

    # Validate against the f32 reference of the original module (bf16 MXU math
    # in the kernel -> generous tolerances).
    ref_probs, ref_z1 = reference_forward(x, params['raw'])
    assert float(jnp.max(jnp.abs(z1 - ref_z1))) < 1e-2, "lh1 activations mismatch"
    assert float(jnp.max(jnp.abs(probs - ref_probs))) < 5e-3, "softmax output mismatch"

    print("KERNEL_OK")
</pallas_src>

<mosaic_0001>
module attributes {stable_mosaic.version = 11 : i64} {
  func.func @kernel(%arg0: i32, %arg1: memref<1x304x38xbf16, #tpu.memory_space<vmem>>, %arg2: memref<266x32xbf16, #tpu.memory_space<vmem>>, %arg3: memref<1x32xf32, #tpu.memory_space<vmem>>, %arg4: memref<64x248xbf16, #tpu.memory_space<vmem>>, %arg5: memref<1x248xf32, #tpu.memory_space<vmem>>, %arg6: memref<2x248xf32, #tpu.memory_space<vmem>>, %arg7: memref<496x112xbf16, #tpu.memory_space<vmem>>, %arg8: memref<1x112xf32, #tpu.memory_space<vmem>>, %arg9: memref<336x192xbf16, #tpu.memory_space<vmem>>, %arg10: memref<1x192xf32, #tpu.memory_space<vmem>>, %arg11: memref<576x160xbf16, #tpu.memory_space<vmem>>, %arg12: memref<1x160xf32, #tpu.memory_space<vmem>>, %arg13: memref<2x160xf32, #tpu.memory_space<vmem>>, %arg14: memref<480x3xbf16, #tpu.memory_space<vmem>>, %arg15: memref<1x3xf32, #tpu.memory_space<vmem>>, %arg16: memref<9x7xbf16, #tpu.memory_space<vmem>>, %arg17: memref<1x7xf32, #tpu.memory_space<vmem>>, %arg18: memref<8x268xbf16, #tpu.memory_space<vmem>>, %arg19: memref<7x7xbf16, #tpu.memory_space<vmem>>, %arg20: memref<1x7xf32, #tpu.memory_space<vmem>>, %arg21: memref<7x128xbf16, #tpu.memory_space<vmem>>, %arg22: memref<1x128xf32, #tpu.memory_space<vmem>>, %arg23: memref<1x8x128xf32, #tpu.memory_space<vmem>>, %arg24: memref<1x8x7xf32, #tpu.memory_space<vmem>>) attributes {dimension_semantics = [#tpu.dimension_semantics<parallel>], iteration_bounds = array<i64: 2>, scalar_prefetch = 0 : i64, scratch_operands = 0 : i64, tpu.core_type = #tpu.core_type<tc>, window_params = [{transform_indices = @transform_0, window_bounds = array<i64: 1, 304, 38>}, {pipeline_mode = #tpu.pipeline_mode<synchronous>, transform_indices = @transform_1, window_bounds = array<i64: 266, 32>}, {pipeline_mode = #tpu.pipeline_mode<synchronous>, transform_indices = @transform_2, window_bounds = array<i64: 1, 32>}, {pipeline_mode = #tpu.pipeline_mode<synchronous>, transform_indices = @transform_3, window_bounds = array<i64: 64, 248>}, {pipeline_mode = #tpu.pipeline_mode<synchronous>, transform_indices = @transform_4, window_bounds = array<i64: 1, 248>}, {pipeline_mode = #tpu.pipeline_mode<synchronous>, transform_indices = @transform_5, window_bounds = array<i64: 2, 248>}, {pipeline_mode = #tpu.pipeline_mode<synchronous>, transform_indices = @transform_6, window_bounds = array<i64: 496, 112>}, {pipeline_mode = #tpu.pipeline_mode<synchronous>, transform_indices = @transform_7, window_bounds = array<i64: 1, 112>}, {pipeline_mode = #tpu.pipeline_mode<synchronous>, transform_indices = @transform_8, window_bounds = array<i64: 336, 192>}, {pipeline_mode = #tpu.pipeline_mode<synchronous>, transform_indices = @transform_9, window_bounds = array<i64: 1, 192>}, {pipeline_mode = #tpu.pipeline_mode<synchronous>, transform_indices = @transform_10, window_bounds = array<i64: 576, 160>}, {pipeline_mode = #tpu.pipeline_mode<synchronous>, transform_indices = @transform_11, window_bounds = array<i64: 1, 160>}, {pipeline_mode = #tpu.pipeline_mode<synchronous>, transform_indices = @transform_12, window_bounds = array<i64: 2, 160>}, {pipeline_mode = #tpu.pipeline_mode<synchronous>, transform_indices = @transform_13, window_bounds = array<i64: 480, 3>}, {pipeline_mode = #tpu.pipeline_mode<synchronous>, transform_indices = @transform_14, window_bounds = array<i64: 1, 3>}, {pipeline_mode = #tpu.pipeline_mode<synchronous>, transform_indices = @transform_15, window_bounds = array<i64: 9, 7>}, {pipeline_mode = #tpu.pipeline_mode<synchronous>, transform_indices = @transform_16, window_bounds = array<i64: 1, 7>}, {pipeline_mode = #tpu.pipeline_mode<synchronous>, transform_indices = @transform_17, window_bounds = array<i64: 8, 268>}, {pipeline_mode = #tpu.pipeline_mode<synchronous>, transform_indices = @transform_18, window_bounds = array<i64: 7, 7>}, {pipeline_mode = #tpu.pipeline_mode<synchronous>, transform_indices = @transform_19, window_bounds = array<i64: 1, 7>}, {pipeline_mode = #tpu.pipeline_mode<synchronous>, transform_indices = @transform_20, window_bounds = array<i64: 7, 128>}, {pipeline_mode = #tpu.pipeline_mode<synchronous>, transform_indices = @transform_21, window_bounds = array<i64: 1, 128>}, {transform_indices = @transform_22, window_bounds = array<i64: 1, 8, 128>}, {transform_indices = @transform_23, window_bounds = array<i64: 1, 8, 7>}]} {
    %c0 = arith.constant 0 : index
    %c0_0 = arith.constant 0 : index
    %c0_1 = arith.constant 0 : index
    %0 = vector.load %arg1[%c0, %c0_0, %c0_1] : memref<1x304x38xbf16, #tpu.memory_space<vmem>>, vector<1x304x38xbf16>
    %1 = vector.shape_cast %0 : vector<1x304x38xbf16> to vector<304x38xbf16>
    %2 = vector.extract_strided_slice %1 {offsets = [0, 0], sizes = [298, 38], strides = [1, 1]} : vector<304x38xbf16> to vector<298x38xbf16>
    %3 = vector.extract_strided_slice %1 {offsets = [1, 0], sizes = [298, 38], strides = [1, 1]} : vector<304x38xbf16> to vector<298x38xbf16>
    %4 = vector.extract_strided_slice %1 {offsets = [2, 0], sizes = [298, 38], strides = [1, 1]} : vector<304x38xbf16> to vector<298x38xbf16>
    %5 = vector.extract_strided_slice %1 {offsets = [3, 0], sizes = [298, 38], strides = [1, 1]} : vector<304x38xbf16> to vector<298x38xbf16>
    %6 = vector.extract_strided_slice %1 {offsets = [4, 0], sizes = [298, 38], strides = [1, 1]} : vector<304x38xbf16> to vector<298x38xbf16>
    %7 = vector.extract_strided_slice %1 {offsets = [5, 0], sizes = [298, 38], strides = [1, 1]} : vector<304x38xbf16> to vector<298x38xbf16>
    %8 = vector.extract_strided_slice %1 {offsets = [6, 0], sizes = [298, 38], strides = [1, 1]} : vector<304x38xbf16> to vector<298x38xbf16>
    %9 = tpu.concatenate %2, %3, %4, %5, %6, %7, %8 in 1 : vector<298x38xbf16>, vector<298x38xbf16>, vector<298x38xbf16>, vector<298x38xbf16>, vector<298x38xbf16>, vector<298x38xbf16>, vector<298x38xbf16> -> vector<298x266xbf16>
    %c0_2 = arith.constant 0 : index
    %c0_3 = arith.constant 0 : index
    %10 = vector.load %arg2[%c0_2, %c0_3] : memref<266x32xbf16, #tpu.memory_space<vmem>>, vector<266x32xbf16>
    %cst = arith.constant dense<0.000000e+00> : vector<298x32xf32>
    %11 = tpu.matmul %9, %10, %cst {dimension_numbers = #tpu.dot_dimension_numbers<[1], [0], [0], [1], [0, 0, 1, 1], [], []>} : vector<298x266xbf16>, vector<266x32xbf16>, vector<298x32xf32> -> vector<298x32xf32>
    %c0_4 = arith.constant 0 : index
    %c0_5 = arith.constant 0 : index
    %12 = vector.load %arg3[%c0_4, %c0_5] : memref<1x32xf32, #tpu.memory_space<vmem>>, vector<1x32xf32>
    %13 = vector.broadcast %12 : vector<1x32xf32> to vector<298x32xf32>
    %14 = arith.addf %11, %13 : vector<298x32xf32>
    %cst_6 = arith.constant 0.000000e+00 : f32
    %15 = vector.broadcast %cst_6 : f32 to vector<298x32xf32>
    %16 = arith.maximumf %14, %15 : vector<298x32xf32>
    %17 = arith.truncf %16 : vector<298x32xf32> to vector<298x32xbf16>
    %18 = vector.extract_strided_slice %17 {offsets = [0, 0], sizes = [297, 32], strides = [1, 1]} : vector<298x32xbf16> to vector<297x32xbf16>
    %19 = vector.extract_strided_slice %17 {offsets = [1, 0], sizes = [297, 32], strides = [1, 1]} : vector<298x32xbf16> to vector<297x32xbf16>
    %20 = tpu.concatenate %18, %19 in 1 : vector<297x32xbf16>, vector<297x32xbf16> -> vector<297x64xbf16>
    %c0_7 = arith.constant 0 : index
    %c0_8 = arith.constant 0 : index
    %21 = vector.load %arg4[%c0_7, %c0_8] : memref<64x248xbf16, #tpu.memory_space<vmem>>, vector<64x248xbf16>
    %cst_9 = arith.constant dense<0.000000e+00> : vector<297x248xf32>
    %22 = tpu.matmul %20, %21, %cst_9 {dimension_numbers = #tpu.dot_dimension_numbers<[1], [0], [0], [1], [0, 0, 1, 1], [], []>} : vector<297x64xbf16>, vector<64x248xbf16>, vector<297x248xf32> -> vector<297x248xf32>
    %c0_10 = arith.constant 0 : index
    %c0_11 = arith.constant 0 : index
    %23 = vector.load %arg5[%c0_10, %c0_11] : memref<1x248xf32, #tpu.memory_space<vmem>>, vector<1x248xf32>
    %24 = vector.broadcast %23 : vector<1x248xf32> to vector<297x248xf32>
    %25 = arith.addf %22, %24 : vector<297x248xf32>
    %cst_12 = arith.constant 0.000000e+00 : f32
    %26 = vector.broadcast %cst_12 : f32 to vector<297x248xf32>
    %27 = arith.maximumf %25, %26 : vector<297x248xf32>
    %28 = arith.truncf %27 : vector<297x248xf32> to vector<297x248xbf16>
    %29 = vector.extract_strided_slice %28 {offsets = [0, 8], sizes = [297, 240], strides = [1, 1]} : vector<297x248xbf16> to vector<297x240xbf16>
    %30 = vector.extract_strided_slice %28 {offsets = [0, 0], sizes = [297, 8], strides = [1, 1]} : vector<297x248xbf16> to vector<297x8xbf16>
    %31 = tpu.concatenate %29, %30 in 1 : vector<297x240xbf16>, vector<297x8xbf16> -> vector<297x248xbf16>
    %32 = arith.maximumf %28, %31 : vector<297x248xbf16>
    %33 = vector.extract_strided_slice %32 {offsets = [0, 0], sizes = [296, 248], strides = [1, 1]} : vector<297x248xbf16> to vector<296x248xbf16>
    %34 = vector.extract_strided_slice %32 {offsets = [1, 0], sizes = [296, 248], strides = [1, 1]} : vector<297x248xbf16> to vector<296x248xbf16>
    %35 = arith.maximumf %33, %34 : vector<296x248xbf16>
    %36 = arith.extf %35 : vector<296x248xbf16> to vector<296x248xf32>
    %c0_13 = arith.constant 0 : index
    %c0_14 = arith.constant 0 : index
    %37 = vector.load %arg6[%c0_13, %c0_14] : memref<2x248xf32, #tpu.memory_space<vmem>>, vector<1x248xf32>
    %38 = vector.broadcast %37 : vector<1x248xf32> to vector<296x248xf32>
    %39 = arith.mulf %36, %38 : vector<296x248xf32>
    %c1 = arith.constant 1 : index
    %c0_15 = arith.constant 0 : index
    %40 = vector.load %arg6[%c1, %c0_15] : memref<2x248xf32, #tpu.memory_space<vmem>>, vector<1x248xf32>
    %41 = vector.broadcast %40 : vector<1x248xf32> to vector<296x248xf32>
    %42 = arith.addf %39, %41 : vector<296x248xf32>
    %cst_16 = arith.constant 0.000000e+00 : f32
    %43 = vector.broadcast %cst_16 : f32 to vector<296x248xf32>
    %44 = arith.maximumf %42, %43 : vector<296x248xf32>
    %45 = arith.truncf %44 : vector<296x248xf32> to vector<296x248xbf16>
    %46 = vector.extract_strided_slice %45 {offsets = [0, 0], sizes = [294, 248], strides = [1, 1]} : vector<296x248xbf16> to vector<294x248xbf16>
    %47 = vector.extract_strided_slice %45 {offsets = [2, 0], sizes = [294, 248], strides = [1, 1]} : vector<296x248xbf16> to vector<294x248xbf16>
    %48 = tpu.concatenate %46, %47 in 1 : vector<294x248xbf16>, vector<294x248xbf16> -> vector<294x496xbf16>
    %c0_17 = arith.constant 0 : index
    %c0_18 = arith.constant 0 : index
    %49 = vector.load %arg7[%c0_17, %c0_18] : memref<496x112xbf16, #tpu.memory_space<vmem>>, vector<496x112xbf16>
    %cst_19 = arith.constant dense<0.000000e+00> : vector<294x112xf32>
    %50 = tpu.matmul %48, %49, %cst_19 {dimension_numbers = #tpu.dot_dimension_numbers<[1], [0], [0], [1], [0, 0, 1, 1], [], []>} : vector<294x496xbf16>, vector<496x112xbf16>, vector<294x112xf32> -> vector<294x112xf32>
    %c0_20 = arith.constant 0 : index
    %c0_21 = arith.constant 0 : index
    %51 = vector.load %arg8[%c0_20, %c0_21] : memref<1x112xf32, #tpu.memory_space<vmem>>, vector<1x112xf32>
    %52 = vector.broadcast %51 : vector<1x112xf32> to vector<294x112xf32>
    %53 = arith.addf %50, %52 : vector<294x112xf32>
    %cst_22 = arith.constant 0.000000e+00 : f32
    %54 = vector.broadcast %cst_22 : f32 to vector<294x112xf32>
    %55 = arith.maximumf %53, %54 : vector<294x112xf32>
    %56 = arith.truncf %55 : vector<294x112xf32> to vector<294x112xbf16>
    %57 = vector.extract_strided_slice %56 {offsets = [0, 0], sizes = [290, 112], strides = [1, 1]} : vector<294x112xbf16> to vector<290x112xbf16>
    %58 = vector.extract_strided_slice %56 {offsets = [2, 0], sizes = [290, 112], strides = [1, 1]} : vector<294x112xbf16> to vector<290x112xbf16>
    %59 = vector.extract_strided_slice %56 {offsets = [4, 0], sizes = [290, 112], strides = [1, 1]} : vector<294x112xbf16> to vector<290x112xbf16>
    %60 = tpu.concatenate %57, %58, %59 in 1 : vector<290x112xbf16>, vector<290x112xbf16>, vector<290x112xbf16> -> vector<290x336xbf16>
    %c0_23 = arith.constant 0 : index
    %c0_24 = arith.constant 0 : index
    %61 = vector.load %arg9[%c0_23, %c0_24] : memref<336x192xbf16, #tpu.memory_space<vmem>>, vector<336x192xbf16>
    %cst_25 = arith.constant dense<0.000000e+00> : vector<290x192xf32>
    %62 = tpu.matmul %60, %61, %cst_25 {dimension_numbers = #tpu.dot_dimension_numbers<[1], [0], [0], [1], [0, 0, 1, 1], [], []>} : vector<290x336xbf16>, vector<336x192xbf16>, vector<290x192xf32> -> vector<290x192xf32>
    %c0_26 = arith.constant 0 : index
    %c0_27 = arith.constant 0 : index
    %63 = vector.load %arg10[%c0_26, %c0_27] : memref<1x192xf32, #tpu.memory_space<vmem>>, vector<1x192xf32>
    %64 = vector.broadcast %63 : vector<1x192xf32> to vector<290x192xf32>
    %65 = arith.addf %62, %64 : vector<290x192xf32>
    %cst_28 = arith.constant 0.000000e+00 : f32
    %66 = vector.broadcast %cst_28 : f32 to vector<290x192xf32>
    %67 = arith.maximumf %65, %66 : vector<290x192xf32>
    %68 = arith.truncf %67 : vector<290x192xf32> to vector<290x192xbf16>
    %69 = vector.extract_strided_slice %68 {offsets = [0, 0], sizes = [286, 192], strides = [1, 1]} : vector<290x192xbf16> to vector<286x192xbf16>
    %70 = vector.extract_strided_slice %68 {offsets = [2, 0], sizes = [286, 192], strides = [1, 1]} : vector<290x192xbf16> to vector<286x192xbf16>
    %71 = vector.extract_strided_slice %68 {offsets = [4, 0], sizes = [286, 192], strides = [1, 1]} : vector<290x192xbf16> to vector<286x192xbf16>
    %72 = tpu.concatenate %69, %70, %71 in 1 : vector<286x192xbf16>, vector<286x192xbf16>, vector<286x192xbf16> -> vector<286x576xbf16>
    %c0_29 = arith.constant 0 : index
    %c0_30 = arith.constant 0 : index
    %73 = vector.load %arg11[%c0_29, %c0_30] : memref<576x160xbf16, #tpu.memory_space<vmem>>, vector<576x160xbf16>
    %cst_31 = arith.constant dense<0.000000e+00> : vector<286x160xf32>
    %74 = tpu.matmul %72, %73, %cst_31 {dimension_numbers = #tpu.dot_dimension_numbers<[1], [0], [0], [1], [0, 0, 1, 1], [], []>} : vector<286x576xbf16>, vector<576x160xbf16>, vector<286x160xf32> -> vector<286x160xf32>
    %c0_32 = arith.constant 0 : index
    %c0_33 = arith.constant 0 : index
    %75 = vector.load %arg12[%c0_32, %c0_33] : memref<1x160xf32, #tpu.memory_space<vmem>>, vector<1x160xf32>
    %76 = vector.broadcast %75 : vector<1x160xf32> to vector<286x160xf32>
    %77 = arith.addf %74, %76 : vector<286x160xf32>
    %cst_34 = arith.constant 0.000000e+00 : f32
    %78 = vector.broadcast %cst_34 : f32 to vector<286x160xf32>
    %79 = arith.maximumf %77, %78 : vector<286x160xf32>
    %80 = arith.truncf %79 : vector<286x160xf32> to vector<286x160xbf16>
    %81 = vector.extract_strided_slice %80 {offsets = [0, 16], sizes = [286, 144], strides = [1, 1]} : vector<286x160xbf16> to vector<286x144xbf16>
    %82 = vector.extract_strided_slice %80 {offsets = [0, 0], sizes = [286, 16], strides = [1, 1]} : vector<286x160xbf16> to vector<286x16xbf16>
    %83 = tpu.concatenate %81, %82 in 1 : vector<286x144xbf16>, vector<286x16xbf16> -> vector<286x160xbf16>
    %84 = arith.maximumf %80, %83 : vector<286x160xbf16>
    %85 = vector.extract_strided_slice %84 {offsets = [0, 0], sizes = [284, 160], strides = [1, 1]} : vector<286x160xbf16> to vector<284x160xbf16>
    %86 = vector.extract_strided_slice %84 {offsets = [2, 0], sizes = [284, 160], strides = [1, 1]} : vector<286x160xbf16> to vector<284x160xbf16>
    %87 = arith.maximumf %85, %86 : vector<284x160xbf16>
    %88 = arith.extf %87 : vector<284x160xbf16> to vector<284x160xf32>
    %c0_35 = arith.constant 0 : index
    %c0_36 = arith.constant 0 : index
    %89 = vector.load %arg13[%c0_35, %c0_36] : memref<2x160xf32, #tpu.memory_space<vmem>>, vector<1x160xf32>
    %90 = vector.broadcast %89 : vector<1x160xf32> to vector<284x160xf32>
    %91 = arith.mulf %88, %90 : vector<284x160xf32>
    %c1_37 = arith.constant 1 : index
    %c0_38 = arith.constant 0 : index
    %92 = vector.load %arg13[%c1_37, %c0_38] : memref<2x160xf32, #tpu.memory_space<vmem>>, vector<1x160xf32>
    %93 = vector.broadcast %92 : vector<1x160xf32> to vector<284x160xf32>
    %94 = arith.addf %91, %93 : vector<284x160xf32>
    %cst_39 = arith.constant 0.000000e+00 : f32
    %95 = vector.broadcast %cst_39 : f32 to vector<284x160xf32>
    %96 = arith.maximumf %94, %95 : vector<284x160xf32>
    %97 = arith.truncf %96 : vector<284x160xf32> to vector<284x160xbf16>
    %98 = vector.extract_strided_slice %97 {offsets = [0, 0], sizes = [276, 160], strides = [1, 1]} : vector<284x160xbf16> to vector<276x160xbf16>
    %99 = vector.extract_strided_slice %97 {offsets = [4, 0], sizes = [276, 160], strides = [1, 1]} : vector<284x160xbf16> to vector<276x160xbf16>
    %100 = vector.extract_strided_slice %97 {offsets = [8, 0], sizes = [276, 160], strides = [1, 1]} : vector<284x160xbf16> to vector<276x160xbf16>
    %101 = tpu.concatenate %98, %99, %100 in 1 : vector<276x160xbf16>, vector<276x160xbf16>, vector<276x160xbf16> -> vector<276x480xbf16>
    %c0_40 = arith.constant 0 : index
    %c0_41 = arith.constant 0 : index
    %102 = vector.load %arg14[%c0_40, %c0_41] : memref<480x3xbf16, #tpu.memory_space<vmem>>, vector<480x3xbf16>
    %cst_42 = arith.constant dense<0.000000e+00> : vector<276x3xf32>
    %103 = tpu.matmul %101, %102, %cst_42 {dimension_numbers = #tpu.dot_dimension_numbers<[1], [0], [0], [1], [0, 0, 1, 1], [], []>} : vector<276x480xbf16>, vector<480x3xbf16>, vector<276x3xf32> -> vector<276x3xf32>
    %c0_43 = arith.constant 0 : index
    %c0_44 = arith.constant 0 : index
    %104 = vector.load %arg15[%c0_43, %c0_44] : memref<1x3xf32, #tpu.memory_space<vmem>>, vector<1x3xf32>
    %105 = vector.broadcast %104 : vector<1x3xf32> to vector<276x3xf32>
    %106 = arith.addf %103, %105 : vector<276x3xf32>
    %cst_45 = arith.constant 0.000000e+00 : f32
    %107 = vector.broadcast %cst_45 : f32 to vector<276x3xf32>
    %108 = arith.maximumf %106, %107 : vector<276x3xf32>
    %109 = arith.truncf %108 : vector<276x3xf32> to vector<276x3xbf16>
    %110 = vector.extract_strided_slice %109 {offsets = [0, 0], sizes = [268, 3], strides = [1, 1]} : vector<276x3xbf16> to vector<268x3xbf16>
    %111 = vector.extract_strided_slice %109 {offsets = [4, 0], sizes = [268, 3], strides = [1, 1]} : vector<276x3xbf16> to vector<268x3xbf16>
    %112 = vector.extract_strided_slice %109 {offsets = [8, 0], sizes = [268, 3], strides = [1, 1]} : vector<276x3xbf16> to vector<268x3xbf16>
    %113 = tpu.concatenate %110, %111, %112 in 1 : vector<268x3xbf16>, vector<268x3xbf16>, vector<268x3xbf16> -> vector<268x9xbf16>
    %c0_46 = arith.constant 0 : index
    %c0_47 = arith.constant 0 : index
    %114 = vector.load %arg16[%c0_46, %c0_47] : memref<9x7xbf16, #tpu.memory_space<vmem>>, vector<9x7xbf16>
    %cst_48 = arith.constant dense<0.000000e+00> : vector<268x7xf32>
    %115 = tpu.matmul %113, %114, %cst_48 {dimension_numbers = #tpu.dot_dimension_numbers<[1], [0], [0], [1], [0, 0, 1, 1], [], []>} : vector<268x9xbf16>, vector<9x7xbf16>, vector<268x7xf32> -> vector<268x7xf32>
    %c0_49 = arith.constant 0 : index
    %c0_50 = arith.constant 0 : index
    %116 = vector.load %arg17[%c0_49, %c0_50] : memref<1x7xf32, #tpu.memory_space<vmem>>, vector<1x7xf32>
    %117 = vector.broadcast %116 : vector<1x7xf32> to vector<268x7xf32>
    %118 = arith.addf %115, %117 : vector<268x7xf32>
    %cst_51 = arith.constant 0.000000e+00 : f32
    %119 = vector.broadcast %cst_51 : f32 to vector<268x7xf32>
    %120 = arith.maximumf %118, %119 : vector<268x7xf32>
    %121 = arith.truncf %120 : vector<268x7xf32> to vector<268x7xbf16>
    %c0_52 = arith.constant 0 : index
    %c0_53 = arith.constant 0 : index
    %122 = vector.load %arg18[%c0_52, %c0_53] : memref<8x268xbf16, #tpu.memory_space<vmem>>, vector<8x268xbf16>
    %cst_54 = arith.constant dense<0.000000e+00> : vector<8x7xf32>
    %123 = tpu.matmul %122, %121, %cst_54 {dimension_numbers = #tpu.dot_dimension_numbers<[1], [0], [0], [1], [0, 0, 1, 1], [], []>} : vector<8x268xbf16>, vector<268x7xbf16>, vector<8x7xf32> -> vector<8x7xf32>
    %c0_55 = arith.constant 0 : index
    %c0_56 = arith.constant 0 : index
    %c0_57 = arith.constant 0 : index
    %124 = vector.load %arg24[%c0_55, %c0_56, %c0_57] : memref<1x8x7xf32, #tpu.memory_space<vmem>>, vector<1x8x7xf32>
    %125 = vector.shape_cast %124 : vector<1x8x7xf32> to vector<8x7xf32>
    %126 = vector.shape_cast %123 : vector<8x7xf32> to vector<1x8x7xf32>
    tpu.vector_store %arg24[%c0_55, %c0_56, %c0_57], %126 {strides = array<i32>} : memref<1x8x7xf32, #tpu.memory_space<vmem>>, vector<1x8x7xf32>,
    %127 = arith.truncf %123 : vector<8x7xf32> to vector<8x7xbf16>
    %c0_58 = arith.constant 0 : index
    %c0_59 = arith.constant 0 : index
    %128 = vector.load %arg19[%c0_58, %c0_59] : memref<7x7xbf16, #tpu.memory_space<vmem>>, vector<7x7xbf16>
    %cst_60 = arith.constant dense<0.000000e+00> : vector<8x7xf32>
    %129 = tpu.matmul %127, %128, %cst_60 {dimension_numbers = #tpu.dot_dimension_numbers<[1], [0], [0], [1], [0, 0, 1, 1], [], []>} : vector<8x7xbf16>, vector<7x7xbf16>, vector<8x7xf32> -> vector<8x7xf32>
    %c0_61 = arith.constant 0 : index
    %c0_62 = arith.constant 0 : index
    %130 = vector.load %arg20[%c0_61, %c0_62] : memref<1x7xf32, #tpu.memory_space<vmem>>, vector<1x7xf32>
    %131 = vector.broadcast %130 : vector<1x7xf32> to vector<8x7xf32>
    %132 = arith.addf %129, %131 : vector<8x7xf32>
    %cst_63 = arith.constant 0.000000e+00 : f32
    %133 = vector.broadcast %cst_63 : f32 to vector<8x7xf32>
    %134 = arith.maximumf %132, %133 : vector<8x7xf32>
    %135 = arith.truncf %134 : vector<8x7xf32> to vector<8x7xbf16>
    %c0_64 = arith.constant 0 : index
    %c0_65 = arith.constant 0 : index
    %136 = vector.load %arg21[%c0_64, %c0_65] : memref<7x128xbf16, #tpu.memory_space<vmem>>, vector<7x128xbf16>
    %cst_66 = arith.constant dense<0.000000e+00> : vector<8x128xf32>
    %137 = tpu.matmul %135, %136, %cst_66 {dimension_numbers = #tpu.dot_dimension_numbers<[1], [0], [0], [1], [0, 0, 1, 1], [], []>} : vector<8x7xbf16>, vector<7x128xbf16>, vector<8x128xf32> -> vector<8x128xf32>
    %c0_67 = arith.constant 0 : index
    %c0_68 = arith.constant 0 : index
    %138 = vector.load %arg22[%c0_67, %c0_68] : memref<1x128xf32, #tpu.memory_space<vmem>>, vector<1x128xf32>
    %139 = vector.broadcast %138 : vector<1x128xf32> to vector<8x128xf32>
    %140 = arith.addf %137, %139 : vector<8x128xf32>
    %cst_69 = arith.constant dense<0xFF800000> : vector<8xf32>
    %141 = vector.multi_reduction <maximumf>, %140, %cst_69 [1] : vector<8x128xf32> to vector<8xf32>
    %142 = vector.shape_cast %141 : vector<8xf32> to vector<8x1xf32>
    %143 = vector.broadcast %142 : vector<8x1xf32> to vector<8x128xf32>
    %144 = arith.subf %140, %143 : vector<8x128xf32>
    %145 = math.exp %144 : vector<8x128xf32>
    %cst_70 = arith.constant dense<0.000000e+00> : vector<8xf32>
    %146 = vector.multi_reduction <add>, %145, %cst_70 [1] : vector<8x128xf32> to vector<8xf32>
    %147 = vector.shape_cast %146 : vector<8xf32> to vector<8x1xf32>
    %148 = tpu.reciprocal %147 {approx = true} : vector<8x1xf32> -> vector<8x1xf32>
    %149 = vector.broadcast %148 : vector<8x1xf32> to vector<8x128xf32>
    %150 = arith.mulf %145, %149 : vector<8x128xf32>
    %c0_71 = arith.constant 0 : index
    %c0_72 = arith.constant 0 : index
    %c0_73 = arith.constant 0 : index
    %151 = vector.load %arg23[%c0_71, %c0_72, %c0_73] : memref<1x8x128xf32, #tpu.memory_space<vmem>>, vector<1x8x128xf32>
    %152 = vector.shape_cast %151 : vector<1x8x128xf32> to vector<8x128xf32>
    %153 = vector.shape_cast %150 : vector<8x128xf32> to vector<1x8x128xf32>
    tpu.vector_store %arg23[%c0_71, %c0_72, %c0_73], %153 {strides = array<i32>} : memref<1x8x128xf32, #tpu.memory_space<vmem>>, vector<1x8x128xf32>,
    return
  }
  func.func @transform_0(%arg0: i32) -> (i32, i32, i32) {
    %c0_i32 = arith.constant 0 : i32
    %c0_i32_0 = arith.constant 0 : i32
    %c0_i32_1 = arith.constant 0 : i32
    return %arg0, %c0_i32, %c0_i32_0 : i32, i32, i32
  }
  func.func @transform_1(%arg0: i32) -> (i32, i32) {
    %c0_i32 = arith.constant 0 : i32
    %c0_i32_0 = arith.constant 0 : i32
    %c0_i32_1 = arith.constant 0 : i32
    return %c0_i32, %c0_i32_0 : i32, i32
  }
  func.func @transform_2(%arg0: i32) -> (i32, i32) {
    %c0_i32 = arith.constant 0 : i32
    %c0_i32_0 = arith.constant 0 : i32
    %c0_i32_1 = arith.constant 0 : i32
    return %c0_i32, %c0_i32_0 : i32, i32
  }
  func.func @transform_3(%arg0: i32) -> (i32, i32) {
    %c0_i32 = arith.constant 0 : i32
    %c0_i32_0 = arith.constant 0 : i32
    %c0_i32_1 = arith.constant 0 : i32
    return %c0_i32, %c0_i32_0 : i32, i32
  }
  func.func @transform_4(%arg0: i32) -> (i32, i32) {
    %c0_i32 = arith.constant 0 : i32
    %c0_i32_0 = arith.constant 0 : i32
    %c0_i32_1 = arith.constant 0 : i32
    return %c0_i32, %c0_i32_0 : i32, i32
  }
  func.func @transform_5(%arg0: i32) -> (i32, i32) {
    %c0_i32 = arith.constant 0 : i32
    %c0_i32_0 = arith.constant 0 : i32
    %c0_i32_1 = arith.constant 0 : i32
    return %c0_i32, %c0_i32_0 : i32, i32
  }
  func.func @transform_6(%arg0: i32) -> (i32, i32) {
    %c0_i32 = arith.constant 0 : i32
    %c0_i32_0 = arith.constant 0 : i32
    %c0_i32_1 = arith.constant 0 : i32
    return %c0_i32, %c0_i32_0 : i32, i32
  }
  func.func @transform_7(%arg0: i32) -> (i32, i32) {
    %c0_i32 = arith.constant 0 : i32
    %c0_i32_0 = arith.constant 0 : i32
    %c0_i32_1 = arith.constant 0 : i32
    return %c0_i32, %c0_i32_0 : i32, i32
  }
  func.func @transform_8(%arg0: i32) -> (i32, i32) {
    %c0_i32 = arith.constant 0 : i32
    %c0_i32_0 = arith.constant 0 : i32
    %c0_i32_1 = arith.constant 0 : i32
    return %c0_i32, %c0_i32_0 : i32, i32
  }
  func.func @transform_9(%arg0: i32) -> (i32, i32) {
    %c0_i32 = arith.constant 0 : i32
    %c0_i32_0 = arith.constant 0 : i32
    %c0_i32_1 = arith.constant 0 : i32
    return %c0_i32, %c0_i32_0 : i32, i32
  }
  func.func @transform_10(%arg0: i32) -> (i32, i32) {
    %c0_i32 = arith.constant 0 : i32
    %c0_i32_0 = arith.constant 0 : i32
    %c0_i32_1 = arith.constant 0 : i32
    return %c0_i32, %c0_i32_0 : i32, i32
  }
  func.func @transform_11(%arg0: i32) -> (i32, i32) {
    %c0_i32 = arith.constant 0 : i32
    %c0_i32_0 = arith.constant 0 : i32
    %c0_i32_1 = arith.constant 0 : i32
    return %c0_i32, %c0_i32_0 : i32, i32
  }
  func.func @transform_12(%arg0: i32) -> (i32, i32) {
    %c0_i32 = arith.constant 0 : i32
    %c0_i32_0 = arith.constant 0 : i32
    %c0_i32_1 = arith.constant 0 : i32
    return %c0_i32, %c0_i32_0 : i32, i32
  }
  func.func @transform_13(%arg0: i32) -> (i32, i32) {
    %c0_i32 = arith.constant 0 : i32
    %c0_i32_0 = arith.constant 0 : i32
    %c0_i32_1 = arith.constant 0 : i32
    return %c0_i32, %c0_i32_0 : i32, i32
  }
  func.func @transform_14(%arg0: i32) -> (i32, i32) {
    %c0_i32 = arith.constant 0 : i32
    %c0_i32_0 = arith.constant 0 : i32
    %c0_i32_1 = arith.constant 0 : i32
    return %c0_i32, %c0_i32_0 : i32, i32
  }
  func.func @transform_15(%arg0: i32) -> (i32, i32) {
    %c0_i32 = arith.constant 0 : i32
    %c0_i32_0 = arith.constant 0 : i32
    %c0_i32_1 = arith.constant 0 : i32
    return %c0_i32, %c0_i32_0 : i32, i32
  }
  func.func @transform_16(%arg0: i32) -> (i32, i32) {
    %c0_i32 = arith.constant 0 : i32
    %c0_i32_0 = arith.constant 0 : i32
    %c0_i32_1 = arith.constant 0 : i32
    return %c0_i32, %c0_i32_0 : i32, i32
  }
  func.func @transform_17(%arg0: i32) -> (i32, i32) {
    %c0_i32 = arith.constant 0 : i32
    %c0_i32_0 = arith.constant 0 : i32
    %c0_i32_1 = arith.constant 0 : i32
    return %c0_i32, %c0_i32_0 : i32, i32
  }
  func.func @transform_18(%arg0: i32) -> (i32, i32) {
    %c0_i32 = arith.constant 0 : i32
    %c0_i32_0 = arith.constant 0 : i32
    %c0_i32_1 = arith.constant 0 : i32
    return %c0_i32, %c0_i32_0 : i32, i32
  }
  func.func @transform_19(%arg0: i32) -> (i32, i32) {
    %c0_i32 = arith.constant 0 : i32
    %c0_i32_0 = arith.constant 0 : i32
    %c0_i32_1 = arith.constant 0 : i32
    return %c0_i32, %c0_i32_0 : i32, i32
  }
  func.func @transform_20(%arg0: i32) -> (i32, i32) {
    %c0_i32 = arith.constant 0 : i32
    %c0_i32_0 = arith.constant 0 : i32
    %c0_i32_1 = arith.constant 0 : i32
    return %c0_i32, %c0_i32_0 : i32, i32
  }
  func.func @transform_21(%arg0: i32) -> (i32, i32) {
    %c0_i32 = arith.constant 0 : i32
    %c0_i32_0 = arith.constant 0 : i32
    %c0_i32_1 = arith.constant 0 : i32
    return %c0_i32, %c0_i32_0 : i32, i32
  }
  func.func @transform_22(%arg0: i32) -> (i32, i32, i32) {
    %c0_i32 = arith.constant 0 : i32
    %c0_i32_0 = arith.constant 0 : i32
    %c0_i32_1 = arith.constant 0 : i32
    return %arg0, %c0_i32, %c0_i32_0 : i32, i32, i32
  }
  func.func @transform_23(%arg0: i32) -> (i32, i32, i32) {
    %c0_i32 = arith.constant 0 : i32
    %c0_i32_0 = arith.constant 0 : i32
    %c0_i32_1 = arith.constant 0 : i32
    return %arg0, %c0_i32, %c0_i32_0 : i32, i32, i32
  }
}

</mosaic_0001>

<llo_original>
// kernel: _lambda_.1
$region0: #{_lambda_.1}
  #allocation0 [shape = 'u32[]', space=smem, size = 0x4, offset = 0x4, fixed_abs, tag = 'smem constant byte address 0x4 - core index']
  #allocation1 [shape = 'u32[144,128]{1,0:T(1,128)}', space=vmem, size = 0x12000, scoped, tag = 'internal scratch']
  %s0 = inlined_call_operand.vmem [shape: bf16[2,304,38], index: 0, kind: input, shape index: {}]
  %s1 = inlined_call_operand.vmem [shape: bf16[266,32], index: 1, kind: input, shape index: {}]
  %s2 = inlined_call_operand.vmem [shape: f32[1,32], index: 2, kind: input, shape index: {}]
  %s3 = inlined_call_operand.vmem [shape: bf16[64,248], index: 3, kind: input, shape index: {}]
  %s4 = inlined_call_operand.vmem [shape: f32[1,248], index: 4, kind: input, shape index: {}]
  %s5 = inlined_call_operand.vmem [shape: f32[2,248], index: 5, kind: input, shape index: {}]
  %s6 = inlined_call_operand.vmem [shape: bf16[496,112], index: 6, kind: input, shape index: {}]
  %s7 = inlined_call_operand.vmem [shape: f32[1,112], index: 7, kind: input, shape index: {}]
  %s8 = inlined_call_operand.vmem [shape: bf16[336,192], index: 8, kind: input, shape index: {}]
  %s9 = inlined_call_operand.vmem [shape: f32[1,192], index: 9, kind: input, shape index: {}]
  %s10 = inlined_call_operand.vmem [shape: bf16[576,160], index: 10, kind: input, shape index: {}]
  %s11 = inlined_call_operand.vmem [shape: f32[1,160], index: 11, kind: input, shape index: {}]
  %s12 = inlined_call_operand.vmem [shape: f32[2,160], index: 12, kind: input, shape index: {}]
  %s13 = inlined_call_operand.vmem [shape: bf16[480,3], index: 13, kind: input, shape index: {}]
  %s14 = inlined_call_operand.vmem [shape: f32[1,3], index: 14, kind: input, shape index: {}]
  %s15 = inlined_call_operand.vmem [shape: bf16[9,7], index: 15, kind: input, shape index: {}]
  %s16 = inlined_call_operand.vmem [shape: f32[1,7], index: 16, kind: input, shape index: {}]
  %s17 = inlined_call_operand.vmem [shape: bf16[8,268], index: 17, kind: input, shape index: {}]
  %s18 = inlined_call_operand.vmem [shape: bf16[7,7], index: 18, kind: input, shape index: {}]
  %s19 = inlined_call_operand.vmem [shape: f32[1,7], index: 19, kind: input, shape index: {}]
  %s20 = inlined_call_operand.vmem [shape: bf16[7,128], index: 20, kind: input, shape index: {}]
  %s21 = inlined_call_operand.vmem [shape: f32[1,128], index: 21, kind: input, shape index: {}]
  %s22 = inlined_call_operand.vmem [shape: f32[2,8,128], index: 22, kind: output, shape index: {0}]
  %s23 = inlined_call_operand.vmem [shape: f32[2,8,7], index: 23, kind: output, shape index: {1}]
  %24 = xla_tuple %s22, %s23
  %s25 = sld [smem:[#allocation0]]
  $region129: #{_lambda_.1} parent=0
    _
  %s27 = ssub.s32 1, %s25
  %s28 = scalar_select 0, %s27, %s25
  loop: start=0, step=1, limit=4
  $region2: #{_lambda_.1} parent=0 // loop_pre_header
    _
  $region3: #{_lambda_.1} parent=0 // loop_header
    %s30 = sphi 0, %s34
    %p31 = scmp.ge.s32.totalorder %s30, 4
    %s40 = sphi 0, %s42
    %s43 = sphi 0, %s40
    %s44 = sphi 0, %s43
    %s60 = sphi 0, %s44
    %s64 = sphi 0, %s64
    %s66 = sphi 0, %s64
    %s67 = sphi 0, %s66
    %s81 = sphi 0, %s67
    %s85 = sphi 0, %s85
    %s87 = sphi 0, %s85
    %s88 = sphi 0, %s87
    %s102 = sphi 0, %s88
    %s106 = sphi 0, %s106
    %s108 = sphi 0, %s106
    %s109 = sphi 0, %s108
    %s123 = sphi 0, %s109
    %s127 = sphi 0, %s127
    %s129 = sphi 0, %s127
    %s130 = sphi 0, %s129
    %s144 = sphi 0, %s130
    %s148 = sphi 0, %s148
    %s150 = sphi 0, %s148
    %s151 = sphi 0, %s150
    %s165 = sphi 0, %s151
    %s169 = sphi 0, %s169
    %s171 = sphi 0, %s169
    %s172 = sphi 0, %s171
    %s186 = sphi 0, %s172
    %s190 = sphi 0, %s190
    %s192 = sphi 0, %s190
    %s193 = sphi 0, %s192
    %s207 = sphi 0, %s193
    %s211 = sphi 0, %s211
    %s213 = sphi 0, %s211
    %s214 = sphi 0, %s213
    %s228 = sphi 0, %s214
    %s232 = sphi 0, %s232
    %s234 = sphi 0, %s232
    %s235 = sphi 0, %s234
    %s249 = sphi 0, %s235
    %s253 = sphi 0, %s253
    %s255 = sphi 0, %s253
    %s256 = sphi 0, %s255
    %s270 = sphi 0, %s256
    %s274 = sphi 0, %s274
    %s276 = sphi 0, %s274
    %s277 = sphi 0, %s276
    %s291 = sphi 0, %s277
    %s295 = sphi 0, %s295
    %s297 = sphi 0, %s295
    %s298 = sphi 0, %s297
    %s312 = sphi 0, %s298
    %s316 = sphi 0, %s316
    %s318 = sphi 0, %s316
    %s319 = sphi 0, %s318
    %s333 = sphi 0, %s319
    %s337 = sphi 0, %s337
    %s339 = sphi 0, %s337
    %s340 = sphi 0, %s339
    %s354 = sphi 0, %s340
    %s358 = sphi 0, %s358
    %s360 = sphi 0, %s358
    %s361 = sphi 0, %s360
    %s375 = sphi 0, %s361
    %s379 = sphi 0, %s379
    %s381 = sphi 0, %s379
    %s382 = sphi 0, %s381
    %s396 = sphi 0, %s382
    %s400 = sphi 0, %s400
    %s402 = sphi 0, %s400
    %s403 = sphi 0, %s402
    %s417 = sphi 0, %s403
    %s421 = sphi 0, %s421
    %s423 = sphi 0, %s421
    %s424 = sphi 0, %s423
    %s438 = sphi 0, %s424
    %s442 = sphi 0, %s442
    %s444 = sphi 0, %s442
    %s445 = sphi 0, %s444
    %s459 = sphi 0, %s445
    %s463 = sphi 0, %s463
    %s465 = sphi 0, %s463
    %s466 = sphi 0, %s465
    %s480 = sphi 0, %s466
    %s484 = sphi 0, %s484
    %s486 = sphi 0, %s484
    %s487 = sphi 0, %s486
    %s501 = sphi 0, %s487
    %s507 = sphi 0, %s509
    %s510 = sphi 0, %s507
    %s511 = sphi 0, %s510
    %s527 = sphi 0, %s511
    %s533 = sphi 0, %s535
    %s536 = sphi 0, %s533
    %s537 = sphi 0, %s536
    %s553 = sphi 0, %s537
  $region4: #{_lambda_.1} parent=0 // loop_header_branch
    %33 = sbr.rel (%p31) target = $region8
  $region5: #{_lambda_.1} parent=0 // loop_body
    %s35 = ssub.s32 %s30, 1
    %s36 = ssub.s32 %s30, 2
    %s37 = sadd.s32 %s30, 1
    %s38 = ssub.s32 %s30, %s37
    %p39 = scmp.eq.s32.totalorder %s38, 0
    %s41 = sadd.s32 %s40, 1
    %s42 = scalar_select %p39, %s40, %s41
    %p45 = pneg %p39
    %p46 = scmp.eq.s32.totalorder %s30, 1
    %p47 = por %p45, %p46
    %p48 = scmp.ne.s32.totalorder %s40, %s43
    %p49 = scmp.eq.s32.totalorder %s30, 0
    %p50 = por %p48, %p49
    %p51 = scmp.ne.s32.totalorder %s40, %s43
    %p52 = scmp.eq.s32.totalorder %s35, 1
    %p53 = por %p51, %p52
    %p54 = scmp.ne.s32.totalorder %s43, %s44
    %p55 = scmp.eq.s32.totalorder %s35, 0
    %p56 = por %p54, %p55
    %p57 = scmp.ne.s32.totalorder %s43, %s44
    %p58 = scmp.eq.s32.totalorder %s36, 1
    %p59 = por %p57, %p58
    %p61 = scmp.ne.s32.totalorder %s44, %s60
    %p62 = scmp.eq.s32.totalorder %s36, 0
    %p63 = por %p61, %p62
    %s65 = sadd.s32 %s64, 1
    %p68 = scmp.eq.s32.totalorder %s30, 1
    %p69 = scmp.ne.s32.totalorder %s64, %s66
    %p70 = scmp.eq.s32.totalorder %s30, 0
    %p71 = por %p69, %p70
    %p72 = scmp.ne.s32.totalorder %s64, %s66
    %p73 = scmp.eq.s32.totalorder %s35, 1
    %p74 = por %p72, %p73
    %p75 = scmp.ne.s32.totalorder %s66, %s67
    %p76 = scmp.eq.s32.totalorder %s35, 0
    %p77 = por %p75, %p76
    %p78 = scmp.ne.s32.totalorder %s66, %s67
    %p79 = scmp.eq.s32.totalorder %s36, 1
    %p80 = por %p78, %p79
    %p82 = scmp.ne.s32.totalorder %s67, %s81
    %p83 = scmp.eq.s32.totalorder %s36, 0
    %p84 = por %p82, %p83
    %s86 = sadd.s32 %s85, 1
    %p89 = scmp.eq.s32.totalorder %s30, 1
    %p90 = scmp.ne.s32.totalorder %s85, %s87
    %p91 = scmp.eq.s32.totalorder %s30, 0
    %p92 = por %p90, %p91
    %p93 = scmp.ne.s32.totalorder %s85, %s87
    %p94 = scmp.eq.s32.totalorder %s35, 1
    %p95 = por %p93, %p94
    %p96 = scmp.ne.s32.totalorder %s87, %s88
    %p97 = scmp.eq.s32.totalorder %s35, 0
    %p98 = por %p96, %p97
    %p99 = scmp.ne.s32.totalorder %s87, %s88
    %p100 = scmp.eq.s32.totalorder %s36, 1
    %p101 = por %p99, %p100
    %p103 = scmp.ne.s32.totalorder %s88, %s102
    %p104 = scmp.eq.s32.totalorder %s36, 0
    %p105 = por %p103, %p104
    %s107 = sadd.s32 %s106, 1
    %p110 = scmp.eq.s32.totalorder %s30, 1
    %p111 = scmp.ne.s32.totalorder %s106, %s108
    %p112 = scmp.eq.s32.totalorder %s30, 0
    %p113 = por %p111, %p112
    %p114 = scmp.ne.s32.totalorder %s106, %s108
    %p115 = scmp.eq.s32.totalorder %s35, 1
    %p116 = por %p114, %p115
    %p117 = scmp.ne.s32.totalorder %s108, %s109
    %p118 = scmp.eq.s32.totalorder %s35, 0
    %p119 = por %p117, %p118
    %p120 = scmp.ne.s32.totalorder %s108, %s109
    %p121 = scmp.eq.s32.totalorder %s36, 1
    %p122 = por %p120, %p121
    %p124 = scmp.ne.s32.totalorder %s109, %s123
    %p125 = scmp.eq.s32.totalorder %s36, 0
    %p126 = por %p124, %p125
    %s128 = sadd.s32 %s127, 1
    %p131 = scmp.eq.s32.totalorder %s30, 1
    %p132 = scmp.ne.s32.totalorder %s127, %s129
    %p133 = scmp.eq.s32.totalorder %s30, 0
    %p134 = por %p132, %p133
    %p135 = scmp.ne.s32.totalorder %s127, %s129
    %p136 = scmp.eq.s32.totalorder %s35, 1
    %p137 = por %p135, %p136
    %p138 = scmp.ne.s32.totalorder %s129, %s130
    %p139 = scmp.eq.s32.totalorder %s35, 0
    %p140 = por %p138, %p139
    %p141 = scmp.ne.s32.totalorder %s129, %s130
    %p142 = scmp.eq.s32.totalorder %s36, 1
    %p143 = por %p141, %p142
    %p145 = scmp.ne.s32.totalorder %s130, %s144
    %p146 = scmp.eq.s32.totalorder %s36, 0
    %p147 = por %p145, %p146
    %s149 = sadd.s32 %s148, 1
    %p152 = scmp.eq.s32.totalorder %s30, 1
    %p153 = scmp.ne.s32.totalorder %s148, %s150
    %p154 = scmp.eq.s32.totalorder %s30, 0
    %p155 = por %p153, %p154
    %p156 = scmp.ne.s32.totalorder %s148, %s150
    %p157 = scmp.eq.s32.totalorder %s35, 1
    %p158 = por %p156, %p157
    %p159 = scmp.ne.s32.totalorder %s150, %s151
    %p160 = scmp.eq.s32.totalorder %s35, 0
    %p161 = por %p159, %p160
    %p162 = scmp.ne.s32.totalorder %s150, %s151
    %p163 = scmp.eq.s32.totalorder %s36, 1
    %p164 = por %p162, %p163
    %p166 = scmp.ne.s32.totalorder %s151, %s165
    %p167 = scmp.eq.s32.totalorder %s36, 0
    %p168 = por %p166, %p167
    %s170 = sadd.s32 %s169, 1
    %p173 = scmp.eq.s32.totalorder %s30, 1
    %p174 = scmp.ne.s32.totalorder %s169, %s171
    %p175 = scmp.eq.s32.totalorder %s30, 0
    %p176 = por %p174, %p175
    %p177 = scmp.ne.s32.totalorder %s169, %s171
    %p178 = scmp.eq.s32.totalorder %s35, 1
    %p179 = por %p177, %p178
    %p180 = scmp.ne.s32.totalorder %s171, %s172
    %p181 = scmp.eq.s32.totalorder %s35, 0
    %p182 = por %p180, %p181
    %p183 = scmp.ne.s32.totalorder %s171, %s172
    %p184 = scmp.eq.s32.totalorder %s36, 1
    %p185 = por %p183, %p184
    %p187 = scmp.ne.s32.totalorder %s172, %s186
    %p188 = scmp.eq.s32.totalorder %s36, 0
    %p189 = por %p187, %p188
    %s191 = sadd.s32 %s190, 1
    %p194 = scmp.eq.s32.totalorder %s30, 1
    %p195 = scmp.ne.s32.totalorder %s190, %s192
    %p196 = scmp.eq.s32.totalorder %s30, 0
    %p197 = por %p195, %p196
    %p198 = scmp.ne.s32.totalorder %s190, %s192
    %p199 = scmp.eq.s32.totalorder %s35, 1
    %p200 = por %p198, %p199
    %p201 = scmp.ne.s32.totalorder %s192, %s193
    %p202 = scmp.eq.s32.totalorder %s35, 0
    %p203 = por %p201, %p202
    %p204 = scmp.ne.s32.totalorder %s192, %s193
    %p205 = scmp.eq.s32.totalorder %s36, 1
    %p206 = por %p204, %p205
    %p208 = scmp.ne.s32.totalorder %s193, %s207
    %p209 = scmp.eq.s32.totalorder %s36, 0
    %p210 = por %p208, %p209
    %s212 = sadd.s32 %s211, 1
    %p215 = scmp.eq.s32.totalorder %s30, 1
    %p216 = scmp.ne.s32.totalorder %s211, %s213
    %p217 = scmp.eq.s32.totalorder %s30, 0
    %p218 = por %p216, %p217
    %p219 = scmp.ne.s32.totalorder %s211, %s213
    %p220 = scmp.eq.s32.totalorder %s35, 1
    %p221 = por %p219, %p220
    %p222 = scmp.ne.s32.totalorder %s213, %s214
    %p223 = scmp.eq.s32.totalorder %s35, 0
    %p224 = por %p222, %p223
    %p225 = scmp.ne.s32.totalorder %s213, %s214
    %p226 = scmp.eq.s32.totalorder %s36, 1
    %p227 = por %p225, %p226
    %p229 = scmp.ne.s32.totalorder %s214, %s228
    %p230 = scmp.eq.s32.totalorder %s36, 0
    %p231 = por %p229, %p230
    %s233 = sadd.s32 %s232, 1
    %p236 = scmp.eq.s32.totalorder %s30, 1
    %p237 = scmp.ne.s32.totalorder %s232, %s234
    %p238 = scmp.eq.s32.totalorder %s30, 0
    %p239 = por %p237, %p238
    %p240 = scmp.ne.s32.totalorder %s232, %s234
    %p241 = scmp.eq.s32.totalorder %s35, 1
    %p242 = por %p240, %p241
    %p243 = scmp.ne.s32.totalorder %s234, %s235
    %p244 = scmp.eq.s32.totalorder %s35, 0
    %p245 = por %p243, %p244
    %p246 = scmp.ne.s32.totalorder %s234, %s235
    %p247 = scmp.eq.s32.totalorder %s36, 1
    %p248 = por %p246, %p247
    %p250 = scmp.ne.s32.totalorder %s235, %s249
    %p251 = scmp.eq.s32.totalorder %s36, 0
    %p252 = por %p250, %p251
    %s254 = sadd.s32 %s253, 1
    %p257 = scmp.eq.s32.totalorder %s30, 1
    %p258 = scmp.ne.s32.totalorder %s253, %s255
    %p259 = scmp.eq.s32.totalorder %s30, 0
    %p260 = por %p258, %p259
    %p261 = scmp.ne.s32.totalorder %s253, %s255
    %p262 = scmp.eq.s32.totalorder %s35, 1
    %p263 = por %p261, %p262
    %p264 = scmp.ne.s32.totalorder %s255, %s256
    %p265 = scmp.eq.s32.totalorder %s35, 0
    %p266 = por %p264, %p265
    %p267 = scmp.ne.s32.totalorder %s255, %s256
    %p268 = scmp.eq.s32.totalorder %s36, 1
    %p269 = por %p267, %p268
    %p271 = scmp.ne.s32.totalorder %s256, %s270
    %p272 = scmp.eq.s32.totalorder %s36, 0
    %p273 = por %p271, %p272
    %s275 = sadd.s32 %s274, 1
    %p278 = scmp.eq.s32.totalorder %s30, 1
    %p279 = scmp.ne.s32.totalorder %s274, %s276
    %p280 = scmp.eq.s32.totalorder %s30, 0
    %p281 = por %p279, %p280
    %p282 = scmp.ne.s32.totalorder %s274, %s276
    %p283 = scmp.eq.s32.totalorder %s35, 1
    %p284 = por %p282, %p283
    %p285 = scmp.ne.s32.totalorder %s276, %s277
    %p286 = scmp.eq.s32.totalorder %s35, 0
    %p287 = por %p285, %p286
    %p288 = scmp.ne.s32.totalorder %s276, %s277
    %p289 = scmp.eq.s32.totalorder %s36, 1
    %p290 = por %p288, %p289
    %p292 = scmp.ne.s32.totalorder %s277, %s291
    %p293 = scmp.eq.s32.totalorder %s36, 0
    %p294 = por %p292, %p293
    %s296 = sadd.s32 %s295, 1
    %p299 = scmp.eq.s32.totalorder %s30, 1
    %p300 = scmp.ne.s32.totalorder %s295, %s297
    %p301 = scmp.eq.s32.totalorder %s30, 0
    %p302 = por %p300, %p301
    %p303 = scmp.ne.s32.totalorder %s295, %s297
    %p304 = scmp.eq.s32.totalorder %s35, 1
    %p305 = por %p303, %p304
    %p306 = scmp.ne.s32.totalorder %s297, %s298
    %p307 = scmp.eq.s32.totalorder %s35, 0
    %p308 = por %p306, %p307
    %p309 = scmp.ne.s32.totalorder %s297, %s298
    %p310 = scmp.eq.s32.totalorder %s36, 1
    %p311 = por %p309, %p310
    %p313 = scmp.ne.s32.totalorder %s298, %s312
    %p314 = scmp.eq.s32.totalorder %s36, 0
    %p315 = por %p313, %p314
    %s317 = sadd.s32 %s316, 1
    %p320 = scmp.eq.s32.totalorder %s30, 1
    %p321 = scmp.ne.s32.totalorder %s316, %s318
    %p322 = scmp.eq.s32.totalorder %s30, 0
    %p323 = por %p321, %p322
    %p324 = scmp.ne.s32.totalorder %s316, %s318
    %p325 = scmp.eq.s32.totalorder %s35, 1
    %p326 = por %p324, %p325
    %p327 = scmp.ne.s32.totalorder %s318, %s319
    %p328 = scmp.eq.s32.totalorder %s35, 0
    %p329 = por %p327, %p328
    %p330 = scmp.ne.s32.totalorder %s318, %s319
    %p331 = scmp.eq.s32.totalorder %s36, 1
    %p332 = por %p330, %p331
    %p334 = scmp.ne.s32.totalorder %s319, %s333
    %p335 = scmp.eq.s32.totalorder %s36, 0
    %p336 = por %p334, %p335
    %s338 = sadd.s32 %s337, 1
    %p341 = scmp.eq.s32.totalorder %s30, 1
    %p342 = scmp.ne.s32.totalorder %s337, %s339
    %p343 = scmp.eq.s32.totalorder %s30, 0
    %p344 = por %p342, %p343
    %p345 = scmp.ne.s32.totalorder %s337, %s339
    %p346 = scmp.eq.s32.totalorder %s35, 1
    %p347 = por %p345, %p346
    %p348 = scmp.ne.s32.totalorder %s339, %s340
    %p349 = scmp.eq.s32.totalorder %s35, 0
    %p350 = por %p348, %p349
    %p351 = scmp.ne.s32.totalorder %s339, %s340
    %p352 = scmp.eq.s32.totalorder %s36, 1
    %p353 = por %p351, %p352
    %p355 = scmp.ne.s32.totalorder %s340, %s354
    %p356 = scmp.eq.s32.totalorder %s36, 0
    %p357 = por %p355, %p356
    %s359 = sadd.s32 %s358, 1
    %p362 = scmp.eq.s32.totalorder %s30, 1
    %p363 = scmp.ne.s32.totalorder %s358, %s360
    %p364 = scmp.eq.s32.totalorder %s30, 0
    %p365 = por %p363, %p364
    %p366 = scmp.ne.s32.totalorder %s358, %s360
    %p367 = scmp.eq.s32.totalorder %s35, 1
    %p368 = por %p366, %p367
    %p369 = scmp.ne.s32.totalorder %s360, %s361
    %p370 = scmp.eq.s32.totalorder %s35, 0
    %p371 = por %p369, %p370
    %p372 = scmp.ne.s32.totalorder %s360, %s361
    %p373 = scmp.eq.s32.totalorder %s36, 1
    %p374 = por %p372, %p373
    %p376 = scmp.ne.s32.totalorder %s361, %s375
    %p377 = scmp.eq.s32.totalorder %s36, 0
    %p378 = por %p376, %p377
    %s380 = sadd.s32 %s379, 1
    %p383 = scmp.eq.s32.totalorder %s30, 1
    %p384 = scmp.ne.s32.totalorder %s379, %s381
    %p385 = scmp.eq.s32.totalorder %s30, 0
    %p386 = por %p384, %p385
    %p387 = scmp.ne.s32.totalorder %s379, %s381
    %p388 = scmp.eq.s32.totalorder %s35, 1
    %p389 = por %p387, %p388
    %p390 = scmp.ne.s32.totalorder %s381, %s382
    %p391 = scmp.eq.s32.totalorder %s35, 0
    %p392 = por %p390, %p391
    %p393 = scmp.ne.s32.totalorder %s381, %s382
    %p394 = scmp.eq.s32.totalorder %s36, 1
    %p395 = por %p393, %p394
    %p397 = scmp.ne.s32.totalorder %s382, %s396
    %p398 = scmp.eq.s32.totalorder %s36, 0
    %p399 = por %p397, %p398
    %s401 = sadd.s32 %s400, 1
    %p404 = scmp.eq.s32.totalorder %s30, 1
    %p405 = scmp.ne.s32.totalorder %s400, %s402
    %p406 = scmp.eq.s32.totalorder %s30, 0
    %p407 = por %p405, %p406
    %p408 = scmp.ne.s32.totalorder %s400, %s402
    %p409 = scmp.eq.s32.totalorder %s35, 1
    %p410 = por %p408, %p409
    %p411 = scmp.ne.s32.totalorder %s402, %s403
    %p412 = scmp.eq.s32.totalorder %s35, 0
    %p413 = por %p411, %p412
    %p414 = scmp.ne.s32.totalorder %s402, %s403
    %p415 = scmp.eq.s32.totalorder %s36, 1
    %p416 = por %p414, %p415
    %p418 = scmp.ne.s32.totalorder %s403, %s417
    %p419 = scmp.eq.s32.totalorder %s36, 0
    %p420 = por %p418, %p419
    %s422 = sadd.s32 %s421, 1
    %p425 = scmp.eq.s32.totalorder %s30, 1
    %p426 = scmp.ne.s32.totalorder %s421, %s423
    %p427 = scmp.eq.s32.totalorder %s30, 0
    %p428 = por %p426, %p427
    %p429 = scmp.ne.s32.totalorder %s421, %s423
    %p430 = scmp.eq.s32.totalorder %s35, 1
    %p431 = por %p429, %p430
    %p432 = scmp.ne.s32.totalorder %s423, %s424
    %p433 = scmp.eq.s32.totalorder %s35, 0
    %p434 = por %p432, %p433
    %p435 = scmp.ne.s32.totalorder %s423, %s424
    %p436 = scmp.eq.s32.totalorder %s36, 1
    %p437 = por %p435, %p436
    %p439 = scmp.ne.s32.totalorder %s424, %s438
    %p440 = scmp.eq.s32.totalorder %s36, 0
    %p441 = por %p439, %p440
    %s443 = sadd.s32 %s442, 1
    %p446 = scmp.eq.s32.totalorder %s30, 1
    %p447 = scmp.ne.s32.totalorder %s442, %s444
    %p448 = scmp.eq.s32.totalorder %s30, 0
    %p449 = por %p447, %p448
    %p450 = scmp.ne.s32.totalorder %s442, %s444
    %p451 = scmp.eq.s32.totalorder %s35, 1
    %p452 = por %p450, %p451
    %p453 = scmp.ne.s32.totalorder %s444, %s445
    %p454 = scmp.eq.s32.totalorder %s35, 0
    %p455 = por %p453, %p454
    %p456 = scmp.ne.s32.totalorder %s444, %s445
    %p457 = scmp.eq.s32.totalorder %s36, 1
    %p458 = por %p456, %p457
    %p460 = scmp.ne.s32.totalorder %s445, %s459
    %p461 = scmp.eq.s32.totalorder %s36, 0
    %p462 = por %p460, %p461
    %s464 = sadd.s32 %s463, 1
    %p467 = scmp.eq.s32.totalorder %s30, 1
    %p468 = scmp.ne.s32.totalorder %s463, %s465
    %p469 = scmp.eq.s32.totalorder %s30, 0
    %p470 = por %p468, %p469
    %p471 = scmp.ne.s32.totalorder %s463, %s465
    %p472 = scmp.eq.s32.totalorder %s35, 1
    %p473 = por %p471, %p472
    %p474 = scmp.ne.s32.totalorder %s465, %s466
    %p475 = scmp.eq.s32.totalorder %s35, 0
    %p476 = por %p474, %p475
    %p477 = scmp.ne.s32.totalorder %s465, %s466
    %p478 = scmp.eq.s32.totalorder %s36, 1
    %p479 = por %p477, %p478
    %p481 = scmp.ne.s32.totalorder %s466, %s480
    %p482 = scmp.eq.s32.totalorder %s36, 0
    %p483 = por %p481, %p482
    %s485 = sadd.s32 %s484, 1
    %p488 = scmp.eq.s32.totalorder %s30, 1
    %p489 = scmp.ne.s32.totalorder %s484, %s486
    %p490 = scmp.eq.s32.totalorder %s30, 0
    %p491 = por %p489, %p490
    %p492 = scmp.ne.s32.totalorder %s484, %s486
    %p493 = scmp.eq.s32.totalorder %s35, 1
    %p494 = por %p492, %p493
    %p495 = scmp.ne.s32.totalorder %s486, %s487
    %p496 = scmp.eq.s32.totalorder %s35, 0
    %p497 = por %p495, %p496
    %p498 = scmp.ne.s32.totalorder %s486, %s487
    %p499 = scmp.eq.s32.totalorder %s36, 1
    %p500 = por %p498, %p499
    %p502 = scmp.ne.s32.totalorder %s487, %s501
    %p503 = scmp.eq.s32.totalorder %s36, 0
    %p504 = por %p502, %p503
    %s505 = ssub.s32 %s30, %s37
    %p506 = scmp.eq.s32.totalorder %s505, 0
    %s508 = sadd.s32 %s507, 1
    %s509 = scalar_select %p506, %s507, %s508
    %p512 = pneg %p506
    %p513 = scmp.eq.s32.totalorder %s30, 1
    %p514 = por %p512, %p513
    %p515 = scmp.ne.s32.totalorder %s507, %s510
    %p516 = scmp.eq.s32.totalorder %s30, 0
    %p517 = por %p515, %p516
    %p518 = scmp.ne.s32.totalorder %s507, %s510
    %p519 = scmp.eq.s32.totalorder %s35, 1
    %p520 = por %p518, %p519
    %p521 = scmp.ne.s32.totalorder %s510, %s511
    %p522 = scmp.eq.s32.totalorder %s35, 0
    %p523 = por %p521, %p522
    %p524 = scmp.ne.s32.totalorder %s510, %s511
    %p525 = scmp.eq.s32.totalorder %s36, 1
    %p526 = por %p524, %p525
    %p528 = scmp.ne.s32.totalorder %s511, %s527
    %p529 = scmp.eq.s32.totalorder %s36, 0
    %p530 = por %p528, %p529
    %s531 = ssub.s32 %s30, %s37
    %p532 = scmp.eq.s32.totalorder %s531, 0
    %s534 = sadd.s32 %s533, 1
    %s535 = scalar_select %p532, %s533, %s534
    %p538 = pneg %p532
    %p539 = scmp.eq.s32.totalorder %s30, 1
    %p540 = por %p538, %p539
    %p541 = scmp.ne.s32.totalorder %s533, %s536
    %p542 = scmp.eq.s32.totalorder %s30, 0
    %p543 = por %p541, %p542
    %p544 = scmp.ne.s32.totalorder %s533, %s536
    %p545 = scmp.eq.s32.totalorder %s35, 1
    %p546 = por %p544, %p545
    %p547 = scmp.ne.s32.totalorder %s536, %s537
    %p548 = scmp.eq.s32.totalorder %s35, 0
    %p549 = por %p547, %p548
    %p550 = scmp.ne.s32.totalorder %s536, %s537
    %p551 = scmp.eq.s32.totalorder %s36, 1
    %p552 = por %p550, %p551
    %p554 = scmp.ne.s32.totalorder %s537, %s553
    %p555 = scmp.eq.s32.totalorder %s36, 0
    %p556 = por %p554, %p555
    %p557 = scmp.le.s32.totalorder 1, %s30
    %p558 = scmp.lt.s32.totalorder %s30, 3
    %p559 = pnand %p557, %p558
    %p560 = pneg %p559
    // Predicated region
    $region9: #{_lambda_.1} parent=5 // pred_check
      _
    $region10: #{_lambda_.1} parent=5 // pred_check_branch
      %562 = sbr.rel (%p559) target = $region12
    $region11: #{_lambda_.1} parent=5 // pred_region
      %s563 = ssub.s32 %s30, 1
      // Predicated region
      $region13: #{_lambda_.1} parent=11 // pred_check
        %p564 = pneg %p77
      $region14: #{_lambda_.1} parent=11 // pred_check_branch
        %566 = sbr.rel (%p564) target = $region16
      $region15: #{_lambda_.1} parent=11 // pred_region
        _
      $region16: #{_lambda_.1} parent=11 // pred_fallthru
        _
      // Predicated region
      $region17: #{_lambda_.1} parent=11 // pred_check
        %p567 = pneg %p98
      $region18: #{_lambda_.1} parent=11 // pred_check_branch
        %569 = sbr.rel (%p567) target = $region20
      $region19: #{_lambda_.1} parent=11 // pred_region
        _
      $region20: #{_lambda_.1} parent=11 // pred_fallthru
        _
      // Predicated region
      $region21: #{_lambda_.1} parent=11 // pred_check
        %p570 = pneg %p119
      $region22: #{_lambda_.1} parent=11 // pred_check_branch
        %572 = sbr.rel (%p570) target = $region24
      $region23: #{_lambda_.1} parent=11 // pred_region
        _
      $region24: #{_lambda_.1} parent=11 // pred_fallthru
        _
      // Predicated region
      $region25: #{_lambda_.1} parent=11 // pred_check
        %p573 = pneg %p140
      $region26: #{_lambda_.1} parent=11 // pred_check_branch
        %575 = sbr.rel (%p573) target = $region28
      $region27: #{_lambda_.1} parent=11 // pred_region
        _
      $region28: #{_lambda_.1} parent=11 // pred_fallthru
        _
      // Predicated region
      $region29: #{_lambda_.1} parent=11 // pred_check
        %p576 = pneg %p161
      $region30: #{_lambda_.1} parent=11 // pred_check_branch
        %578 = sbr.rel (%p576) target = $region32
      $region31: #{_lambda_.1} parent=11 // pred_region
        _
      $region32: #{_lambda_.1} parent=11 // pred_fallthru
        _
      // Predicated region
      $region33: #{_lambda_.1} parent=11 // pred_check
        %p579 = pneg %p182
      $region34: #{_lambda_.1} parent=11 // pred_check_branch
        %581 = sbr.rel (%p579) target = $region36
      $region35: #{_lambda_.1} parent=11 // pred_region
        _
      $region36: #{_lambda_.1} parent=11 // pred_fallthru
        _
      // Predicated region
      $region37: #{_lambda_.1} parent=11 // pred_check
        %p582 = pneg %p203
      $region38: #{_lambda_.1} parent=11 // pred_check_branch
        %584 = sbr.rel (%p582) target = $region40
      $region39: #{_lambda_.1} parent=11 // pred_region
        _
      $region40: #{_lambda_.1} parent=11 // pred_fallthru
        _
      // Predicated region
      $region41: #{_lambda_.1} parent=11 // pred_check
        %p585 = pneg %p224
      $region42: #{_lambda_.1} parent=11 // pred_check_branch
        %587 = sbr.rel (%p585) target = $region44
      $region43: #{_lambda_.1} parent=11 // pred_region
        _
      $region44: #{_lambda_.1} parent=11 // pred_fallthru
        _
      // Predicated region
      $region45: #{_lambda_.1} parent=11 // pred_check
        %p588 = pneg %p245
      $region46: #{_lambda_.1} parent=11 // pred_check_branch
        %590 = sbr.rel (%p588) target = $region48
      $region47: #{_lambda_.1} parent=11 // pred_region
        _
      $region48: #{_lambda_.1} parent=11 // pred_fallthru
        _
      // Predicated region
      $region49: #{_lambda_.1} parent=11 // pred_check
        %p591 = pneg %p266
      $region50: #{_lambda_.1} parent=11 // pred_check_branch
        %593 = sbr.rel (%p591) target = $region52
      $region51: #{_lambda_.1} parent=11 // pred_region
        _
      $region52: #{_lambda_.1} parent=11 // pred_fallthru
        _
      // Predicated region
      $region53: #{_lambda_.1} parent=11 // pred_check
        %p594 = pneg %p287
      $region54: #{_lambda_.1} parent=11 // pred_check_branch
        %596 = sbr.rel (%p594) target = $region56
      $region55: #{_lambda_.1} parent=11 // pred_region
        _
      $region56: #{_lambda_.1} parent=11 // pred_fallthru
        _
      // Predicated region
      $region57: #{_lambda_.1} parent=11 // pred_check
        %p597 = pneg %p308
      $region58: #{_lambda_.1} parent=11 // pred_check_branch
        %599 = sbr.rel (%p597) target = $region60
      $region59: #{_lambda_.1} parent=11 // pred_region
        _
      $region60: #{_lambda_.1} parent=11 // pred_fallthru
        _
      // Predicated region
      $region61: #{_lambda_.1} parent=11 // pred_check
        %p600 = pneg %p329
      $region62: #{_lambda_.1} parent=11 // pred_check_branch
        %602 = sbr.rel (%p600) target = $region64
      $region63: #{_lambda_.1} parent=11 // pred_region
        _
      $region64: #{_lambda_.1} parent=11 // pred_fallthru
        _
      // Predicated region
      $region65: #{_lambda_.1} parent=11 // pred_check
        %p603 = pneg %p350
      $region66: #{_lambda_.1} parent=11 // pred_check_branch
        %605 = sbr.rel (%p603) target = $region68
      $region67: #{_lambda_.1} parent=11 // pred_region
        _
      $region68: #{_lambda_.1} parent=11 // pred_fallthru
        _
      // Predicated region
      $region69: #{_lambda_.1} parent=11 // pred_check
        %p606 = pneg %p371
      $region70: #{_lambda_.1} parent=11 // pred_check_branch
        %608 = sbr.rel (%p606) target = $region72
      $region71: #{_lambda_.1} parent=11 // pred_region
        _
      $region72: #{_lambda_.1} parent=11 // pred_fallthru
        _
      // Predicated region
      $region73: #{_lambda_.1} parent=11 // pred_check
        %p609 = pneg %p392
      $region74: #{_lambda_.1} parent=11 // pred_check_branch
        %611 = sbr.rel (%p609) target = $region76
      $region75: #{_lambda_.1} parent=11 // pred_region
        _
      $region76: #{_lambda_.1} parent=11 // pred_fallthru
        _
      // Predicated region
      $region77: #{_lambda_.1} parent=11 // pred_check
        %p612 = pneg %p413
      $region78: #{_lambda_.1} parent=11 // pred_check_branch
        %614 = sbr.rel (%p612) target = $region80
      $region79: #{_lambda_.1} parent=11 // pred_region
        _
      $region80: #{_lambda_.1} parent=11 // pred_fallthru
        _
      // Predicated region
      $region81: #{_lambda_.1} parent=11 // pred_check
        %p615 = pneg %p434
      $region82: #{_lambda_.1} parent=11 // pred_check_branch
        %617 = sbr.rel (%p615) target = $region84
      $region83: #{_lambda_.1} parent=11 // pred_region
        _
      $region84: #{_lambda_.1} parent=11 // pred_fallthru
        _
      // Predicated region
      $region85: #{_lambda_.1} parent=11 // pred_check
        %p618 = pneg %p455
      $region86: #{_lambda_.1} parent=11 // pred_check_branch
        %620 = sbr.rel (%p618) target = $region88
      $region87: #{_lambda_.1} parent=11 // pred_region
        _
      $region88: #{_lambda_.1} parent=11 // pred_fallthru
        _
      // Predicated region
      $region89: #{_lambda_.1} parent=11 // pred_check
        %p621 = pneg %p476
      $region90: #{_lambda_.1} parent=11 // pred_check_branch
        %623 = sbr.rel (%p621) target = $region92
      $region91: #{_lambda_.1} parent=11 // pred_region
        _
      $region92: #{_lambda_.1} parent=11 // pred_fallthru
        _
      // Predicated region
      $region93: #{_lambda_.1} parent=11 // pred_check
        %p624 = pneg %p497
      $region94: #{_lambda_.1} parent=11 // pred_check_branch
        %626 = sbr.rel (%p624) target = $region96
      $region95: #{_lambda_.1} parent=11 // pred_region
        _
      $region96: #{_lambda_.1} parent=11 // pred_fallthru
        _
    $region12: #{_lambda_.1} parent=5 // pred_fallthru
      _
    %p627 = scmp.lt.s32.totalorder %s30, 2
    // Predicated region
    $region97: #{_lambda_.1} parent=5 // pred_check
      %p628 = pneg %p627
    $region98: #{_lambda_.1} parent=5 // pred_check_branch
      %630 = sbr.rel (%p628) target = $region100
    $region99: #{_lambda_.1} parent=5 // pred_region
      // Predicated region
      $region101: #{_lambda_.1} parent=99 // pred_check
        %p631 = pneg %p50
      $region102: #{_lambda_.1} parent=99 // pred_check_branch
        %633 = sbr.rel (%p631) target = $region104
      $region103: #{_lambda_.1} parent=99 // pred_region
        %p634 = scmp.lt.s32.totalorder %s30, 1
        %s635 = scalar_select %p634, %s30, 1
        %s636 = smul.addr %s635, 38
        %s637 = smul.addr %s636, 4
        %s638 = scalar_lea.vmem %s0, %s637
      $region104: #{_lambda_.1} parent=99 // pred_fallthru
        _
    $region100: #{_lambda_.1} parent=5 // pred_fallthru
      _
    %p639 = scmp.le.s32.totalorder 1, %s30
    %p640 = scmp.lt.s32.totalorder %s30, 3
    %p641 = pnand %p639, %p640
    %p642 = pneg %p641
    // Predicated region
    $region105: #{_lambda_.1} parent=5 // pred_check
      _
    $region106: #{_lambda_.1} parent=5 // pred_check_branch
      %644 = sbr.rel (%p641) target = $region108
    $region107: #{_lambda_.1} parent=5 // pred_region
      %s645 = ssub.s32 %s30, 1
      %p646 = scmp.lt.s32.totalorder %s35, 1
      %s647 = scalar_select %p646, %s35, 1
      %s648 = smul.addr %s647, 38
      %s649 = smul.addr %s648, 4
      %s650 = scalar_lea.vmem %s0, %s649
      %p651 = pneg %p56
      %p652 = pneg %p53
      %p653 = pneg %p77
      %p654 = pneg %p74
      %p655 = pneg %p98
      %p656 = pneg %p95
      %p657 = pneg %p119
      %p658 = pneg %p116
      %p659 = pneg %p140
      %p660 = pneg %p137
      %p661 = pneg %p161
      %p662 = pneg %p158
      %p663 = pneg %p182
      %p664 = pneg %p179
      %p665 = pneg %p203
      %p666 = pneg %p200
      %p667 = pneg %p224
      %p668 = pneg %p221
      %p669 = pneg %p245
      %p670 = pneg %p242
      %p671 = pneg %p266
      %p672 = pneg %p263
      %p673 = pneg %p287
      %p674 = pneg %p284
      %p675 = pneg %p308
      %p676 = pneg %p305
      %p677 = pneg %p329
      %p678 = pneg %p326
      %p679 = pneg %p350
      %p680 = pneg %p347
      %p681 = pneg %p371
      %p682 = pneg %p368
      %p683 = pneg %p392
      %p684 = pneg %p389
      %p685 = pneg %p413
      %p686 = pneg %p410
      %p687 = pneg %p434
      %p688 = pneg %p431
      %p689 = pneg %p455
      %p690 = pneg %p452
      %p691 = pneg %p476
      %p692 = pneg %p473
      %p693 = pneg %p497
      %p694 = pneg %p494
      %p695 = pneg %p523
      %p696 = pneg %p520
      %p697 = scmp.lt.s32.totalorder %s35, 1
      %s698 = scalar_select %p697, %s35, 1
      %s699 = smul.addr %s698, 8
      %s700 = scalar_lea.vmem %s22, %s699
      %p701 = pneg %p549
      %p702 = pneg %p546
      %p703 = scmp.lt.s32.totalorder %s35, 1
      %s704 = scalar_select %p703, %s35, 1
      %s705 = smul.addr %s704, 8
      %s706 = scalar_lea.vmem %s23, %s705
      %p707 = scmp.lt.s32.totalorder %s35, 1
      %s708 = scalar_select %p707, %s35, 1
      %s709 = smul.addr %s708, 38
      %s710 = smul.addr %s709, 4
      %s711 = scalar_lea.vmem %s0, %s710
      %p712 = scmp.lt.s32.totalorder %s35, 1
      %s713 = scalar_select %p712, %s35, 1
      %s714 = smul.addr %s713, 8
      %s715 = scalar_lea.vmem %s22, %s714
      %p716 = scmp.lt.s32.totalorder %s35, 1
      %s717 = scalar_select %p716, %s35, 1
      %s718 = smul.addr %s717, 8
      %s719 = scalar_lea.vmem %s23, %s718
      %v721 = vld [vmem:[%s711] sm:$0xf]
      %v722 = vld [vmem:[%s711 + $0x4] sm:$0xf]
      %v723 = vld [vmem:[%s711 + $0x8] sm:$0xf]
      %v724 = vld [vmem:[%s711 + $0xc] sm:$0xf]
      %v725 = vld [vmem:[%s711 + $0x10] sm:$0xf]
      %v726 = vld [vmem:[%s711 + $0x14] sm:$0xf]
      %v727 = vld [vmem:[%s711 + $0x18] sm:$0xf]
      %v728 = vld [vmem:[%s711 + $0x1c] sm:$0xf]
      %v729 = vld [vmem:[%s711 + $0x20] sm:$0xf]
      %v730 = vld [vmem:[%s711 + $0x24] sm:$0xf]
      %v731 = vld [vmem:[%s711 + $0x28] sm:$0xf]
      %v732 = vld [vmem:[%s711 + $0x2c] sm:$0xf]
      %v733 = vld [vmem:[%s711 + $0x30] sm:$0xf]
      %v734 = vld [vmem:[%s711 + $0x34] sm:$0xf]
      %v735 = vld [vmem:[%s711 + $0x38] sm:$0xf]
      %v736 = vld [vmem:[%s711 + $0x3c] sm:$0xf]
      %v737 = vld [vmem:[%s711 + $0x40] sm:$0xf]
      %v738 = vld [vmem:[%s711 + $0x44] sm:$0xf]
      %v739 = vld [vmem:[%s711 + $0x48] sm:$0xf]
      %v740 = vld [vmem:[%s711 + $0x4c] sm:$0xf]
      %v741 = vld [vmem:[%s711 + $0x50] sm:$0xf]
      %v742 = vld [vmem:[%s711 + $0x54] sm:$0xf]
      %v743 = vld [vmem:[%s711 + $0x58] sm:$0xf]
      %v744 = vld [vmem:[%s711 + $0x5c] sm:$0xf]
      %v745 = vld [vmem:[%s711 + $0x60] sm:$0xf]
      %v746 = vld [vmem:[%s711 + $0x64] sm:$0xf]
      %v747 = vld [vmem:[%s711 + $0x68] sm:$0xf]
      %v748 = vld [vmem:[%s711 + $0x6c] sm:$0xf]
      %v749 = vld [vmem:[%s711 + $0x70] sm:$0xf]
      %v750 = vld [vmem:[%s711 + $0x74] sm:$0xf]
      %v751 = vld [vmem:[%s711 + $0x78] sm:$0xf]
      %v752 = vld [vmem:[%s711 + $0x7c] sm:$0xf]
      %v753 = vld [vmem:[%s711 + $0x80] sm:$0xf]
      %v754 = vld [vmem:[%s711 + $0x84] sm:$0xf]
      %v755 = vld [vmem:[%s711 + $0x88] sm:$0xf]
      %v756 = vld [vmem:[%s711 + $0x8c] sm:$0xf]
      %v757 = vld [vmem:[%s711 + $0x90] sm:$0xf]
      %v758 = vld [vmem:[%s711 + $0x94] sm:$0xf]
      %v797 = vunpack.c.l.b16 %v721
      %v798 = vunpack.c.l.b16 %v722
      %v799 = vunpack.c.l.b16 %v723
      %v800 = vunpack.c.l.b16 %v724
      %v801 = vunpack.c.l.b16 %v725
      %v802 = vunpack.c.l.b16 %v726
      %v803 = vunpack.c.l.b16 %v727
      %v804 = vunpack.c.l.b16 %v728
      %v805 = vunpack.c.l.b16 %v729
      %v806 = vunpack.c.l.b16 %v730
      %v807 = vunpack.c.l.b16 %v731
      %v808 = vunpack.c.l.b16 %v732
      %v809 = vunpack.c.l.b16 %v733
      %v810 = vunpack.c.l.b16 %v734
      %v811 = vunpack.c.l.b16 %v735
      %v812 = vunpack.c.l.b16 %v736
      %v813 = vunpack.c.l.b16 %v737
      %v814 = vunpack.c.l.b16 %v738
      %v815 = vunpack.c.l.b16 %v739
      %v816 = vunpack.c.l.b16 %v740
      %v817 = vunpack.c.l.b16 %v741
      %v818 = vunpack.c.l.b16 %v742
      %v819 = vunpack.c.l.b16 %v743
      %v820 = vunpack.c.l.b16 %v744
      %v821 = vunpack.c.l.b16 %v745
      %v822 = vunpack.c.l.b16 %v746
      %v823 = vunpack.c.l.b16 %v747
      %v824 = vunpack.c.l.b16 %v748
      %v825 = vunpack.c.l.b16 %v749
      %v826 = vunpack.c.l.b16 %v750
      %v827 = vunpack.c.l.b16 %v751
      %v828 = vunpack.c.l.b16 %v752
      %v829 = vunpack.c.l.b16 %v753
      %v830 = vunpack.c.l.b16 %v754
      %v831 = vunpack.c.l.b16 %v755
      %v832 = vunpack.c.l.b16 %v756
      %v833 = vunpack.c.l.b16 %v757
      %v834 = vunpack.c.l.b16 %v758
      %v835 = vpack.c.b16 %v798, %v797
      %v836 = vpack.c.b16 %v800, %v799
      %v837 = vpack.c.b16 %v802, %v801
      %v838 = vpack.c.b16 %v804, %v803
      %v839 = vpack.c.b16 %v806, %v805
      %v840 = vpack.c.b16 %v808, %v807
      %v841 = vpack.c.b16 %v810, %v809
      %v842 = vpack.c.b16 %v812, %v811
      %v843 = vpack.c.b16 %v814, %v813
      %v844 = vpack.c.b16 %v816, %v815
      %v845 = vpack.c.b16 %v818, %v817
      %v846 = vpack.c.b16 %v820, %v819
      %v847 = vpack.c.b16 %v822, %v821
      %v848 = vpack.c.b16 %v824, %v823
      %v849 = vpack.c.b16 %v826, %v825
      %v850 = vpack.c.b16 %v828, %v827
      %v851 = vpack.c.b16 %v830, %v829
      %v852 = vpack.c.b16 %v832, %v831
      %v853 = vpack.c.b16 %v834, %v833
      %vm854 = vsmask.f32 7424
      %v856 = vshrl.u32 %v835, 16
      %v858 = vshll.u32 %v835, 16
      %v860 = vrot.slane %v858, 1
      %v861 = vor.u32 %v856, %v860
      %v863 = vshll.u32 %v836, 16
      %v865 = vrot.slane %v863, 1
      %v866 = vsel %vm854, %v861, %v865
      %v867 = vshrl.u32 %v836, 16
      %v869 = vor.u32 %v867, %v865
      %v871 = vshll.u32 %v837, 16
      %v873 = vrot.slane %v871, 1
      %v874 = vsel %vm854, %v869, %v873
      %v875 = vshrl.u32 %v837, 16
      %v877 = vor.u32 %v875, %v873
      %v879 = vshll.u32 %v838, 16
      %v881 = vrot.slane %v879, 1
      %v882 = vsel %vm854, %v877, %v881
      %v883 = vshrl.u32 %v838, 16
      %v885 = vor.u32 %v883, %v881
      %v887 = vshll.u32 %v839, 16
      %v889 = vrot.slane %v887, 1
      %v890 = vsel %vm854, %v885, %v889
      %v891 = vshrl.u32 %v839, 16
      %v893 = vor.u32 %v891, %v889
      %v895 = vshll.u32 %v840, 16
      %v897 = vrot.slane %v895, 1
      %v898 = vsel %vm854, %v893, %v897
      %v899 = vshrl.u32 %v840, 16
      %v901 = vor.u32 %v899, %v897
      %v903 = vshll.u32 %v841, 16
      %v905 = vrot.slane %v903, 1
      %v906 = vsel %vm854, %v901, %v905
      %v907 = vshrl.u32 %v841, 16
      %v909 = vor.u32 %v907, %v905
      %v911 = vshll.u32 %v842, 16
      %v913 = vrot.slane %v911, 1
      %v914 = vsel %vm854, %v909, %v913
      %v915 = vshrl.u32 %v842, 16
      %v917 = vor.u32 %v915, %v913
      %v919 = vshll.u32 %v843, 16
      %v921 = vrot.slane %v919, 1
      %v922 = vsel %vm854, %v917, %v921
      %v923 = vshrl.u32 %v843, 16
      %v925 = vor.u32 %v923, %v921
      %v927 = vshll.u32 %v844, 16
      %v929 = vrot.slane %v927, 1
      %v930 = vsel %vm854, %v925, %v929
      %v931 = vshrl.u32 %v844, 16
      %v933 = vor.u32 %v931, %v929
      %v935 = vshll.u32 %v845, 16
      %v937 = vrot.slane %v935, 1
      %v938 = vsel %vm854, %v933, %v937
      %v939 = vshrl.u32 %v845, 16
      %v941 = vor.u32 %v939, %v937
      %v943 = vshll.u32 %v846, 16
      %v945 = vrot.slane %v943, 1
      %v946 = vsel %vm854, %v941, %v945
      %v947 = vshrl.u32 %v846, 16
      %v949 = vor.u32 %v947, %v945
      %v951 = vshll.u32 %v847, 16
      %v953 = vrot.slane %v951, 1
      %v954 = vsel %vm854, %v949, %v953
      %v955 = vshrl.u32 %v847, 16
      %v957 = vor.u32 %v955, %v953
      %v959 = vshll.u32 %v848, 16
      %v961 = vrot.slane %v959, 1
      %v962 = vsel %vm854, %v957, %v961
      %v963 = vshrl.u32 %v848, 16
      %v965 = vor.u32 %v963, %v961
      %v967 = vshll.u32 %v849, 16
      %v969 = vrot.slane %v967, 1
      %v970 = vsel %vm854, %v965, %v969
      %v971 = vshrl.u32 %v849, 16
      %v973 = vor.u32 %v971, %v969
      %v975 = vshll.u32 %v850, 16
      %v977 = vrot.slane %v975, 1
      %v978 = vsel %vm854, %v973, %v977
      %v979 = vshrl.u32 %v850, 16
      %v981 = vor.u32 %v979, %v977
      %v983 = vshll.u32 %v851, 16
      %v985 = vrot.slane %v983, 1
      %v986 = vsel %vm854, %v981, %v985
      %v987 = vshrl.u32 %v851, 16
      %v989 = vor.u32 %v987, %v985
      %v991 = vshll.u32 %v852, 16
      %v993 = vrot.slane %v991, 1
      %v994 = vsel %vm854, %v989, %v993
      %v995 = vshrl.u32 %v852, 16
      %v997 = vor.u32 %v995, %v993
      %v999 = vshll.u32 %v853, 16
      %v1001 = vrot.slane %v999, 1
      %v1002 = vsel %vm854, %v997, %v1001
      %v1003 = vshrl.u32 %v853, 16
      %v1005 = vor.u32 %v1003, %v1001
      %1006 = vrot.lane.b32.xlu0 %v866, 38
      %v1007 = vpop.permute.xlu0 %1006
      %1008 = vrot.lane.b32.xlu0 %v874, 38
      %v1009 = vpop.permute.xlu0 %1008
      %1010 = vrot.lane.b32.xlu0 %v882, 38
      %v1011 = vpop.permute.xlu0 %1010
      %1012 = vrot.lane.b32.xlu0 %v890, 38
      %v1013 = vpop.permute.xlu0 %1012
      %1014 = vrot.lane.b32.xlu0 %v898, 38
      %v1015 = vpop.permute.xlu0 %1014
      %1016 = vrot.lane.b32.xlu0 %v906, 38
      %v1017 = vpop.permute.xlu0 %1016
      %1018 = vrot.lane.b32.xlu0 %v914, 38
      %v1019 = vpop.permute.xlu0 %1018
      %1020 = vrot.lane.b32.xlu0 %v922, 38
      %v1021 = vpop.permute.xlu0 %1020
      %1022 = vrot.lane.b32.xlu0 %v930, 38
      %v1023 = vpop.permute.xlu0 %1022
      %1024 = vrot.lane.b32.xlu0 %v938, 38
      %v1025 = vpop.permute.xlu0 %1024
      %1026 = vrot.lane.b32.xlu0 %v946, 38
      %v1027 = vpop.permute.xlu0 %1026
      %1028 = vrot.lane.b32.xlu0 %v954, 38
      %v1029 = vpop.permute.xlu0 %1028
      %1030 = vrot.lane.b32.xlu0 %v962, 38
      %v1031 = vpop.permute.xlu0 %1030
      %1032 = vrot.lane.b32.xlu0 %v970, 38
      %v1033 = vpop.permute.xlu0 %1032
      %1034 = vrot.lane.b32.xlu0 %v978, 38
      %v1035 = vpop.permute.xlu0 %1034
      %1036 = vrot.lane.b32.xlu0 %v986, 38
      %v1037 = vpop.permute.xlu0 %1036
      %1038 = vrot.lane.b32.xlu0 %v994, 38
      %v1039 = vpop.permute.xlu0 %1038
      %1040 = vrot.lane.b32.xlu0 %v1002, 38
      %v1041 = vpop.permute.xlu0 %1040
      %1042 = vrot.lane.b32.xlu0 %v1005, 38
      %v1043 = vpop.permute.xlu0 %1042
      %vm1044 = vcmask 1046528
      %v1045 = vrot.slane %v835, 1
      %v1046 = vrot.slane %v836, 1
      %v1047 = vsel %vm1044, %v1045, %v1046
      %v1048 = vrot.slane %v837, 1
      %v1049 = vsel %vm1044, %v1046, %v1048
      %v1050 = vrot.slane %v838, 1
      %v1051 = vsel %vm1044, %v1048, %v1050
      %v1052 = vrot.slane %v839, 1
      %v1053 = vsel %vm1044, %v1050, %v1052
      %v1054 = vrot.slane %v840, 1
      %v1055 = vsel %vm1044, %v1052, %v1054
      %v1056 = vrot.slane %v841, 1
      %v1057 = vsel %vm1044, %v1054, %v1056
      %v1058 = vrot.slane %v842, 1
      %v1059 = vsel %vm1044, %v1056, %v1058
      %v1060 = vrot.slane %v843, 1
      %v1061 = vsel %vm1044, %v1058, %v1060
      %v1062 = vrot.slane %v844, 1
      %v1063 = vsel %vm1044, %v1060, %v1062
      %v1064 = vrot.slane %v845, 1
      %v1065 = vsel %vm1044, %v1062, %v1064
      %v1066 = vrot.slane %v846, 1
      %v1067 = vsel %vm1044, %v1064, %v1066
      %v1068 = vrot.slane %v847, 1
      %v1069 = vsel %vm1044, %v1066, %v1068
      %v1070 = vrot.slane %v848, 1
      %v1071 = vsel %vm1044, %v1068, %v1070
      %v1072 = vrot.slane %v849, 1
      %v1073 = vsel %vm1044, %v1070, %v1072
      %v1074 = vrot.slane %v850, 1
      %v1075 = vsel %vm1044, %v1072, %v1074
      %v1076 = vrot.slane %v851, 1
      %v1077 = vsel %vm1044, %v1074, %v1076
      %v1078 = vrot.slane %v852, 1
      %v1079 = vsel %vm1044, %v1076, %v1078
      %v1080 = vrot.slane %v853, 1
      %v1081 = vsel %vm1044, %v1078, %v1080
      %1082 = vrot.lane.b32.xlu0 %v1047, 76
      %v1083 = vpop.permute.xlu0 %1082
      %1084 = vrot.lane.b32.xlu0 %v1049, 76
      %v1085 = vpop.permute.xlu0 %1084
      %1086 = vrot.lane.b32.xlu0 %v1051, 76
      %v1087 = vpop.permute.xlu0 %1086
      %1088 = vrot.lane.b32.xlu0 %v1053, 76
      %v1089 = vpop.permute.xlu0 %1088
      %1090 = vrot.lane.b32.xlu0 %v1055, 76
      %v1091 = vpop.permute.xlu0 %1090
      %1092 = vrot.lane.b32.xlu0 %v1057, 76
      %v1093 = vpop.permute.xlu0 %1092
      %1094 = vrot.lane.b32.xlu0 %v1059, 76
      %v1095 = vpop.permute.xlu0 %1094
      %1096 = vrot.lane.b32.xlu0 %v1061, 76
      %v1097 = vpop.permute.xlu0 %1096
      %1098 = vrot.lane.b32.xlu0 %v1063, 76
      %v1099 = vpop.permute.xlu0 %1098
      %1100 = vrot.lane.b32.xlu0 %v1065, 76
      %v1101 = vpop.permute.xlu0 %1100
      %1102 = vrot.lane.b32.xlu0 %v1067, 76
      %v1103 = vpop.permute.xlu0 %1102
      %1104 = vrot.lane.b32.xlu0 %v1069, 76
      %v1105 = vpop.permute.xlu0 %1104
      %1106 = vrot.lane.b32.xlu0 %v1071, 76
      %v1107 = vpop.permute.xlu0 %1106
      %1108 = vrot.lane.b32.xlu0 %v1073, 76
      %v1109 = vpop.permute.xlu0 %1108
      %1110 = vrot.lane.b32.xlu0 %v1075, 76
      %v1111 = vpop.permute.xlu0 %1110
      %1112 = vrot.lane.b32.xlu0 %v1077, 76
      %v1113 = vpop.permute.xlu0 %1112
      %1114 = vrot.lane.b32.xlu0 %v1079, 76
      %v1115 = vpop.permute.xlu0 %1114
      %1116 = vrot.lane.b32.xlu0 %v1081, 76
      %v1117 = vpop.permute.xlu0 %1116
      %1118 = vrot.lane.b32.xlu0 %v1080, 76
      %v1119 = vpop.permute.xlu0 %1118
      %vm1120 = vsmask.f32 6400
      %v1121 = vrot.slane %v856, 1
      %v1122 = vrot.slane %v858, 2
      %v1123 = vor.u32 %v1121, %v1122
      %v1124 = vrot.slane %v867, 1
      %v1125 = vrot.slane %v863, 2
      %v1126 = vor.u32 %v1124, %v1125
      %v1127 = vsel %vm1120, %v1123, %v1126
      %v1128 = vrot.slane %v875, 1
      %v1129 = vrot.slane %v871, 2
      %v1130 = vor.u32 %v1128, %v1129
      %v1131 = vsel %vm1120, %v1126, %v1130
      %v1132 = vrot.slane %v883, 1
      %v1133 = vrot.slane %v879, 2
      %v1134 = vor.u32 %v1132, %v1133
      %v1135 = vsel %vm1120, %v1130, %v1134
      %v1136 = vrot.slane %v891, 1
      %v1137 = vrot.slane %v887, 2
      %v1138 = vor.u32 %v1136, %v1137
      %v1139 = vsel %vm1120, %v1134, %v1138
      %v1140 = vrot.slane %v899, 1
      %v1141 = vrot.slane %v895, 2
      %v1142 = vor.u32 %v1140, %v1141
      %v1143 = vsel %vm1120, %v1138, %v1142
      %v1144 = vrot.slane %v907, 1
      %v1145 = vrot.slane %v903, 2
      %v1146 = vor.u32 %v1144, %v1145
      %v1147 = vsel %vm1120, %v1142, %v1146
      %v1148 = vrot.slane %v915, 1
      %v1149 = vrot.slane %v911, 2
      %v1150 = vor.u32 %v1148, %v1149
      %v1151 = vsel %vm1120, %v1146, %v1150
      %v1152 = vrot.slane %v923, 1
      %v1153 = vrot.slane %v919, 2
      %v1154 = vor.u32 %v1152, %v1153
      %v1155 = vsel %vm1120, %v1150, %v1154
      %v1156 = vrot.slane %v931, 1
      %v1157 = vrot.slane %v927, 2
      %v1158 = vor.u32 %v1156, %v1157
      %v1159 = vsel %vm1120, %v1154, %v1158
      %v1160 = vrot.slane %v939, 1
      %v1161 = vrot.slane %v935, 2
      %v1162 = vor.u32 %v1160, %v1161
      %v1163 = vsel %vm1120, %v1158, %v1162
      %v1164 = vrot.slane %v947, 1
      %v1165 = vrot.slane %v943, 2
      %v1166 = vor.u32 %v1164, %v1165
      %v1167 = vsel %vm1120, %v1162, %v1166
      %v1168 = vrot.slane %v955, 1
      %v1169 = vrot.slane %v951, 2
      %v1170 = vor.u32 %v1168, %v1169
      %v1171 = vsel %vm1120, %v1166, %v1170
      %v1172 = vrot.slane %v963, 1
      %v1173 = vrot.slane %v959, 2
      %v1174 = vor.u32 %v1172, %v1173
      %v1175 = vsel %vm1120, %v1170, %v1174
      %v1176 = vrot.slane %v971, 1
      %v1177 = vrot.slane %v967, 2
      %v1178 = vor.u32 %v1176, %v1177
      %v1179 = vsel %vm1120, %v1174, %v1178
      %v1180 = vrot.slane %v979, 1
      %v1181 = vrot.slane %v975, 2
      %v1182 = vor.u32 %v1180, %v1181
      %v1183 = vsel %vm1120, %v1178, %v1182
      %v1184 = vrot.slane %v987, 1
      %v1185 = vrot.slane %v983, 2
      %v1186 = vor.u32 %v1184, %v1185
      %v1187 = vsel %vm1120, %v1182, %v1186
      %v1188 = vrot.slane %v995, 1
      %v1189 = vrot.slane %v991, 2
      %v1190 = vor.u32 %v1188, %v1189
      %v1191 = vsel %vm1120, %v1186, %v1190
      %v1192 = vrot.slane %v1003, 1
      %v1193 = vrot.slane %v999, 2
      %v1194 = vor.u32 %v1192, %v1193
      %v1195 = vsel %vm1120, %v1190, %v1194
      %1196 = vrot.lane.b32.xlu0 %v1127, 114
      %v1197 = vpop.permute.xlu0 %1196
      %1198 = vrot.lane.b32.xlu0 %v1131, 114
      %v1199 = vpop.permute.xlu0 %1198
      %1200 = vrot.lane.b32.xlu0 %v1135, 114
      %v1201 = vpop.permute.xlu0 %1200
      %1202 = vrot.lane.b32.xlu0 %v1139, 114
      %v1203 = vpop.permute.xlu0 %1202
      %1204 = vrot.lane.b32.xlu0 %v1143, 114
      %v1205 = vpop.permute.xlu0 %1204
      %1206 = vrot.lane.b32.xlu0 %v1147, 114
      %v1207 = vpop.permute.xlu0 %1206
      %1208 = vrot.lane.b32.xlu0 %v1151, 114
      %v1209 = vpop.permute.xlu0 %1208
      %1210 = vrot.lane.b32.xlu0 %v1155, 114
      %v1211 = vpop.permute.xlu0 %1210
      %1212 = vrot.lane.b32.xlu0 %v1159, 114
      %v1213 = vpop.permute.xlu0 %1212
      %1214 = vrot.lane.b32.xlu0 %v1163, 114
      %v1215 = vpop.permute.xlu0 %1214
      %1216 = vrot.lane.b32.xlu0 %v1167, 114
      %v1217 = vpop.permute.xlu0 %1216
      %1218 = vrot.lane.b32.xlu0 %v1171, 114
      %v1219 = vpop.permute.xlu0 %1218
      %1220 = vrot.lane.b32.xlu0 %v1175, 114
      %v1221 = vpop.permute.xlu0 %1220
      %1222 = vrot.lane.b32.xlu0 %v1179, 114
      %v1223 = vpop.permute.xlu0 %1222
      %1224 = vrot.lane.b32.xlu0 %v1183, 114
      %v1225 = vpop.permute.xlu0 %1224
      %1226 = vrot.lane.b32.xlu0 %v1187, 114
      %v1227 = vpop.permute.xlu0 %1226
      %1228 = vrot.lane.b32.xlu0 %v1191, 114
      %v1229 = vpop.permute.xlu0 %1228
      %1230 = vrot.lane.b32.xlu0 %v1195, 114
      %v1231 = vpop.permute.xlu0 %1230
      %1232 = vrot.lane.b32.xlu0 %v1194, 114
      %v1233 = vpop.permute.xlu0 %1232
      %vm1234 = vcmask 1045504
      %v1235 = vrot.slane %v835, 2
      %v1236 = vrot.slane %v836, 2
      %v1237 = vsel %vm1234, %v1235, %v1236
      %v1238 = vrot.slane %v837, 2
      %v1239 = vsel %vm1234, %v1236, %v1238
      %v1240 = vrot.slane %v838, 2
      %v1241 = vsel %vm1234, %v1238, %v1240
      %v1242 = vrot.slane %v839, 2
      %v1243 = vsel %vm1234, %v1240, %v1242
      %v1244 = vrot.slane %v840, 2
      %v1245 = vsel %vm1234, %v1242, %v1244
      %v1246 = vrot.slane %v841, 2
      %v1247 = vsel %vm1234, %v1244, %v1246
      %v1248 = vrot.slane %v842, 2
      %v1249 = vsel %vm1234, %v1246, %v1248
      %v1250 = vrot.slane %v843, 2
      %v1251 = vsel %vm1234, %v1248, %v1250
      %v1252 = vrot.slane %v844, 2
      %v1253 = vsel %vm1234, %v1250, %v1252
      %v1254 = vrot.slane %v845, 2
      %v1255 = vsel %vm1234, %v1252, %v1254
      %v1256 = vrot.slane %v846, 2
      %v1257 = vsel %vm1234, %v1254, %v1256
      %v1258 = vrot.slane %v847, 2
      %v1259 = vsel %vm1234, %v1256, %v1258
      %v1260 = vrot.slane %v848, 2
      %v1261 = vsel %vm1234, %v1258, %v1260
      %v1262 = vrot.slane %v849, 2
      %v1263 = vsel %vm1234, %v1260, %v1262
      %v1264 = vrot.slane %v850, 2
      %v1265 = vsel %vm1234, %v1262, %v1264
      %v1266 = vrot.slane %v851, 2
      %v1267 = vsel %vm1234, %v1264, %v1266
      %v1268 = vrot.slane %v852, 2
      %v1269 = vsel %vm1234, %v1266, %v1268
      %v1270 = vrot.slane %v853, 2
      %v1271 = vsel %vm1234, %v1268, %v1270
      %1272 = vrot.lane.b32.xlu0 %v1237, 24
      %v1273 = vpop.permute.xlu0 %1272
      %1274 = vrot.lane.b32.xlu0 %v1239, 24
      %v1275 = vpop.permute.xlu0 %1274
      %1276 = vrot.lane.b32.xlu0 %v1241, 24
      %v1277 = vpop.permute.xlu0 %1276
      %1278 = vrot.lane.b32.xlu0 %v1243, 24
      %v1279 = vpop.permute.xlu0 %1278
      %1280 = vrot.lane.b32.xlu0 %v1245, 24
      %v1281 = vpop.permute.xlu0 %1280
      %1282 = vrot.lane.b32.xlu0 %v1247, 24
      %v1283 = vpop.permute.xlu0 %1282
      %1284 = vrot.lane.b32.xlu0 %v1249, 24
      %v1285 = vpop.permute.xlu0 %1284
      %1286 = vrot.lane.b32.xlu0 %v1251, 24
      %v1287 = vpop.permute.xlu0 %1286
      %1288 = vrot.lane.b32.xlu0 %v1253, 24
      %v1289 = vpop.permute.xlu0 %1288
      %1290 = vrot.lane.b32.xlu0 %v1255, 24
      %v1291 = vpop.permute.xlu0 %1290
      %1292 = vrot.lane.b32.xlu0 %v1257, 24
      %v1293 = vpop.permute.xlu0 %1292
      %1294 = vrot.lane.b32.xlu0 %v1259, 24
      %v1295 = vpop.permute.xlu0 %1294
      %1296 = vrot.lane.b32.xlu0 %v1261, 24
      %v1297 = vpop.permute.xlu0 %1296
      %1298 = vrot.lane.b32.xlu0 %v1263, 24
      %v1299 = vpop.permute.xlu0 %1298
      %1300 = vrot.lane.b32.xlu0 %v1265, 24
      %v1301 = vpop.permute.xlu0 %1300
      %1302 = vrot.lane.b32.xlu0 %v1267, 24
      %v1303 = vpop.permute.xlu0 %1302
      %1304 = vrot.lane.b32.xlu0 %v1269, 24
      %v1305 = vpop.permute.xlu0 %1304
      %1306 = vrot.lane.b32.xlu0 %v1271, 24
      %v1307 = vpop.permute.xlu0 %1306
      %1308 = vrot.lane.b32.xlu0 %v1270, 24
      %v1309 = vpop.permute.xlu0 %1308
      %vm1310 = vsmask.f32 5376
      %v1311 = vrot.slane %v856, 2
      %v1312 = vrot.slane %v858, 3
      %v1313 = vor.u32 %v1311, %v1312
      %v1314 = vrot.slane %v867, 2
      %v1315 = vrot.slane %v863, 3
      %v1316 = vor.u32 %v1314, %v1315
      %v1317 = vsel %vm1310, %v1313, %v1316
      %v1318 = vrot.slane %v875, 2
      %v1319 = vrot.slane %v871, 3
      %v1320 = vor.u32 %v1318, %v1319
      %v1321 = vsel %vm1310, %v1316, %v1320
      %v1322 = vrot.slane %v883, 2
      %v1323 = vrot.slane %v879, 3
      %v1324 = vor.u32 %v1322, %v1323
      %v1325 = vsel %vm1310, %v1320, %v1324
      %v1326 = vrot.slane %v891, 2
      %v1327 = vrot.slane %v887, 3
      %v1328 = vor.u32 %v1326, %v1327
      %v1329 = vsel %vm1310, %v1324, %v1328
      %v1330 = vrot.slane %v899, 2
      %v1331 = vrot.slane %v895, 3
      %v1332 = vor.u32 %v1330, %v1331
      %v1333 = vsel %vm1310, %v1328, %v1332
      %v1334 = vrot.slane %v907, 2
      %v1335 = vrot.slane %v903, 3
      %v1336 = vor.u32 %v1334, %v1335
      %v1337 = vsel %vm1310, %v1332, %v1336
      %v1338 = vrot.slane %v915, 2
      %v1339 = vrot.slane %v911, 3
      %v1340 = vor.u32 %v1338, %v1339
      %v1341 = vsel %vm1310, %v1336, %v1340
      %v1342 = vrot.slane %v923, 2
      %v1343 = vrot.slane %v919, 3
      %v1344 = vor.u32 %v1342, %v1343
      %v1345 = vsel %vm1310, %v1340, %v1344
      %v1346 = vrot.slane %v931, 2
      %v1347 = vrot.slane %v927, 3
      %v1348 = vor.u32 %v1346, %v1347
      %v1349 = vsel %vm1310, %v1344, %v1348
      %v1350 = vrot.slane %v939, 2
      %v1351 = vrot.slane %v935, 3
      %v1352 = vor.u32 %v1350, %v1351
      %v1353 = vsel %vm1310, %v1348, %v1352
      %v1354 = vrot.slane %v947, 2
      %v1355 = vrot.slane %v943, 3
      %v1356 = vor.u32 %v1354, %v1355
      %v1357 = vsel %vm1310, %v1352, %v1356
      %v1358 = vrot.slane %v955, 2
      %v1359 = vrot.slane %v951, 3
      %v1360 = vor.u32 %v1358, %v1359
      %v1361 = vsel %vm1310, %v1356, %v1360
      %v1362 = vrot.slane %v963, 2
      %v1363 = vrot.slane %v959, 3
      %v1364 = vor.u32 %v1362, %v1363
      %v1365 = vsel %vm1310, %v1360, %v1364
      %v1366 = vrot.slane %v971, 2
      %v1367 = vrot.slane %v967, 3
      %v1368 = vor.u32 %v1366, %v1367
      %v1369 = vsel %vm1310, %v1364, %v1368
      %v1370 = vrot.slane %v979, 2
      %v1371 = vrot.slane %v975, 3
      %v1372 = vor.u32 %v1370, %v1371
      %v1373 = vsel %vm1310, %v1368, %v1372
      %v1374 = vrot.slane %v987, 2
      %v1375 = vrot.slane %v983, 3
      %v1376 = vor.u32 %v1374, %v1375
      %v1377 = vsel %vm1310, %v1372, %v1376
      %v1378 = vrot.slane %v995, 2
      %v1379 = vrot.slane %v991, 3
      %v1380 = vor.u32 %v1378, %v1379
      %v1381 = vsel %vm1310, %v1376, %v1380
      %v1382 = vrot.slane %v1003, 2
      %v1383 = vrot.slane %v999, 3
      %v1384 = vor.u32 %v1382, %v1383
      %v1385 = vsel %vm1310, %v1380, %v1384
      %1386 = vrot.lane.b32.xlu0 %v1317, 62
      %v1387 = vpop.permute.xlu0 %1386
      %1388 = vrot.lane.b32.xlu0 %v1321, 62
      %v1389 = vpop.permute.xlu0 %1388
      %1390 = vrot.lane.b32.xlu0 %v1325, 62
      %v1391 = vpop.permute.xlu0 %1390
      %1392 = vrot.lane.b32.xlu0 %v1329, 62
      %v1393 = vpop.permute.xlu0 %1392
      %1394 = vrot.lane.b32.xlu0 %v1333, 62
      %v1395 = vpop.permute.xlu0 %1394
      %1396 = vrot.lane.b32.xlu0 %v1337, 62
      %v1397 = vpop.permute.xlu0 %1396
      %1398 = vrot.lane.b32.xlu0 %v1341, 62
      %v1399 = vpop.permute.xlu0 %1398
      %1400 = vrot.lane.b32.xlu0 %v1345, 62
      %v1401 = vpop.permute.xlu0 %1400
      %1402 = vrot.lane.b32.xlu0 %v1349, 62
      %v1403 = vpop.permute.xlu0 %1402
      %1404 = vrot.lane.b32.xlu0 %v1353, 62
      %v1405 = vpop.permute.xlu0 %1404
      %1406 = vrot.lane.b32.xlu0 %v1357, 62
      %v1407 = vpop.permute.xlu0 %1406
      %1408 = vrot.lane.b32.xlu0 %v1361, 62
      %v1409 = vpop.permute.xlu0 %1408
      %1410 = vrot.lane.b32.xlu0 %v1365, 62
      %v1411 = vpop.permute.xlu0 %1410
      %1412 = vrot.lane.b32.xlu0 %v1369, 62
      %v1413 = vpop.permute.xlu0 %1412
      %1414 = vrot.lane.b32.xlu0 %v1373, 62
      %v1415 = vpop.permute.xlu0 %1414
      %1416 = vrot.lane.b32.xlu0 %v1377, 62
      %v1417 = vpop.permute.xlu0 %1416
      %1418 = vrot.lane.b32.xlu0 %v1381, 62
      %v1419 = vpop.permute.xlu0 %1418
      %1420 = vrot.lane.b32.xlu0 %v1385, 62
      %v1421 = vpop.permute.xlu0 %1420
      %1422 = vrot.lane.b32.xlu0 %v1384, 62
      %v1423 = vpop.permute.xlu0 %1422
      %vm1424 = vcmask 1044480
      %v1425 = vrot.slane %v835, 3
      %v1426 = vrot.slane %v836, 3
      %v1427 = vsel %vm1424, %v1425, %v1426
      %v1428 = vrot.slane %v837, 3
      %v1429 = vsel %vm1424, %v1426, %v1428
      %v1430 = vrot.slane %v838, 3
      %v1431 = vsel %vm1424, %v1428, %v1430
      %v1432 = vrot.slane %v839, 3
      %v1433 = vsel %vm1424, %v1430, %v1432
      %v1434 = vrot.slane %v840, 3
      %v1435 = vsel %vm1424, %v1432, %v1434
      %v1436 = vrot.slane %v841, 3
      %v1437 = vsel %vm1424, %v1434, %v1436
      %v1438 = vrot.slane %v842, 3
      %v1439 = vsel %vm1424, %v1436, %v1438
      %v1440 = vrot.slane %v843, 3
      %v1441 = vsel %vm1424, %v1438, %v1440
      %v1442 = vrot.slane %v844, 3
      %v1443 = vsel %vm1424, %v1440, %v1442
      %v1444 = vrot.slane %v845, 3
      %v1445 = vsel %vm1424, %v1442, %v1444
      %v1446 = vrot.slane %v846, 3
      %v1447 = vsel %vm1424, %v1444, %v1446
      %v1448 = vrot.slane %v847, 3
      %v1449 = vsel %vm1424, %v1446, %v1448
      %v1450 = vrot.slane %v848, 3
      %v1451 = vsel %vm1424, %v1448, %v1450
      %v1452 = vrot.slane %v849, 3
      %v1453 = vsel %vm1424, %v1450, %v1452
      %v1454 = vrot.slane %v850, 3
      %v1455 = vsel %vm1424, %v1452, %v1454
      %v1456 = vrot.slane %v851, 3
      %v1457 = vsel %vm1424, %v1454, %v1456
      %v1458 = vrot.slane %v852, 3
      %v1459 = vsel %vm1424, %v1456, %v1458
      %v1460 = vrot.slane %v853, 3
      %v1461 = vsel %vm1424, %v1458, %v1460
      %1462 = vrot.lane.b32.xlu0 %v1427, 100
      %v1463 = vpop.permute.xlu0 %1462
      %1464 = vrot.lane.b32.xlu0 %v1429, 100
      %v1465 = vpop.permute.xlu0 %1464
      %1466 = vrot.lane.b32.xlu0 %v1431, 100
      %v1467 = vpop.permute.xlu0 %1466
      %1468 = vrot.lane.b32.xlu0 %v1433, 100
      %v1469 = vpop.permute.xlu0 %1468
      %1470 = vrot.lane.b32.xlu0 %v1435, 100
      %v1471 = vpop.permute.xlu0 %1470
      %1472 = vrot.lane.b32.xlu0 %v1437, 100
      %v1473 = vpop.permute.xlu0 %1472
      %1474 = vrot.lane.b32.xlu0 %v1439, 100
      %v1475 = vpop.permute.xlu0 %1474
      %1476 = vrot.lane.b32.xlu0 %v1441, 100
      %v1477 = vpop.permute.xlu0 %1476
      %1478 = vrot.lane.b32.xlu0 %v1443, 100
      %v1479 = vpop.permute.xlu0 %1478
      %1480 = vrot.lane.b32.xlu0 %v1445, 100
      %v1481 = vpop.permute.xlu0 %1480
      %1482 = vrot.lane.b32.xlu0 %v1447, 100
      %v1483 = vpop.permute.xlu0 %1482
      %1484 = vrot.lane.b32.xlu0 %v1449, 100
      %v1485 = vpop.permute.xlu0 %1484
      %1486 = vrot.lane.b32.xlu0 %v1451, 100
      %v1487 = vpop.permute.xlu0 %1486
      %1488 = vrot.lane.b32.xlu0 %v1453, 100
      %v1489 = vpop.permute.xlu0 %1488
      %1490 = vrot.lane.b32.xlu0 %v1455, 100
      %v1491 = vpop.permute.xlu0 %1490
      %1492 = vrot.lane.b32.xlu0 %v1457, 100
      %v1493 = vpop.permute.xlu0 %1492
      %1494 = vrot.lane.b32.xlu0 %v1459, 100
      %v1495 = vpop.permute.xlu0 %1494
      %1496 = vrot.lane.b32.xlu0 %v1461, 100
      %v1497 = vpop.permute.xlu0 %1496
      %1498 = vrot.lane.b32.xlu0 %v1460, 100
      %v1499 = vpop.permute.xlu0 %1498
      %vm1500 = vcmask 310272
      %v1502 = vsel %vm1500, %v835, %v1007
      %v1504 = vsel %vm1500, %v836, %v1009
      %v1506 = vsel %vm1500, %v837, %v1011
      %v1508 = vsel %vm1500, %v838, %v1013
      %v1510 = vsel %vm1500, %v839, %v1015
      %v1512 = vsel %vm1500, %v840, %v1017
      %v1514 = vsel %vm1500, %v841, %v1019
      %v1516 = vsel %vm1500, %v842, %v1021
      %v1518 = vsel %vm1500, %v843, %v1023
      %v1520 = vsel %vm1500, %v844, %v1025
      %v1522 = vsel %vm1500, %v845, %v1027
      %v1524 = vsel %vm1500, %v846, %v1029
      %v1526 = vsel %vm1500, %v847, %v1031
      %v1528 = vsel %vm1500, %v848, %v1033
      %v1530 = vsel %vm1500, %v849, %v1035
      %v1532 = vsel %vm1500, %v850, %v1037
      %v1534 = vsel %vm1500, %v851, %v1039
      %v1536 = vsel %vm1500, %v852, %v1041
      %v1538 = vsel %vm1500, %v853, %v1043
      %vm1539 = vcmask 621568
      %v1541 = vsel %vm1539, %v1502, %v1083
      %v1543 = vsel %vm1539, %v1504, %v1085
      %v1545 = vsel %vm1539, %v1506, %v1087
      %v1547 = vsel %vm1539, %v1508, %v1089
      %v1549 = vsel %vm1539, %v1510, %v1091
      %v1551 = vsel %vm1539, %v1512, %v1093
      %v1553 = vsel %vm1539, %v1514, %v1095
      %v1555 = vsel %vm1539, %v1516, %v1097
      %v1557 = vsel %vm1539, %v1518, %v1099
      %v1559 = vsel %vm1539, %v1520, %v1101
      %v1561 = vsel %vm1539, %v1522, %v1103
      %v1563 = vsel %vm1539, %v1524, %v1105
      %v1565 = vsel %vm1539, %v1526, %v1107
      %v1567 = vsel %vm1539, %v1528, %v1109
      %v1569 = vsel %vm1539, %v1530, %v1111
      %v1571 = vsel %vm1539, %v1532, %v1113
      %v1573 = vsel %vm1539, %v1534, %v1115
      %v1575 = vsel %vm1539, %v1536, %v1117
      %v1577 = vsel %vm1539, %v1538, %v1119
      %vm1578 = vcmask 932864
      %v1580 = vsel %vm1578, %v1541, %v1197
      %v1583 = vsel %vm1578, %v1543, %v1199
      %v1586 = vsel %vm1578, %v1545, %v1201
      %v1589 = vsel %vm1578, %v1547, %v1203
      %v1592 = vsel %vm1578, %v1549, %v1205
      %v1595 = vsel %vm1578, %v1551, %v1207
      %v1598 = vsel %vm1578, %v1553, %v1209
      %v1601 = vsel %vm1578, %v1555, %v1211
      %v1604 = vsel %vm1578, %v1557, %v1213
      %v1607 = vsel %vm1578, %v1559, %v1215
      %v1610 = vsel %vm1578, %v1561, %v1217
      %v1613 = vsel %vm1578, %v1563, %v1219
      %v1616 = vsel %vm1578, %v1565, %v1221
      %v1619 = vsel %vm1578, %v1567, %v1223
      %v1622 = vsel %vm1578, %v1569, %v1225
      %v1625 = vsel %vm1578, %v1571, %v1227
      %v1628 = vsel %vm1578, %v1573, %v1229
      %v1631 = vsel %vm1578, %v1575, %v1231
      %v1634 = vsel %vm1578, %v1577, %v1233
      %vm1636 = vcmask 195584
      %v1638 = vsel %vm1636, %v1197, %v1273
      %v1640 = vsel %vm1636, %v1199, %v1275
      %v1642 = vsel %vm1636, %v1201, %v1277
      %v1644 = vsel %vm1636, %v1203, %v1279
      %v1646 = vsel %vm1636, %v1205, %v1281
      %v1648 = vsel %vm1636, %v1207, %v1283
      %v1650 = vsel %vm1636, %v1209, %v1285
      %v1652 = vsel %vm1636, %v1211, %v1287
      %v1654 = vsel %vm1636, %v1213, %v1289
      %v1656 = vsel %vm1636, %v1215, %v1291
      %v1658 = vsel %vm1636, %v1217, %v1293
      %v1660 = vsel %vm1636, %v1219, %v1295
      %v1662 = vsel %vm1636, %v1221, %v1297
      %v1664 = vsel %vm1636, %v1223, %v1299
      %v1666 = vsel %vm1636, %v1225, %v1301
      %v1668 = vsel %vm1636, %v1227, %v1303
      %v1670 = vsel %vm1636, %v1229, %v1305
      %v1672 = vsel %vm1636, %v1231, %v1307
      %v1674 = vsel %vm1636, %v1233, %v1309
      %vm1675 = vcmask 506880
      %v1677 = vsel %vm1675, %v1638, %v1387
      %v1679 = vsel %vm1675, %v1640, %v1389
      %v1681 = vsel %vm1675, %v1642, %v1391
      %v1683 = vsel %vm1675, %v1644, %v1393
      %v1685 = vsel %vm1675, %v1646, %v1395
      %v1687 = vsel %vm1675, %v1648, %v1397
      %v1689 = vsel %vm1675, %v1650, %v1399
      %v1691 = vsel %vm1675, %v1652, %v1401
      %v1693 = vsel %vm1675, %v1654, %v1403
      %v1695 = vsel %vm1675, %v1656, %v1405
      %v1697 = vsel %vm1675, %v1658, %v1407
      %v1699 = vsel %vm1675, %v1660, %v1409
      %v1701 = vsel %vm1675, %v1662, %v1411
      %v1703 = vsel %vm1675, %v1664, %v1413
      %v1705 = vsel %vm1675, %v1666, %v1415
      %v1707 = vsel %vm1675, %v1668, %v1417
      %v1709 = vsel %vm1675, %v1670, %v1419
      %v1711 = vsel %vm1675, %v1672, %v1421
      %v1713 = vsel %vm1675, %v1674, %v1423
      %vm1714 = vcmask 818176
      %v1716 = vsel %vm1714, %v1677, %v1463
      %v1719 = vsel %vm1714, %v1679, %v1465
      %v1722 = vsel %vm1714, %v1681, %v1467
      %v1725 = vsel %vm1714, %v1683, %v1469
      %v1728 = vsel %vm1714, %v1685, %v1471
      %v1731 = vsel %vm1714, %v1687, %v1473
      %v1734 = vsel %vm1714, %v1689, %v1475
      %v1737 = vsel %vm1714, %v1691, %v1477
      %v1740 = vsel %vm1714, %v1693, %v1479
      %v1743 = vsel %vm1714, %v1695, %v1481
      %v1746 = vsel %vm1714, %v1697, %v1483
      %v1749 = vsel %vm1714, %v1699, %v1485
      %v1752 = vsel %vm1714, %v1701, %v1487
      %v1755 = vsel %vm1714, %v1703, %v1489
      %v1758 = vsel %vm1714, %v1705, %v1491
      %v1761 = vsel %vm1714, %v1707, %v1493
      %v1764 = vsel %vm1714, %v1709, %v1495
      %v1767 = vsel %vm1714, %v1711, %v1497
      %v1770 = vsel %vm1714, %v1713, %v1499
      %v1772 = vld [vmem:[%s1] sm:$0xf]
      %v1773 = vld [vmem:[%s1 + $0x4] sm:$0xf]
      %v1774 = vld [vmem:[%s1 + $0x8] sm:$0xf]
      %v1775 = vld [vmem:[%s1 + $0xc] sm:$0xf]
      %v1776 = vld [vmem:[%s1 + $0x10] sm:$0xf]
      %v1777 = vld [vmem:[%s1 + $0x14] sm:$0xf]
      %v1778 = vld [vmem:[%s1 + $0x18] sm:$0xf]
      %v1779 = vld [vmem:[%s1 + $0x1c] sm:$0xf]
      %v1780 = vld [vmem:[%s1 + $0x20] sm:$0xf]
      %v1781 = vld [vmem:[%s1 + $0x24] sm:$0xf]
      %v1782 = vld [vmem:[%s1 + $0x28] sm:$0xf]
      %v1783 = vld [vmem:[%s1 + $0x2c] sm:$0xf]
      %v1784 = vld [vmem:[%s1 + $0x30] sm:$0xf]
      %v1785 = vld [vmem:[%s1 + $0x34] sm:$0xf]
      %v1786 = vld [vmem:[%s1 + $0x38] sm:$0xf]
      %v1787 = vld [vmem:[%s1 + $0x3c] sm:$0xf]
      %v1788 = vld [vmem:[%s1 + $0x40] sm:$0xf]
      %v1789 = vld [vmem:[%s1 + $0x44] sm:$0xf]
      %v1790 = vld [vmem:[%s1 + $0x48] sm:$0xf]
      %v1791 = vld [vmem:[%s1 + $0x4c] sm:$0xf]
      %v1792 = vld [vmem:[%s1 + $0x50] sm:$0xf]
      %v1793 = vld [vmem:[%s1 + $0x54] sm:$0xf]
      %v1794 = vld [vmem:[%s1 + $0x58] sm:$0xf]
      %v1795 = vld [vmem:[%s1 + $0x5c] sm:$0xf]
      %v1796 = vld [vmem:[%s1 + $0x60] sm:$0xf]
      %v1797 = vld [vmem:[%s1 + $0x64] sm:$0xf]
      %v1798 = vld [vmem:[%s1 + $0x68] sm:$0xf]
      %v1799 = vld [vmem:[%s1 + $0x6c] sm:$0xf]
      %v1800 = vld [vmem:[%s1 + $0x70] sm:$0xf]
      %v1801 = vld [vmem:[%s1 + $0x74] sm:$0xf]
      %v1802 = vld [vmem:[%s1 + $0x78] sm:$0xf]
      %v1803 = vld [vmem:[%s1 + $0x7c] sm:$0xf]
      %v1804 = vld [vmem:[%s1 + $0x80] sm:$0xf]
      %v1805 = vld [vmem:[%s1 + $0x84] sm:$0x1]
      %v1806 = vld [vmem:[%s2] sm:$0x1]
      %v1808 = vlaneseq
      %v1809 = vshrl.u32 %v1808, 7
      %v1810 = vsub.s32 0, %v1809
      %v1811 = vrot.slane %v1806, %v1810
      %v1847 = vunpack.c.l.b16 %v1772
      %v1848 = vunpack.c.l.b16 %v1773
      %v1849 = vunpack.c.l.b16 %v1774
      %v1850 = vunpack.c.l.b16 %v1775
      %v1851 = vunpack.c.l.b16 %v1776
      %v1852 = vunpack.c.l.b16 %v1777
      %v1853 = vunpack.c.l.b16 %v1778
      %v1854 = vunpack.c.l.b16 %v1779
      %v1855 = vunpack.c.l.b16 %v1780
      %v1856 = vunpack.c.l.b16 %v1781
      %v1857 = vunpack.c.l.b16 %v1782
      %v1858 = vunpack.c.l.b16 %v1783
      %v1859 = vunpack.c.l.b16 %v1784
      %v1860 = vunpack.c.l.b16 %v1785
      %v1861 = vunpack.c.l.b16 %v1786
      %v1862 = vunpack.c.l.b16 %v1787
      %v1863 = vunpack.c.l.b16 %v1788
      %v1864 = vunpack.c.l.b16 %v1789
      %v1865 = vunpack.c.l.b16 %v1790
      %v1866 = vunpack.c.l.b16 %v1791
      %v1867 = vunpack.c.l.b16 %v1792
      %v1868 = vunpack.c.l.b16 %v1793
      %v1869 = vunpack.c.l.b16 %v1794
      %v1870 = vunpack.c.l.b16 %v1795
      %v1871 = vunpack.c.l.b16 %v1796
      %v1872 = vunpack.c.l.b16 %v1797
      %v1873 = vunpack.c.l.b16 %v1798
      %v1874 = vunpack.c.l.b16 %v1799
      %v1875 = vunpack.c.l.b16 %v1800
      %v1876 = vunpack.c.l.b16 %v1801
      %v1877 = vunpack.c.l.b16 %v1802
      %v1878 = vunpack.c.l.b16 %v1803
      %v1879 = vunpack.c.l.b16 %v1804
      %v1880 = vunpack.c.l.b16 %v1805
      %v1881 = vpack.c.b16 %v1848, %v1847
      %v1882 = vpack.c.b16 %v1850, %v1849
      %v1883 = vpack.c.b16 %v1852, %v1851
      %v1884 = vpack.c.b16 %v1854, %v1853
      %v1885 = vpack.c.b16 %v1856, %v1855
      %v1886 = vpack.c.b16 %v1858, %v1857
      %v1887 = vpack.c.b16 %v1860, %v1859
      %v1888 = vpack.c.b16 %v1862, %v1861
      %v1889 = vpack.c.b16 %v1864, %v1863
      %v1890 = vpack.c.b16 %v1866, %v1865
      %v1891 = vpack.c.b16 %v1868, %v1867
      %v1892 = vpack.c.b16 %v1870, %v1869
      %v1893 = vpack.c.b16 %v1872, %v1871
      %v1894 = vpack.c.b16 %v1874, %v1873
      %v1895 = vpack.c.b16 %v1876, %v1875
      %v1896 = vpack.c.b16 %v1878, %v1877
      %v1897 = vpack.c.b16 %v1880, %v1879
      %vm1914 = vcmask 80896
      %v1915 = vsel %vm1914, %v1463, 0
      %v1917 = vsel %vm1914, %v1465, 0
      %v1919 = vsel %vm1914, %v1467, 0
      %v1921 = vsel %vm1914, %v1469, 0
      %v1923 = vsel %vm1914, %v1471, 0
      %v1925 = vsel %vm1914, %v1473, 0
      %v1927 = vsel %vm1914, %v1475, 0
      %v1929 = vsel %vm1914, %v1477, 0
      %v1931 = vsel %vm1914, %v1479, 0
      %v1933 = vsel %vm1914, %v1481, 0
      %v1935 = vsel %vm1914, %v1483, 0
      %v1937 = vsel %vm1914, %v1485, 0
      %v1939 = vsel %vm1914, %v1487, 0
      %v1941 = vsel %vm1914, %v1489, 0
      %v1943 = vsel %vm1914, %v1491, 0
      %v1945 = vsel %vm1914, %v1493, 0
      %v1947 = vsel %vm1914, %v1495, 0
      %v1949 = vsel %vm1914, %v1497, 0
      %v1951 = vsel %vm1914, %v1499, 0
      %vm1953 = vcmask 1044480
      %v1955 = vsel %vm1953, %v1897, 0
      %1957 = vmatprep.subr.bf16.mxu0 0
      %1958 = vmatpush1.bf16.msra.mxu0 %v1888
      %1959 = vmatprep.subr.bf16.mxu0 0
      %1960 = vmatpush1.bf16.msra.mxu0 %v1887
      %1961 = vmatprep.subr.bf16.mxu0 0
      %1962 = vmatpush1.bf16.msra.mxu0 %v1886
      %1963 = vmatprep.subr.bf16.mxu0 0
      %1964 = vmatpush1.bf16.msra.mxu0 %v1885
      %1965 = vmatprep.subr.bf16.mxu0 0
      %1966 = vmatpush1.bf16.msra.mxu0 %v1884
      %1967 = vmatprep.subr.bf16.mxu0 0
      %1968 = vmatpush1.bf16.msra.mxu0 %v1883
      %1969 = vmatprep.subr.bf16.mxu0 0
      %1970 = vmatpush1.bf16.msra.mxu0 %v1882
      %1971 = vmatprep.subr.bf16.mxu0 0
      %1972 = vmatpush1.bf16.msra.mxu0 %v1881
      %1973 = vmatprep.subr.bf16.mxu0 0
      %1974 = vmatpush2.bf16.msra.mxu0 %v1896
      %1975 = vmatprep.subr.bf16.mxu0 0
      %1976 = vmatpush2.bf16.msra.mxu0 %v1895
      %1977 = vmatprep.subr.bf16.mxu0 0
      %1978 = vmatpush2.bf16.msra.mxu0 %v1894
      %1979 = vmatprep.subr.bf16.mxu0 0
      %1980 = vmatpush2.bf16.msra.mxu0 %v1893
      %1981 = vmatprep.subr.bf16.mxu0 0
      %1982 = vmatpush2.bf16.msra.mxu0 %v1892
      %1983 = vmatprep.subr.bf16.mxu0 0
      %1984 = vmatpush2.bf16.msra.mxu0 %v1891
      %1985 = vmatprep.subr.bf16.mxu0 0
      %1986 = vmatpush2.bf16.msra.mxu0 %v1890
      %1987 = vmatprep.subr.bf16.mxu0 0
      %1988 = vmatpush2.bf16.msra.mxu0 %v1889
      %1989 = vmatprep.mubr.bf16.mxu0 %v1716
      %1990 = vmatmul.mubr.bf16.gmra.mxu0 %v1580
      %v1991 = vpop.f32.mrf.mxu0
      %v1992 = vadd.f32 %v1811, %v1991
      %v1993 = vpop.f32.mrf.mxu0
      %v1994 = vpop.f32.mrf.mxu0
      %v1995 = vadd.f32 %v1811, %v1994
      %v1996 = vpop.f32.mrf.mxu0
      %1997 = vmatprep.mubr.bf16.mxu0 %v1719
      %1998 = vmatmul.mubr.bf16.gmra.mxu0 %v1583
      %v1999 = vpop.f32.mrf.mxu0
      %v2000 = vadd.f32 %v1811, %v1999
      %v2001 = vpop.f32.mrf.mxu0
      %v2002 = vpop.f32.mrf.mxu0
      %v2003 = vadd.f32 %v1811, %v2002
      %v2004 = vpop.f32.mrf.mxu0
      %2005 = vmatprep.mubr.bf16.mxu0 %v1722
      %2006 = vmatmul.mubr.bf16.gmra.mxu0 %v1586
      %v2007 = vpop.f32.mrf.mxu0
      %v2008 = vadd.f32 %v1811, %v2007
      %v2009 = vpop.f32.mrf.mxu0
      %v2010 = vpop.f32.mrf.mxu0
      %v2011 = vadd.f32 %v1811, %v2010
      %v2012 = vpop.f32.mrf.mxu0
      %2013 = vmatprep.mubr.bf16.mxu0 %v1725
      %2014 = vmatmul.mubr.bf16.gmra.mxu0 %v1589
      %v2015 = vpop.f32.mrf.mxu0
      %v2016 = vadd.f32 %v1811, %v2015
      %v2017 = vpop.f32.mrf.mxu0
      %v2018 = vpop.f32.mrf.mxu0
      %v2019 = vadd.f32 %v1811, %v2018
      %v2020 = vpop.f32.mrf.mxu0
      %2021 = vmatprep.mubr.bf16.mxu0 %v1728
      %2022 = vmatmul.mubr.bf16.gmra.mxu0 %v1592
      %v2023 = vpop.f32.mrf.mxu0
      %v2024 = vadd.f32 %v1811, %v2023
      %v2025 = vpop.f32.mrf.mxu0
      %v2026 = vpop.f32.mrf.mxu0
      %v2027 = vadd.f32 %v1811, %v2026
      %v2028 = vpop.f32.mrf.mxu0
      %2029 = vmatprep.mubr.bf16.mxu0 %v1731
      %2030 = vmatmul.mubr.bf16.gmra.mxu0 %v1595
      %v2031 = vpop.f32.mrf.mxu0
      %v2032 = vadd.f32 %v1811, %v2031
      %v2033 = vpop.f32.mrf.mxu0
      %v2034 = vpop.f32.mrf.mxu0
      %v2035 = vadd.f32 %v1811, %v2034
      %v2036 = vpop.f32.mrf.mxu0
      %2037 = vmatprep.mubr.bf16.mxu0 %v1734
      %2038 = vmatmul.mubr.bf16.gmra.mxu0 %v1598
      %v2039 = vpop.f32.mrf.mxu0
      %v2040 = vadd.f32 %v1811, %v2039
      %v2041 = vpop.f32.mrf.mxu0
      %v2042 = vpop.f32.mrf.mxu0
      %v2043 = vadd.f32 %v1811, %v2042
      %v2044 = vpop.f32.mrf.mxu0
      %2045 = vmatprep.mubr.bf16.mxu0 %v1737
      %2046 = vmatmul.mubr.bf16.gmra.mxu0 %v1601
      %v2047 = vpop.f32.mrf.mxu0
      %v2048 = vadd.f32 %v1811, %v2047
      %v2049 = vpop.f32.mrf.mxu0
      %v2050 = vpop.f32.mrf.mxu0
      %v2051 = vadd.f32 %v1811, %v2050
      %v2052 = vpop.f32.mrf.mxu0
      %2053 = vmatprep.mubr.bf16.mxu0 %v1740
      %2054 = vmatmul.mubr.bf16.gmra.mxu0 %v1604
      %v2055 = vpop.f32.mrf.mxu0
      %v2056 = vadd.f32 %v1811, %v2055
      %v2057 = vpop.f32.mrf.mxu0
      %v2058 = vpop.f32.mrf.mxu0
      %v2059 = vadd.f32 %v1811, %v2058
      %v2060 = vpop.f32.mrf.mxu0
      %2061 = vmatprep.mubr.bf16.mxu0 %v1743
      %2062 = vmatmul.mubr.bf16.gmra.mxu0 %v1607
      %v2063 = vpop.f32.mrf.mxu0
      %v2064 = vadd.f32 %v1811, %v2063
      %v2065 = vpop.f32.mrf.mxu0
      %v2066 = vpop.f32.mrf.mxu0
      %v2067 = vadd.f32 %v1811, %v2066
      %v2068 = vpop.f32.mrf.mxu0
      %2069 = vmatprep.mubr.bf16.mxu0 %v1746
      %2070 = vmatmul.mubr.bf16.gmra.mxu0 %v1610
      %v2071 = vpop.f32.mrf.mxu0
      %v2072 = vadd.f32 %v1811, %v2071
      %v2073 = vpop.f32.mrf.mxu0
      %v2074 = vpop.f32.mrf.mxu0
      %v2075 = vadd.f32 %v1811, %v2074
      %v2076 = vpop.f32.mrf.mxu0
      %2077 = vmatprep.mubr.bf16.mxu0 %v1749
      %2078 = vmatmul.mubr.bf16.gmra.mxu0 %v1613
      %v2079 = vpop.f32.mrf.mxu0
      %v2080 = vadd.f32 %v1811, %v2079
      %v2081 = vpop.f32.mrf.mxu0
      %v2082 = vpop.f32.mrf.mxu0
      %v2083 = vadd.f32 %v1811, %v2082
      %v2084 = vpop.f32.mrf.mxu0
      %2085 = vmatprep.mubr.bf16.mxu0 %v1752
      %2086 = vmatmul.mubr.bf16.gmra.mxu0 %v1616
      %v2087 = vpop.f32.mrf.mxu0
      %v2088 = vadd.f32 %v1811, %v2087
      %v2089 = vpop.f32.mrf.mxu0
      %v2090 = vpop.f32.mrf.mxu0
      %v2091 = vadd.f32 %v1811, %v2090
      %v2092 = vpop.f32.mrf.mxu0
      %2093 = vmatprep.mubr.bf16.mxu0 %v1755
      %2094 = vmatmul.mubr.bf16.gmra.mxu0 %v1619
      %v2095 = vpop.f32.mrf.mxu0
      %v2096 = vadd.f32 %v1811, %v2095
      %v2097 = vpop.f32.mrf.mxu0
      %v2098 = vpop.f32.mrf.mxu0
      %v2099 = vadd.f32 %v1811, %v2098
      %v2100 = vpop.f32.mrf.mxu0
      %2101 = vmatprep.mubr.bf16.mxu0 %v1758
      %2102 = vmatmul.mubr.bf16.gmra.mxu0 %v1622
      %v2103 = vpop.f32.mrf.mxu0
      %v2104 = vadd.f32 %v1811, %v2103
      %v2105 = vpop.f32.mrf.mxu0
      %v2106 = vpop.f32.mrf.mxu0
      %v2107 = vadd.f32 %v1811, %v2106
      %v2108 = vpop.f32.mrf.mxu0
      %2109 = vmatprep.mubr.bf16.mxu0 %v1761
      %2110 = vmatmul.mubr.bf16.gmra.mxu0 %v1625
      %v2111 = vpop.f32.mrf.mxu0
      %v2112 = vadd.f32 %v1811, %v2111
      %v2113 = vpop.f32.mrf.mxu0
      %v2114 = vpop.f32.mrf.mxu0
      %v2115 = vadd.f32 %v1811, %v2114
      %v2116 = vpop.f32.mrf.mxu0
      %2117 = vmatprep.mubr.bf16.mxu0 %v1764
      %2118 = vmatmul.mubr.bf16.gmra.mxu0 %v1628
      %v2119 = vpop.f32.mrf.mxu0
      %v2120 = vadd.f32 %v1811, %v2119
      %v2121 = vpop.f32.mrf.mxu0
      %v2122 = vpop.f32.mrf.mxu0
      %v2123 = vadd.f32 %v1811, %v2122
      %v2124 = vpop.f32.mrf.mxu0
      %2125 = vmatprep.mubr.bf16.mxu0 %v1767
      %2126 = vmatmul.mubr.bf16.gmra.mxu0 %v1631
      %v2127 = vpop.f32.mrf.mxu0
      %v2128 = vadd.f32 %v1811, %v2127
      %v2129 = vpop.f32.mrf.mxu0
      %v2130 = vpop.f32.mrf.mxu0
      %v2131 = vadd.f32 %v1811, %v2130
      %v2132 = vpop.f32.mrf.mxu0
      %2133 = vmatprep.mubr.bf16.mxu0 %v1770
      %2134 = vmatmul.mubr.bf16.gmra.mxu0 %v1634
      %v2135 = vpop.f32.mrf.mxu0
      %v2136 = vadd.f32 %v1811, %v2135
      %v2137 = vpop.f32.mrf.mxu0
      %v2138 = vpop.f32.mrf.mxu0
      %v2139 = vadd.f32 %v1811, %v2138
      %v2140 = vpop.f32.mrf.mxu0
      %2141 = vdwg.mxu0
      %2142 = vmatprep.subr.bf16.mxu0 0
      %2143 = vmatpush1.bf16.msra.mxu0 0
      %2144 = vmatprep.subr.bf16.mxu0 0
      %2145 = vmatpush1.bf16.msra.mxu0 0
      %2146 = vmatprep.subr.bf16.mxu0 0
      %2147 = vmatpush1.bf16.msra.mxu0 0
      %2148 = vmatprep.subr.bf16.mxu0 0
      %2149 = vmatpush1.bf16.msra.mxu0 0
      %2150 = vmatprep.subr.bf16.mxu0 0
      %2151 = vmatpush1.bf16.msra.mxu0 0
      %2152 = vmatprep.subr.bf16.mxu0 0
      %2153 = vmatpush1.bf16.msra.mxu0 0
      %2154 = vmatprep.subr.bf16.mxu0 0
      %2155 = vmatpush1.bf16.msra.mxu0 0
      %2156 = vmatprep.subr.bf16.mxu0 0
      %2157 = vmatpush1.bf16.msra.mxu0 %v1955
      %2158 = vmatprep.subr.bf16.mxu0 0
      %2159 = vmatpush2.bf16.msra.mxu0 0
      %2160 = vmatprep.subr.bf16.mxu0 0
      %2161 = vmatpush2.bf16.msra.mxu0 0
      %2162 = vmatprep.subr.bf16.mxu0 0
      %2163 = vmatpush2.bf16.msra.mxu0 0
      %2164 = vmatprep.subr.bf16.mxu0 0
      %2165 = vmatpush2.bf16.msra.mxu0 0
      %2166 = vmatprep.subr.bf16.mxu0 0
      %2167 = vmatpush2.bf16.msra.mxu0 0
      %2168 = vmatprep.subr.bf16.mxu0 0
      %2169 = vmatpush2.bf16.msra.mxu0 0
      %2170 = vmatprep.subr.bf16.mxu0 0
      %2171 = vmatpush2.bf16.msra.mxu0 0
      %2172 = vmatprep.subr.bf16.mxu0 0
      %2173 = vmatpush2.bf16.msra.mxu0 0
      %2174 = vmatprep.mubr.bf16.mxu0 0
      %2175 = vmatmul.mubr.bf16.gmra.mxu0 %v1915
      %v2176 = vpop.f32.mrf.mxu0
      %v2177 = vadd.f32 %v1992, %v2176
      %v2178 = vpop.f32.mrf.mxu0
      %v2179 = vpop.f32.mrf.mxu0
      %v2180 = vadd.f32 %v1995, %v2179
      %v2181 = vpop.f32.mrf.mxu0
      %2182 = vmatprep.mubr.bf16.mxu0 0
      %2183 = vmatmul.mubr.bf16.gmra.mxu0 %v1917
      %v2184 = vpop.f32.mrf.mxu0
      %v2185 = vadd.f32 %v2000, %v2184
      %v2186 = vpop.f32.mrf.mxu0
      %v2187 = vpop.f32.mrf.mxu0
      %v2188 = vadd.f32 %v2003, %v2187
      %v2189 = vpop.f32.mrf.mxu0
      %2190 = vmatprep.mubr.bf16.mxu0 0
      %2191 = vmatmul.mubr.bf16.gmra.mxu0 %v1919
      %v2192 = vpop.f32.mrf.mxu0
      %v2193 = vadd.f32 %v2008, %v2192
      %v2194 = vpop.f32.mrf.mxu0
      %v2195 = vpop.f32.mrf.mxu0
      %v2196 = vadd.f32 %v2011, %v2195
      %v2197 = vpop.f32.mrf.mxu0
      %2198 = vmatprep.mubr.bf16.mxu0 0
      %2199 = vmatmul.mubr.bf16.gmra.mxu0 %v1921
      %v2200 = vpop.f32.mrf.mxu0
      %v2201 = vadd.f32 %v2016, %v2200
      %v2202 = vpop.f32.mrf.mxu0
      %v2203 = vpop.f32.mrf.mxu0
      %v2204 = vadd.f32 %v2019, %v2203
      %v2205 = vpop.f32.mrf.mxu0
      %2206 = vmatprep.mubr.bf16.mxu0 0
      %2207 = vmatmul.mubr.bf16.gmra.mxu0 %v1923
      %v2208 = vpop.f32.mrf.mxu0
      %v2209 = vadd.f32 %v2024, %v2208
      %v2210 = vpop.f32.mrf.mxu0
      %v2211 = vpop.f32.mrf.mxu0
      %v2212 = vadd.f32 %v2027, %v2211
      %v2213 = vpop.f32.mrf.mxu0
      %2214 = vmatprep.mubr.bf16.mxu0 0
      %2215 = vmatmul.mubr.bf16.gmra.mxu0 %v1925
      %v2216 = vpop.f32.mrf.mxu0
      %v2217 = vadd.f32 %v2032, %v2216
      %v2218 = vpop.f32.mrf.mxu0
      %v2219 = vpop.f32.mrf.mxu0
      %v2220 = vadd.f32 %v2035, %v2219
      %v2221 = vpop.f32.mrf.mxu0
      %2222 = vmatprep.mubr.bf16.mxu0 0
      %2223 = vmatmul.mubr.bf16.gmra.mxu0 %v1927
      %v2224 = vpop.f32.mrf.mxu0
      %v2225 = vadd.f32 %v2040, %v2224
      %v2226 = vpop.f32.mrf.mxu0
      %v2227 = vpop.f32.mrf.mxu0
      %v2228 = vadd.f32 %v2043, %v2227
      %v2229 = vpop.f32.mrf.mxu0
      %2230 = vmatprep.mubr.bf16.mxu0 0
      %2231 = vmatmul.mubr.bf16.gmra.mxu0 %v1929
      %v2232 = vpop.f32.mrf.mxu0
      %v2233 = vadd.f32 %v2048, %v2232
      %v2234 = vpop.f32.mrf.mxu0
      %v2235 = vpop.f32.mrf.mxu0
      %v2236 = vadd.f32 %v2051, %v2235
      %v2237 = vpop.f32.mrf.mxu0
      %2238 = vmatprep.mubr.bf16.mxu0 0
      %2239 = vmatmul.mubr.bf16.gmra.mxu0 %v1931
      %v2240 = vpop.f32.mrf.mxu0
      %v2241 = vadd.f32 %v2056, %v2240
      %v2242 = vpop.f32.mrf.mxu0
      %v2243 = vpop.f32.mrf.mxu0
      %v2244 = vadd.f32 %v2059, %v2243
      %v2245 = vpop.f32.mrf.mxu0
      %2246 = vmatprep.mubr.bf16.mxu0 0
      %2247 = vmatmul.mubr.bf16.gmra.mxu0 %v1933
      %v2248 = vpop.f32.mrf.mxu0
      %v2249 = vadd.f32 %v2064, %v2248
      %v2250 = vpop.f32.mrf.mxu0
      %v2251 = vpop.f32.mrf.mxu0
      %v2252 = vadd.f32 %v2067, %v2251
      %v2253 = vpop.f32.mrf.mxu0
      %2254 = vmatprep.mubr.bf16.mxu0 0
      %2255 = vmatmul.mubr.bf16.gmra.mxu0 %v1935
      %v2256 = vpop.f32.mrf.mxu0
      %v2257 = vadd.f32 %v2072, %v2256
      %v2258 = vpop.f32.mrf.mxu0
      %v2259 = vpop.f32.mrf.mxu0
      %v2260 = vadd.f32 %v2075, %v2259
      %v2261 = vpop.f32.mrf.mxu0
      %2262 = vmatprep.mubr.bf16.mxu0 0
      %2263 = vmatmul.mubr.bf16.gmra.mxu0 %v1937
      %v2264 = vpop.f32.mrf.mxu0
      %v2265 = vadd.f32 %v2080, %v2264
      %v2266 = vpop.f32.mrf.mxu0
      %v2267 = vpop.f32.mrf.mxu0
      %v2268 = vadd.f32 %v2083, %v2267
      %v2269 = vpop.f32.mrf.mxu0
      %2270 = vmatprep.mubr.bf16.mxu0 0
      %2271 = vmatmul.mubr.bf16.gmra.mxu0 %v1939
      %v2272 = vpop.f32.mrf.mxu0
      %v2273 = vadd.f32 %v2088, %v2272
      %v2274 = vpop.f32.mrf.mxu0
      %v2275 = vpop.f32.mrf.mxu0
      %v2276 = vadd.f32 %v2091, %v2275
      %v2277 = vpop.f32.mrf.mxu0
      %2278 = vmatprep.mubr.bf16.mxu0 0
      %2279 = vmatmul.mubr.bf16.gmra.mxu0 %v1941
      %v2280 = vpop.f32.mrf.mxu0
      %v2281 = vadd.f32 %v2096, %v2280
      %v2282 = vpop.f32.mrf.mxu0
      %v2283 = vpop.f32.mrf.mxu0
      %v2284 = vadd.f32 %v2099, %v2283
      %v2285 = vpop.f32.mrf.mxu0
      %2286 = vmatprep.mubr.bf16.mxu0 0
      %2287 = vmatmul.mubr.bf16.gmra.mxu0 %v1943
      %v2288 = vpop.f32.mrf.mxu0
      %v2289 = vadd.f32 %v2104, %v2288
      %v2290 = vpop.f32.mrf.mxu0
      %v2291 = vpop.f32.mrf.mxu0
      %v2292 = vadd.f32 %v2107, %v2291
      %v2293 = vpop.f32.mrf.mxu0
      %2294 = vmatprep.mubr.bf16.mxu0 0
      %2295 = vmatmul.mubr.bf16.gmra.mxu0 %v1945
      %v2296 = vpop.f32.mrf.mxu0
      %v2297 = vadd.f32 %v2112, %v2296
      %v2298 = vpop.f32.mrf.mxu0
      %v2299 = vpop.f32.mrf.mxu0
      %v2300 = vadd.f32 %v2115, %v2299
      %v2301 = vpop.f32.mrf.mxu0
      %2302 = vmatprep.mubr.bf16.mxu0 0
      %2303 = vmatmul.mubr.bf16.gmra.mxu0 %v1947
      %v2304 = vpop.f32.mrf.mxu0
      %v2305 = vadd.f32 %v2120, %v2304
      %v2306 = vpop.f32.mrf.mxu0
      %v2307 = vpop.f32.mrf.mxu0
      %v2308 = vadd.f32 %v2123, %v2307
      %v2309 = vpop.f32.mrf.mxu0
      %2310 = vmatprep.mubr.bf16.mxu0 0
      %2311 = vmatmul.mubr.bf16.gmra.mxu0 %v1949
      %v2312 = vpop.f32.mrf.mxu0
      %v2313 = vadd.f32 %v2128, %v2312
      %v2314 = vpop.f32.mrf.mxu0
      %v2315 = vpop.f32.mrf.mxu0
      %v2316 = vadd.f32 %v2131, %v2315
      %v2317 = vpop.f32.mrf.mxu0
      %2318 = vmatprep.mubr.bf16.mxu0 0
      %2319 = vmatmul.mubr.bf16.gmra.mxu0 %v1951
      %v2320 = vpop.f32.mrf.mxu0
      %v2321 = vadd.f32 %v2136, %v2320
      %v2322 = vpop.f32.mrf.mxu0
      %v2323 = vpop.f32.mrf.mxu0
      %v2324 = vadd.f32 %v2139, %v2323
      %v2325 = vpop.f32.mrf.mxu0
      %2326 = vdwg.mxu0
      %v2327 = vmax.f32 %v2177, 0.0
      %v2328 = vmax.f32 %v2180, 0.0
      %v2329 = vmax.f32 %v2185, 0.0
      %v2330 = vmax.f32 %v2188, 0.0
      %v2331 = vmax.f32 %v2193, 0.0
      %v2332 = vmax.f32 %v2196, 0.0
      %v2333 = vmax.f32 %v2201, 0.0
      %v2334 = vmax.f32 %v2204, 0.0
      %v2335 = vmax.f32 %v2209, 0.0
      %v2336 = vmax.f32 %v2212, 0.0
      %v2337 = vmax.f32 %v2217, 0.0
      %v2338 = vmax.f32 %v2220, 0.0
      %v2339 = vmax.f32 %v2225, 0.0
      %v2340 = vmax.f32 %v2228, 0.0
      %v2341 = vmax.f32 %v2233, 0.0
      %v2342 = vmax.f32 %v2236, 0.0
      %v2343 = vmax.f32 %v2241, 0.0
      %v2344 = vmax.f32 %v2244, 0.0
      %v2345 = vmax.f32 %v2249, 0.0
      %v2346 = vmax.f32 %v2252, 0.0
      %v2347 = vmax.f32 %v2257, 0.0
      %v2348 = vmax.f32 %v2260, 0.0
      %v2349 = vmax.f32 %v2265, 0.0
      %v2350 = vmax.f32 %v2268, 0.0
      %v2351 = vmax.f32 %v2273, 0.0
      %v2352 = vmax.f32 %v2276, 0.0
      %v2353 = vmax.f32 %v2281, 0.0
      %v2354 = vmax.f32 %v2284, 0.0
      %v2355 = vmax.f32 %v2289, 0.0
      %v2356 = vmax.f32 %v2292, 0.0
      %v2357 = vmax.f32 %v2297, 0.0
      %v2358 = vmax.f32 %v2300, 0.0
      %v2359 = vmax.f32 %v2305, 0.0
      %v2360 = vmax.f32 %v2308, 0.0
      %v2361 = vmax.f32 %v2313, 0.0
      %v2362 = vmax.f32 %v2316, 0.0
      %v2363 = vmax.f32 %v2321, 0.0
      %v2364 = vmax.f32 %v2324, 0.0
      %v2365 = vpack.c.bf16 %v2328, %v2327
      %v2366 = vpack.c.bf16 %v2330, %v2329
      %v2367 = vpack.c.bf16 %v2332, %v2331
      %v2368 = vpack.c.bf16 %v2334, %v2333
      %v2369 = vpack.c.bf16 %v2336, %v2335
      %v2370 = vpack.c.bf16 %v2338, %v2337
      %v2371 = vpack.c.bf16 %v2340, %v2339
      %v2372 = vpack.c.bf16 %v2342, %v2341
      %v2373 = vpack.c.bf16 %v2344, %v2343
      %v2374 = vpack.c.bf16 %v2346, %v2345
      %v2375 = vpack.c.bf16 %v2348, %v2347
      %v2376 = vpack.c.bf16 %v2350, %v2349
      %v2377 = vpack.c.bf16 %v2352, %v2351
      %v2378 = vpack.c.bf16 %v2354, %v2353
      %v2379 = vpack.c.bf16 %v2356, %v2355
      %v2380 = vpack.c.bf16 %v2358, %v2357
      %v2381 = vpack.c.bf16 %v2360, %v2359
      %v2382 = vpack.c.bf16 %v2362, %v2361
      %v2383 = vpack.c.bf16 %v2364, %v2363
      %v2385 = vshrl.u32 %v2365, 16
      %v2387 = vshll.u32 %v2365, 16
      %v2389 = vrot.slane %v2387, 1
      %v2390 = vor.u32 %v2385, %v2389
      %v2392 = vshll.u32 %v2366, 16
      %v2394 = vrot.slane %v2392, 1
      %v2395 = vsel %vm854, %v2390, %v2394
      %v2396 = vshrl.u32 %v2366, 16
      %v2398 = vor.u32 %v2396, %v2394
      %v2400 = vshll.u32 %v2367, 16
      %v2402 = vrot.slane %v2400, 1
      %v2403 = vsel %vm854, %v2398, %v2402
      %v2404 = vshrl.u32 %v2367, 16
      %v2406 = vor.u32 %v2404, %v2402
      %v2408 = vshll.u32 %v2368, 16
      %v2410 = vrot.slane %v2408, 1
      %v2411 = vsel %vm854, %v2406, %v2410
      %v2412 = vshrl.u32 %v2368, 16
      %v2414 = vor.u32 %v2412, %v2410
      %v2416 = vshll.u32 %v2369, 16
      %v2418 = vrot.slane %v2416, 1
      %v2419 = vsel %vm854, %v2414, %v2418
      %v2420 = vshrl.u32 %v2369, 16
      %v2422 = vor.u32 %v2420, %v2418
      %v2424 = vshll.u32 %v2370, 16
      %v2426 = vrot.slane %v2424, 1
      %v2427 = vsel %vm854, %v2422, %v2426
      %v2428 = vshrl.u32 %v2370, 16
      %v2430 = vor.u32 %v2428, %v2426
      %v2432 = vshll.u32 %v2371, 16
      %v2434 = vrot.slane %v2432, 1
      %v2435 = vsel %vm854, %v2430, %v2434
      %v2436 = vshrl.u32 %v2371, 16
      %v2438 = vor.u32 %v2436, %v2434
      %v2440 = vshll.u32 %v2372, 16
      %v2442 = vrot.slane %v2440, 1
      %v2443 = vsel %vm854, %v2438, %v2442
      %v2444 = vshrl.u32 %v2372, 16
      %v2446 = vor.u32 %v2444, %v2442
      %v2448 = vshll.u32 %v2373, 16
      %v2450 = vrot.slane %v2448, 1
      %v2451 = vsel %vm854, %v2446, %v2450
      %v2452 = vshrl.u32 %v2373, 16
      %v2454 = vor.u32 %v2452, %v2450
      %v2456 = vshll.u32 %v2374, 16
      %v2458 = vrot.slane %v2456, 1
      %v2459 = vsel %vm854, %v2454, %v2458
      %v2460 = vshrl.u32 %v2374, 16
      %v2462 = vor.u32 %v2460, %v2458
      %v2464 = vshll.u32 %v2375, 16
      %v2466 = vrot.slane %v2464, 1
      %v2467 = vsel %vm854, %v2462, %v2466
      %v2468 = vshrl.u32 %v2375, 16
      %v2470 = vor.u32 %v2468, %v2466
      %v2472 = vshll.u32 %v2376, 16
      %v2474 = vrot.slane %v2472, 1
      %v2475 = vsel %vm854, %v2470, %v2474
      %v2476 = vshrl.u32 %v2376, 16
      %v2478 = vor.u32 %v2476, %v2474
      %v2480 = vshll.u32 %v2377, 16
      %v2482 = vrot.slane %v2480, 1
      %v2483 = vsel %vm854, %v2478, %v2482
      %v2484 = vshrl.u32 %v2377, 16
      %v2486 = vor.u32 %v2484, %v2482
      %v2488 = vshll.u32 %v2378, 16
      %v2490 = vrot.slane %v2488, 1
      %v2491 = vsel %vm854, %v2486, %v2490
      %v2492 = vshrl.u32 %v2378, 16
      %v2494 = vor.u32 %v2492, %v2490
      %v2496 = vshll.u32 %v2379, 16
      %v2498 = vrot.slane %v2496, 1
      %v2499 = vsel %vm854, %v2494, %v2498
      %v2500 = vshrl.u32 %v2379, 16
      %v2502 = vor.u32 %v2500, %v2498
      %v2504 = vshll.u32 %v2380, 16
      %v2506 = vrot.slane %v2504, 1
      %v2507 = vsel %vm854, %v2502, %v2506
      %v2508 = vshrl.u32 %v2380, 16
      %v2510 = vor.u32 %v2508, %v2506
      %v2512 = vshll.u32 %v2381, 16
      %v2514 = vrot.slane %v2512, 1
      %v2515 = vsel %vm854, %v2510, %v2514
      %v2516 = vshrl.u32 %v2381, 16
      %v2518 = vor.u32 %v2516, %v2514
      %v2520 = vshll.u32 %v2382, 16
      %v2522 = vrot.slane %v2520, 1
      %v2523 = vsel %vm854, %v2518, %v2522
      %v2524 = vshrl.u32 %v2382, 16
      %v2526 = vor.u32 %v2524, %v2522
      %v2528 = vshll.u32 %v2383, 16
      %v2530 = vrot.slane %v2528, 1
      %v2531 = vsel %vm854, %v2526, %v2530
      %v2532 = vshrl.u32 %v2383, 16
      %v2534 = vor.u32 %v2532, %v2530
      %2535 = vrot.lane.b32.xlu0 %v2395, 32
      %v2536 = vpop.permute.xlu0 %2535
      %2537 = vrot.lane.b32.xlu0 %v2403, 32
      %v2538 = vpop.permute.xlu0 %2537
      %2539 = vrot.lane.b32.xlu0 %v2411, 32
      %v2540 = vpop.permute.xlu0 %2539
      %2541 = vrot.lane.b32.xlu0 %v2419, 32
      %v2542 = vpop.permute.xlu0 %2541
      %2543 = vrot.lane.b32.xlu0 %v2427, 32
      %v2544 = vpop.permute.xlu0 %2543
      %2545 = vrot.lane.b32.xlu0 %v2435, 32
      %v2546 = vpop.permute.xlu0 %2545
      %2547 = vrot.lane.b32.xlu0 %v2443, 32
      %v2548 = vpop.permute.xlu0 %2547
      %2549 = vrot.lane.b32.xlu0 %v2451, 32
      %v2550 = vpop.permute.xlu0 %2549
      %2551 = vrot.lane.b32.xlu0 %v2459, 32
      %v2552 = vpop.permute.xlu0 %2551
      %2553 = vrot.lane.b32.xlu0 %v2467, 32
      %v2554 = vpop.permute.xlu0 %2553
      %2555 = vrot.lane.b32.xlu0 %v2475, 32
      %v2556 = vpop.permute.xlu0 %2555
      %2557 = vrot.lane.b32.xlu0 %v2483, 32
      %v2558 = vpop.permute.xlu0 %2557
      %2559 = vrot.lane.b32.xlu0 %v2491, 32
      %v2560 = vpop.permute.xlu0 %2559
      %2561 = vrot.lane.b32.xlu0 %v2499, 32
      %v2562 = vpop.permute.xlu0 %2561
      %2563 = vrot.lane.b32.xlu0 %v2507, 32
      %v2564 = vpop.permute.xlu0 %2563
      %2565 = vrot.lane.b32.xlu0 %v2515, 32
      %v2566 = vpop.permute.xlu0 %2565
      %2567 = vrot.lane.b32.xlu0 %v2523, 32
      %v2568 = vpop.permute.xlu0 %2567
      %2569 = vrot.lane.b32.xlu0 %v2531, 32
      %v2570 = vpop.permute.xlu0 %2569
      %2571 = vrot.lane.b32.xlu0 %v2534, 32
      %v2572 = vpop.permute.xlu0 %2571
      %vm2573 = vcmask 261120
      %v2575 = vsel %vm2573, %v2365, %v2536
      %v2577 = vsel %vm2573, %v2366, %v2538
      %v2579 = vsel %vm2573, %v2367, %v2540
      %v2581 = vsel %vm2573, %v2368, %v2542
      %v2583 = vsel %vm2573, %v2369, %v2544
      %v2585 = vsel %vm2573, %v2370, %v2546
      %v2587 = vsel %vm2573, %v2371, %v2548
      %v2589 = vsel %vm2573, %v2372, %v2550
      %v2591 = vsel %vm2573, %v2373, %v2552
      %v2593 = vsel %vm2573, %v2374, %v2554
      %v2595 = vsel %vm2573, %v2375, %v2556
      %v2597 = vsel %vm2573, %v2376, %v2558
      %v2599 = vsel %vm2573, %v2377, %v2560
      %v2601 = vsel %vm2573, %v2378, %v2562
      %v2603 = vsel %vm2573, %v2379, %v2564
      %v2605 = vsel %vm2573, %v2380, %v2566
      %v2607 = vsel %vm2573, %v2381, %v2568
      %v2609 = vsel %vm2573, %v2382, %v2570
      %v2611 = vsel %vm2573, %v2383, %v2572
      %v2612 = vld [vmem:[%s3] sm:$0xff]
      %v2613 = vld [vmem:[%s3 + $0x8] sm:$0xff]
      %v2614 = vld [vmem:[%s3 + $0x10] sm:$0xff]
      %v2615 = vld [vmem:[%s3 + $0x18] sm:$0xff]
      %v2616 = vld [vmem:[%s3 + $0x20] sm:$0xff]
      %v2617 = vld [vmem:[%s3 + $0x28] sm:$0xff]
      %v2618 = vld [vmem:[%s3 + $0x30] sm:$0xff]
      %v2619 = vld [vmem:[%s3 + $0x38] sm:$0xff]
      %v2620 = vld [vmem:[%s4] sm:$0x3]
      %v2622 = vlaneseq
      %v2623 = vshrl.u32 %v2622, 7
      %v2624 = vsub.s32 0, %v2623
      %v2625 = vrot.slane %v2620, %v2624
      %v2626 = vlaneseq
      %v2627 = vshrl.u32 %v2626, 7
      %v2628 = vsub.s32 1, %v2627
      %v2629 = vrot.slane %v2620, %v2628
      %v2640 = vunpack.c.l.b16 %v2612
      %v2641 = vunpack.c.h.b16 %v2612
      %v2642 = vunpack.c.l.b16 %v2613
      %v2643 = vunpack.c.h.b16 %v2613
      %v2644 = vunpack.c.l.b16 %v2614
      %v2645 = vunpack.c.h.b16 %v2614
      %v2646 = vunpack.c.l.b16 %v2615
      %v2647 = vunpack.c.h.b16 %v2615
      %v2648 = vunpack.c.l.b16 %v2616
      %v2649 = vunpack.c.h.b16 %v2616
      %v2650 = vunpack.c.l.b16 %v2617
      %v2651 = vunpack.c.h.b16 %v2617
      %v2652 = vunpack.c.l.b16 %v2618
      %v2653 = vunpack.c.h.b16 %v2618
      %v2654 = vunpack.c.l.b16 %v2619
      %v2655 = vunpack.c.h.b16 %v2619
      %v2656 = vpack.c.b16 %v2642, %v2640
      %v2657 = vpack.c.b16 %v2643, %v2641
      %v2658 = vpack.c.b16 %v2646, %v2644
      %v2659 = vpack.c.b16 %v2647, %v2645
      %v2660 = vpack.c.b16 %v2650, %v2648
      %v2661 = vpack.c.b16 %v2651, %v2649
      %v2662 = vpack.c.b16 %v2654, %v2652
      %v2663 = vpack.c.b16 %v2655, %v2653
      %vm2672 = vcmask 523264
      %v2673 = vsel %vm2672, %v2575, 0
      %v2675 = vsel %vm2672, %v2577, 0
      %v2677 = vsel %vm2672, %v2579, 0
      %v2679 = vsel %vm2672, %v2581, 0
      %v2681 = vsel %vm2672, %v2583, 0
      %v2683 = vsel %vm2672, %v2585, 0
      %v2685 = vsel %vm2672, %v2587, 0
      %v2687 = vsel %vm2672, %v2589, 0
      %v2689 = vsel %vm2672, %v2591, 0
      %v2691 = vsel %vm2672, %v2593, 0
      %v2693 = vsel %vm2672, %v2595, 0
      %v2695 = vsel %vm2672, %v2597, 0
      %v2697 = vsel %vm2672, %v2599, 0
      %v2699 = vsel %vm2672, %v2601, 0
      %v2701 = vsel %vm2672, %v2603, 0
      %v2703 = vsel %vm2672, %v2605, 0
      %v2705 = vsel %vm2672, %v2607, 0
      %v2707 = vsel %vm2672, %v2609, 0
      %v2709 = vsel %vm2672, %v2611, 0
      %2711 = vmatprep.subr.bf16.mxu0 0
      %2712 = vmatpush1.bf16.msra.mxu0 0
      %2713 = vmatprep.subr.bf16.mxu0 0
      %2714 = vmatpush1.bf16.msra.mxu0 0
      %2715 = vmatprep.subr.bf16.mxu0 0
      %2716 = vmatpush1.bf16.msra.mxu0 0
      %2717 = vmatprep.subr.bf16.mxu0 0
      %2718 = vmatpush1.bf16.msra.mxu0 0
      %2719 = vmatprep.subr.bf16.mxu0 %v2663
      %2720 = vmatpush1.bf16.msra.mxu0 %v2662
      %2721 = vmatprep.subr.bf16.mxu0 %v2661
      %2722 = vmatpush1.bf16.msra.mxu0 %v2660
      %2723 = vmatprep.subr.bf16.mxu0 %v2659
      %2724 = vmatpush1.bf16.msra.mxu0 %v2658
      %2725 = vmatprep.subr.bf16.mxu0 %v2657
      %2726 = vmatpush1.bf16.msra.mxu0 %v2656
      %2727 = vmatprep.subr.bf16.mxu0 0
      %2728 = vmatpush2.bf16.msra.mxu0 0
      %2729 = vmatprep.subr.bf16.mxu0 0
      %2730 = vmatpush2.bf16.msra.mxu0 0
      %2731 = vmatprep.subr.bf16.mxu0 0
      %2732 = vmatpush2.bf16.msra.mxu0 0
      %2733 = vmatprep.subr.bf16.mxu0 0
      %2734 = vmatpush2.bf16.msra.mxu0 0
      %2735 = vmatprep.subr.bf16.mxu0 0
      %2736 = vmatpush2.bf16.msra.mxu0 0
      %2737 = vmatprep.subr.bf16.mxu0 0
      %2738 = vmatpush2.bf16.msra.mxu0 0
      %2739 = vmatprep.subr.bf16.mxu0 0
      %2740 = vmatpush2.bf16.msra.mxu0 0
      %2741 = vmatprep.subr.bf16.mxu0 0
      %2742 = vmatpush2.bf16.msra.mxu0 0
      %2743 = vmatprep.mubr.bf16.mxu0 0
      %2744 = vmatmul.mubr.bf16.gmra.mxu0 %v2673
      %v2745 = vpop.f32.mrf.mxu0
      %v2746 = vadd.f32 %v2625, %v2745
      %v2747 = vpop.f32.mrf.mxu0
      %v2748 = vadd.f32 %v2629, %v2747
      %v2749 = vpop.f32.mrf.mxu0
      %v2750 = vadd.f32 %v2625, %v2749
      %v2751 = vpop.f32.mrf.mxu0
      %v2752 = vadd.f32 %v2629, %v2751
      %2753 = vmatprep.mubr.bf16.mxu0 0
      %2754 = vmatmul.mubr.bf16.gmra.mxu0 %v2675
      %v2755 = vpop.f32.mrf.mxu0
      %v2756 = vadd.f32 %v2625, %v2755
      %v2757 = vpop.f32.mrf.mxu0
      %v2758 = vadd.f32 %v2629, %v2757
      %v2759 = vpop.f32.mrf.mxu0
      %v2760 = vadd.f32 %v2625, %v2759
      %v2761 = vpop.f32.mrf.mxu0
      %v2762 = vadd.f32 %v2629, %v2761
      %2763 = vmatprep.mubr.bf16.mxu0 0
      %2764 = vmatmul.mubr.bf16.gmra.mxu0 %v2677
      %v2765 = vpop.f32.mrf.mxu0
      %v2766 = vadd.f32 %v2625, %v2765
      %v2767 = vpop.f32.mrf.mxu0
      %v2768 = vadd.f32 %v2629, %v2767
      %v2769 = vpop.f32.mrf.mxu0
      %v2770 = vadd.f32 %v2625, %v2769
      %v2771 = vpop.f32.mrf.mxu0
      %v2772 = vadd.f32 %v2629, %v2771
      %2773 = vmatprep.mubr.bf16.mxu0 0
      %2774 = vmatmul.mubr.bf16.gmra.mxu0 %v2679
      %v2775 = vpop.f32.mrf.mxu0
      %v2776 = vadd.f32 %v2625, %v2775
      %v2777 = vpop.f32.mrf.mxu0
      %v2778 = vadd.f32 %v2629, %v2777
      %v2779 = vpop.f32.mrf.mxu0
      %v2780 = vadd.f32 %v2625, %v2779
      %v2781 = vpop.f32.mrf.mxu0
      %v2782 = vadd.f32 %v2629, %v2781
      %2783 = vmatprep.mubr.bf16.mxu0 0
      %2784 = vmatmul.mubr.bf16.gmra.mxu0 %v2681
      %v2785 = vpop.f32.mrf.mxu0
      %v2786 = vadd.f32 %v2625, %v2785
      %v2787 = vpop.f32.mrf.mxu0
      %v2788 = vadd.f32 %v2629, %v2787
      %v2789 = vpop.f32.mrf.mxu0
      %v2790 = vadd.f32 %v2625, %v2789
      %v2791 = vpop.f32.mrf.mxu0
      %v2792 = vadd.f32 %v2629, %v2791
      %2793 = vmatprep.mubr.bf16.mxu0 0
      %2794 = vmatmul.mubr.bf16.gmra.mxu0 %v2683
      %v2795 = vpop.f32.mrf.mxu0
      %v2796 = vadd.f32 %v2625, %v2795
      %v2797 = vpop.f32.mrf.mxu0
      %v2798 = vadd.f32 %v2629, %v2797
      %v2799 = vpop.f32.mrf.mxu0
      %v2800 = vadd.f32 %v2625, %v2799
      %v2801 = vpop.f32.mrf.mxu0
      %v2802 = vadd.f32 %v2629, %v2801
      %2803 = vmatprep.mubr.bf16.mxu0 0
      %2804 = vmatmul.mubr.bf16.gmra.mxu0 %v2685
      %v2805 = vpop.f32.mrf.mxu0
      %v2806 = vadd.f32 %v2625, %v2805
      %v2807 = vpop.f32.mrf.mxu0
      %v2808 = vadd.f32 %v2629, %v2807
      %v2809 = vpop.f32.mrf.mxu0
      %v2810 = vadd.f32 %v2625, %v2809
      %v2811 = vpop.f32.mrf.mxu0
      %v2812 = vadd.f32 %v2629, %v2811
      %2813 = vmatprep.mubr.bf16.mxu0 0
      %2814 = vmatmul.mubr.bf16.gmra.mxu0 %v2687
      %v2815 = vpop.f32.mrf.mxu0
      %v2816 = vadd.f32 %v2625, %v2815
      %v2817 = vpop.f32.mrf.mxu0
      %v2818 = vadd.f32 %v2629, %v2817
      %v2819 = vpop.f32.mrf.mxu0
      %v2820 = vadd.f32 %v2625, %v2819
      %v2821 = vpop.f32.mrf.mxu0
      %v2822 = vadd.f32 %v2629, %v2821
      %2823 = vmatprep.mubr.bf16.mxu0 0
      %2824 = vmatmul.mubr.bf16.gmra.mxu0 %v2689
      %v2825 = vpop.f32.mrf.mxu0
      %v2826 = vadd.f32 %v2625, %v2825
      %v2827 = vpop.f32.mrf.mxu0
      %v2828 = vadd.f32 %v2629, %v2827
      %v2829 = vpop.f32.mrf.mxu0
      %v2830 = vadd.f32 %v2625, %v2829
      %v2831 = vpop.f32.mrf.mxu0
      %v2832 = vadd.f32 %v2629, %v2831
      %2833 = vmatprep.mubr.bf16.mxu0 0
      %2834 = vmatmul.mubr.bf16.gmra.mxu0 %v2691
      %v2835 = vpop.f32.mrf.mxu0
      %v2836 = vadd.f32 %v2625, %v2835
      %v2837 = vpop.f32.mrf.mxu0
      %v2838 = vadd.f32 %v2629, %v2837
      %v2839 = vpop.f32.mrf.mxu0
      %v2840 = vadd.f32 %v2625, %v2839
      %v2841 = vpop.f32.mrf.mxu0
      %v2842 = vadd.f32 %v2629, %v2841
      %2843 = vmatprep.mubr.bf16.mxu0 0
      %2844 = vmatmul.mubr.bf16.gmra.mxu0 %v2693
      %v2845 = vpop.f32.mrf.mxu0
      %v2846 = vadd.f32 %v2625, %v2845
      %v2847 = vpop.f32.mrf.mxu0
      %v2848 = vadd.f32 %v2629, %v2847
      %v2849 = vpop.f32.mrf.mxu0
      %v2850 = vadd.f32 %v2625, %v2849
      %v2851 = vpop.f32.mrf.mxu0
      %v2852 = vadd.f32 %v2629, %v2851
      %2853 = vmatprep.mubr.bf16.mxu0 0
      %2854 = vmatmul.mubr.bf16.gmra.mxu0 %v2695
      %v2855 = vpop.f32.mrf.mxu0
      %v2856 = vadd.f32 %v2625, %v2855
      %v2857 = vpop.f32.mrf.mxu0
      %v2858 = vadd.f32 %v2629, %v2857
      %v2859 = vpop.f32.mrf.mxu0
      %v2860 = vadd.f32 %v2625, %v2859
      %v2861 = vpop.f32.mrf.mxu0
      %v2862 = vadd.f32 %v2629, %v2861
      %2863 = vmatprep.mubr.bf16.mxu0 0
      %2864 = vmatmul.mubr.bf16.gmra.mxu0 %v2697
      %v2865 = vpop.f32.mrf.mxu0
      %v2866 = vadd.f32 %v2625, %v2865
      %v2867 = vpop.f32.mrf.mxu0
      %v2868 = vadd.f32 %v2629, %v2867
      %v2869 = vpop.f32.mrf.mxu0
      %v2870 = vadd.f32 %v2625, %v2869
      %v2871 = vpop.f32.mrf.mxu0
      %v2872 = vadd.f32 %v2629, %v2871
      %2873 = vmatprep.mubr.bf16.mxu0 0
      %2874 = vmatmul.mubr.bf16.gmra.mxu0 %v2699
      %v2875 = vpop.f32.mrf.mxu0
      %v2876 = vadd.f32 %v2625, %v2875
      %v2877 = vpop.f32.mrf.mxu0
      %v2878 = vadd.f32 %v2629, %v2877
      %v2879 = vpop.f32.mrf.mxu0
      %v2880 = vadd.f32 %v2625, %v2879
      %v2881 = vpop.f32.mrf.mxu0
      %v2882 = vadd.f32 %v2629, %v2881
      %2883 = vmatprep.mubr.bf16.mxu0 0
      %2884 = vmatmul.mubr.bf16.gmra.mxu0 %v2701
      %v2885 = vpop.f32.mrf.mxu0
      %v2886 = vadd.f32 %v2625, %v2885
      %v2887 = vpop.f32.mrf.mxu0
      %v2888 = vadd.f32 %v2629, %v2887
      %v2889 = vpop.f32.mrf.mxu0
      %v2890 = vadd.f32 %v2625, %v2889
      %v2891 = vpop.f32.mrf.mxu0
      %v2892 = vadd.f32 %v2629, %v2891
      %2893 = vmatprep.mubr.bf16.mxu0 0
      %2894 = vmatmul.mubr.bf16.gmra.mxu0 %v2703
      %v2895 = vpop.f32.mrf.mxu0
      %v2896 = vadd.f32 %v2625, %v2895
      %v2897 = vpop.f32.mrf.mxu0
      %v2898 = vadd.f32 %v2629, %v2897
      %v2899 = vpop.f32.mrf.mxu0
      %v2900 = vadd.f32 %v2625, %v2899
      %v2901 = vpop.f32.mrf.mxu0
      %v2902 = vadd.f32 %v2629, %v2901
      %2903 = vmatprep.mubr.bf16.mxu0 0
      %2904 = vmatmul.mubr.bf16.gmra.mxu0 %v2705
      %v2905 = vpop.f32.mrf.mxu0
      %v2906 = vadd.f32 %v2625, %v2905
      %v2907 = vpop.f32.mrf.mxu0
      %v2908 = vadd.f32 %v2629, %v2907
      %v2909 = vpop.f32.mrf.mxu0
      %v2910 = vadd.f32 %v2625, %v2909
      %v2911 = vpop.f32.mrf.mxu0
      %v2912 = vadd.f32 %v2629, %v2911
      %2913 = vmatprep.mubr.bf16.mxu0 0
      %2914 = vmatmul.mubr.bf16.gmra.mxu0 %v2707
      %v2915 = vpop.f32.mrf.mxu0
      %v2916 = vadd.f32 %v2625, %v2915
      %v2917 = vpop.f32.mrf.mxu0
      %v2918 = vadd.f32 %v2629, %v2917
      %v2919 = vpop.f32.mrf.mxu0
      %v2920 = vadd.f32 %v2625, %v2919
      %v2921 = vpop.f32.mrf.mxu0
      %v2922 = vadd.f32 %v2629, %v2921
      %2923 = vmatprep.mubr.bf16.mxu0 0
      %2924 = vmatmul.mubr.bf16.gmra.mxu0 %v2709
      %v2925 = vpop.f32.mrf.mxu0
      %v2926 = vadd.f32 %v2625, %v2925
      %v2927 = vpop.f32.mrf.mxu0
      %v2928 = vadd.f32 %v2629, %v2927
      %v2929 = vpop.f32.mrf.mxu0
      %v2930 = vadd.f32 %v2625, %v2929
      %v2931 = vpop.f32.mrf.mxu0
      %v2932 = vadd.f32 %v2629, %v2931
      %2933 = vdwg.mxu0
      %v2934 = vmax.f32 %v2746, 0.0
      %v2935 = vmax.f32 %v2748, 0.0
      %v2936 = vmax.f32 %v2750, 0.0
      %v2937 = vmax.f32 %v2752, 0.0
      %v2938 = vmax.f32 %v2756, 0.0
      %v2939 = vmax.f32 %v2758, 0.0
      %v2940 = vmax.f32 %v2760, 0.0
      %v2941 = vmax.f32 %v2762, 0.0
      %v2942 = vmax.f32 %v2766, 0.0
      %v2943 = vmax.f32 %v2768, 0.0
      %v2944 = vmax.f32 %v2770, 0.0
      %v2945 = vmax.f32 %v2772, 0.0
      %v2946 = vmax.f32 %v2776, 0.0
      %v2947 = vmax.f32 %v2778, 0.0
      %v2948 = vmax.f32 %v2780, 0.0
      %v2949 = vmax.f32 %v2782, 0.0
      %v2950 = vmax.f32 %v2786, 0.0
      %v2951 = vmax.f32 %v2788, 0.0
      %v2952 = vmax.f32 %v2790, 0.0
      %v2953 = vmax.f32 %v2792, 0.0
      %v2954 = vmax.f32 %v2796, 0.0
      %v2955 = vmax.f32 %v2798, 0.0
      %v2956 = vmax.f32 %v2800, 0.0
      %v2957 = vmax.f32 %v2802, 0.0
      %v2958 = vmax.f32 %v2806, 0.0
      %v2959 = vmax.f32 %v2808, 0.0
      %v2960 = vmax.f32 %v2810, 0.0
      %v2961 = vmax.f32 %v2812, 0.0
      %v2962 = vmax.f32 %v2816, 0.0
      %v2963 = vmax.f32 %v2818, 0.0
      %v2964 = vmax.f32 %v2820, 0.0
      %v2965 = vmax.f32 %v2822, 0.0
      %v2966 = vmax.f32 %v2826, 0.0
      %v2967 = vmax.f32 %v2828, 0.0
      %v2968 = vmax.f32 %v2830, 0.0
      %v2969 = vmax.f32 %v2832, 0.0
      %v2970 = vmax.f32 %v2836, 0.0
      %v2971 = vmax.f32 %v2838, 0.0
      %v2972 = vmax.f32 %v2840, 0.0
      %v2973 = vmax.f32 %v2842, 0.0
      %v2974 = vmax.f32 %v2846, 0.0
      %v2975 = vmax.f32 %v2848, 0.0
      %v2976 = vmax.f32 %v2850, 0.0
      %v2977 = vmax.f32 %v2852, 0.0
      %v2978 = vmax.f32 %v2856, 0.0
      %v2979 = vmax.f32 %v2858, 0.0
      %v2980 = vmax.f32 %v2860, 0.0
      %v2981 = vmax.f32 %v2862, 0.0
      %v2982 = vmax.f32 %v2866, 0.0
      %v2983 = vmax.f32 %v2868, 0.0
      %v2984 = vmax.f32 %v2870, 0.0
      %v2985 = vmax.f32 %v2872, 0.0
      %v2986 = vmax.f32 %v2876, 0.0
      %v2987 = vmax.f32 %v2878, 0.0
      %v2988 = vmax.f32 %v2880, 0.0
      %v2989 = vmax.f32 %v2882, 0.0
      %v2990 = vmax.f32 %v2886, 0.0
      %v2991 = vmax.f32 %v2888, 0.0
      %v2992 = vmax.f32 %v2890, 0.0
      %v2993 = vmax.f32 %v2892, 0.0
      %v2994 = vmax.f32 %v2896, 0.0
      %v2995 = vmax.f32 %v2898, 0.0
      %v2996 = vmax.f32 %v2900, 0.0
      %v2997 = vmax.f32 %v2902, 0.0
      %v2998 = vmax.f32 %v2906, 0.0
      %v2999 = vmax.f32 %v2908, 0.0
      %v3000 = vmax.f32 %v2910, 0.0
      %v3001 = vmax.f32 %v2912, 0.0
      %v3002 = vmax.f32 %v2916, 0.0
      %v3003 = vmax.f32 %v2918, 0.0
      %v3004 = vmax.f32 %v2920, 0.0
      %v3005 = vmax.f32 %v2922, 0.0
      %v3006 = vmax.f32 %v2926, 0.0
      %v3007 = vmax.f32 %v2928, 0.0
      %v3008 = vmax.f32 %v2930, 0.0
      %v3009 = vmax.f32 %v2932, 0.0
      %v3010 = vpack.c.bf16 %v2936, %v2934
      %v3011 = vpack.c.bf16 %v2937, %v2935
      %v3012 = vpack.c.bf16 %v2940, %v2938
      %v3013 = vpack.c.bf16 %v2941, %v2939
      %v3014 = vpack.c.bf16 %v2944, %v2942
      %v3015 = vpack.c.bf16 %v2945, %v2943
      %v3016 = vpack.c.bf16 %v2948, %v2946
      %v3017 = vpack.c.bf16 %v2949, %v2947
      %v3018 = vpack.c.bf16 %v2952, %v2950
      %v3019 = vpack.c.bf16 %v2953, %v2951
      %v3020 = vpack.c.bf16 %v2956, %v2954
      %v3021 = vpack.c.bf16 %v2957, %v2955
      %v3022 = vpack.c.bf16 %v2960, %v2958
      %v3023 = vpack.c.bf16 %v2961, %v2959
      %v3024 = vpack.c.bf16 %v2964, %v2962
      %v3025 = vpack.c.bf16 %v2965, %v2963
      %v3026 = vpack.c.bf16 %v2968, %v2966
      %v3027 = vpack.c.bf16 %v2969, %v2967
      %v3028 = vpack.c.bf16 %v2972, %v2970
      %v3029 = vpack.c.bf16 %v2973, %v2971
      %v3030 = vpack.c.bf16 %v2976, %v2974
      %v3031 = vpack.c.bf16 %v2977, %v2975
      %v3032 = vpack.c.bf16 %v2980, %v2978
      %v3033 = vpack.c.bf16 %v2981, %v2979
      %v3034 = vpack.c.bf16 %v2984, %v2982
      %v3035 = vpack.c.bf16 %v2985, %v2983
      %v3036 = vpack.c.bf16 %v2988, %v2986
      %v3037 = vpack.c.bf16 %v2989, %v2987
      %v3038 = vpack.c.bf16 %v2992, %v2990
      %v3039 = vpack.c.bf16 %v2993, %v2991
      %v3040 = vpack.c.bf16 %v2996, %v2994
      %v3041 = vpack.c.bf16 %v2997, %v2995
      %v3042 = vpack.c.bf16 %v3000, %v2998
      %v3043 = vpack.c.bf16 %v3001, %v2999
      %v3044 = vpack.c.bf16 %v3004, %v3002
      %v3045 = vpack.c.bf16 %v3005, %v3003
      %v3046 = vpack.c.bf16 %v3008, %v3006
      %v3047 = vpack.c.bf16 %v3009, %v3007
      %3086 = vrot.lane.b32.xlu0 %v3010, 120
      %v3087 = vpop.permute.xlu0 %3086
      %3088 = vrot.lane.b32.xlu0 %v3011, 120
      %v3089 = vpop.permute.xlu0 %3088
      %3090 = vrot.lane.b32.xlu0 %v3012, 120
      %v3091 = vpop.permute.xlu0 %3090
      %3092 = vrot.lane.b32.xlu0 %v3013, 120
      %v3093 = vpop.permute.xlu0 %3092
      %3094 = vrot.lane.b32.xlu0 %v3014, 120
      %v3095 = vpop.permute.xlu0 %3094
      %3096 = vrot.lane.b32.xlu0 %v3015, 120
      %v3097 = vpop.permute.xlu0 %3096
      %3098 = vrot.lane.b32.xlu0 %v3016, 120
      %v3099 = vpop.permute.xlu0 %3098
      %3100 = vrot.lane.b32.xlu0 %v3017, 120
      %v3101 = vpop.permute.xlu0 %3100
      %3102 = vrot.lane.b32.xlu0 %v3018, 120
      %v3103 = vpop.permute.xlu0 %3102
      %3104 = vrot.lane.b32.xlu0 %v3019, 120
      %v3105 = vpop.permute.xlu0 %3104
      %3106 = vrot.lane.b32.xlu0 %v3020, 120
      %v3107 = vpop.permute.xlu0 %3106
      %3108 = vrot.lane.b32.xlu0 %v3021, 120
      %v3109 = vpop.permute.xlu0 %3108
      %3110 = vrot.lane.b32.xlu0 %v3022, 120
      %v3111 = vpop.permute.xlu0 %3110
      %3112 = vrot.lane.b32.xlu0 %v3023, 120
      %v3113 = vpop.permute.xlu0 %3112
      %3114 = vrot.lane.b32.xlu0 %v3024, 120
      %v3115 = vpop.permute.xlu0 %3114
      %3116 = vrot.lane.b32.xlu0 %v3025, 120
      %v3117 = vpop.permute.xlu0 %3116
      %3118 = vrot.lane.b32.xlu0 %v3026, 120
      %v3119 = vpop.permute.xlu0 %3118
      %3120 = vrot.lane.b32.xlu0 %v3027, 120
      %v3121 = vpop.permute.xlu0 %3120
      %3122 = vrot.lane.b32.xlu0 %v3028, 120
      %v3123 = vpop.permute.xlu0 %3122
      %3124 = vrot.lane.b32.xlu0 %v3029, 120
      %v3125 = vpop.permute.xlu0 %3124
      %3126 = vrot.lane.b32.xlu0 %v3030, 120
      %v3127 = vpop.permute.xlu0 %3126
      %3128 = vrot.lane.b32.xlu0 %v3031, 120
      %v3129 = vpop.permute.xlu0 %3128
      %3130 = vrot.lane.b32.xlu0 %v3032, 120
      %v3131 = vpop.permute.xlu0 %3130
      %3132 = vrot.lane.b32.xlu0 %v3033, 120
      %v3133 = vpop.permute.xlu0 %3132
      %3134 = vrot.lane.b32.xlu0 %v3034, 120
      %v3135 = vpop.permute.xlu0 %3134
      %3136 = vrot.lane.b32.xlu0 %v3035, 120
      %v3137 = vpop.permute.xlu0 %3136
      %3138 = vrot.lane.b32.xlu0 %v3036, 120
      %v3139 = vpop.permute.xlu0 %3138
      %3140 = vrot.lane.b32.xlu0 %v3037, 120
      %v3141 = vpop.permute.xlu0 %3140
      %3142 = vrot.lane.b32.xlu0 %v3038, 120
      %v3143 = vpop.permute.xlu0 %3142
      %3144 = vrot.lane.b32.xlu0 %v3039, 120
      %v3145 = vpop.permute.xlu0 %3144
      %3146 = vrot.lane.b32.xlu0 %v3040, 120
      %v3147 = vpop.permute.xlu0 %3146
      %3148 = vrot.lane.b32.xlu0 %v3041, 120
      %v3149 = vpop.permute.xlu0 %3148
      %3150 = vrot.lane.b32.xlu0 %v3042, 120
      %v3151 = vpop.permute.xlu0 %3150
      %3152 = vrot.lane.b32.xlu0 %v3043, 120
      %v3153 = vpop.permute.xlu0 %3152
      %3154 = vrot.lane.b32.xlu0 %v3044, 120
      %v3155 = vpop.permute.xlu0 %3154
      %3156 = vrot.lane.b32.xlu0 %v3045, 120
      %v3157 = vpop.permute.xlu0 %3156
      %3158 = vrot.lane.b32.xlu0 %v3046, 120
      %v3159 = vpop.permute.xlu0 %3158
      %3160 = vrot.lane.b32.xlu0 %v3047, 120
      %v3161 = vpop.permute.xlu0 %3160
      %vm3162 = vcmask 982016
      %v3163 = vsel %vm3162, %v3087, %v3089
      %v3164 = vsel %vm3162, %v3091, %v3093
      %v3165 = vsel %vm3162, %v3095, %v3097
      %v3166 = vsel %vm3162, %v3099, %v3101
      %v3167 = vsel %vm3162, %v3103, %v3105
      %v3168 = vsel %vm3162, %v3107, %v3109
      %v3169 = vsel %vm3162, %v3111, %v3113
      %v3170 = vsel %vm3162, %v3115, %v3117
      %v3171 = vsel %vm3162, %v3119, %v3121
      %v3172 = vsel %vm3162, %v3123, %v3125
      %v3173 = vsel %vm3162, %v3127, %v3129
      %v3174 = vsel %vm3162, %v3131, %v3133
      %v3175 = vsel %vm3162, %v3135, %v3137
      %v3176 = vsel %vm3162, %v3139, %v3141
      %v3177 = vsel %vm3162, %v3143, %v3145
      %v3178 = vsel %vm3162, %v3147, %v3149
      %v3179 = vsel %vm3162, %v3151, %v3153
      %v3180 = vsel %vm3162, %v3155, %v3157
      %v3181 = vsel %vm3162, %v3159, %v3161
      %3201 = vrot.lane.b32.xlu0 %v3010, 112
      %v3202 = vpop.permute.xlu0 %3201
      %3203 = vrot.lane.b32.xlu0 %v3012, 112
      %v3204 = vpop.permute.xlu0 %3203
      %3205 = vrot.lane.b32.xlu0 %v3014, 112
      %v3206 = vpop.permute.xlu0 %3205
      %3207 = vrot.lane.b32.xlu0 %v3016, 112
      %v3208 = vpop.permute.xlu0 %3207
      %3209 = vrot.lane.b32.xlu0 %v3018, 112
      %v3210 = vpop.permute.xlu0 %3209
      %3211 = vrot.lane.b32.xlu0 %v3020, 112
      %v3212 = vpop.permute.xlu0 %3211
      %3213 = vrot.lane.b32.xlu0 %v3022, 112
      %v3214 = vpop.permute.xlu0 %3213
      %3215 = vrot.lane.b32.xlu0 %v3024, 112
      %v3216 = vpop.permute.xlu0 %3215
      %3217 = vrot.lane.b32.xlu0 %v3026, 112
      %v3218 = vpop.permute.xlu0 %3217
      %3219 = vrot.lane.b32.xlu0 %v3028, 112
      %v3220 = vpop.permute.xlu0 %3219
      %3221 = vrot.lane.b32.xlu0 %v3030, 112
      %v3222 = vpop.permute.xlu0 %3221
      %3223 = vrot.lane.b32.xlu0 %v3032, 112
      %v3224 = vpop.permute.xlu0 %3223
      %3225 = vrot.lane.b32.xlu0 %v3034, 112
      %v3226 = vpop.permute.xlu0 %3225
      %3227 = vrot.lane.b32.xlu0 %v3036, 112
      %v3228 = vpop.permute.xlu0 %3227
      %3229 = vrot.lane.b32.xlu0 %v3038, 112
      %v3230 = vpop.permute.xlu0 %3229
      %3231 = vrot.lane.b32.xlu0 %v3040, 112
      %v3232 = vpop.permute.xlu0 %3231
      %3233 = vrot.lane.b32.xlu0 %v3042, 112
      %v3234 = vpop.permute.xlu0 %3233
      %3235 = vrot.lane.b32.xlu0 %v3044, 112
      %v3236 = vpop.permute.xlu0 %3235
      %3237 = vrot.lane.b32.xlu0 %v3046, 112
      %v3238 = vpop.permute.xlu0 %3237
      %vm3239 = vcmask 916480
      %v3242 = vsel %vm3239, %v3089, %v3202
      %v3246 = vsel %vm3239, %v3093, %v3204
      %v3250 = vsel %vm3239, %v3097, %v3206
      %v3254 = vsel %vm3239, %v3101, %v3208
      %v3258 = vsel %vm3239, %v3105, %v3210
      %v3262 = vsel %vm3239, %v3109, %v3212
      %v3266 = vsel %vm3239, %v3113, %v3214
      %v3270 = vsel %vm3239, %v3117, %v3216
      %v3274 = vsel %vm3239, %v3121, %v3218
      %v3278 = vsel %vm3239, %v3125, %v3220
      %v3282 = vsel %vm3239, %v3129, %v3222
      %v3286 = vsel %vm3239, %v3133, %v3224
      %v3290 = vsel %vm3239, %v3137, %v3226
      %v3294 = vsel %vm3239, %v3141, %v3228
      %v3298 = vsel %vm3239, %v3145, %v3230
      %v3302 = vsel %vm3239, %v3149, %v3232
      %v3306 = vsel %vm3239, %v3153, %v3234
      %v3310 = vsel %vm3239, %v3157, %v3236
      %v3314 = vsel %vm3239, %v3161, %v3238
      %v3316 = vmax.bf16 %v3010, %v3163
      %v3317 = vmax.bf16 %v3011, %v3242
      %v3318 = vmax.bf16 %v3012, %v3164
      %v3319 = vmax.bf16 %v3013, %v3246
      %v3320 = vmax.bf16 %v3014, %v3165
      %v3321 = vmax.bf16 %v3015, %v3250
      %v3322 = vmax.bf16 %v3016, %v3166
      %v3323 = vmax.bf16 %v3017, %v3254
      %v3324 = vmax.bf16 %v3018, %v3167
      %v3325 = vmax.bf16 %v3019, %v3258
      %v3326 = vmax.bf16 %v3020, %v3168
      %v3327 = vmax.bf16 %v3021, %v3262
      %v3328 = vmax.bf16 %v3022, %v3169
      %v3329 = vmax.bf16 %v3023, %v3266
      %v3330 = vmax.bf16 %v3024, %v3170
      %v3331 = vmax.bf16 %v3025, %v3270
      %v3332 = vmax.bf16 %v3026, %v3171
      %v3333 = vmax.bf16 %v3027, %v3274
      %v3334 = vmax.bf16 %v3028, %v3172
      %v3335 = vmax.bf16 %v3029, %v3278
      %v3336 = vmax.bf16 %v3030, %v3173
      %v3337 = vmax.bf16 %v3031, %v3282
      %v3338 = vmax.bf16 %v3032, %v3174
      %v3339 = vmax.bf16 %v3033, %v3286
      %v3340 = vmax.bf16 %v3034, %v3175
      %v3341 = vmax.bf16 %v3035, %v3290
      %v3342 = vmax.bf16 %v3036, %v3176
      %v3343 = vmax.bf16 %v3037, %v3294
      %v3344 = vmax.bf16 %v3038, %v3177
      %v3345 = vmax.bf16 %v3039, %v3298
      %v3346 = vmax.bf16 %v3040, %v3178
      %v3347 = vmax.bf16 %v3041, %v3302
      %v3348 = vmax.bf16 %v3042, %v3179
      %v3349 = vmax.bf16 %v3043, %v3306
      %v3350 = vmax.bf16 %v3044, %v3180
      %v3351 = vmax.bf16 %v3045, %v3310
      %v3352 = vmax.bf16 %v3046, %v3181
      %v3353 = vmax.bf16 %v3047, %v3314
      %v3355 = vshrl.u32 %v3316, 16
      %v3357 = vshll.u32 %v3316, 16
      %v3359 = vrot.slane %v3357, 1
      %v3360 = vor.u32 %v3355, %v3359
      %v3362 = vshll.u32 %v3318, 16
      %v3364 = vrot.slane %v3362, 1
      %v3365 = vsel %vm854, %v3360, %v3364
      %v3367 = vshrl.u32 %v3317, 16
      %v3369 = vshll.u32 %v3317, 16
      %v3371 = vrot.slane %v3369, 1
      %v3372 = vor.u32 %v3367, %v3371
      %v3374 = vshll.u32 %v3319, 16
      %v3376 = vrot.slane %v3374, 1
      %v3377 = vsel %vm854, %v3372, %v3376
      %v3378 = vshrl.u32 %v3318, 16
      %v3380 = vor.u32 %v3378, %v3364
      %v3382 = vshll.u32 %v3320, 16
      %v3384 = vrot.slane %v3382, 1
      %v3385 = vsel %vm854, %v3380, %v3384
      %v3386 = vshrl.u32 %v3319, 16
      %v3388 = vor.u32 %v3386, %v3376
      %v3390 = vshll.u32 %v3321, 16
      %v3392 = vrot.slane %v3390, 1
      %v3393 = vsel %vm854, %v3388, %v3392
      %v3394 = vshrl.u32 %v3320, 16
      %v3396 = vor.u32 %v3394, %v3384
      %v3398 = vshll.u32 %v3322, 16
      %v3400 = vrot.slane %v3398, 1
      %v3401 = vsel %vm854, %v3396, %v3400
      %v3402 = vshrl.u32 %v3321, 16
      %v3404 = vor.u32 %v3402, %v3392
      %v3406 = vshll.u32 %v3323, 16
      %v3408 = vrot.slane %v3406, 1
      %v3409 = vsel %vm854, %v3404, %v3408
      %v3410 = vshrl.u32 %v3322, 16
      %v3412 = vor.u32 %v3410, %v3400
      %v3414 = vshll.u32 %v3324, 16
      %v3416 = vrot.slane %v3414, 1
      %v3417 = vsel %vm854, %v3412, %v3416
      %v3418 = vshrl.u32 %v3323, 16
      %v3420 = vor.u32 %v3418, %v3408
      %v3422 = vshll.u32 %v3325, 16
      %v3424 = vrot.slane %v3422, 1
      %v3425 = vsel %vm854, %v3420, %v3424
      %v3426 = vshrl.u32 %v3324, 16
      %v3428 = vor.u32 %v3426, %v3416
      %v3430 = vshll.u32 %v3326, 16
      %v3432 = vrot.slane %v3430, 1
      %v3433 = vsel %vm854, %v3428, %v3432
      %v3434 = vshrl.u32 %v3325, 16
      %v3436 = vor.u32 %v3434, %v3424
      %v3438 = vshll.u32 %v3327, 16
      %v3440 = vrot.slane %v3438, 1
      %v3441 = vsel %vm854, %v3436, %v3440
      %v3442 = vshrl.u32 %v3326, 16
      %v3444 = vor.u32 %v3442, %v3432
      %v3446 = vshll.u32 %v3328, 16
      %v3448 = vrot.slane %v3446, 1
      %v3449 = vsel %vm854, %v3444, %v3448
      %v3450 = vshrl.u32 %v3327, 16
      %v3452 = vor.u32 %v3450, %v3440
      %v3454 = vshll.u32 %v3329, 16
      %v3456 = vrot.slane %v3454, 1
      %v3457 = vsel %vm854, %v3452, %v3456
      %v3458 = vshrl.u32 %v3328, 16
      %v3460 = vor.u32 %v3458, %v3448
      %v3462 = vshll.u32 %v3330, 16
      %v3464 = vrot.slane %v3462, 1
      %v3465 = vsel %vm854, %v3460, %v3464
      %v3466 = vshrl.u32 %v3329, 16
      %v3468 = vor.u32 %v3466, %v3456
      %v3470 = vshll.u32 %v3331, 16
      %v3472 = vrot.slane %v3470, 1
      %v3473 = vsel %vm854, %v3468, %v3472
      %v3474 = vshrl.u32 %v3330, 16
      %v3476 = vor.u32 %v3474, %v3464
      %v3478 = vshll.u32 %v3332, 16
      %v3480 = vrot.slane %v3478, 1
      %v3481 = vsel %vm854, %v3476, %v3480
      %v3482 = vshrl.u32 %v3331, 16
      %v3484 = vor.u32 %v3482, %v3472
      %v3486 = vshll.u32 %v3333, 16
      %v3488 = vrot.slane %v3486, 1
      %v3489 = vsel %vm854, %v3484, %v3488
      %v3490 = vshrl.u32 %v3332, 16
      %v3492 = vor.u32 %v3490, %v3480
      %v3494 = vshll.u32 %v3334, 16
      %v3496 = vrot.slane %v3494, 1
      %v3497 = vsel %vm854, %v3492, %v3496
      %v3498 = vshrl.u32 %v3333, 16
      %v3500 = vor.u32 %v3498, %v3488
      %v3502 = vshll.u32 %v3335, 16
      %v3504 = vrot.slane %v3502, 1
      %v3505 = vsel %vm854, %v3500, %v3504
      %v3506 = vshrl.u32 %v3334, 16
      %v3508 = vor.u32 %v3506, %v3496
      %v3510 = vshll.u32 %v3336, 16
      %v3512 = vrot.slane %v3510, 1
      %v3513 = vsel %vm854, %v3508, %v3512
      %v3514 = vshrl.u32 %v3335, 16
      %v3516 = vor.u32 %v3514, %v3504
      %v3518 = vshll.u32 %v3337, 16
      %v3520 = vrot.slane %v3518, 1
      %v3521 = vsel %vm854, %v3516, %v3520
      %v3522 = vshrl.u32 %v3336, 16
      %v3524 = vor.u32 %v3522, %v3512
      %v3526 = vshll.u32 %v3338, 16
      %v3528 = vrot.slane %v3526, 1
      %v3529 = vsel %vm854, %v3524, %v3528
      %v3530 = vshrl.u32 %v3337, 16
      %v3532 = vor.u32 %v3530, %v3520
      %v3534 = vshll.u32 %v3339, 16
      %v3536 = vrot.slane %v3534, 1
      %v3537 = vsel %vm854, %v3532, %v3536
      %v3538 = vshrl.u32 %v3338, 16
      %v3540 = vor.u32 %v3538, %v3528
      %v3542 = vshll.u32 %v3340, 16
      %v3544 = vrot.slane %v3542, 1
      %v3545 = vsel %vm854, %v3540, %v3544
      %v3546 = vshrl.u32 %v3339, 16
      %v3548 = vor.u32 %v3546, %v3536
      %v3550 = vshll.u32 %v3341, 16
      %v3552 = vrot.slane %v3550, 1
      %v3553 = vsel %vm854, %v3548, %v3552
      %v3554 = vshrl.u32 %v3340, 16
      %v3556 = vor.u32 %v3554, %v3544
      %v3558 = vshll.u32 %v3342, 16
      %v3560 = vrot.slane %v3558, 1
      %v3561 = vsel %vm854, %v3556, %v3560
      %v3562 = vshrl.u32 %v3341, 16
      %v3564 = vor.u32 %v3562, %v3552
      %v3566 = vshll.u32 %v3343, 16
      %v3568 = vrot.slane %v3566, 1
      %v3569 = vsel %vm854, %v3564, %v3568
      %v3570 = vshrl.u32 %v3342, 16
      %v3572 = vor.u32 %v3570, %v3560
      %v3574 = vshll.u32 %v3344, 16
      %v3576 = vrot.slane %v3574, 1
      %v3577 = vsel %vm854, %v3572, %v3576
      %v3578 = vshrl.u32 %v3343, 16
      %v3580 = vor.u32 %v3578, %v3568
      %v3582 = vshll.u32 %v3345, 16
      %v3584 = vrot.slane %v3582, 1
      %v3585 = vsel %vm854, %v3580, %v3584
      %v3586 = vshrl.u32 %v3344, 16
      %v3588 = vor.u32 %v3586, %v3576
      %v3590 = vshll.u32 %v3346, 16
      %v3592 = vrot.slane %v3590, 1
      %v3593 = vsel %vm854, %v3588, %v3592
      %v3594 = vshrl.u32 %v3345, 16
      %v3596 = vor.u32 %v3594, %v3584
      %v3598 = vshll.u32 %v3347, 16
      %v3600 = vrot.slane %v3598, 1
      %v3601 = vsel %vm854, %v3596, %v3600
      %v3602 = vshrl.u32 %v3346, 16
      %v3604 = vor.u32 %v3602, %v3592
      %v3606 = vshll.u32 %v3348, 16
      %v3608 = vrot.slane %v3606, 1
      %v3609 = vsel %vm854, %v3604, %v3608
      %v3610 = vshrl.u32 %v3347, 16
      %v3612 = vor.u32 %v3610, %v3600
      %v3614 = vshll.u32 %v3349, 16
      %v3616 = vrot.slane %v3614, 1
      %v3617 = vsel %vm854, %v3612, %v3616
      %v3618 = vshrl.u32 %v3348, 16
      %v3620 = vor.u32 %v3618, %v3608
      %v3622 = vshll.u32 %v3350, 16
      %v3624 = vrot.slane %v3622, 1
      %v3625 = vsel %vm854, %v3620, %v3624
      %v3626 = vshrl.u32 %v3349, 16
      %v3628 = vor.u32 %v3626, %v3616
      %v3630 = vshll.u32 %v3351, 16
      %v3632 = vrot.slane %v3630, 1
      %v3633 = vsel %vm854, %v3628, %v3632
      %v3634 = vshrl.u32 %v3350, 16
      %v3636 = vor.u32 %v3634, %v3624
      %v3638 = vshll.u32 %v3352, 16
      %v3640 = vrot.slane %v3638, 1
      %v3641 = vsel %vm854, %v3636, %v3640
      %v3642 = vshrl.u32 %v3351, 16
      %v3644 = vor.u32 %v3642, %v3632
      %v3646 = vshll.u32 %v3353, 16
      %v3648 = vrot.slane %v3646, 1
      %v3649 = vsel %vm854, %v3644, %v3648
      %v3650 = vshrl.u32 %v3352, 16
      %v3652 = vor.u32 %v3650, %v3640
      %v3653 = vshrl.u32 %v3353, 16
      %v3655 = vor.u32 %v3653, %v3648
      %v3694 = vmax.bf16 %v3316, %v3365
      %v3695 = vmax.bf16 %v3317, %v3377
      %v3696 = vmax.bf16 %v3318, %v3385
      %v3697 = vmax.bf16 %v3319, %v3393
      %v3698 = vmax.bf16 %v3320, %v3401
      %v3699 = vmax.bf16 %v3321, %v3409
      %v3700 = vmax.bf16 %v3322, %v3417
      %v3701 = vmax.bf16 %v3323, %v3425
      %v3702 = vmax.bf16 %v3324, %v3433
      %v3703 = vmax.bf16 %v3325, %v3441
      %v3704 = vmax.bf16 %v3326, %v3449
      %v3705 = vmax.bf16 %v3327, %v3457
      %v3706 = vmax.bf16 %v3328, %v3465
      %v3707 = vmax.bf16 %v3329, %v3473
      %v3708 = vmax.bf16 %v3330, %v3481
      %v3709 = vmax.bf16 %v3331, %v3489
      %v3710 = vmax.bf16 %v3332, %v3497
      %v3711 = vmax.bf16 %v3333, %v3505
      %v3712 = vmax.bf16 %v3334, %v3513
      %v3713 = vmax.bf16 %v3335, %v3521
      %v3714 = vmax.bf16 %v3336, %v3529
      %v3715 = vmax.bf16 %v3337, %v3537
      %v3716 = vmax.bf16 %v3338, %v3545
      %v3717 = vmax.bf16 %v3339, %v3553
      %v3718 = vmax.bf16 %v3340, %v3561
      %v3719 = vmax.bf16 %v3341, %v3569
      %v3720 = vmax.bf16 %v3342, %v3577
      %v3721 = vmax.bf16 %v3343, %v3585
      %v3722 = vmax.bf16 %v3344, %v3593
      %v3723 = vmax.bf16 %v3345, %v3601
      %v3724 = vmax.bf16 %v3346, %v3609
      %v3725 = vmax.bf16 %v3347, %v3617
      %v3726 = vmax.bf16 %v3348, %v3625
      %v3727 = vmax.bf16 %v3349, %v3633
      %v3728 = vmax.bf16 %v3350, %v3641
      %v3729 = vmax.bf16 %v3351, %v3649
      %v3730 = vmax.bf16 %v3352, %v3652
      %v3731 = vmax.bf16 %v3353, %v3655
      %v3732 = vunpack.c.l.bf16 %v3694
      %v3733 = vunpack.c.l.bf16 %v3695
      %v3734 = vunpack.c.h.bf16 %v3694
      %v3735 = vunpack.c.h.bf16 %v3695
      %v3736 = vunpack.c.l.bf16 %v3696
      %v3737 = vunpack.c.l.bf16 %v3697
      %v3738 = vunpack.c.h.bf16 %v3696
      %v3739 = vunpack.c.h.bf16 %v3697
      %v3740 = vunpack.c.l.bf16 %v3698
      %v3741 = vunpack.c.l.bf16 %v3699
      %v3742 = vunpack.c.h.bf16 %v3698
      %v3743 = vunpack.c.h.bf16 %v3699
      %v3744 = vunpack.c.l.bf16 %v3700
      %v3745 = vunpack.c.l.bf16 %v3701
      %v3746 = vunpack.c.h.bf16 %v3700
      %v3747 = vunpack.c.h.bf16 %v3701
      %v3748 = vunpack.c.l.bf16 %v3702
      %v3749 = vunpack.c.l.bf16 %v3703
      %v3750 = vunpack.c.h.bf16 %v3702
      %v3751 = vunpack.c.h.bf16 %v3703
      %v3752 = vunpack.c.l.bf16 %v3704
      %v3753 = vunpack.c.l.bf16 %v3705
      %v3754 = vunpack.c.h.bf16 %v3704
      %v3755 = vunpack.c.h.bf16 %v3705
      %v3756 = vunpack.c.l.bf16 %v3706
      %v3757 = vunpack.c.l.bf16 %v3707
      %v3758 = vunpack.c.h.bf16 %v3706
      %v3759 = vunpack.c.h.bf16 %v3707
      %v3760 = vunpack.c.l.bf16 %v3708
      %v3761 = vunpack.c.l.bf16 %v3709
      %v3762 = vunpack.c.h.bf16 %v3708
      %v3763 = vunpack.c.h.bf16 %v3709
      %v3764 = vunpack.c.l.bf16 %v3710
      %v3765 = vunpack.c.l.bf16 %v3711
      %v3766 = vunpack.c.h.bf16 %v3710
      %v3767 = vunpack.c.h.bf16 %v3711
      %v3768 = vunpack.c.l.bf16 %v3712
      %v3769 = vunpack.c.l.bf16 %v3713
      %v3770 = vunpack.c.h.bf16 %v3712
      %v3771 = vunpack.c.h.bf16 %v3713
      %v3772 = vunpack.c.l.bf16 %v3714
      %v3773 = vunpack.c.l.bf16 %v3715
      %v3774 = vunpack.c.h.bf16 %v3714
      %v3775 = vunpack.c.h.bf16 %v3715
      %v3776 = vunpack.c.l.bf16 %v3716
      %v3777 = vunpack.c.l.bf16 %v3717
      %v3778 = vunpack.c.h.bf16 %v3716
      %v3779 = vunpack.c.h.bf16 %v3717
      %v3780 = vunpack.c.l.bf16 %v3718
      %v3781 = vunpack.c.l.bf16 %v3719
      %v3782 = vunpack.c.h.bf16 %v3718
      %v3783 = vunpack.c.h.bf16 %v3719
      %v3784 = vunpack.c.l.bf16 %v3720
      %v3785 = vunpack.c.l.bf16 %v3721
      %v3786 = vunpack.c.h.bf16 %v3720
      %v3787 = vunpack.c.h.bf16 %v3721
      %v3788 = vunpack.c.l.bf16 %v3722
      %v3789 = vunpack.c.l.bf16 %v3723
      %v3790 = vunpack.c.h.bf16 %v3722
      %v3791 = vunpack.c.h.bf16 %v3723
      %v3792 = vunpack.c.l.bf16 %v3724
      %v3793 = vunpack.c.l.bf16 %v3725
      %v3794 = vunpack.c.h.bf16 %v3724
      %v3795 = vunpack.c.h.bf16 %v3725
      %v3796 = vunpack.c.l.bf16 %v3726
      %v3797 = vunpack.c.l.bf16 %v3727
      %v3798 = vunpack.c.h.bf16 %v3726
      %v3799 = vunpack.c.h.bf16 %v3727
      %v3800 = vunpack.c.l.bf16 %v3728
      %v3801 = vunpack.c.l.bf16 %v3729
      %v3802 = vunpack.c.h.bf16 %v3728
      %v3803 = vunpack.c.h.bf16 %v3729
      %v3804 = vunpack.c.l.bf16 %v3730
      %v3805 = vunpack.c.l.bf16 %v3731
      %v3806 = vld [vmem:[%s5] ss:$2 sm:$0x3]
      %v3808 = vlaneseq
      %v3809 = vshrl.u32 %v3808, 7
      %v3810 = vsub.s32 0, %v3809
      %v3811 = vrot.slane %v3806, %v3810
      %v3812 = vlaneseq
      %v3813 = vshrl.u32 %v3812, 7
      %v3814 = vsub.s32 1, %v3813
      %v3815 = vrot.slane %v3806, %v3814
      %v3818 = vmul.f32 %v3732, %v3811
      %v3819 = vmul.f32 %v3733, %v3815
      %v3820 = vmul.f32 %v3734, %v3811
      %v3821 = vmul.f32 %v3735, %v3815
      %v3822 = vmul.f32 %v3736, %v3811
      %v3823 = vmul.f32 %v3737, %v3815
      %v3824 = vmul.f32 %v3738, %v3811
      %v3825 = vmul.f32 %v3739, %v3815
      %v3826 = vmul.f32 %v3740, %v3811
      %v3827 = vmul.f32 %v3741, %v3815
      %v3828 = vmul.f32 %v3742, %v3811
      %v3829 = vmul.f32 %v3743, %v3815
      %v3830 = vmul.f32 %v3744, %v3811
      %v3831 = vmul.f32 %v3745, %v3815
      %v3832 = vmul.f32 %v3746, %v3811
      %v3833 = vmul.f32 %v3747, %v3815
      %v3834 = vmul.f32 %v3748, %v3811
      %v3835 = vmul.f32 %v3749, %v3815
      %v3836 = vmul.f32 %v3750, %v3811
      %v3837 = vmul.f32 %v3751, %v3815
      %v3838 = vmul.f32 %v3752, %v3811
      %v3839 = vmul.f32 %v3753, %v3815
      %v3840 = vmul.f32 %v3754, %v3811
      %v3841 = vmul.f32 %v3755, %v3815
      %v3842 = vmul.f32 %v3756, %v3811
      %v3843 = vmul.f32 %v3757, %v3815
      %v3844 = vmul.f32 %v3758, %v3811
      %v3845 = vmul.f32 %v3759, %v3815
      %v3846 = vmul.f32 %v3760, %v3811
      %v3847 = vmul.f32 %v3761, %v3815
      %v3848 = vmul.f32 %v3762, %v3811
      %v3849 = vmul.f32 %v3763, %v3815
      %v3850 = vmul.f32 %v3764, %v3811
      %v3851 = vmul.f32 %v3765, %v3815
      %v3852 = vmul.f32 %v3766, %v3811
      %v3853 = vmul.f32 %v3767, %v3815
      %v3854 = vmul.f32 %v3768, %v3811
      %v3855 = vmul.f32 %v3769, %v3815
      %v3856 = vmul.f32 %v3770, %v3811
      %v3857 = vmul.f32 %v3771, %v3815
      %v3858 = vmul.f32 %v3772, %v3811
      %v3859 = vmul.f32 %v3773, %v3815
      %v3860 = vmul.f32 %v3774, %v3811
      %v3861 = vmul.f32 %v3775, %v3815
      %v3862 = vmul.f32 %v3776, %v3811
      %v3863 = vmul.f32 %v3777, %v3815
      %v3864 = vmul.f32 %v3778, %v3811
      %v3865 = vmul.f32 %v3779, %v3815
      %v3866 = vmul.f32 %v3780, %v3811
      %v3867 = vmul.f32 %v3781, %v3815
      %v3868 = vmul.f32 %v3782, %v3811
      %v3869 = vmul.f32 %v3783, %v3815
      %v3870 = vmul.f32 %v3784, %v3811
      %v3871 = vmul.f32 %v3785, %v3815
      %v3872 = vmul.f32 %v3786, %v3811
      %v3873 = vmul.f32 %v3787, %v3815
      %v3874 = vmul.f32 %v3788, %v3811
      %v3875 = vmul.f32 %v3789, %v3815
      %v3876 = vmul.f32 %v3790, %v3811
      %v3877 = vmul.f32 %v3791, %v3815
      %v3878 = vmul.f32 %v3792, %v3811
      %v3879 = vmul.f32 %v3793, %v3815
      %v3880 = vmul.f32 %v3794, %v3811
      %v3881 = vmul.f32 %v3795, %v3815
      %v3882 = vmul.f32 %v3796, %v3811
      %v3883 = vmul.f32 %v3797, %v3815
      %v3884 = vmul.f32 %v3798, %v3811
      %v3885 = vmul.f32 %v3799, %v3815
      %v3886 = vmul.f32 %v3800, %v3811
      %v3887 = vmul.f32 %v3801, %v3815
      %v3888 = vmul.f32 %v3802, %v3811
      %v3889 = vmul.f32 %v3803, %v3815
      %v3890 = vmul.f32 %v3804, %v3811
      %v3891 = vmul.f32 %v3805, %v3815
      %s3892 = scalar_lea.vmem %s5, 1
      %v3893 = vld [vmem:[%s3892] ss:$2 sm:$0x3]
      %v3895 = vlaneseq
      %v3896 = vshrl.u32 %v3895, 7
      %v3897 = vsub.s32 0, %v3896
      %v3898 = vrot.slane %v3893, %v3897
      %v3899 = vlaneseq
      %v3900 = vshrl.u32 %v3899, 7
      %v3901 = vsub.s32 1, %v3900
      %v3902 = vrot.slane %v3893, %v3901
      %v3905 = vadd.f32 %v3818, %v3898
      %v3906 = vadd.f32 %v3819, %v3902
      %v3907 = vadd.f32 %v3820, %v3898
      %v3908 = vadd.f32 %v3821, %v3902
      %v3909 = vadd.f32 %v3822, %v3898
      %v3910 = vadd.f32 %v3823, %v3902
      %v3911 = vadd.f32 %v3824, %v3898
      %v3912 = vadd.f32 %v3825, %v3902
      %v3913 = vadd.f32 %v3826, %v3898
      %v3914 = vadd.f32 %v3827, %v3902
      %v3915 = vadd.f32 %v3828, %v3898
      %v3916 = vadd.f32 %v3829, %v3902
      %v3917 = vadd.f32 %v3830, %v3898
      %v3918 = vadd.f32 %v3831, %v3902
      %v3919 = vadd.f32 %v3832, %v3898
      %v3920 = vadd.f32 %v3833, %v3902
      %v3921 = vadd.f32 %v3834, %v3898
      %v3922 = vadd.f32 %v3835, %v3902
      %v3923 = vadd.f32 %v3836, %v3898
      %v3924 = vadd.f32 %v3837, %v3902
      %v3925 = vadd.f32 %v3838, %v3898
      %v3926 = vadd.f32 %v3839, %v3902
      %v3927 = vadd.f32 %v3840, %v3898
      %v3928 = vadd.f32 %v3841, %v3902
      %v3929 = vadd.f32 %v3842, %v3898
      %v3930 = vadd.f32 %v3843, %v3902
      %v3931 = vadd.f32 %v3844, %v3898
      %v3932 = vadd.f32 %v3845, %v3902
      %v3933 = vadd.f32 %v3846, %v3898
      %v3934 = vadd.f32 %v3847, %v3902
      %v3935 = vadd.f32 %v3848, %v3898
      %v3936 = vadd.f32 %v3849, %v3902
      %v3937 = vadd.f32 %v3850, %v3898
      %v3938 = vadd.f32 %v3851, %v3902
      %v3939 = vadd.f32 %v3852, %v3898
      %v3940 = vadd.f32 %v3853, %v3902
      %v3941 = vadd.f32 %v3854, %v3898
      %v3942 = vadd.f32 %v3855, %v3902
      %v3943 = vadd.f32 %v3856, %v3898
      %v3944 = vadd.f32 %v3857, %v3902
      %v3945 = vadd.f32 %v3858, %v3898
      %v3946 = vadd.f32 %v3859, %v3902
      %v3947 = vadd.f32 %v3860, %v3898
      %v3948 = vadd.f32 %v3861, %v3902
      %v3949 = vadd.f32 %v3862, %v3898
      %v3950 = vadd.f32 %v3863, %v3902
      %v3951 = vadd.f32 %v3864, %v3898
      %v3952 = vadd.f32 %v3865, %v3902
      %v3953 = vadd.f32 %v3866, %v3898
      %v3954 = vadd.f32 %v3867, %v3902
      %v3955 = vadd.f32 %v3868, %v3898
      %v3956 = vadd.f32 %v3869, %v3902
      %v3957 = vadd.f32 %v3870, %v3898
      %v3958 = vadd.f32 %v3871, %v3902
      %v3959 = vadd.f32 %v3872, %v3898
      %v3960 = vadd.f32 %v3873, %v3902
      %v3961 = vadd.f32 %v3874, %v3898
      %v3962 = vadd.f32 %v3875, %v3902
      %v3963 = vadd.f32 %v3876, %v3898
      %v3964 = vadd.f32 %v3877, %v3902
      %v3965 = vadd.f32 %v3878, %v3898
      %v3966 = vadd.f32 %v3879, %v3902
      %v3967 = vadd.f32 %v3880, %v3898
      %v3968 = vadd.f32 %v3881, %v3902
      %v3969 = vadd.f32 %v3882, %v3898
      %v3970 = vadd.f32 %v3883, %v3902
      %v3971 = vadd.f32 %v3884, %v3898
      %v3972 = vadd.f32 %v3885, %v3902
      %v3973 = vadd.f32 %v3886, %v3898
      %v3974 = vadd.f32 %v3887, %v3902
      %v3975 = vadd.f32 %v3888, %v3898
      %v3976 = vadd.f32 %v3889, %v3902
      %v3977 = vadd.f32 %v3890, %v3898
      %v3978 = vadd.f32 %v3891, %v3902
      %v3979 = vmax.f32 %v3905, 0.0
      %v3980 = vmax.f32 %v3906, 0.0
      %v3981 = vmax.f32 %v3907, 0.0
      %v3982 = vmax.f32 %v3908, 0.0
      %v3983 = vmax.f32 %v3909, 0.0
      %v3984 = vmax.f32 %v3910, 0.0
      %v3985 = vmax.f32 %v3911, 0.0
      %v3986 = vmax.f32 %v3912, 0.0
      %v3987 = vmax.f32 %v3913, 0.0
      %v3988 = vmax.f32 %v3914, 0.0
      %v3989 = vmax.f32 %v3915, 0.0
      %v3990 = vmax.f32 %v3916, 0.0
      %v3991 = vmax.f32 %v3917, 0.0
      %v3992 = vmax.f32 %v3918, 0.0
      %v3993 = vmax.f32 %v3919, 0.0
      %v3994 = vmax.f32 %v3920, 0.0
      %v3995 = vmax.f32 %v3921, 0.0
      %v3996 = vmax.f32 %v3922, 0.0
      %v3997 = vmax.f32 %v3923, 0.0
      %v3998 = vmax.f32 %v3924, 0.0
      %v3999 = vmax.f32 %v3925, 0.0
      %v4000 = vmax.f32 %v3926, 0.0
      %v4001 = vmax.f32 %v3927, 0.0
      %v4002 = vmax.f32 %v3928, 0.0
      %v4003 = vmax.f32 %v3929, 0.0
      %v4004 = vmax.f32 %v3930, 0.0
      %v4005 = vmax.f32 %v3931, 0.0
      %v4006 = vmax.f32 %v3932, 0.0
      %v4007 = vmax.f32 %v3933, 0.0
      %v4008 = vmax.f32 %v3934, 0.0
      %v4009 = vmax.f32 %v3935, 0.0
      %v4010 = vmax.f32 %v3936, 0.0
      %v4011 = vmax.f32 %v3937, 0.0
      %v4012 = vmax.f32 %v3938, 0.0
      %v4013 = vmax.f32 %v3939, 0.0
      %v4014 = vmax.f32 %v3940, 0.0
      %v4015 = vmax.f32 %v3941, 0.0
      %v4016 = vmax.f32 %v3942, 0.0
      %v4017 = vmax.f32 %v3943, 0.0
      %v4018 = vmax.f32 %v3944, 0.0
      %v4019 = vmax.f32 %v3945, 0.0
      %v4020 = vmax.f32 %v3946, 0.0
      %v4021 = vmax.f32 %v3947, 0.0
      %v4022 = vmax.f32 %v3948, 0.0
      %v4023 = vmax.f32 %v3949, 0.0
      %v4024 = vmax.f32 %v3950, 0.0
      %v4025 = vmax.f32 %v3951, 0.0
      %v4026 = vmax.f32 %v3952, 0.0
      %v4027 = vmax.f32 %v3953, 0.0
      %v4028 = vmax.f32 %v3954, 0.0
      %v4029 = vmax.f32 %v3955, 0.0
      %v4030 = vmax.f32 %v3956, 0.0
      %v4031 = vmax.f32 %v3957, 0.0
      %v4032 = vmax.f32 %v3958, 0.0
      %v4033 = vmax.f32 %v3959, 0.0
      %v4034 = vmax.f32 %v3960, 0.0
      %v4035 = vmax.f32 %v3961, 0.0
      %v4036 = vmax.f32 %v3962, 0.0
      %v4037 = vmax.f32 %v3963, 0.0
      %v4038 = vmax.f32 %v3964, 0.0
      %v4039 = vmax.f32 %v3965, 0.0
      %v4040 = vmax.f32 %v3966, 0.0
      %v4041 = vmax.f32 %v3967, 0.0
      %v4042 = vmax.f32 %v3968, 0.0
      %v4043 = vmax.f32 %v3969, 0.0
      %v4044 = vmax.f32 %v3970, 0.0
      %v4045 = vmax.f32 %v3971, 0.0
      %v4046 = vmax.f32 %v3972, 0.0
      %v4047 = vmax.f32 %v3973, 0.0
      %v4048 = vmax.f32 %v3974, 0.0
      %v4049 = vmax.f32 %v3975, 0.0
      %v4050 = vmax.f32 %v3976, 0.0
      %v4051 = vmax.f32 %v3977, 0.0
      %v4052 = vmax.f32 %v3978, 0.0
      %v4053 = vpack.c.bf16 %v3981, %v3979
      %v4054 = vpack.c.bf16 %v3982, %v3980
      %v4055 = vpack.c.bf16 %v3985, %v3983
      %v4056 = vpack.c.bf16 %v3986, %v3984
      %v4057 = vpack.c.bf16 %v3989, %v3987
      %v4058 = vpack.c.bf16 %v3990, %v3988
      %v4059 = vpack.c.bf16 %v3993, %v3991
      %v4060 = vpack.c.bf16 %v3994, %v3992
      %v4061 = vpack.c.bf16 %v3997, %v3995
      %v4062 = vpack.c.bf16 %v3998, %v3996
      %v4063 = vpack.c.bf16 %v4001, %v3999
      %v4064 = vpack.c.bf16 %v4002, %v4000
      %v4065 = vpack.c.bf16 %v4005, %v4003
      %v4066 = vpack.c.bf16 %v4006, %v4004
      %v4067 = vpack.c.bf16 %v4009, %v4007
      %v4068 = vpack.c.bf16 %v4010, %v4008
      %v4069 = vpack.c.bf16 %v4013, %v4011
      %v4070 = vpack.c.bf16 %v4014, %v4012
      %v4071 = vpack.c.bf16 %v4017, %v4015
      %v4072 = vpack.c.bf16 %v4018, %v4016
      %v4073 = vpack.c.bf16 %v4021, %v4019
      %v4074 = vpack.c.bf16 %v4022, %v4020
      %v4075 = vpack.c.bf16 %v4025, %v4023
      %v4076 = vpack.c.bf16 %v4026, %v4024
      %v4077 = vpack.c.bf16 %v4029, %v4027
      %v4078 = vpack.c.bf16 %v4030, %v4028
      %v4079 = vpack.c.bf16 %v4033, %v4031
      %v4080 = vpack.c.bf16 %v4034, %v4032
      %v4081 = vpack.c.bf16 %v4037, %v4035
      %v4082 = vpack.c.bf16 %v4038, %v4036
      %v4083 = vpack.c.bf16 %v4041, %v4039
      %v4084 = vpack.c.bf16 %v4042, %v4040
      %v4085 = vpack.c.bf16 %v4045, %v4043
      %v4086 = vpack.c.bf16 %v4046, %v4044
      %v4087 = vpack.c.bf16 %v4049, %v4047
      %v4088 = vpack.c.bf16 %v4050, %v4048
      %v4089 = vpack.c.bf16 %v4051, %v4051
      %v4090 = vpack.c.bf16 %v4052, %v4052
      %v4129 = vrot.slane %v4053, 1
      %v4130 = vrot.slane %v4055, 1
      %v4131 = vsel %vm1044, %v4129, %v4130
      %v4132 = vrot.slane %v4054, 1
      %v4133 = vrot.slane %v4056, 1
      %v4134 = vsel %vm1044, %v4132, %v4133
      %v4135 = vrot.slane %v4057, 1
      %v4136 = vsel %vm1044, %v4130, %v4135
      %v4137 = vrot.slane %v4058, 1
      %v4138 = vsel %vm1044, %v4133, %v4137
      %v4139 = vrot.slane %v4059, 1
      %v4140 = vsel %vm1044, %v4135, %v4139
      %v4141 = vrot.slane %v4060, 1
      %v4142 = vsel %vm1044, %v4137, %v4141
      %v4143 = vrot.slane %v4061, 1
      %v4144 = vsel %vm1044, %v4139, %v4143
      %v4145 = vrot.slane %v4062, 1
      %v4146 = vsel %vm1044, %v4141, %v4145
      %v4147 = vrot.slane %v4063, 1
      %v4148 = vsel %vm1044, %v4143, %v4147
      %v4149 = vrot.slane %v4064, 1
      %v4150 = vsel %vm1044, %v4145, %v4149
      %v4151 = vrot.slane %v4065, 1
      %v4152 = vsel %vm1044, %v4147, %v4151
      %v4153 = vrot.slane %v4066, 1
      %v4154 = vsel %vm1044, %v4149, %v4153
      %v4155 = vrot.slane %v4067, 1
      %v4156 = vsel %vm1044, %v4151, %v4155
      %v4157 = vrot.slane %v4068, 1
      %v4158 = vsel %vm1044, %v4153, %v4157
      %v4159 = vrot.slane %v4069, 1
      %v4160 = vsel %vm1044, %v4155, %v4159
      %v4161 = vrot.slane %v4070, 1
      %v4162 = vsel %vm1044, %v4157, %v4161
      %v4163 = vrot.slane %v4071, 1
      %v4164 = vsel %vm1044, %v4159, %v4163
      %v4165 = vrot.slane %v4072, 1
      %v4166 = vsel %vm1044, %v4161, %v4165
      %v4167 = vrot.slane %v4073, 1
      %v4168 = vsel %vm1044, %v4163, %v4167
      %v4169 = vrot.slane %v4074, 1
      %v4170 = vsel %vm1044, %v4165, %v4169
      %v4171 = vrot.slane %v4075, 1
      %v4172 = vsel %vm1044, %v4167, %v4171
      %v4173 = vrot.slane %v4076, 1
      %v4174 = vsel %vm1044, %v4169, %v4173
      %v4175 = vrot.slane %v4077, 1
      %v4176 = vsel %vm1044, %v4171, %v4175
      %v4177 = vrot.slane %v4078, 1
      %v4178 = vsel %vm1044, %v4173, %v4177
      %v4179 = vrot.slane %v4079, 1
      %v4180 = vsel %vm1044, %v4175, %v4179
      %v4181 = vrot.slane %v4080, 1
      %v4182 = vsel %vm1044, %v4177, %v4181
      %v4183 = vrot.slane %v4081, 1
      %v4184 = vsel %vm1044, %v4179, %v4183
      %v4185 = vrot.slane %v4082, 1
      %v4186 = vsel %vm1044, %v4181, %v4185
      %v4187 = vrot.slane %v4083, 1
      %v4188 = vsel %vm1044, %v4183, %v4187
      %v4189 = vrot.slane %v4084, 1
      %v4190 = vsel %vm1044, %v4185, %v4189
      %v4191 = vrot.slane %v4085, 1
      %v4192 = vsel %vm1044, %v4187, %v4191
      %v4193 = vrot.slane %v4086, 1
      %v4194 = vsel %vm1044, %v4189, %v4193
      %v4195 = vrot.slane %v4087, 1
      %v4196 = vsel %vm1044, %v4191, %v4195
      %v4197 = vrot.slane %v4088, 1
      %v4198 = vsel %vm1044, %v4193, %v4197
      %v4199 = vrot.slane %v4089, 1
      %v4200 = vsel %vm1044, %v4195, %v4199
      %v4201 = vrot.slane %v4090, 1
      %v4202 = vsel %vm1044, %v4197, %v4201
      %4203 = vrot.lane.b32.xlu0 %v4131, 120
      %v4204 = vpop.permute.xlu0 %4203
      %4205 = vrot.lane.b32.xlu0 %v4134, 120
      %v4206 = vpop.permute.xlu0 %4205
      %4207 = vrot.lane.b32.xlu0 %v4136, 120
      %v4208 = vpop.permute.xlu0 %4207
      %4209 = vrot.lane.b32.xlu0 %v4138, 120
      %v4210 = vpop.permute.xlu0 %4209
      %4211 = vrot.lane.b32.xlu0 %v4140, 120
      %v4212 = vpop.permute.xlu0 %4211
      %4213 = vrot.lane.b32.xlu0 %v4142, 120
      %v4214 = vpop.permute.xlu0 %4213
      %4215 = vrot.lane.b32.xlu0 %v4144, 120
      %v4216 = vpop.permute.xlu0 %4215
      %4217 = vrot.lane.b32.xlu0 %v4146, 120
      %v4218 = vpop.permute.xlu0 %4217
      %4219 = vrot.lane.b32.xlu0 %v4148, 120
      %v4220 = vpop.permute.xlu0 %4219
      %4221 = vrot.lane.b32.xlu0 %v4150, 120
      %v4222 = vpop.permute.xlu0 %4221
      %4223 = vrot.lane.b32.xlu0 %v4152, 120
      %v4224 = vpop.permute.xlu0 %4223
      %4225 = vrot.lane.b32.xlu0 %v4154, 120
      %v4226 = vpop.permute.xlu0 %4225
      %4227 = vrot.lane.b32.xlu0 %v4156, 120
      %v4228 = vpop.permute.xlu0 %4227
      %4229 = vrot.lane.b32.xlu0 %v4158, 120
      %v4230 = vpop.permute.xlu0 %4229
      %4231 = vrot.lane.b32.xlu0 %v4160, 120
      %v4232 = vpop.permute.xlu0 %4231
      %4233 = vrot.lane.b32.xlu0 %v4162, 120
      %v4234 = vpop.permute.xlu0 %4233
      %4235 = vrot.lane.b32.xlu0 %v4164, 120
      %v4236 = vpop.permute.xlu0 %4235
      %4237 = vrot.lane.b32.xlu0 %v4166, 120
      %v4238 = vpop.permute.xlu0 %4237
      %4239 = vrot.lane.b32.xlu0 %v4168, 120
      %v4240 = vpop.permute.xlu0 %4239
      %4241 = vrot.lane.b32.xlu0 %v4170, 120
      %v4242 = vpop.permute.xlu0 %4241
      %4243 = vrot.lane.b32.xlu0 %v4172, 120
      %v4244 = vpop.permute.xlu0 %4243
      %4245 = vrot.lane.b32.xlu0 %v4174, 120
      %v4246 = vpop.permute.xlu0 %4245
      %4247 = vrot.lane.b32.xlu0 %v4176, 120
      %v4248 = vpop.permute.xlu0 %4247
      %4249 = vrot.lane.b32.xlu0 %v4178, 120
      %v4250 = vpop.permute.xlu0 %4249
      %4251 = vrot.lane.b32.xlu0 %v4180, 120
      %v4252 = vpop.permute.xlu0 %4251
      %4253 = vrot.lane.b32.xlu0 %v4182, 120
      %v4254 = vpop.permute.xlu0 %4253
      %4255 = vrot.lane.b32.xlu0 %v4184, 120
      %v4256 = vpop.permute.xlu0 %4255
      %4257 = vrot.lane.b32.xlu0 %v4186, 120
      %v4258 = vpop.permute.xlu0 %4257
      %4259 = vrot.lane.b32.xlu0 %v4188, 120
      %v4260 = vpop.permute.xlu0 %4259
      %4261 = vrot.lane.b32.xlu0 %v4190, 120
      %v4262 = vpop.permute.xlu0 %4261
      %4263 = vrot.lane.b32.xlu0 %v4192, 120
      %v4264 = vpop.permute.xlu0 %4263
      %4265 = vrot.lane.b32.xlu0 %v4194, 120
      %v4266 = vpop.permute.xlu0 %4265
      %4267 = vrot.lane.b32.xlu0 %v4196, 120
      %v4268 = vpop.permute.xlu0 %4267
      %4269 = vrot.lane.b32.xlu0 %v4198, 120
      %v4270 = vpop.permute.xlu0 %4269
      %4271 = vrot.lane.b32.xlu0 %v4200, 120
      %v4272 = vpop.permute.xlu0 %4271
      %4273 = vrot.lane.b32.xlu0 %v4202, 120
      %v4274 = vpop.permute.xlu0 %4273
      %4275 = vrot.lane.b32.xlu0 %v4199, 120
      %v4276 = vpop.permute.xlu0 %4275
      %4277 = vrot.lane.b32.xlu0 %v4201, 120
      %v4278 = vpop.permute.xlu0 %4277
      %v4279 = vsel %vm3162, %v4204, %v4206
      %v4280 = vsel %vm3162, %v4208, %v4210
      %v4281 = vsel %vm3162, %v4212, %v4214
      %v4282 = vsel %vm3162, %v4216, %v4218
      %v4283 = vsel %vm3162, %v4220, %v4222
      %v4284 = vsel %vm3162, %v4224, %v4226
      %v4285 = vsel %vm3162, %v4228, %v4230
      %v4286 = vsel %vm3162, %v4232, %v4234
      %v4287 = vsel %vm3162, %v4236, %v4238
      %v4288 = vsel %vm3162, %v4240, %v4242
      %v4289 = vsel %vm3162, %v4244, %v4246
      %v4290 = vsel %vm3162, %v4248, %v4250
      %v4291 = vsel %vm3162, %v4252, %v4254
      %v4292 = vsel %vm3162, %v4256, %v4258
      %v4293 = vsel %vm3162, %v4260, %v4262
      %v4294 = vsel %vm3162, %v4264, %v4266
      %v4295 = vsel %vm3162, %v4268, %v4270
      %v4296 = vsel %vm3162, %v4272, %v4274
      %v4297 = vsel %vm3162, %v4276, %v4278
      %vm4317 = vcmask 982016
      %v4320 = vsel %vm4317, %v4054, %v4204
      %v4324 = vsel %vm4317, %v4056, %v4208
      %v4328 = vsel %vm4317, %v4058, %v4212
      %v4332 = vsel %vm4317, %v4060, %v4216
      %v4336 = vsel %vm4317, %v4062, %v4220
      %v4340 = vsel %vm4317, %v4064, %v4224
      %v4344 = vsel %vm4317, %v4066, %v4228
      %v4348 = vsel %vm4317, %v4068, %v4232
      %v4352 = vsel %vm4317, %v4070, %v4236
      %v4356 = vsel %vm4317, %v4072, %v4240
      %v4360 = vsel %vm4317, %v4074, %v4244
      %v4364 = vsel %vm4317, %v4076, %v4248
      %v4368 = vsel %vm4317, %v4078, %v4252
      %v4372 = vsel %vm4317, %v4080, %v4256
      %v4376 = vsel %vm4317, %v4082, %v4260
      %v4380 = vsel %vm4317, %v4084, %v4264
      %v4384 = vsel %vm4317, %v4086, %v4268
      %v4388 = vsel %vm4317, %v4088, %v4272
      %v4392 = vsel %vm4317, %v4090, %v4276
      %v4394 = vld [vmem:[%s6] sm:$0xf]
      %v4395 = vld [vmem:[%s6 + $0x4] sm:$0xf]
      %v4396 = vld [vmem:[%s6 + $0x8] sm:$0xf]
      %v4397 = vld [vmem:[%s6 + $0xc] sm:$0xf]
      %v4398 = vld [vmem:[%s6 + $0x10] sm:$0xf]
      %v4399 = vld [vmem:[%s6 + $0x14] sm:$0xf]
      %v4400 = vld [vmem:[%s6 + $0x18] sm:$0xf]
      %v4401 = vld [vmem:[%s6 + $0x1c] sm:$0xf]
      %v4402 = vld [vmem:[%s6 + $0x20] sm:$0xf]
      %v4403 = vld [vmem:[%s6 + $0x24] sm:$0xf]
      %v4404 = vld [vmem:[%s6 + $0x28] sm:$0xf]
      %v4405 = vld [vmem:[%s6 + $0x2c] sm:$0xf]
      %v4406 = vld [vmem:[%s6 + $0x30] sm:$0xf]
      %v4407 = vld [vmem:[%s6 + $0x34] sm:$0xf]
      %v4408 = vld [vmem:[%s6 + $0x38] sm:$0xf]
      %v4409 = vld [vmem:[%s6 + $0x3c] sm:$0xf]
      %v4410 = vld [vmem:[%s6 + $0x40] sm:$0xf]
      %v4411 = vld [vmem:[%s6 + $0x44] sm:$0xf]
      %v4412 = vld [vmem:[%s6 + $0x48] sm:$0xf]
      %v4413 = vld [vmem:[%s6 + $0x4c] sm:$0xf]
      %v4414 = vld [vmem:[%s6 + $0x50] sm:$0xf]
      %v4415 = vld [vmem:[%s6 + $0x54] sm:$0xf]
      %v4416 = vld [vmem:[%s6 + $0x58] sm:$0xf]
      %v4417 = vld [vmem:[%s6 + $0x5c] sm:$0xf]
      %v4418 = vld [vmem:[%s6 + $0x60] sm:$0xf]
      %v4419 = vld [vmem:[%s6 + $0x64] sm:$0xf]
      %v4420 = vld [vmem:[%s6 + $0x68] sm:$0xf]
      %v4421 = vld [vmem:[%s6 + $0x6c] sm:$0xf]
      %v4422 = vld [vmem:[%s6 + $0x70] sm:$0xf]
      %v4423 = vld [vmem:[%s6 + $0x74] sm:$0xf]
      %v4424 = vld [vmem:[%s6 + $0x78] sm:$0xf]
      %v4425 = vld [vmem:[%s6 + $0x7c] sm:$0xf]
      %v4426 = vld [vmem:[%s6 + $0x80] sm:$0xf]
      %v4427 = vld [vmem:[%s6 + $0x84] sm:$0xf]
      %v4428 = vld [vmem:[%s6 + $0x88] sm:$0xf]
      %v4429 = vld [vmem:[%s6 + $0x8c] sm:$0xf]
      %v4430 = vld [vmem:[%s6 + $0x90] sm:$0xf]
      %v4431 = vld [vmem:[%s6 + $0x94] sm:$0xf]
      %v4432 = vld [vmem:[%s6 + $0x98] sm:$0xf]
      %v4433 = vld [vmem:[%s6 + $0x9c] sm:$0xf]
      %v4434 = vld [vmem:[%s6 + $0xa0] sm:$0xf]
      %v4435 = vld [vmem:[%s6 + $0xa4] sm:$0xf]
      %v4436 = vld [vmem:[%s6 + $0xa8] sm:$0xf]
      %v4437 = vld [vmem:[%s6 + $0xac] sm:$0xf]
      %v4438 = vld [vmem:[%s6 + $0xb0] sm:$0xf]
      %v4439 = vld [vmem:[%s6 + $0xb4] sm:$0xf]
      %v4440 = vld [vmem:[%s6 + $0xb8] sm:$0xf]
      %v4441 = vld [vmem:[%s6 + $0xbc] sm:$0xf]
      %v4442 = vld [vmem:[%s6 + $0xc0] sm:$0xf]
      %v4443 = vld [vmem:[%s6 + $0xc4] sm:$0xf]
      %v4444 = vld [vmem:[%s6 + $0xc8] sm:$0xf]
      %v4445 = vld [vmem:[%s6 + $0xcc] sm:$0xf]
      %v4446 = vld [vmem:[%s6 + $0xd0] sm:$0xf]
      %v4447 = vld [vmem:[%s6 + $0xd4] sm:$0xf]
      %v4448 = vld [vmem:[%s6 + $0xd8] sm:$0xf]
      %v4449 = vld [vmem:[%s6 + $0xdc] sm:$0xf]
      %v4450 = vld [vmem:[%s6 + $0xe0] sm:$0xf]
      %v4451 = vld [vmem:[%s6 + $0xe4] sm:$0xf]
      %v4452 = vld [vmem:[%s6 + $0xe8] sm:$0xf]
      %v4453 = vld [vmem:[%s6 + $0xec] sm:$0xf]
      %v4454 = vld [vmem:[%s6 + $0xf0] sm:$0xf]
      %v4455 = vld [vmem:[%s6 + $0xf4] sm:$0xf]
      %v4456 = vld [vmem:[%s7] sm:$0x1]
      %v4458 = vlaneseq
      %v4459 = vshrl.u32 %v4458, 7
      %v4460 = vsub.s32 0, %v4459
      %v4461 = vrot.slane %v4456, %v4460
      %v4525 = vunpack.c.l.b16 %v4394
      %v4526 = vunpack.c.l.b16 %v4395
      %v4527 = vunpack.c.l.b16 %v4396
      %v4528 = vunpack.c.l.b16 %v4397
      %v4529 = vunpack.c.l.b16 %v4398
      %v4530 = vunpack.c.l.b16 %v4399
      %v4531 = vunpack.c.l.b16 %v4400
      %v4532 = vunpack.c.l.b16 %v4401
      %v4533 = vunpack.c.l.b16 %v4402
      %v4534 = vunpack.c.l.b16 %v4403
      %v4535 = vunpack.c.l.b16 %v4404
      %v4536 = vunpack.c.l.b16 %v4405
      %v4537 = vunpack.c.l.b16 %v4406
      %v4538 = vunpack.c.l.b16 %v4407
      %v4539 = vunpack.c.l.b16 %v4408
      %v4540 = vunpack.c.l.b16 %v4409
      %v4541 = vunpack.c.l.b16 %v4410
      %v4542 = vunpack.c.l.b16 %v4411
      %v4543 = vunpack.c.l.b16 %v4412
      %v4544 = vunpack.c.l.b16 %v4413
      %v4545 = vunpack.c.l.b16 %v4414
      %v4546 = vunpack.c.l.b16 %v4415
      %v4547 = vunpack.c.l.b16 %v4416
      %v4548 = vunpack.c.l.b16 %v4417
      %v4549 = vunpack.c.l.b16 %v4418
      %v4550 = vunpack.c.l.b16 %v4419
      %v4551 = vunpack.c.l.b16 %v4420
      %v4552 = vunpack.c.l.b16 %v4421
      %v4553 = vunpack.c.l.b16 %v4422
      %v4554 = vunpack.c.l.b16 %v4423
      %v4555 = vunpack.c.l.b16 %v4424
      %v4556 = vunpack.c.l.b16 %v4425
      %v4557 = vunpack.c.l.b16 %v4426
      %v4558 = vunpack.c.l.b16 %v4427
      %v4559 = vunpack.c.l.b16 %v4428
      %v4560 = vunpack.c.l.b16 %v4429
      %v4561 = vunpack.c.l.b16 %v4430
      %v4562 = vunpack.c.l.b16 %v4431
      %v4563 = vunpack.c.l.b16 %v4432
      %v4564 = vunpack.c.l.b16 %v4433
      %v4565 = vunpack.c.l.b16 %v4434
      %v4566 = vunpack.c.l.b16 %v4435
      %v4567 = vunpack.c.l.b16 %v4436
      %v4568 = vunpack.c.l.b16 %v4437
      %v4569 = vunpack.c.l.b16 %v4438
      %v4570 = vunpack.c.l.b16 %v4439
      %v4571 = vunpack.c.l.b16 %v4440
      %v4572 = vunpack.c.l.b16 %v4441
      %v4573 = vunpack.c.l.b16 %v4442
      %v4574 = vunpack.c.l.b16 %v4443
      %v4575 = vunpack.c.l.b16 %v4444
      %v4576 = vunpack.c.l.b16 %v4445
      %v4577 = vunpack.c.l.b16 %v4446
      %v4578 = vunpack.c.l.b16 %v4447
      %v4579 = vunpack.c.l.b16 %v4448
      %v4580 = vunpack.c.l.b16 %v4449
      %v4581 = vunpack.c.l.b16 %v4450
      %v4582 = vunpack.c.l.b16 %v4451
      %v4583 = vunpack.c.l.b16 %v4452
      %v4584 = vunpack.c.l.b16 %v4453
      %v4585 = vunpack.c.l.b16 %v4454
      %v4586 = vunpack.c.l.b16 %v4455
      %v4587 = vpack.c.b16 %v4526, %v4525
      %v4588 = vpack.c.b16 %v4528, %v4527
      %v4589 = vpack.c.b16 %v4530, %v4529
      %v4590 = vpack.c.b16 %v4532, %v4531
      %v4591 = vpack.c.b16 %v4534, %v4533
      %v4592 = vpack.c.b16 %v4536, %v4535
      %v4593 = vpack.c.b16 %v4538, %v4537
      %v4594 = vpack.c.b16 %v4540, %v4539
      %v4595 = vpack.c.b16 %v4542, %v4541
      %v4596 = vpack.c.b16 %v4544, %v4543
      %v4597 = vpack.c.b16 %v4546, %v4545
      %v4598 = vpack.c.b16 %v4548, %v4547
      %v4599 = vpack.c.b16 %v4550, %v4549
      %v4600 = vpack.c.b16 %v4552, %v4551
      %v4601 = vpack.c.b16 %v4554, %v4553
      %v4602 = vpack.c.b16 %v4556, %v4555
      %v4603 = vpack.c.b16 %v4558, %v4557
      %v4604 = vpack.c.b16 %v4560, %v4559
      %v4605 = vpack.c.b16 %v4562, %v4561
      %v4606 = vpack.c.b16 %v4564, %v4563
      %v4607 = vpack.c.b16 %v4566, %v4565
      %v4608 = vpack.c.b16 %v4568, %v4567
      %v4609 = vpack.c.b16 %v4570, %v4569
      %v4610 = vpack.c.b16 %v4572, %v4571
      %v4611 = vpack.c.b16 %v4574, %v4573
      %v4612 = vpack.c.b16 %v4576, %v4575
      %v4613 = vpack.c.b16 %v4578, %v4577
      %v4614 = vpack.c.b16 %v4580, %v4579
      %v4615 = vpack.c.b16 %v4582, %v4581
      %v4616 = vpack.c.b16 %v4584, %v4583
      %v4617 = vpack.c.b16 %v4586, %v4585
      %v4650 = vsel %vm3239, %v4206, 0
      %v4653 = vsel %vm3239, %v4210, 0
      %v4656 = vsel %vm3239, %v4214, 0
      %v4659 = vsel %vm3239, %v4218, 0
      %v4662 = vsel %vm3239, %v4222, 0
      %v4665 = vsel %vm3239, %v4226, 0
      %v4668 = vsel %vm3239, %v4230, 0
      %v4671 = vsel %vm3239, %v4234, 0
      %v4674 = vsel %vm3239, %v4238, 0
      %v4677 = vsel %vm3239, %v4242, 0
      %v4680 = vsel %vm3239, %v4246, 0
      %v4683 = vsel %vm3239, %v4250, 0
      %v4686 = vsel %vm3239, %v4254, 0
      %v4689 = vsel %vm3239, %v4258, 0
      %v4692 = vsel %vm3239, %v4262, 0
      %v4695 = vsel %vm3239, %v4266, 0
      %v4698 = vsel %vm3239, %v4270, 0
      %v4701 = vsel %vm3239, %v4274, 0
      %v4704 = vsel %vm3239, %v4278, 0
      %4706 = vmatprep.subr.bf16.mxu0 0
      %4707 = vmatpush1.bf16.msra.mxu0 %v4594
      %4708 = vmatprep.subr.bf16.mxu0 0
      %4709 = vmatpush1.bf16.msra.mxu0 %v4593
      %4710 = vmatprep.subr.bf16.mxu0 0
      %4711 = vmatpush1.bf16.msra.mxu0 %v4592
      %4712 = vmatprep.subr.bf16.mxu0 0
      %4713 = vmatpush1.bf16.msra.mxu0 %v4591
      %4714 = vmatprep.subr.bf16.mxu0 0
      %4715 = vmatpush1.bf16.msra.mxu0 %v4590
      %4716 = vmatprep.subr.bf16.mxu0 0
      %4717 = vmatpush1.bf16.msra.mxu0 %v4589
      %4718 = vmatprep.subr.bf16.mxu0 0
      %4719 = vmatpush1.bf16.msra.mxu0 %v4588
      %4720 = vmatprep.subr.bf16.mxu0 0
      %4721 = vmatpush1.bf16.msra.mxu0 %v4587
      %4722 = vmatprep.subr.bf16.mxu0 0
      %4723 = vmatpush2.bf16.msra.mxu0 %v4602
      %4724 = vmatprep.subr.bf16.mxu0 0
      %4725 = vmatpush2.bf16.msra.mxu0 %v4601
      %4726 = vmatprep.subr.bf16.mxu0 0
      %4727 = vmatpush2.bf16.msra.mxu0 %v4600
      %4728 = vmatprep.subr.bf16.mxu0 0
      %4729 = vmatpush2.bf16.msra.mxu0 %v4599
      %4730 = vmatprep.subr.bf16.mxu0 0
      %4731 = vmatpush2.bf16.msra.mxu0 %v4598
      %4732 = vmatprep.subr.bf16.mxu0 0
      %4733 = vmatpush2.bf16.msra.mxu0 %v4597
      %4734 = vmatprep.subr.bf16.mxu0 0
      %4735 = vmatpush2.bf16.msra.mxu0 %v4596
      %4736 = vmatprep.subr.bf16.mxu0 0
      %4737 = vmatpush2.bf16.msra.mxu0 %v4595
      %4738 = vmatprep.mubr.bf16.mxu0 %v4320
      %4739 = vmatmul.mubr.bf16.gmra.mxu0 %v4053
      %v4740 = vpop.f32.mrf.mxu0
      %v4741 = vadd.f32 %v4461, %v4740
      %v4742 = vpop.f32.mrf.mxu0
      %v4743 = vpop.f32.mrf.mxu0
      %v4744 = vadd.f32 %v4461, %v4743
      %v4745 = vpop.f32.mrf.mxu0
      %4746 = vmatprep.mubr.bf16.mxu0 %v4324
      %4747 = vmatmul.mubr.bf16.gmra.mxu0 %v4055
      %v4748 = vpop.f32.mrf.mxu0
      %v4749 = vadd.f32 %v4461, %v4748
      %v4750 = vpop.f32.mrf.mxu0
      %v4751 = vpop.f32.mrf.mxu0
      %v4752 = vadd.f32 %v4461, %v4751
      %v4753 = vpop.f32.mrf.mxu0
      %4754 = vmatprep.mubr.bf16.mxu0 %v4328
      %4755 = vmatmul.mubr.bf16.gmra.mxu0 %v4057
      %v4756 = vpop.f32.mrf.mxu0
      %v4757 = vadd.f32 %v4461, %v4756
      %v4758 = vpop.f32.mrf.mxu0
      %v4759 = vpop.f32.mrf.mxu0
      %v4760 = vadd.f32 %v4461, %v4759
      %v4761 = vpop.f32.mrf.mxu0
      %4762 = vmatprep.mubr.bf16.mxu0 %v4332
      %4763 = vmatmul.mubr.bf16.gmra.mxu0 %v4059
      %v4764 = vpop.f32.mrf.mxu0
      %v4765 = vadd.f32 %v4461, %v4764
      %v4766 = vpop.f32.mrf.mxu0
      %v4767 = vpop.f32.mrf.mxu0
      %v4768 = vadd.f32 %v4461, %v4767
      %v4769 = vpop.f32.mrf.mxu0
      %4770 = vmatprep.mubr.bf16.mxu0 %v4336
      %4771 = vmatmul.mubr.bf16.gmra.mxu0 %v4061
      %v4772 = vpop.f32.mrf.mxu0
      %v4773 = vadd.f32 %v4461, %v4772
      %v4774 = vpop.f32.mrf.mxu0
      %v4775 = vpop.f32.mrf.mxu0
      %v4776 = vadd.f32 %v4461, %v4775
      %v4777 = vpop.f32.mrf.mxu0
      %4778 = vmatprep.mubr.bf16.mxu0 %v4340
      %4779 = vmatmul.mubr.bf16.gmra.mxu0 %v4063
      %v4780 = vpop.f32.mrf.mxu0
      %v4781 = vadd.f32 %v4461, %v4780
      %v4782 = vpop.f32.mrf.mxu0
      %v4783 = vpop.f32.mrf.mxu0
      %v4784 = vadd.f32 %v4461, %v4783
      %v4785 = vpop.f32.mrf.mxu0
      %4786 = vmatprep.mubr.bf16.mxu0 %v4344
      %4787 = vmatmul.mubr.bf16.gmra.mxu0 %v4065
      %v4788 = vpop.f32.mrf.mxu0
      %v4789 = vadd.f32 %v4461, %v4788
      %v4790 = vpop.f32.mrf.mxu0
      %v4791 = vpop.f32.mrf.mxu0
      %v4792 = vadd.f32 %v4461, %v4791
      %v4793 = vpop.f32.mrf.mxu0
      %4794 = vmatprep.mubr.bf16.mxu0 %v4348
      %4795 = vmatmul.mubr.bf16.gmra.mxu0 %v4067
      %v4796 = vpop.f32.mrf.mxu0
      %v4797 = vadd.f32 %v4461, %v4796
      %v4798 = vpop.f32.mrf.mxu0
      %v4799 = vpop.f32.mrf.mxu0
      %v4800 = vadd.f32 %v4461, %v4799
      %v4801 = vpop.f32.mrf.mxu0
      %4802 = vmatprep.mubr.bf16.mxu0 %v4352
      %4803 = vmatmul.mubr.bf16.gmra.mxu0 %v4069
      %v4804 = vpop.f32.mrf.mxu0
      %v4805 = vadd.f32 %v4461, %v4804
      %v4806 = vpop.f32.mrf.mxu0
      %v4807 = vpop.f32.mrf.mxu0
      %v4808 = vadd.f32 %v4461, %v4807
      %v4809 = vpop.f32.mrf.mxu0
      %4810 = vmatprep.mubr.bf16.mxu0 %v4356
      %4811 = vmatmul.mubr.bf16.gmra.mxu0 %v4071
      %v4812 = vpop.f32.mrf.mxu0
      %v4813 = vadd.f32 %v4461, %v4812
      %v4814 = vpop.f32.mrf.mxu0
      %v4815 = vpop.f32.mrf.mxu0
      %v4816 = vadd.f32 %v4461, %v4815
      %v4817 = vpop.f32.mrf.mxu0
      %4818 = vmatprep.mubr.bf16.mxu0 %v4360
      %4819 = vmatmul.mubr.bf16.gmra.mxu0 %v4073
      %v4820 = vpop.f32.mrf.mxu0
      %v4821 = vadd.f32 %v4461, %v4820
      %v4822 = vpop.f32.mrf.mxu0
      %v4823 = vpop.f32.mrf.mxu0
      %v4824 = vadd.f32 %v4461, %v4823
      %v4825 = vpop.f32.mrf.mxu0
      %4826 = vmatprep.mubr.bf16.mxu0 %v4364
      %4827 = vmatmul.mubr.bf16.gmra.mxu0 %v4075
      %v4828 = vpop.f32.mrf.mxu0
      %v4829 = vadd.f32 %v4461, %v4828
      %v4830 = vpop.f32.mrf.mxu0
      %v4831 = vpop.f32.mrf.mxu0
      %v4832 = vadd.f32 %v4461, %v4831
      %v4833 = vpop.f32.mrf.mxu0
      %4834 = vmatprep.mubr.bf16.mxu0 %v4368
      %4835 = vmatmul.mubr.bf16.gmra.mxu0 %v4077
      %v4836 = vpop.f32.mrf.mxu0
      %v4837 = vadd.f32 %v4461, %v4836
      %v4838 = vpop.f32.mrf.mxu0
      %v4839 = vpop.f32.mrf.mxu0
      %v4840 = vadd.f32 %v4461, %v4839
      %v4841 = vpop.f32.mrf.mxu0
      %4842 = vmatprep.mubr.bf16.mxu0 %v4372
      %4843 = vmatmul.mubr.bf16.gmra.mxu0 %v4079
      %v4844 = vpop.f32.mrf.mxu0
      %v4845 = vadd.f32 %v4461, %v4844
      %v4846 = vpop.f32.mrf.mxu0
      %v4847 = vpop.f32.mrf.mxu0
      %v4848 = vadd.f32 %v4461, %v4847
      %v4849 = vpop.f32.mrf.mxu0
      %4850 = vmatprep.mubr.bf16.mxu0 %v4376
      %4851 = vmatmul.mubr.bf16.gmra.mxu0 %v4081
      %v4852 = vpop.f32.mrf.mxu0
      %v4853 = vadd.f32 %v4461, %v4852
      %v4854 = vpop.f32.mrf.mxu0
      %v4855 = vpop.f32.mrf.mxu0
      %v4856 = vadd.f32 %v4461, %v4855
      %v4857 = vpop.f32.mrf.mxu0
      %4858 = vmatprep.mubr.bf16.mxu0 %v4380
      %4859 = vmatmul.mubr.bf16.gmra.mxu0 %v4083
      %v4860 = vpop.f32.mrf.mxu0
      %v4861 = vadd.f32 %v4461, %v4860
      %v4862 = vpop.f32.mrf.mxu0
      %v4863 = vpop.f32.mrf.mxu0
      %v4864 = vadd.f32 %v4461, %v4863
      %v4865 = vpop.f32.mrf.mxu0
      %4866 = vmatprep.mubr.bf16.mxu0 %v4384
      %4867 = vmatmul.mubr.bf16.gmra.mxu0 %v4085
      %v4868 = vpop.f32.mrf.mxu0
      %v4869 = vadd.f32 %v4461, %v4868
      %v4870 = vpop.f32.mrf.mxu0
      %v4871 = vpop.f32.mrf.mxu0
      %v4872 = vadd.f32 %v4461, %v4871
      %v4873 = vpop.f32.mrf.mxu0
      %4874 = vmatprep.mubr.bf16.mxu0 %v4388
      %4875 = vmatmul.mubr.bf16.gmra.mxu0 %v4087
      %v4876 = vpop.f32.mrf.mxu0
      %v4877 = vadd.f32 %v4461, %v4876
      %v4878 = vpop.f32.mrf.mxu0
      %v4879 = vpop.f32.mrf.mxu0
      %v4880 = vadd.f32 %v4461, %v4879
      %v4881 = vpop.f32.mrf.mxu0
      %4882 = vmatprep.mubr.bf16.mxu0 %v4392
      %4883 = vmatmul.mubr.bf16.gmra.mxu0 %v4089
      %v4884 = vpop.f32.mrf.mxu0
      %v4885 = vadd.f32 %v4461, %v4884
      %v4886 = vpop.f32.mrf.mxu0
      %v4887 = vpop.f32.mrf.mxu0
      %v4888 = vpop.f32.mrf.mxu0
      %4889 = vdwg.mxu0
      %4890 = vmatprep.subr.bf16.mxu0 0
      %4891 = vmatpush1.bf16.msra.mxu0 %v4610
      %4892 = vmatprep.subr.bf16.mxu0 0
      %4893 = vmatpush1.bf16.msra.mxu0 %v4609
      %4894 = vmatprep.subr.bf16.mxu0 0
      %4895 = vmatpush1.bf16.msra.mxu0 %v4608
      %4896 = vmatprep.subr.bf16.mxu0 0
      %4897 = vmatpush1.bf16.msra.mxu0 %v4607
      %4898 = vmatprep.subr.bf16.mxu0 0
      %4899 = vmatpush1.bf16.msra.mxu0 %v4606
      %4900 = vmatprep.subr.bf16.mxu0 0
      %4901 = vmatpush1.bf16.msra.mxu0 %v4605
      %4902 = vmatprep.subr.bf16.mxu0 0
      %4903 = vmatpush1.bf16.msra.mxu0 %v4604
      %4904 = vmatprep.subr.bf16.mxu0 0
      %4905 = vmatpush1.bf16.msra.mxu0 %v4603
      %4906 = vmatprep.subr.bf16.mxu0 0
      %4907 = vmatpush2.bf16.msra.mxu0 0
      %4908 = vmatprep.subr.bf16.mxu0 0
      %4909 = vmatpush2.bf16.msra.mxu0 %v4617
      %4910 = vmatprep.subr.bf16.mxu0 0
      %4911 = vmatpush2.bf16.msra.mxu0 %v4616
      %4912 = vmatprep.subr.bf16.mxu0 0
      %4913 = vmatpush2.bf16.msra.mxu0 %v4615
      %4914 = vmatprep.subr.bf16.mxu0 0
      %4915 = vmatpush2.bf16.msra.mxu0 %v4614
      %4916 = vmatprep.subr.bf16.mxu0 0
      %4917 = vmatpush2.bf16.msra.mxu0 %v4613
      %4918 = vmatprep.subr.bf16.mxu0 0
      %4919 = vmatpush2.bf16.msra.mxu0 %v4612
      %4920 = vmatprep.subr.bf16.mxu0 0
      %4921 = vmatpush2.bf16.msra.mxu0 %v4611
      %4922 = vmatprep.mubr.bf16.mxu0 %v4650
      %4923 = vmatmul.mubr.bf16.gmra.mxu0 %v4279
      %v4924 = vpop.f32.mrf.mxu0
      %v4925 = vadd.f32 %v4741, %v4924
      %v4926 = vpop.f32.mrf.mxu0
      %v4927 = vpop.f32.mrf.mxu0
      %v4928 = vadd.f32 %v4744, %v4927
      %v4929 = vpop.f32.mrf.mxu0
      %4930 = vmatprep.mubr.bf16.mxu0 %v4653
      %4931 = vmatmul.mubr.bf16.gmra.mxu0 %v4280
      %v4932 = vpop.f32.mrf.mxu0
      %v4933 = vadd.f32 %v4749, %v4932
      %v4934 = vpop.f32.mrf.mxu0
      %v4935 = vpop.f32.mrf.mxu0
      %v4936 = vadd.f32 %v4752, %v4935
      %v4937 = vpop.f32.mrf.mxu0
      %4938 = vmatprep.mubr.bf16.mxu0 %v4656
      %4939 = vmatmul.mubr.bf16.gmra.mxu0 %v4281
      %v4940 = vpop.f32.mrf.mxu0
      %v4941 = vadd.f32 %v4757, %v4940
      %v4942 = vpop.f32.mrf.mxu0
      %v4943 = vpop.f32.mrf.mxu0
      %v4944 = vadd.f32 %v4760, %v4943
      %v4945 = vpop.f32.mrf.mxu0
      %4946 = vmatprep.mubr.bf16.mxu0 %v4659
      %4947 = vmatmul.mubr.bf16.gmra.mxu0 %v4282
      %v4948 = vpop.f32.mrf.mxu0
      %v4949 = vadd.f32 %v4765, %v4948
      %v4950 = vpop.f32.mrf.mxu0
      %v4951 = vpop.f32.mrf.mxu0
      %v4952 = vadd.f32 %v4768, %v4951
      %v4953 = vpop.f32.mrf.mxu0
      %4954 = vmatprep.mubr.bf16.mxu0 %v4662
      %4955 = vmatmul.mubr.bf16.gmra.mxu0 %v4283
      %v4956 = vpop.f32.mrf.mxu0
      %v4957 = vadd.f32 %v4773, %v4956
      %v4958 = vpop.f32.mrf.mxu0
      %v4959 = vpop.f32.mrf.mxu0
      %v4960 = vadd.f32 %v4776, %v4959
      %v4961 = vpop.f32.mrf.mxu0
      %4962 = vmatprep.mubr.bf16.mxu0 %v4665
      %4963 = vmatmul.mubr.bf16.gmra.mxu0 %v4284
      %v4964 = vpop.f32.mrf.mxu0
      %v4965 = vadd.f32 %v4781, %v4964
      %v4966 = vpop.f32.mrf.mxu0
      %v4967 = vpop.f32.mrf.mxu0
      %v4968 = vadd.f32 %v4784, %v4967
      %v4969 = vpop.f32.mrf.mxu0
      %4970 = vmatprep.mubr.bf16.mxu0 %v4668
      %4971 = vmatmul.mubr.bf16.gmra.mxu0 %v4285
      %v4972 = vpop.f32.mrf.mxu0
      %v4973 = vadd.f32 %v4789, %v4972
      %v4974 = vpop.f32.mrf.mxu0
      %v4975 = vpop.f32.mrf.mxu0
      %v4976 = vadd.f32 %v4792, %v4975
      %v4977 = vpop.f32.mrf.mxu0
      %4978 = vmatprep.mubr.bf16.mxu0 %v4671
      %4979 = vmatmul.mubr.bf16.gmra.mxu0 %v4286
      %v4980 = vpop.f32.mrf.mxu0
      %v4981 = vadd.f32 %v4797, %v4980
      %v4982 = vpop.f32.mrf.mxu0
      %v4983 = vpop.f32.mrf.mxu0
      %v4984 = vadd.f32 %v4800, %v4983
      %v4985 = vpop.f32.mrf.mxu0
      %4986 = vmatprep.mubr.bf16.mxu0 %v4674
      %4987 = vmatmul.mubr.bf16.gmra.mxu0 %v4287
      %v4988 = vpop.f32.mrf.mxu0
      %v4989 = vadd.f32 %v4805, %v4988
      %v4990 = vpop.f32.mrf.mxu0
      %v4991 = vpop.f32.mrf.mxu0
      %v4992 = vadd.f32 %v4808, %v4991
      %v4993 = vpop.f32.mrf.mxu0
      %4994 = vmatprep.mubr.bf16.mxu0 %v4677
      %4995 = vmatmul.mubr.bf16.gmra.mxu0 %v4288
      %v4996 = vpop.f32.mrf.mxu0
      %v4997 = vadd.f32 %v4813, %v4996
      %v4998 = vpop.f32.mrf.mxu0
      %v4999 = vpop.f32.mrf.mxu0
      %v5000 = vadd.f32 %v4816, %v4999
      %v5001 = vpop.f32.mrf.mxu0
      %5002 = vmatprep.mubr.bf16.mxu0 %v4680
      %5003 = vmatmul.mubr.bf16.gmra.mxu0 %v4289
      %v5004 = vpop.f32.mrf.mxu0
      %v5005 = vadd.f32 %v4821, %v5004
      %v5006 = vpop.f32.mrf.mxu0
      %v5007 = vpop.f32.mrf.mxu0
      %v5008 = vadd.f32 %v4824, %v5007
      %v5009 = vpop.f32.mrf.mxu0
      %5010 = vmatprep.mubr.bf16.mxu0 %v4683
      %5011 = vmatmul.mubr.bf16.gmra.mxu0 %v4290
      %v5012 = vpop.f32.mrf.mxu0
      %v5013 = vadd.f32 %v4829, %v5012
      %v5014 = vpop.f32.mrf.mxu0
      %v5015 = vpop.f32.mrf.mxu0
      %v5016 = vadd.f32 %v4832, %v5015
      %v5017 = vpop.f32.mrf.mxu0
      %5018 = vmatprep.mubr.bf16.mxu0 %v4686
      %5019 = vmatmul.mubr.bf16.gmra.mxu0 %v4291
      %v5020 = vpop.f32.mrf.mxu0
      %v5021 = vadd.f32 %v4837, %v5020
      %v5022 = vpop.f32.mrf.mxu0
      %v5023 = vpop.f32.mrf.mxu0
      %v5024 = vadd.f32 %v4840, %v5023
      %v5025 = vpop.f32.mrf.mxu0
      %5026 = vmatprep.mubr.bf16.mxu0 %v4689
      %5027 = vmatmul.mubr.bf16.gmra.mxu0 %v4292
      %v5028 = vpop.f32.mrf.mxu0
      %v5029 = vadd.f32 %v4845, %v5028
      %v5030 = vpop.f32.mrf.mxu0
      %v5031 = vpop.f32.mrf.mxu0
      %v5032 = vadd.f32 %v4848, %v5031
      %v5033 = vpop.f32.mrf.mxu0
      %5034 = vmatprep.mubr.bf16.mxu0 %v4692
      %5035 = vmatmul.mubr.bf16.gmra.mxu0 %v4293
      %v5036 = vpop.f32.mrf.mxu0
      %v5037 = vadd.f32 %v4853, %v5036
      %v5038 = vpop.f32.mrf.mxu0
      %v5039 = vpop.f32.mrf.mxu0
      %v5040 = vadd.f32 %v4856, %v5039
      %v5041 = vpop.f32.mrf.mxu0
      %5042 = vmatprep.mubr.bf16.mxu0 %v4695
      %5043 = vmatmul.mubr.bf16.gmra.mxu0 %v4294
      %v5044 = vpop.f32.mrf.mxu0
      %v5045 = vadd.f32 %v4861, %v5044
      %v5046 = vpop.f32.mrf.mxu0
      %v5047 = vpop.f32.mrf.mxu0
      %v5048 = vadd.f32 %v4864, %v5047
      %v5049 = vpop.f32.mrf.mxu0
      %5050 = vmatprep.mubr.bf16.mxu0 %v4698
      %5051 = vmatmul.mubr.bf16.gmra.mxu0 %v4295
      %v5052 = vpop.f32.mrf.mxu0
      %v5053 = vadd.f32 %v4869, %v5052
      %v5054 = vpop.f32.mrf.mxu0
      %v5055 = vpop.f32.mrf.mxu0
      %v5056 = vadd.f32 %v4872, %v5055
      %v5057 = vpop.f32.mrf.mxu0
      %5058 = vmatprep.mubr.bf16.mxu0 %v4701
      %5059 = vmatmul.mubr.bf16.gmra.mxu0 %v4296
      %v5060 = vpop.f32.mrf.mxu0
      %v5061 = vadd.f32 %v4877, %v5060
      %v5062 = vpop.f32.mrf.mxu0
      %v5063 = vpop.f32.mrf.mxu0
      %v5064 = vadd.f32 %v4880, %v5063
      %v5065 = vpop.f32.mrf.mxu0
      %5066 = vmatprep.mubr.bf16.mxu0 %v4704
      %5067 = vmatmul.mubr.bf16.gmra.mxu0 %v4297
      %v5068 = vpop.f32.mrf.mxu0
      %v5069 = vadd.f32 %v4885, %v5068
      %v5070 = vpop.f32.mrf.mxu0
      %v5071 = vpop.f32.mrf.mxu0
      %v5072 = vpop.f32.mrf.mxu0
      %5073 = vdwg.mxu0
      %v5074 = vmax.f32 %v4925, 0.0
      %v5075 = vmax.f32 %v4928, 0.0
      %v5076 = vmax.f32 %v4933, 0.0
      %v5077 = vmax.f32 %v4936, 0.0
      %v5078 = vmax.f32 %v4941, 0.0
      %v5079 = vmax.f32 %v4944, 0.0
      %v5080 = vmax.f32 %v4949, 0.0
      %v5081 = vmax.f32 %v4952, 0.0
      %v5082 = vmax.f32 %v4957, 0.0
      %v5083 = vmax.f32 %v4960, 0.0
      %v5084 = vmax.f32 %v4965, 0.0
      %v5085 = vmax.f32 %v4968, 0.0
      %v5086 = vmax.f32 %v4973, 0.0
      %v5087 = vmax.f32 %v4976, 0.0
      %v5088 = vmax.f32 %v4981, 0.0
      %v5089 = vmax.f32 %v4984, 0.0
      %v5090 = vmax.f32 %v4989, 0.0
      %v5091 = vmax.f32 %v4992, 0.0
      %v5092 = vmax.f32 %v4997, 0.0
      %v5093 = vmax.f32 %v5000, 0.0
      %v5094 = vmax.f32 %v5005, 0.0
      %v5095 = vmax.f32 %v5008, 0.0
      %v5096 = vmax.f32 %v5013, 0.0
      %v5097 = vmax.f32 %v5016, 0.0
      %v5098 = vmax.f32 %v5021, 0.0
      %v5099 = vmax.f32 %v5024, 0.0
      %v5100 = vmax.f32 %v5029, 0.0
      %v5101 = vmax.f32 %v5032, 0.0
      %v5102 = vmax.f32 %v5037, 0.0
      %v5103 = vmax.f32 %v5040, 0.0
      %v5104 = vmax.f32 %v5045, 0.0
      %v5105 = vmax.f32 %v5048, 0.0
      %v5106 = vmax.f32 %v5053, 0.0
      %v5107 = vmax.f32 %v5056, 0.0
      %v5108 = vmax.f32 %v5061, 0.0
      %v5109 = vmax.f32 %v5064, 0.0
      %v5110 = vmax.f32 %v5069, 0.0
      %v5111 = vpack.c.bf16 %v5075, %v5074
      %v5112 = vpack.c.bf16 %v5077, %v5076
      %v5113 = vpack.c.bf16 %v5079, %v5078
      %v5114 = vpack.c.bf16 %v5081, %v5080
      %v5115 = vpack.c.bf16 %v5083, %v5082
      %v5116 = vpack.c.bf16 %v5085, %v5084
      %v5117 = vpack.c.bf16 %v5087, %v5086
      %v5118 = vpack.c.bf16 %v5089, %v5088
      %v5119 = vpack.c.bf16 %v5091, %v5090
      %v5120 = vpack.c.bf16 %v5093, %v5092
      %v5121 = vpack.c.bf16 %v5095, %v5094
      %v5122 = vpack.c.bf16 %v5097, %v5096
      %v5123 = vpack.c.bf16 %v5099, %v5098
      %v5124 = vpack.c.bf16 %v5101, %v5100
      %v5125 = vpack.c.bf16 %v5103, %v5102
      %v5126 = vpack.c.bf16 %v5105, %v5104
      %v5127 = vpack.c.bf16 %v5107, %v5106
      %v5128 = vpack.c.bf16 %v5109, %v5108
      %v5129 = vpack.c.bf16 %v5110, %v5110
      %v5149 = vrot.slane %v5111, 1
      %v5150 = vrot.slane %v5112, 1
      %v5151 = vsel %vm1044, %v5149, %v5150
      %v5152 = vrot.slane %v5113, 1
      %v5153 = vsel %vm1044, %v5150, %v5152
      %v5154 = vrot.slane %v5114, 1
      %v5155 = vsel %vm1044, %v5152, %v5154
      %v5156 = vrot.slane %v5115, 1
      %v5157 = vsel %vm1044, %v5154, %v5156
      %v5158 = vrot.slane %v5116, 1
      %v5159 = vsel %vm1044, %v5156, %v5158
      %v5160 = vrot.slane %v5117, 1
      %v5161 = vsel %vm1044, %v5158, %v5160
      %v5162 = vrot.slane %v5118, 1
      %v5163 = vsel %vm1044, %v5160, %v5162
      %v5164 = vrot.slane %v5119, 1
      %v5165 = vsel %vm1044, %v5162, %v5164
      %v5166 = vrot.slane %v5120, 1
      %v5167 = vsel %vm1044, %v5164, %v5166
      %v5168 = vrot.slane %v5121, 1
      %v5169 = vsel %vm1044, %v5166, %v5168
      %v5170 = vrot.slane %v5122, 1
      %v5171 = vsel %vm1044, %v5168, %v5170
      %v5172 = vrot.slane %v5123, 1
      %v5173 = vsel %vm1044, %v5170, %v5172
      %v5174 = vrot.slane %v5124, 1
      %v5175 = vsel %vm1044, %v5172, %v5174
      %v5176 = vrot.slane %v5125, 1
      %v5177 = vsel %vm1044, %v5174, %v5176
      %v5178 = vrot.slane %v5126, 1
      %v5179 = vsel %vm1044, %v5176, %v5178
      %v5180 = vrot.slane %v5127, 1
      %v5181 = vsel %vm1044, %v5178, %v5180
      %v5182 = vrot.slane %v5128, 1
      %v5183 = vsel %vm1044, %v5180, %v5182
      %v5184 = vrot.slane %v5129, 1
      %v5185 = vsel %vm1044, %v5182, %v5184
      %5186 = vrot.lane.b32.xlu0 %v5151, 112
      %v5187 = vpop.permute.xlu0 %5186
      %5188 = vrot.lane.b32.xlu0 %v5153, 112
      %v5189 = vpop.permute.xlu0 %5188
      %5190 = vrot.lane.b32.xlu0 %v5155, 112
      %v5191 = vpop.permute.xlu0 %5190
      %5192 = vrot.lane.b32.xlu0 %v5157, 112
      %v5193 = vpop.permute.xlu0 %5192
      %5194 = vrot.lane.b32.xlu0 %v5159, 112
      %v5195 = vpop.permute.xlu0 %5194
      %5196 = vrot.lane.b32.xlu0 %v5161, 112
      %v5197 = vpop.permute.xlu0 %5196
      %5198 = vrot.lane.b32.xlu0 %v5163, 112
      %v5199 = vpop.permute.xlu0 %5198
      %5200 = vrot.lane.b32.xlu0 %v5165, 112
      %v5201 = vpop.permute.xlu0 %5200
      %5202 = vrot.lane.b32.xlu0 %v5167, 112
      %v5203 = vpop.permute.xlu0 %5202
      %5204 = vrot.lane.b32.xlu0 %v5169, 112
      %v5205 = vpop.permute.xlu0 %5204
      %5206 = vrot.lane.b32.xlu0 %v5171, 112
      %v5207 = vpop.permute.xlu0 %5206
      %5208 = vrot.lane.b32.xlu0 %v5173, 112
      %v5209 = vpop.permute.xlu0 %5208
      %5210 = vrot.lane.b32.xlu0 %v5175, 112
      %v5211 = vpop.permute.xlu0 %5210
      %5212 = vrot.lane.b32.xlu0 %v5177, 112
      %v5213 = vpop.permute.xlu0 %5212
      %5214 = vrot.lane.b32.xlu0 %v5179, 112
      %v5215 = vpop.permute.xlu0 %5214
      %5216 = vrot.lane.b32.xlu0 %v5181, 112
      %v5217 = vpop.permute.xlu0 %5216
      %5218 = vrot.lane.b32.xlu0 %v5183, 112
      %v5219 = vpop.permute.xlu0 %5218
      %5220 = vrot.lane.b32.xlu0 %v5185, 112
      %v5221 = vpop.permute.xlu0 %5220
      %5222 = vrot.lane.b32.xlu0 %v5184, 112
      %v5223 = vpop.permute.xlu0 %5222
      %v5224 = vrot.slane %v5111, 2
      %v5225 = vrot.slane %v5112, 2
      %v5226 = vsel %vm1234, %v5224, %v5225
      %v5227 = vrot.slane %v5113, 2
      %v5228 = vsel %vm1234, %v5225, %v5227
      %v5229 = vrot.slane %v5114, 2
      %v5230 = vsel %vm1234, %v5227, %v5229
      %v5231 = vrot.slane %v5115, 2
      %v5232 = vsel %vm1234, %v5229, %v5231
      %v5233 = vrot.slane %v5116, 2
      %v5234 = vsel %vm1234, %v5231, %v5233
      %v5235 = vrot.slane %v5117, 2
      %v5236 = vsel %vm1234, %v5233, %v5235
      %v5237 = vrot.slane %v5118, 2
      %v5238 = vsel %vm1234, %v5235, %v5237
      %v5239 = vrot.slane %v5119, 2
      %v5240 = vsel %vm1234, %v5237, %v5239
      %v5241 = vrot.slane %v5120, 2
      %v5242 = vsel %vm1234, %v5239, %v5241
      %v5243 = vrot.slane %v5121, 2
      %v5244 = vsel %vm1234, %v5241, %v5243
      %v5245 = vrot.slane %v5122, 2
      %v5246 = vsel %vm1234, %v5243, %v5245
      %v5247 = vrot.slane %v5123, 2
      %v5248 = vsel %vm1234, %v5245, %v5247
      %v5249 = vrot.slane %v5124, 2
      %v5250 = vsel %vm1234, %v5247, %v5249
      %v5251 = vrot.slane %v5125, 2
      %v5252 = vsel %vm1234, %v5249, %v5251
      %v5253 = vrot.slane %v5126, 2
      %v5254 = vsel %vm1234, %v5251, %v5253
      %v5255 = vrot.slane %v5127, 2
      %v5256 = vsel %vm1234, %v5253, %v5255
      %v5257 = vrot.slane %v5128, 2
      %v5258 = vsel %vm1234, %v5255, %v5257
      %v5259 = vrot.slane %v5129, 2
      %v5260 = vsel %vm1234, %v5257, %v5259
      %5261 = vrot.lane.b32.xlu0 %v5226, 96
      %v5262 = vpop.permute.xlu0 %5261
      %5263 = vrot.lane.b32.xlu0 %v5228, 96
      %v5264 = vpop.permute.xlu0 %5263
      %5265 = vrot.lane.b32.xlu0 %v5230, 96
      %v5266 = vpop.permute.xlu0 %5265
      %5267 = vrot.lane.b32.xlu0 %v5232, 96
      %v5268 = vpop.permute.xlu0 %5267
      %5269 = vrot.lane.b32.xlu0 %v5234, 96
      %v5270 = vpop.permute.xlu0 %5269
      %5271 = vrot.lane.b32.xlu0 %v5236, 96
      %v5272 = vpop.permute.xlu0 %5271
      %5273 = vrot.lane.b32.xlu0 %v5238, 96
      %v5274 = vpop.permute.xlu0 %5273
      %5275 = vrot.lane.b32.xlu0 %v5240, 96
      %v5276 = vpop.permute.xlu0 %5275
      %5277 = vrot.lane.b32.xlu0 %v5242, 96
      %v5278 = vpop.permute.xlu0 %5277
      %5279 = vrot.lane.b32.xlu0 %v5244, 96
      %v5280 = vpop.permute.xlu0 %5279
      %5281 = vrot.lane.b32.xlu0 %v5246, 96
      %v5282 = vpop.permute.xlu0 %5281
      %5283 = vrot.lane.b32.xlu0 %v5248, 96
      %v5284 = vpop.permute.xlu0 %5283
      %5285 = vrot.lane.b32.xlu0 %v5250, 96
      %v5286 = vpop.permute.xlu0 %5285
      %5287 = vrot.lane.b32.xlu0 %v5252, 96
      %v5288 = vpop.permute.xlu0 %5287
      %5289 = vrot.lane.b32.xlu0 %v5254, 96
      %v5290 = vpop.permute.xlu0 %5289
      %5291 = vrot.lane.b32.xlu0 %v5256, 96
      %v5292 = vpop.permute.xlu0 %5291
      %5293 = vrot.lane.b32.xlu0 %v5258, 96
      %v5294 = vpop.permute.xlu0 %5293
      %5295 = vrot.lane.b32.xlu0 %v5260, 96
      %v5296 = vpop.permute.xlu0 %5295
      %5297 = vrot.lane.b32.xlu0 %v5259, 96
      %v5298 = vpop.permute.xlu0 %5297
      %v5301 = vsel %vm3239, %v5111, %v5187
      %v5305 = vsel %vm3239, %v5112, %v5189
      %v5309 = vsel %vm3239, %v5113, %v5191
      %v5313 = vsel %vm3239, %v5114, %v5193
      %v5317 = vsel %vm3239, %v5115, %v5195
      %v5321 = vsel %vm3239, %v5116, %v5197
      %v5325 = vsel %vm3239, %v5117, %v5199
      %v5329 = vsel %vm3239, %v5118, %v5201
      %v5333 = vsel %vm3239, %v5119, %v5203
      %v5337 = vsel %vm3239, %v5120, %v5205
      %v5341 = vsel %vm3239, %v5121, %v5207
      %v5345 = vsel %vm3239, %v5122, %v5209
      %v5349 = vsel %vm3239, %v5123, %v5211
      %v5353 = vsel %vm3239, %v5124, %v5213
      %v5357 = vsel %vm3239, %v5125, %v5215
      %v5361 = vsel %vm3239, %v5126, %v5217
      %v5365 = vsel %vm3239, %v5127, %v5219
      %v5369 = vsel %vm3239, %v5128, %v5221
      %v5373 = vsel %vm3239, %v5129, %v5223
      %vm5375 = vcmask 785408
      %v5377 = vsel %vm5375, %v5187, %v5262
      %v5380 = vsel %vm5375, %v5189, %v5264
      %v5383 = vsel %vm5375, %v5191, %v5266
      %v5386 = vsel %vm5375, %v5193, %v5268
      %v5389 = vsel %vm5375, %v5195, %v5270
      %v5392 = vsel %vm5375, %v5197, %v5272
      %v5395 = vsel %vm5375, %v5199, %v5274
      %v5398 = vsel %vm5375, %v5201, %v5276
      %v5401 = vsel %vm5375, %v5203, %v5278
      %v5404 = vsel %vm5375, %v5205, %v5280
      %v5407 = vsel %vm5375, %v5207, %v5282
      %v5410 = vsel %vm5375, %v5209, %v5284
      %v5413 = vsel %vm5375, %v5211, %v5286
      %v5416 = vsel %vm5375, %v5213, %v5288
      %v5419 = vsel %vm5375, %v5215, %v5290
      %v5422 = vsel %vm5375, %v5217, %v5292
      %v5425 = vsel %vm5375, %v5219, %v5294
      %v5428 = vsel %vm5375, %v5221, %v5296
      %v5431 = vsel %vm5375, %v5223, %v5298
      %v5433 = vld [vmem:[%s8] sm:$0xff]
      %v5434 = vld [vmem:[%s8 + $0x8] sm:$0xff]
      %v5435 = vld [vmem:[%s8 + $0x10] sm:$0xff]
      %v5436 = vld [vmem:[%s8 + $0x18] sm:$0xff]
      %v5437 = vld [vmem:[%s8 + $0x20] sm:$0xff]
      %v5438 = vld [vmem:[%s8 + $0x28] sm:$0xff]
      %v5439 = vld [vmem:[%s8 + $0x30] sm:$0xff]
      %v5440 = vld [vmem:[%s8 + $0x38] sm:$0xff]
      %v5441 = vld [vmem:[%s8 + $0x40] sm:$0xff]
      %v5442 = vld [vmem:[%s8 + $0x48] sm:$0xff]
      %v5443 = vld [vmem:[%s8 + $0x50] sm:$0xff]
      %v5444 = vld [vmem:[%s8 + $0x58] sm:$0xff]
      %v5445 = vld [vmem:[%s8 + $0x60] sm:$0xff]
      %v5446 = vld [vmem:[%s8 + $0x68] sm:$0xff]
      %v5447 = vld [vmem:[%s8 + $0x70] sm:$0xff]
      %v5448 = vld [vmem:[%s8 + $0x78] sm:$0xff]
      %v5449 = vld [vmem:[%s8 + $0x80] sm:$0xff]
      %v5450 = vld [vmem:[%s8 + $0x88] sm:$0xff]
      %v5451 = vld [vmem:[%s8 + $0x90] sm:$0xff]
      %v5452 = vld [vmem:[%s8 + $0x98] sm:$0xff]
      %v5453 = vld [vmem:[%s8 + $0xa0] sm:$0xff]
      %v5454 = vld [vmem:[%s8 + $0xa8] sm:$0xff]
      %v5455 = vld [vmem:[%s8 + $0xb0] sm:$0xff]
      %v5456 = vld [vmem:[%s8 + $0xb8] sm:$0xff]
      %v5457 = vld [vmem:[%s8 + $0xc0] sm:$0xff]
      %v5458 = vld [vmem:[%s8 + $0xc8] sm:$0xff]
      %v5459 = vld [vmem:[%s8 + $0xd0] sm:$0xff]
      %v5460 = vld [vmem:[%s8 + $0xd8] sm:$0xff]
      %v5461 = vld [vmem:[%s8 + $0xe0] sm:$0xff]
      %v5462 = vld [vmem:[%s8 + $0xe8] sm:$0xff]
      %v5463 = vld [vmem:[%s8 + $0xf0] sm:$0xff]
      %v5464 = vld [vmem:[%s8 + $0xf8] sm:$0xff]
      %v5465 = vld [vmem:[%s8 + $0x100] sm:$0xff]
      %v5466 = vld [vmem:[%s8 + $0x108] sm:$0xff]
      %v5467 = vld [vmem:[%s8 + $0x110] sm:$0xff]
      %v5468 = vld [vmem:[%s8 + $0x118] sm:$0xff]
      %v5469 = vld [vmem:[%s8 + $0x120] sm:$0xff]
      %v5470 = vld [vmem:[%s8 + $0x128] sm:$0xff]
      %v5471 = vld [vmem:[%s8 + $0x130] sm:$0xff]
      %v5472 = vld [vmem:[%s8 + $0x138] sm:$0xff]
      %v5473 = vld [vmem:[%s8 + $0x140] sm:$0xff]
      %v5474 = vld [vmem:[%s8 + $0x148] sm:$0xff]
      %v5475 = vld [vmem:[%s9] sm:$0x3]
      %v5477 = vlaneseq
      %v5478 = vshrl.u32 %v5477, 7
      %v5479 = vsub.s32 0, %v5478
      %v5480 = vrot.slane %v5475, %v5479
      %v5481 = vlaneseq
      %v5482 = vshrl.u32 %v5481, 7
      %v5483 = vsub.s32 1, %v5482
      %v5484 = vrot.slane %v5475, %v5483
      %v5529 = vunpack.c.l.b16 %v5433
      %v5530 = vunpack.c.h.b16 %v5433
      %v5531 = vunpack.c.l.b16 %v5434
      %v5532 = vunpack.c.h.b16 %v5434
      %v5533 = vunpack.c.l.b16 %v5435
      %v5534 = vunpack.c.h.b16 %v5435
      %v5535 = vunpack.c.l.b16 %v5436
      %v5536 = vunpack.c.h.b16 %v5436
      %v5537 = vunpack.c.l.b16 %v5437
      %v5538 = vunpack.c.h.b16 %v5437
      %v5539 = vunpack.c.l.b16 %v5438
      %v5540 = vunpack.c.h.b16 %v5438
      %v5541 = vunpack.c.l.b16 %v5439
      %v5542 = vunpack.c.h.b16 %v5439
      %v5543 = vunpack.c.l.b16 %v5440
      %v5544 = vunpack.c.h.b16 %v5440
      %v5545 = vunpack.c.l.b16 %v5441
      %v5546 = vunpack.c.h.b16 %v5441
      %v5547 = vunpack.c.l.b16 %v5442
      %v5548 = vunpack.c.h.b16 %v5442
      %v5549 = vunpack.c.l.b16 %v5443
      %v5550 = vunpack.c.h.b16 %v5443
      %v5551 = vunpack.c.l.b16 %v5444
      %v5552 = vunpack.c.h.b16 %v5444
      %v5553 = vunpack.c.l.b16 %v5445
      %v5554 = vunpack.c.h.b16 %v5445
      %v5555 = vunpack.c.l.b16 %v5446
      %v5556 = vunpack.c.h.b16 %v5446
      %v5557 = vunpack.c.l.b16 %v5447
      %v5558 = vunpack.c.h.b16 %v5447
      %v5559 = vunpack.c.l.b16 %v5448
      %v5560 = vunpack.c.h.b16 %v5448
      %v5561 = vunpack.c.l.b16 %v5449
      %v5562 = vunpack.c.h.b16 %v5449
      %v5563 = vunpack.c.l.b16 %v5450
      %v5564 = vunpack.c.h.b16 %v5450
      %v5565 = vunpack.c.l.b16 %v5451
      %v5566 = vunpack.c.h.b16 %v5451
      %v5567 = vunpack.c.l.b16 %v5452
      %v5568 = vunpack.c.h.b16 %v5452
      %v5569 = vunpack.c.l.b16 %v5453
      %v5570 = vunpack.c.h.b16 %v5453
      %v5571 = vunpack.c.l.b16 %v5454
      %v5572 = vunpack.c.h.b16 %v5454
      %v5573 = vunpack.c.l.b16 %v5455
      %v5574 = vunpack.c.h.b16 %v5455
      %v5575 = vunpack.c.l.b16 %v5456
      %v5576 = vunpack.c.h.b16 %v5456
      %v5577 = vunpack.c.l.b16 %v5457
      %v5578 = vunpack.c.h.b16 %v5457
      %v5579 = vunpack.c.l.b16 %v5458
      %v5580 = vunpack.c.h.b16 %v5458
      %v5581 = vunpack.c.l.b16 %v5459
      %v5582 = vunpack.c.h.b16 %v5459
      %v5583 = vunpack.c.l.b16 %v5460
      %v5584 = vunpack.c.h.b16 %v5460
      %v5585 = vunpack.c.l.b16 %v5461
      %v5586 = vunpack.c.h.b16 %v5461
      %v5587 = vunpack.c.l.b16 %v5462
      %v5588 = vunpack.c.h.b16 %v5462
      %v5589 = vunpack.c.l.b16 %v5463
      %v5590 = vunpack.c.h.b16 %v5463
      %v5591 = vunpack.c.l.b16 %v5464
      %v5592 = vunpack.c.h.b16 %v5464
      %v5593 = vunpack.c.l.b16 %v5465
      %v5594 = vunpack.c.h.b16 %v5465
      %v5595 = vunpack.c.l.b16 %v5466
      %v5596 = vunpack.c.h.b16 %v5466
      %v5597 = vunpack.c.l.b16 %v5467
      %v5598 = vunpack.c.h.b16 %v5467
      %v5599 = vunpack.c.l.b16 %v5468
      %v5600 = vunpack.c.h.b16 %v5468
      %v5601 = vunpack.c.l.b16 %v5469
      %v5602 = vunpack.c.h.b16 %v5469
      %v5603 = vunpack.c.l.b16 %v5470
      %v5604 = vunpack.c.h.b16 %v5470
      %v5605 = vunpack.c.l.b16 %v5471
      %v5606 = vunpack.c.h.b16 %v5471
      %v5607 = vunpack.c.l.b16 %v5472
      %v5608 = vunpack.c.h.b16 %v5472
      %v5609 = vunpack.c.l.b16 %v5473
      %v5610 = vunpack.c.h.b16 %v5473
      %v5611 = vunpack.c.l.b16 %v5474
      %v5612 = vunpack.c.h.b16 %v5474
      %v5613 = vpack.c.b16 %v5531, %v5529
      %v5614 = vpack.c.b16 %v5532, %v5530
      %v5615 = vpack.c.b16 %v5535, %v5533
      %v5616 = vpack.c.b16 %v5536, %v5534
      %v5617 = vpack.c.b16 %v5539, %v5537
      %v5618 = vpack.c.b16 %v5540, %v5538
      %v5619 = vpack.c.b16 %v5543, %v5541
      %v5620 = vpack.c.b16 %v5544, %v5542
      %v5621 = vpack.c.b16 %v5547, %v5545
      %v5622 = vpack.c.b16 %v5548, %v5546
      %v5623 = vpack.c.b16 %v5551, %v5549
      %v5624 = vpack.c.b16 %v5552, %v5550
      %v5625 = vpack.c.b16 %v5555, %v5553
      %v5626 = vpack.c.b16 %v5556, %v5554
      %v5627 = vpack.c.b16 %v5559, %v5557
      %v5628 = vpack.c.b16 %v5560, %v5558
      %v5629 = vpack.c.b16 %v5563, %v5561
      %v5630 = vpack.c.b16 %v5564, %v5562
      %v5631 = vpack.c.b16 %v5567, %v5565
      %v5632 = vpack.c.b16 %v5568, %v5566
      %v5633 = vpack.c.b16 %v5571, %v5569
      %v5634 = vpack.c.b16 %v5572, %v5570
      %v5635 = vpack.c.b16 %v5575, %v5573
      %v5636 = vpack.c.b16 %v5576, %v5574
      %v5637 = vpack.c.b16 %v5579, %v5577
      %v5638 = vpack.c.b16 %v5580, %v5578
      %v5639 = vpack.c.b16 %v5583, %v5581
      %v5640 = vpack.c.b16 %v5584, %v5582
      %v5641 = vpack.c.b16 %v5587, %v5585
      %v5642 = vpack.c.b16 %v5588, %v5586
      %v5643 = vpack.c.b16 %v5591, %v5589
      %v5644 = vpack.c.b16 %v5592, %v5590
      %v5645 = vpack.c.b16 %v5595, %v5593
      %v5646 = vpack.c.b16 %v5596, %v5594
      %v5647 = vpack.c.b16 %v5599, %v5597
      %v5648 = vpack.c.b16 %v5600, %v5598
      %v5649 = vpack.c.b16 %v5603, %v5601
      %v5650 = vpack.c.b16 %v5604, %v5602
      %v5651 = vpack.c.b16 %v5607, %v5605
      %v5652 = vpack.c.b16 %v5608, %v5606
      %v5653 = vpack.c.b16 %v5611, %v5609
      %v5654 = vpack.c.b16 %v5612, %v5610
      %vm5697 = vcmask 654336
      %v5698 = vsel %vm5697, %v5262, 0
      %v5700 = vsel %vm5697, %v5264, 0
      %v5702 = vsel %vm5697, %v5266, 0
      %v5704 = vsel %vm5697, %v5268, 0
      %v5706 = vsel %vm5697, %v5270, 0
      %v5708 = vsel %vm5697, %v5272, 0
      %v5710 = vsel %vm5697, %v5274, 0
      %v5712 = vsel %vm5697, %v5276, 0
      %v5714 = vsel %vm5697, %v5278, 0
      %v5716 = vsel %vm5697, %v5280, 0
      %v5718 = vsel %vm5697, %v5282, 0
      %v5720 = vsel %vm5697, %v5284, 0
      %v5722 = vsel %vm5697, %v5286, 0
      %v5724 = vsel %vm5697, %v5288, 0
      %v5726 = vsel %vm5697, %v5290, 0
      %v5728 = vsel %vm5697, %v5292, 0
      %v5730 = vsel %vm5697, %v5294, 0
      %v5732 = vsel %vm5697, %v5296, 0
      %v5734 = vsel %vm5697, %v5298, 0
      %5736 = vmatprep.subr.bf16.mxu0 %v5628
      %5737 = vmatpush1.bf16.msra.mxu0 %v5627
      %5738 = vmatprep.subr.bf16.mxu0 %v5626
      %5739 = vmatpush1.bf16.msra.mxu0 %v5625
      %5740 = vmatprep.subr.bf16.mxu0 %v5624
      %5741 = vmatpush1.bf16.msra.mxu0 %v5623
      %5742 = vmatprep.subr.bf16.mxu0 %v5622
      %5743 = vmatpush1.bf16.msra.mxu0 %v5621
      %5744 = vmatprep.subr.bf16.mxu0 %v5620
      %5745 = vmatpush1.bf16.msra.mxu0 %v5619
      %5746 = vmatprep.subr.bf16.mxu0 %v5618
      %5747 = vmatpush1.bf16.msra.mxu0 %v5617
      %5748 = vmatprep.subr.bf16.mxu0 %v5616
      %5749 = vmatpush1.bf16.msra.mxu0 %v5615
      %5750 = vmatprep.subr.bf16.mxu0 %v5614
      %5751 = vmatpush1.bf16.msra.mxu0 %v5613
      %5752 = vmatprep.subr.bf16.mxu0 %v5644
      %5753 = vmatpush2.bf16.msra.mxu0 %v5643
      %5754 = vmatprep.subr.bf16.mxu0 %v5642
      %5755 = vmatpush2.bf16.msra.mxu0 %v5641
      %5756 = vmatprep.subr.bf16.mxu0 %v5640
      %5757 = vmatpush2.bf16.msra.mxu0 %v5639
      %5758 = vmatprep.subr.bf16.mxu0 %v5638
      %5759 = vmatpush2.bf16.msra.mxu0 %v5637
      %5760 = vmatprep.subr.bf16.mxu0 %v5636
      %5761 = vmatpush2.bf16.msra.mxu0 %v5635
      %5762 = vmatprep.subr.bf16.mxu0 %v5634
      %5763 = vmatpush2.bf16.msra.mxu0 %v5633
      %5764 = vmatprep.subr.bf16.mxu0 %v5632
      %5765 = vmatpush2.bf16.msra.mxu0 %v5631
      %5766 = vmatprep.subr.bf16.mxu0 %v5630
      %5767 = vmatpush2.bf16.msra.mxu0 %v5629
      %5768 = vmatprep.mubr.bf16.mxu0 %v5377
      %5769 = vmatmul.mubr.bf16.gmra.mxu0 %v5301
      %v5770 = vpop.f32.mrf.mxu0
      %v5771 = vadd.f32 %v5480, %v5770
      %v5772 = vpop.f32.mrf.mxu0
      %v5773 = vadd.f32 %v5484, %v5772
      %v5774 = vpop.f32.mrf.mxu0
      %v5775 = vadd.f32 %v5480, %v5774
      %v5776 = vpop.f32.mrf.mxu0
      %v5777 = vadd.f32 %v5484, %v5776
      %5778 = vmatprep.mubr.bf16.mxu0 %v5380
      %5779 = vmatmul.mubr.bf16.gmra.mxu0 %v5305
      %v5780 = vpop.f32.mrf.mxu0
      %v5781 = vadd.f32 %v5480, %v5780
      %v5782 = vpop.f32.mrf.mxu0
      %v5783 = vadd.f32 %v5484, %v5782
      %v5784 = vpop.f32.mrf.mxu0
      %v5785 = vadd.f32 %v5480, %v5784
      %v5786 = vpop.f32.mrf.mxu0
      %v5787 = vadd.f32 %v5484, %v5786
      %5788 = vmatprep.mubr.bf16.mxu0 %v5383
      %5789 = vmatmul.mubr.bf16.gmra.mxu0 %v5309
      %v5790 = vpop.f32.mrf.mxu0
      %v5791 = vadd.f32 %v5480, %v5790
      %v5792 = vpop.f32.mrf.mxu0
      %v5793 = vadd.f32 %v5484, %v5792
      %v5794 = vpop.f32.mrf.mxu0
      %v5795 = vadd.f32 %v5480, %v5794
      %v5796 = vpop.f32.mrf.mxu0
      %v5797 = vadd.f32 %v5484, %v5796
      %5798 = vmatprep.mubr.bf16.mxu0 %v5386
      %5799 = vmatmul.mubr.bf16.gmra.mxu0 %v5313
      %v5800 = vpop.f32.mrf.mxu0
      %v5801 = vadd.f32 %v5480, %v5800
      %v5802 = vpop.f32.mrf.mxu0
      %v5803 = vadd.f32 %v5484, %v5802
      %v5804 = vpop.f32.mrf.mxu0
      %v5805 = vadd.f32 %v5480, %v5804
      %v5806 = vpop.f32.mrf.mxu0
      %v5807 = vadd.f32 %v5484, %v5806
      %5808 = vmatprep.mubr.bf16.mxu0 %v5389
      %5809 = vmatmul.mubr.bf16.gmra.mxu0 %v5317
      %v5810 = vpop.f32.mrf.mxu0
      %v5811 = vadd.f32 %v5480, %v5810
      %v5812 = vpop.f32.mrf.mxu0
      %v5813 = vadd.f32 %v5484, %v5812
      %v5814 = vpop.f32.mrf.mxu0
      %v5815 = vadd.f32 %v5480, %v5814
      %v5816 = vpop.f32.mrf.mxu0
      %v5817 = vadd.f32 %v5484, %v5816
      %5818 = vmatprep.mubr.bf16.mxu0 %v5392
      %5819 = vmatmul.mubr.bf16.gmra.mxu0 %v5321
      %v5820 = vpop.f32.mrf.mxu0
      %v5821 = vadd.f32 %v5480, %v5820
      %v5822 = vpop.f32.mrf.mxu0
      %v5823 = vadd.f32 %v5484, %v5822
      %v5824 = vpop.f32.mrf.mxu0
      %v5825 = vadd.f32 %v5480, %v5824
      %v5826 = vpop.f32.mrf.mxu0
      %v5827 = vadd.f32 %v5484, %v5826
      %5828 = vmatprep.mubr.bf16.mxu0 %v5395
      %5829 = vmatmul.mubr.bf16.gmra.mxu0 %v5325
      %v5830 = vpop.f32.mrf.mxu0
      %v5831 = vadd.f32 %v5480, %v5830
      %v5832 = vpop.f32.mrf.mxu0
      %v5833 = vadd.f32 %v5484, %v5832
      %v5834 = vpop.f32.mrf.mxu0
      %v5835 = vadd.f32 %v5480, %v5834
      %v5836 = vpop.f32.mrf.mxu0
      %v5837 = vadd.f32 %v5484, %v5836
      %5838 = vmatprep.mubr.bf16.mxu0 %v5398
      %5839 = vmatmul.mubr.bf16.gmra.mxu0 %v5329
      %v5840 = vpop.f32.mrf.mxu0
      %v5841 = vadd.f32 %v5480, %v5840
      %v5842 = vpop.f32.mrf.mxu0
      %v5843 = vadd.f32 %v5484, %v5842
      %v5844 = vpop.f32.mrf.mxu0
      %v5845 = vadd.f32 %v5480, %v5844
      %v5846 = vpop.f32.mrf.mxu0
      %v5847 = vadd.f32 %v5484, %v5846
      %5848 = vmatprep.mubr.bf16.mxu0 %v5401
      %5849 = vmatmul.mubr.bf16.gmra.mxu0 %v5333
      %v5850 = vpop.f32.mrf.mxu0
      %v5851 = vadd.f32 %v5480, %v5850
      %v5852 = vpop.f32.mrf.mxu0
      %v5853 = vadd.f32 %v5484, %v5852
      %v5854 = vpop.f32.mrf.mxu0
      %v5855 = vadd.f32 %v5480, %v5854
      %v5856 = vpop.f32.mrf.mxu0
      %v5857 = vadd.f32 %v5484, %v5856
      %5858 = vmatprep.mubr.bf16.mxu0 %v5404
      %5859 = vmatmul.mubr.bf16.gmra.mxu0 %v5337
      %v5860 = vpop.f32.mrf.mxu0
      %v5861 = vadd.f32 %v5480, %v5860
      %v5862 = vpop.f32.mrf.mxu0
      %v5863 = vadd.f32 %v5484, %v5862
      %v5864 = vpop.f32.mrf.mxu0
      %v5865 = vadd.f32 %v5480, %v5864
      %v5866 = vpop.f32.mrf.mxu0
      %v5867 = vadd.f32 %v5484, %v5866
      %5868 = vmatprep.mubr.bf16.mxu0 %v5407
      %5869 = vmatmul.mubr.bf16.gmra.mxu0 %v5341
      %v5870 = vpop.f32.mrf.mxu0
      %v5871 = vadd.f32 %v5480, %v5870
      %v5872 = vpop.f32.mrf.mxu0
      %v5873 = vadd.f32 %v5484, %v5872
      %v5874 = vpop.f32.mrf.mxu0
      %v5875 = vadd.f32 %v5480, %v5874
      %v5876 = vpop.f32.mrf.mxu0
      %v5877 = vadd.f32 %v5484, %v5876
      %5878 = vmatprep.mubr.bf16.mxu0 %v5410
      %5879 = vmatmul.mubr.bf16.gmra.mxu0 %v5345
      %v5880 = vpop.f32.mrf.mxu0
      %v5881 = vadd.f32 %v5480, %v5880
      %v5882 = vpop.f32.mrf.mxu0
      %v5883 = vadd.f32 %v5484, %v5882
      %v5884 = vpop.f32.mrf.mxu0
      %v5885 = vadd.f32 %v5480, %v5884
      %v5886 = vpop.f32.mrf.mxu0
      %v5887 = vadd.f32 %v5484, %v5886
      %5888 = vmatprep.mubr.bf16.mxu0 %v5413
      %5889 = vmatmul.mubr.bf16.gmra.mxu0 %v5349
      %v5890 = vpop.f32.mrf.mxu0
      %v5891 = vadd.f32 %v5480, %v5890
      %v5892 = vpop.f32.mrf.mxu0
      %v5893 = vadd.f32 %v5484, %v5892
      %v5894 = vpop.f32.mrf.mxu0
      %v5895 = vadd.f32 %v5480, %v5894
      %v5896 = vpop.f32.mrf.mxu0
      %v5897 = vadd.f32 %v5484, %v5896
      %5898 = vmatprep.mubr.bf16.mxu0 %v5416
      %5899 = vmatmul.mubr.bf16.gmra.mxu0 %v5353
      %v5900 = vpop.f32.mrf.mxu0
      %v5901 = vadd.f32 %v5480, %v5900
      %v5902 = vpop.f32.mrf.mxu0
      %v5903 = vadd.f32 %v5484, %v5902
      %v5904 = vpop.f32.mrf.mxu0
      %v5905 = vadd.f32 %v5480, %v5904
      %v5906 = vpop.f32.mrf.mxu0
      %v5907 = vadd.f32 %v5484, %v5906
      %5908 = vmatprep.mubr.bf16.mxu0 %v5419
      %5909 = vmatmul.mubr.bf16.gmra.mxu0 %v5357
      %v5910 = vpop.f32.mrf.mxu0
      %v5911 = vadd.f32 %v5480, %v5910
      %v5912 = vpop.f32.mrf.mxu0
      %v5913 = vadd.f32 %v5484, %v5912
      %v5914 = vpop.f32.mrf.mxu0
      %v5915 = vadd.f32 %v5480, %v5914
      %v5916 = vpop.f32.mrf.mxu0
      %v5917 = vadd.f32 %v5484, %v5916
      %5918 = vmatprep.mubr.bf16.mxu0 %v5422
      %5919 = vmatmul.mubr.bf16.gmra.mxu0 %v5361
      %v5920 = vpop.f32.mrf.mxu0
      %v5921 = vadd.f32 %v5480, %v5920
      %v5922 = vpop.f32.mrf.mxu0
      %v5923 = vadd.f32 %v5484, %v5922
      %v5924 = vpop.f32.mrf.mxu0
      %v5925 = vadd.f32 %v5480, %v5924
      %v5926 = vpop.f32.mrf.mxu0
      %v5927 = vadd.f32 %v5484, %v5926
      %5928 = vmatprep.mubr.bf16.mxu0 %v5425
      %5929 = vmatmul.mubr.bf16.gmra.mxu0 %v5365
      %v5930 = vpop.f32.mrf.mxu0
      %v5931 = vadd.f32 %v5480, %v5930
      %v5932 = vpop.f32.mrf.mxu0
      %v5933 = vadd.f32 %v5484, %v5932
      %v5934 = vpop.f32.mrf.mxu0
      %v5935 = vadd.f32 %v5480, %v5934
      %v5936 = vpop.f32.mrf.mxu0
      %v5937 = vadd.f32 %v5484, %v5936
      %5938 = vmatprep.mubr.bf16.mxu0 %v5428
      %5939 = vmatmul.mubr.bf16.gmra.mxu0 %v5369
      %v5940 = vpop.f32.mrf.mxu0
      %v5941 = vadd.f32 %v5480, %v5940
      %v5942 = vpop.f32.mrf.mxu0
      %v5943 = vadd.f32 %v5484, %v5942
      %v5944 = vpop.f32.mrf.mxu0
      %v5945 = vadd.f32 %v5480, %v5944
      %v5946 = vpop.f32.mrf.mxu0
      %v5947 = vadd.f32 %v5484, %v5946
      %5948 = vmatprep.mubr.bf16.mxu0 %v5431
      %5949 = vmatmul.mubr.bf16.gmra.mxu0 %v5373
      %v5950 = vpop.f32.mrf.mxu0
      %v5951 = vadd.f32 %v5480, %v5950
      %v5952 = vpop.f32.mrf.mxu0
      %v5953 = vadd.f32 %v5484, %v5952
      %v5954 = vpop.f32.mrf.mxu0
      %v5955 = vpop.f32.mrf.mxu0
      %5956 = vdwg.mxu0
      %5957 = vmatprep.subr.bf16.mxu0 0
      %5958 = vmatpush1.bf16.msra.mxu0 0
      %5959 = vmatprep.subr.bf16.mxu0 0
      %5960 = vmatpush1.bf16.msra.mxu0 0
      %5961 = vmatprep.subr.bf16.mxu0 0
      %5962 = vmatpush1.bf16.msra.mxu0 0
      %5963 = vmatprep.subr.bf16.mxu0 %v5654
      %5964 = vmatpush1.bf16.msra.mxu0 %v5653
      %5965 = vmatprep.subr.bf16.mxu0 %v5652
      %5966 = vmatpush1.bf16.msra.mxu0 %v5651
      %5967 = vmatprep.subr.bf16.mxu0 %v5650
      %5968 = vmatpush1.bf16.msra.mxu0 %v5649
      %5969 = vmatprep.subr.bf16.mxu0 %v5648
      %5970 = vmatpush1.bf16.msra.mxu0 %v5647
      %5971 = vmatprep.subr.bf16.mxu0 %v5646
      %5972 = vmatpush1.bf16.msra.mxu0 %v5645
      %5973 = vmatprep.subr.bf16.mxu0 0
      %5974 = vmatpush2.bf16.msra.mxu0 0
      %5975 = vmatprep.subr.bf16.mxu0 0
      %5976 = vmatpush2.bf16.msra.mxu0 0
      %5977 = vmatprep.subr.bf16.mxu0 0
      %5978 = vmatpush2.bf16.msra.mxu0 0
      %5979 = vmatprep.subr.bf16.mxu0 0
      %5980 = vmatpush2.bf16.msra.mxu0 0
      %5981 = vmatprep.subr.bf16.mxu0 0
      %5982 = vmatpush2.bf16.msra.mxu0 0
      %5983 = vmatprep.subr.bf16.mxu0 0
      %5984 = vmatpush2.bf16.msra.mxu0 0
      %5985 = vmatprep.subr.bf16.mxu0 0
      %5986 = vmatpush2.bf16.msra.mxu0 0
      %5987 = vmatprep.subr.bf16.mxu0 0
      %5988 = vmatpush2.bf16.msra.mxu0 0
      %5989 = vmatprep.mubr.bf16.mxu0 0
      %5990 = vmatmul.mubr.bf16.gmra.mxu0 %v5698
      %v5991 = vpop.f32.mrf.mxu0
      %v5992 = vadd.f32 %v5771, %v5991
      %v5993 = vpop.f32.mrf.mxu0
      %v5994 = vadd.f32 %v5773, %v5993
      %v5995 = vpop.f32.mrf.mxu0
      %v5996 = vadd.f32 %v5775, %v5995
      %v5997 = vpop.f32.mrf.mxu0
      %v5998 = vadd.f32 %v5777, %v5997
      %5999 = vmatprep.mubr.bf16.mxu0 0
      %6000 = vmatmul.mubr.bf16.gmra.mxu0 %v5700
      %v6001 = vpop.f32.mrf.mxu0
      %v6002 = vadd.f32 %v5781, %v6001
      %v6003 = vpop.f32.mrf.mxu0
      %v6004 = vadd.f32 %v5783, %v6003
      %v6005 = vpop.f32.mrf.mxu0
      %v6006 = vadd.f32 %v5785, %v6005
      %v6007 = vpop.f32.mrf.mxu0
      %v6008 = vadd.f32 %v5787, %v6007
      %6009 = vmatprep.mubr.bf16.mxu0 0
      %6010 = vmatmul.mubr.bf16.gmra.mxu0 %v5702
      %v6011 = vpop.f32.mrf.mxu0
      %v6012 = vadd.f32 %v5791, %v6011
      %v6013 = vpop.f32.mrf.mxu0
      %v6014 = vadd.f32 %v5793, %v6013
      %v6015 = vpop.f32.mrf.mxu0
      %v6016 = vadd.f32 %v5795, %v6015
      %v6017 = vpop.f32.mrf.mxu0
      %v6018 = vadd.f32 %v5797, %v6017
      %6019 = vmatprep.mubr.bf16.mxu0 0
      %6020 = vmatmul.mubr.bf16.gmra.mxu0 %v5704
      %v6021 = vpop.f32.mrf.mxu0
      %v6022 = vadd.f32 %v5801, %v6021
      %v6023 = vpop.f32.mrf.mxu0
      %v6024 = vadd.f32 %v5803, %v6023
      %v6025 = vpop.f32.mrf.mxu0
      %v6026 = vadd.f32 %v5805, %v6025
      %v6027 = vpop.f32.mrf.mxu0
      %v6028 = vadd.f32 %v5807, %v6027
      %6029 = vmatprep.mubr.bf16.mxu0 0
      %6030 = vmatmul.mubr.bf16.gmra.mxu0 %v5706
      %v6031 = vpop.f32.mrf.mxu0
      %v6032 = vadd.f32 %v5811, %v6031
      %v6033 = vpop.f32.mrf.mxu0
      %v6034 = vadd.f32 %v5813, %v6033
      %v6035 = vpop.f32.mrf.mxu0
      %v6036 = vadd.f32 %v5815, %v6035
      %v6037 = vpop.f32.mrf.mxu0
      %v6038 = vadd.f32 %v5817, %v6037
      %6039 = vmatprep.mubr.bf16.mxu0 0
      %6040 = vmatmul.mubr.bf16.gmra.mxu0 %v5708
      %v6041 = vpop.f32.mrf.mxu0
      %v6042 = vadd.f32 %v5821, %v6041
      %v6043 = vpop.f32.mrf.mxu0
      %v6044 = vadd.f32 %v5823, %v6043
      %v6045 = vpop.f32.mrf.mxu0
      %v6046 = vadd.f32 %v5825, %v6045
      %v6047 = vpop.f32.mrf.mxu0
      %v6048 = vadd.f32 %v5827, %v6047
      %6049 = vmatprep.mubr.bf16.mxu0 0
      %6050 = vmatmul.mubr.bf16.gmra.mxu0 %v5710
      %v6051 = vpop.f32.mrf.mxu0
      %v6052 = vadd.f32 %v5831, %v6051
      %v6053 = vpop.f32.mrf.mxu0
      %v6054 = vadd.f32 %v5833, %v6053
      %v6055 = vpop.f32.mrf.mxu0
      %v6056 = vadd.f32 %v5835, %v6055
      %v6057 = vpop.f32.mrf.mxu0
      %v6058 = vadd.f32 %v5837, %v6057
      %6059 = vmatprep.mubr.bf16.mxu0 0
      %6060 = vmatmul.mubr.bf16.gmra.mxu0 %v5712
      %v6061 = vpop.f32.mrf.mxu0
      %v6062 = vadd.f32 %v5841, %v6061
      %v6063 = vpop.f32.mrf.mxu0
      %v6064 = vadd.f32 %v5843, %v6063
      %v6065 = vpop.f32.mrf.mxu0
      %v6066 = vadd.f32 %v5845, %v6065
      %v6067 = vpop.f32.mrf.mxu0
      %v6068 = vadd.f32 %v5847, %v6067
      %6069 = vmatprep.mubr.bf16.mxu0 0
      %6070 = vmatmul.mubr.bf16.gmra.mxu0 %v5714
      %v6071 = vpop.f32.mrf.mxu0
      %v6072 = vadd.f32 %v5851, %v6071
      %v6073 = vpop.f32.mrf.mxu0
      %v6074 = vadd.f32 %v5853, %v6073
      %v6075 = vpop.f32.mrf.mxu0
      %v6076 = vadd.f32 %v5855, %v6075
      %v6077 = vpop.f32.mrf.mxu0
      %v6078 = vadd.f32 %v5857, %v6077
      %6079 = vmatprep.mubr.bf16.mxu0 0
      %6080 = vmatmul.mubr.bf16.gmra.mxu0 %v5716
      %v6081 = vpop.f32.mrf.mxu0
      %v6082 = vadd.f32 %v5861, %v6081
      %v6083 = vpop.f32.mrf.mxu0
      %v6084 = vadd.f32 %v5863, %v6083
      %v6085 = vpop.f32.mrf.mxu0
      %v6086 = vadd.f32 %v5865, %v6085
      %v6087 = vpop.f32.mrf.mxu0
      %v6088 = vadd.f32 %v5867, %v6087
      %6089 = vmatprep.mubr.bf16.mxu0 0
      %6090 = vmatmul.mubr.bf16.gmra.mxu0 %v5718
      %v6091 = vpop.f32.mrf.mxu0
      %v6092 = vadd.f32 %v5871, %v6091
      %v6093 = vpop.f32.mrf.mxu0
      %v6094 = vadd.f32 %v5873, %v6093
      %v6095 = vpop.f32.mrf.mxu0
      %v6096 = vadd.f32 %v5875, %v6095
      %v6097 = vpop.f32.mrf.mxu0
      %v6098 = vadd.f32 %v5877, %v6097
      %6099 = vmatprep.mubr.bf16.mxu0 0
      %6100 = vmatmul.mubr.bf16.gmra.mxu0 %v5720
      %v6101 = vpop.f32.mrf.mxu0
      %v6102 = vadd.f32 %v5881, %v6101
      %v6103 = vpop.f32.mrf.mxu0
      %v6104 = vadd.f32 %v5883, %v6103
      %v6105 = vpop.f32.mrf.mxu0
      %v6106 = vadd.f32 %v5885, %v6105
      %v6107 = vpop.f32.mrf.mxu0
      %v6108 = vadd.f32 %v5887, %v6107
      %6109 = vmatprep.mubr.bf16.mxu0 0
      %6110 = vmatmul.mubr.bf16.gmra.mxu0 %v5722
      %v6111 = vpop.f32.mrf.mxu0
      %v6112 = vadd.f32 %v5891, %v6111
      %v6113 = vpop.f32.mrf.mxu0
      %v6114 = vadd.f32 %v5893, %v6113
      %v6115 = vpop.f32.mrf.mxu0
      %v6116 = vadd.f32 %v5895, %v6115
      %v6117 = vpop.f32.mrf.mxu0
      %v6118 = vadd.f32 %v5897, %v6117
      %6119 = vmatprep.mubr.bf16.mxu0 0
      %6120 = vmatmul.mubr.bf16.gmra.mxu0 %v5724
      %v6121 = vpop.f32.mrf.mxu0
      %v6122 = vadd.f32 %v5901, %v6121
      %v6123 = vpop.f32.mrf.mxu0
      %v6124 = vadd.f32 %v5903, %v6123
      %v6125 = vpop.f32.mrf.mxu0
      %v6126 = vadd.f32 %v5905, %v6125
      %v6127 = vpop.f32.mrf.mxu0
      %v6128 = vadd.f32 %v5907, %v6127
      %6129 = vmatprep.mubr.bf16.mxu0 0
      %6130 = vmatmul.mubr.bf16.gmra.mxu0 %v5726
      %v6131 = vpop.f32.mrf.mxu0
      %v6132 = vadd.f32 %v5911, %v6131
      %v6133 = vpop.f32.mrf.mxu0
      %v6134 = vadd.f32 %v5913, %v6133
      %v6135 = vpop.f32.mrf.mxu0
      %v6136 = vadd.f32 %v5915, %v6135
      %v6137 = vpop.f32.mrf.mxu0
      %v6138 = vadd.f32 %v5917, %v6137
      %6139 = vmatprep.mubr.bf16.mxu0 0
      %6140 = vmatmul.mubr.bf16.gmra.mxu0 %v5728
      %v6141 = vpop.f32.mrf.mxu0
      %v6142 = vadd.f32 %v5921, %v6141
      %v6143 = vpop.f32.mrf.mxu0
      %v6144 = vadd.f32 %v5923, %v6143
      %v6145 = vpop.f32.mrf.mxu0
      %v6146 = vadd.f32 %v5925, %v6145
      %v6147 = vpop.f32.mrf.mxu0
      %v6148 = vadd.f32 %v5927, %v6147
      %6149 = vmatprep.mubr.bf16.mxu0 0
      %6150 = vmatmul.mubr.bf16.gmra.mxu0 %v5730
      %v6151 = vpop.f32.mrf.mxu0
      %v6152 = vadd.f32 %v5931, %v6151
      %v6153 = vpop.f32.mrf.mxu0
      %v6154 = vadd.f32 %v5933, %v6153
      %v6155 = vpop.f32.mrf.mxu0
      %v6156 = vadd.f32 %v5935, %v6155
      %v6157 = vpop.f32.mrf.mxu0
      %v6158 = vadd.f32 %v5937, %v6157
      %6159 = vmatprep.mubr.bf16.mxu0 0
      %6160 = vmatmul.mubr.bf16.gmra.mxu0 %v5732
      %v6161 = vpop.f32.mrf.mxu0
      %v6162 = vadd.f32 %v5941, %v6161
      %v6163 = vpop.f32.mrf.mxu0
      %v6164 = vadd.f32 %v5943, %v6163
      %v6165 = vpop.f32.mrf.mxu0
      %v6166 = vadd.f32 %v5945, %v6165
      %v6167 = vpop.f32.mrf.mxu0
      %v6168 = vadd.f32 %v5947, %v6167
      %6169 = vmatprep.mubr.bf16.mxu0 0
      %6170 = vmatmul.mubr.bf16.gmra.mxu0 %v5734
      %v6171 = vpop.f32.mrf.mxu0
      %v6172 = vadd.f32 %v5951, %v6171
      %v6173 = vpop.f32.mrf.mxu0
      %v6174 = vadd.f32 %v5953, %v6173
      %v6175 = vpop.f32.mrf.mxu0
      %v6176 = vpop.f32.mrf.mxu0
      %6177 = vdwg.mxu0
      %v6178 = vmax.f32 %v5992, 0.0
      %v6179 = vmax.f32 %v5994, 0.0
      %v6180 = vmax.f32 %v5996, 0.0
      %v6181 = vmax.f32 %v5998, 0.0
      %v6182 = vmax.f32 %v6002, 0.0
      %v6183 = vmax.f32 %v6004, 0.0
      %v6184 = vmax.f32 %v6006, 0.0
      %v6185 = vmax.f32 %v6008, 0.0
      %v6186 = vmax.f32 %v6012, 0.0
      %v6187 = vmax.f32 %v6014, 0.0
      %v6188 = vmax.f32 %v6016, 0.0
      %v6189 = vmax.f32 %v6018, 0.0
      %v6190 = vmax.f32 %v6022, 0.0
      %v6191 = vmax.f32 %v6024, 0.0
      %v6192 = vmax.f32 %v6026, 0.0
      %v6193 = vmax.f32 %v6028, 0.0
      %v6194 = vmax.f32 %v6032, 0.0
      %v6195 = vmax.f32 %v6034, 0.0
      %v6196 = vmax.f32 %v6036, 0.0
      %v6197 = vmax.f32 %v6038, 0.0
      %v6198 = vmax.f32 %v6042, 0.0
      %v6199 = vmax.f32 %v6044, 0.0
      %v6200 = vmax.f32 %v6046, 0.0
      %v6201 = vmax.f32 %v6048, 0.0
      %v6202 = vmax.f32 %v6052, 0.0
      %v6203 = vmax.f32 %v6054, 0.0
      %v6204 = vmax.f32 %v6056, 0.0
      %v6205 = vmax.f32 %v6058, 0.0
      %v6206 = vmax.f32 %v6062, 0.0
      %v6207 = vmax.f32 %v6064, 0.0
      %v6208 = vmax.f32 %v6066, 0.0
      %v6209 = vmax.f32 %v6068, 0.0
      %v6210 = vmax.f32 %v6072, 0.0
      %v6211 = vmax.f32 %v6074, 0.0
      %v6212 = vmax.f32 %v6076, 0.0
      %v6213 = vmax.f32 %v6078, 0.0
      %v6214 = vmax.f32 %v6082, 0.0
      %v6215 = vmax.f32 %v6084, 0.0
      %v6216 = vmax.f32 %v6086, 0.0
      %v6217 = vmax.f32 %v6088, 0.0
      %v6218 = vmax.f32 %v6092, 0.0
      %v6219 = vmax.f32 %v6094, 0.0
      %v6220 = vmax.f32 %v6096, 0.0
      %v6221 = vmax.f32 %v6098, 0.0
      %v6222 = vmax.f32 %v6102, 0.0
      %v6223 = vmax.f32 %v6104, 0.0
      %v6224 = vmax.f32 %v6106, 0.0
      %v6225 = vmax.f32 %v6108, 0.0
      %v6226 = vmax.f32 %v6112, 0.0
      %v6227 = vmax.f32 %v6114, 0.0
      %v6228 = vmax.f32 %v6116, 0.0
      %v6229 = vmax.f32 %v6118, 0.0
      %v6230 = vmax.f32 %v6122, 0.0
      %v6231 = vmax.f32 %v6124, 0.0
      %v6232 = vmax.f32 %v6126, 0.0
      %v6233 = vmax.f32 %v6128, 0.0
      %v6234 = vmax.f32 %v6132, 0.0
      %v6235 = vmax.f32 %v6134, 0.0
      %v6236 = vmax.f32 %v6136, 0.0
      %v6237 = vmax.f32 %v6138, 0.0
      %v6238 = vmax.f32 %v6142, 0.0
      %v6239 = vmax.f32 %v6144, 0.0
      %v6240 = vmax.f32 %v6146, 0.0
      %v6241 = vmax.f32 %v6148, 0.0
      %v6242 = vmax.f32 %v6152, 0.0
      %v6243 = vmax.f32 %v6154, 0.0
      %v6244 = vmax.f32 %v6156, 0.0
      %v6245 = vmax.f32 %v6158, 0.0
      %v6246 = vmax.f32 %v6162, 0.0
      %v6247 = vmax.f32 %v6164, 0.0
      %v6248 = vmax.f32 %v6166, 0.0
      %v6249 = vmax.f32 %v6168, 0.0
      %v6250 = vmax.f32 %v6172, 0.0
      %v6251 = vmax.f32 %v6174, 0.0
      %v6252 = vpack.c.bf16 %v6180, %v6178
      %v6253 = vpack.c.bf16 %v6181, %v6179
      %v6254 = vpack.c.bf16 %v6184, %v6182
      %v6255 = vpack.c.bf16 %v6185, %v6183
      %v6256 = vpack.c.bf16 %v6188, %v6186
      %v6257 = vpack.c.bf16 %v6189, %v6187
      %v6258 = vpack.c.bf16 %v6192, %v6190
      %v6259 = vpack.c.bf16 %v6193, %v6191
      %v6260 = vpack.c.bf16 %v6196, %v6194
      %v6261 = vpack.c.bf16 %v6197, %v6195
      %v6262 = vpack.c.bf16 %v6200, %v6198
      %v6263 = vpack.c.bf16 %v6201, %v6199
      %v6264 = vpack.c.bf16 %v6204, %v6202
      %v6265 = vpack.c.bf16 %v6205, %v6203
      %v6266 = vpack.c.bf16 %v6208, %v6206
      %v6267 = vpack.c.bf16 %v6209, %v6207
      %v6268 = vpack.c.bf16 %v6212, %v6210
      %v6269 = vpack.c.bf16 %v6213, %v6211
      %v6270 = vpack.c.bf16 %v6216, %v6214
      %v6271 = vpack.c.bf16 %v6217, %v6215
      %v6272 = vpack.c.bf16 %v6220, %v6218
      %v6273 = vpack.c.bf16 %v6221, %v6219
      %v6274 = vpack.c.bf16 %v6224, %v6222
      %v6275 = vpack.c.bf16 %v6225, %v6223
      %v6276 = vpack.c.bf16 %v6228, %v6226
      %v6277 = vpack.c.bf16 %v6229, %v6227
      %v6278 = vpack.c.bf16 %v6232, %v6230
      %v6279 = vpack.c.bf16 %v6233, %v6231
      %v6280 = vpack.c.bf16 %v6236, %v6234
      %v6281 = vpack.c.bf16 %v6237, %v6235
      %v6282 = vpack.c.bf16 %v6240, %v6238
      %v6283 = vpack.c.bf16 %v6241, %v6239
      %v6284 = vpack.c.bf16 %v6244, %v6242
      %v6285 = vpack.c.bf16 %v6245, %v6243
      %v6286 = vpack.c.bf16 %v6248, %v6246
      %v6287 = vpack.c.bf16 %v6249, %v6247
      %v6288 = vpack.c.bf16 %v6250, %v6250
      %v6289 = vpack.c.bf16 %v6251, %v6251
      %v6326 = vrot.slane %v6252, 1
      %v6327 = vrot.slane %v6254, 1
      %v6328 = vsel %vm1044, %v6326, %v6327
      %v6329 = vrot.slane %v6253, 1
      %v6330 = vrot.slane %v6255, 1
      %v6331 = vsel %vm1044, %v6329, %v6330
      %v6332 = vrot.slane %v6256, 1
      %v6333 = vsel %vm1044, %v6327, %v6332
      %v6334 = vrot.slane %v6257, 1
      %v6335 = vsel %vm1044, %v6330, %v6334
      %v6336 = vrot.slane %v6258, 1
      %v6337 = vsel %vm1044, %v6332, %v6336
      %v6338 = vrot.slane %v6259, 1
      %v6339 = vsel %vm1044, %v6334, %v6338
      %v6340 = vrot.slane %v6260, 1
      %v6341 = vsel %vm1044, %v6336, %v6340
      %v6342 = vrot.slane %v6261, 1
      %v6343 = vsel %vm1044, %v6338, %v6342
      %v6344 = vrot.slane %v6262, 1
      %v6345 = vsel %vm1044, %v6340, %v6344
      %v6346 = vrot.slane %v6263, 1
      %v6347 = vsel %vm1044, %v6342, %v6346
      %v6348 = vrot.slane %v6264, 1
      %v6349 = vsel %vm1044, %v6344, %v6348
      %v6350 = vrot.slane %v6265, 1
      %v6351 = vsel %vm1044, %v6346, %v6350
      %v6352 = vrot.slane %v6266, 1
      %v6353 = vsel %vm1044, %v6348, %v6352
      %v6354 = vrot.slane %v6267, 1
      %v6355 = vsel %vm1044, %v6350, %v6354
      %v6356 = vrot.slane %v6268, 1
      %v6357 = vsel %vm1044, %v6352, %v6356
      %v6358 = vrot.slane %v6269, 1
      %v6359 = vsel %vm1044, %v6354, %v6358
      %v6360 = vrot.slane %v6270, 1
      %v6361 = vsel %vm1044, %v6356, %v6360
      %v6362 = vrot.slane %v6271, 1
      %v6363 = vsel %vm1044, %v6358, %v6362
      %v6364 = vrot.slane %v6272, 1
      %v6365 = vsel %vm1044, %v6360, %v6364
      %v6366 = vrot.slane %v6273, 1
      %v6367 = vsel %vm1044, %v6362, %v6366
      %v6368 = vrot.slane %v6274, 1
      %v6369 = vsel %vm1044, %v6364, %v6368
      %v6370 = vrot.slane %v6275, 1
      %v6371 = vsel %vm1044, %v6366, %v6370
      %v6372 = vrot.slane %v6276, 1
      %v6373 = vsel %vm1044, %v6368, %v6372
      %v6374 = vrot.slane %v6277, 1
      %v6375 = vsel %vm1044, %v6370, %v6374
      %v6376 = vrot.slane %v6278, 1
      %v6377 = vsel %vm1044, %v6372, %v6376
      %v6378 = vrot.slane %v6279, 1
      %v6379 = vsel %vm1044, %v6374, %v6378
      %v6380 = vrot.slane %v6280, 1
      %v6381 = vsel %vm1044, %v6376, %v6380
      %v6382 = vrot.slane %v6281, 1
      %v6383 = vsel %vm1044, %v6378, %v6382
      %v6384 = vrot.slane %v6282, 1
      %v6385 = vsel %vm1044, %v6380, %v6384
      %v6386 = vrot.slane %v6283, 1
      %v6387 = vsel %vm1044, %v6382, %v6386
      %v6388 = vrot.slane %v6284, 1
      %v6389 = vsel %vm1044, %v6384, %v6388
      %v6390 = vrot.slane %v6285, 1
      %v6391 = vsel %vm1044, %v6386, %v6390
      %v6392 = vrot.slane %v6286, 1
      %v6393 = vsel %vm1044, %v6388, %v6392
      %v6394 = vrot.slane %v6287, 1
      %v6395 = vsel %vm1044, %v6390, %v6394
      %6396 = vrot.lane.b32.xlu0 %v6328, 64
      %v6397 = vpop.permute.xlu0 %6396
      %6398 = vrot.lane.b32.xlu0 %v6331, 64
      %v6399 = vpop.permute.xlu0 %6398
      %6400 = vrot.lane.b32.xlu0 %v6333, 64
      %v6401 = vpop.permute.xlu0 %6400
      %6402 = vrot.lane.b32.xlu0 %v6335, 64
      %v6403 = vpop.permute.xlu0 %6402
      %6404 = vrot.lane.b32.xlu0 %v6337, 64
      %v6405 = vpop.permute.xlu0 %6404
      %6406 = vrot.lane.b32.xlu0 %v6339, 64
      %v6407 = vpop.permute.xlu0 %6406
      %6408 = vrot.lane.b32.xlu0 %v6341, 64
      %v6409 = vpop.permute.xlu0 %6408
      %6410 = vrot.lane.b32.xlu0 %v6343, 64
      %v6411 = vpop.permute.xlu0 %6410
      %6412 = vrot.lane.b32.xlu0 %v6345, 64
      %v6413 = vpop.permute.xlu0 %6412
      %6414 = vrot.lane.b32.xlu0 %v6347, 64
      %v6415 = vpop.permute.xlu0 %6414
      %6416 = vrot.lane.b32.xlu0 %v6349, 64
      %v6417 = vpop.permute.xlu0 %6416
      %6418 = vrot.lane.b32.xlu0 %v6351, 64
      %v6419 = vpop.permute.xlu0 %6418
      %6420 = vrot.lane.b32.xlu0 %v6353, 64
      %v6421 = vpop.permute.xlu0 %6420
      %6422 = vrot.lane.b32.xlu0 %v6355, 64
      %v6423 = vpop.permute.xlu0 %6422
      %6424 = vrot.lane.b32.xlu0 %v6357, 64
      %v6425 = vpop.permute.xlu0 %6424
      %6426 = vrot.lane.b32.xlu0 %v6359, 64
      %v6427 = vpop.permute.xlu0 %6426
      %6428 = vrot.lane.b32.xlu0 %v6361, 64
      %v6429 = vpop.permute.xlu0 %6428
      %6430 = vrot.lane.b32.xlu0 %v6363, 64
      %v6431 = vpop.permute.xlu0 %6430
      %6432 = vrot.lane.b32.xlu0 %v6365, 64
      %v6433 = vpop.permute.xlu0 %6432
      %6434 = vrot.lane.b32.xlu0 %v6367, 64
      %v6435 = vpop.permute.xlu0 %6434
      %6436 = vrot.lane.b32.xlu0 %v6369, 64
      %v6437 = vpop.permute.xlu0 %6436
      %6438 = vrot.lane.b32.xlu0 %v6371, 64
      %v6439 = vpop.permute.xlu0 %6438
      %6440 = vrot.lane.b32.xlu0 %v6373, 64
      %v6441 = vpop.permute.xlu0 %6440
      %6442 = vrot.lane.b32.xlu0 %v6375, 64
      %v6443 = vpop.permute.xlu0 %6442
      %6444 = vrot.lane.b32.xlu0 %v6377, 64
      %v6445 = vpop.permute.xlu0 %6444
      %6446 = vrot.lane.b32.xlu0 %v6379, 64
      %v6447 = vpop.permute.xlu0 %6446
      %6448 = vrot.lane.b32.xlu0 %v6381, 64
      %v6449 = vpop.permute.xlu0 %6448
      %6450 = vrot.lane.b32.xlu0 %v6383, 64
      %v6451 = vpop.permute.xlu0 %6450
      %6452 = vrot.lane.b32.xlu0 %v6385, 64
      %v6453 = vpop.permute.xlu0 %6452
      %6454 = vrot.lane.b32.xlu0 %v6387, 64
      %v6455 = vpop.permute.xlu0 %6454
      %6456 = vrot.lane.b32.xlu0 %v6389, 64
      %v6457 = vpop.permute.xlu0 %6456
      %6458 = vrot.lane.b32.xlu0 %v6391, 64
      %v6459 = vpop.permute.xlu0 %6458
      %6460 = vrot.lane.b32.xlu0 %v6393, 64
      %v6461 = vpop.permute.xlu0 %6460
      %6462 = vrot.lane.b32.xlu0 %v6395, 64
      %v6463 = vpop.permute.xlu0 %6462
      %6464 = vrot.lane.b32.xlu0 %v6392, 64
      %v6465 = vpop.permute.xlu0 %6464
      %6466 = vrot.lane.b32.xlu0 %v6394, 64
      %v6467 = vpop.permute.xlu0 %6466
      %vm6468 = vcmask 523264
      %v6469 = vsel %vm6468, %v6397, %v6399
      %v6470 = vsel %vm6468, %v6401, %v6403
      %v6471 = vsel %vm6468, %v6405, %v6407
      %v6472 = vsel %vm6468, %v6409, %v6411
      %v6473 = vsel %vm6468, %v6413, %v6415
      %v6474 = vsel %vm6468, %v6417, %v6419
      %v6475 = vsel %vm6468, %v6421, %v6423
      %v6476 = vsel %vm6468, %v6425, %v6427
      %v6477 = vsel %vm6468, %v6429, %v6431
      %v6478 = vsel %vm6468, %v6433, %v6435
      %v6479 = vsel %vm6468, %v6437, %v6439
      %v6480 = vsel %vm6468, %v6441, %v6443
      %v6481 = vsel %vm6468, %v6445, %v6447
      %v6482 = vsel %vm6468, %v6449, %v6451
      %v6483 = vsel %vm6468, %v6453, %v6455
      %v6484 = vsel %vm6468, %v6457, %v6459
      %v6485 = vsel %vm6468, %v6461, %v6463
      %v6486 = vsel %vm6468, %v6465, %v6467
      %v6507 = vrot.slane %v6252, 2
      %v6508 = vrot.slane %v6254, 2
      %v6509 = vsel %vm1234, %v6507, %v6508
      %v6510 = vrot.slane %v6253, 2
      %v6511 = vrot.slane %v6255, 2
      %v6512 = vsel %vm1234, %v6510, %v6511
      %v6513 = vrot.slane %v6256, 2
      %v6514 = vsel %vm1234, %v6508, %v6513
      %v6515 = vrot.slane %v6257, 2
      %v6516 = vsel %vm1234, %v6511, %v6515
      %v6517 = vrot.slane %v6258, 2
      %v6518 = vsel %vm1234, %v6513, %v6517
      %v6519 = vrot.slane %v6259, 2
      %v6520 = vsel %vm1234, %v6515, %v6519
      %v6521 = vrot.slane %v6260, 2
      %v6522 = vsel %vm1234, %v6517, %v6521
      %v6523 = vrot.slane %v6261, 2
      %v6524 = vsel %vm1234, %v6519, %v6523
      %v6525 = vrot.slane %v6262, 2
      %v6526 = vsel %vm1234, %v6521, %v6525
      %v6527 = vrot.slane %v6263, 2
      %v6528 = vsel %vm1234, %v6523, %v6527
      %v6529 = vrot.slane %v6264, 2
      %v6530 = vsel %vm1234, %v6525, %v6529
      %v6531 = vrot.slane %v6265, 2
      %v6532 = vsel %vm1234, %v6527, %v6531
      %v6533 = vrot.slane %v6266, 2
      %v6534 = vsel %vm1234, %v6529, %v6533
      %v6535 = vrot.slane %v6267, 2
      %v6536 = vsel %vm1234, %v6531, %v6535
      %v6537 = vrot.slane %v6268, 2
      %v6538 = vsel %vm1234, %v6533, %v6537
      %v6539 = vrot.slane %v6269, 2
      %v6540 = vsel %vm1234, %v6535, %v6539
      %v6541 = vrot.slane %v6270, 2
      %v6542 = vsel %vm1234, %v6537, %v6541
      %v6543 = vrot.slane %v6271, 2
      %v6544 = vsel %vm1234, %v6539, %v6543
      %v6545 = vrot.slane %v6272, 2
      %v6546 = vsel %vm1234, %v6541, %v6545
      %v6547 = vrot.slane %v6273, 2
      %v6548 = vsel %vm1234, %v6543, %v6547
      %v6549 = vrot.slane %v6274, 2
      %v6550 = vsel %vm1234, %v6545, %v6549
      %v6551 = vrot.slane %v6275, 2
      %v6552 = vsel %vm1234, %v6547, %v6551
      %v6553 = vrot.slane %v6276, 2
      %v6554 = vsel %vm1234, %v6549, %v6553
      %v6555 = vrot.slane %v6277, 2
      %v6556 = vsel %vm1234, %v6551, %v6555
      %v6557 = vrot.slane %v6278, 2
      %v6558 = vsel %vm1234, %v6553, %v6557
      %v6559 = vrot.slane %v6279, 2
      %v6560 = vsel %vm1234, %v6555, %v6559
      %v6561 = vrot.slane %v6280, 2
      %v6562 = vsel %vm1234, %v6557, %v6561
      %v6563 = vrot.slane %v6281, 2
      %v6564 = vsel %vm1234, %v6559, %v6563
      %v6565 = vrot.slane %v6282, 2
      %v6566 = vsel %vm1234, %v6561, %v6565
      %v6567 = vrot.slane %v6283, 2
      %v6568 = vsel %vm1234, %v6563, %v6567
      %v6569 = vrot.slane %v6284, 2
      %v6570 = vsel %vm1234, %v6565, %v6569
      %v6571 = vrot.slane %v6285, 2
      %v6572 = vsel %vm1234, %v6567, %v6571
      %v6573 = vrot.slane %v6286, 2
      %v6574 = vsel %vm1234, %v6569, %v6573
      %v6575 = vrot.slane %v6287, 2
      %v6576 = vsel %vm1234, %v6571, %v6575
      %v6577 = vrot.slane %v6288, 2
      %v6578 = vsel %vm1234, %v6573, %v6577
      %v6579 = vrot.slane %v6289, 2
      %v6580 = vsel %vm1234, %v6575, %v6579
      %v6601 = vsel %vm2672, %v6253, %v6397
      %v6605 = vsel %vm2672, %v6255, %v6401
      %v6609 = vsel %vm2672, %v6257, %v6405
      %v6613 = vsel %vm2672, %v6259, %v6409
      %v6617 = vsel %vm2672, %v6261, %v6413
      %v6621 = vsel %vm2672, %v6263, %v6417
      %v6625 = vsel %vm2672, %v6265, %v6421
      %v6629 = vsel %vm2672, %v6267, %v6425
      %v6633 = vsel %vm2672, %v6269, %v6429
      %v6637 = vsel %vm2672, %v6271, %v6433
      %v6641 = vsel %vm2672, %v6273, %v6437
      %v6645 = vsel %vm2672, %v6275, %v6441
      %v6649 = vsel %vm2672, %v6277, %v6445
      %v6653 = vsel %vm2672, %v6279, %v6449
      %v6657 = vsel %vm2672, %v6281, %v6453
      %v6661 = vsel %vm2672, %v6283, %v6457
      %v6665 = vsel %vm2672, %v6285, %v6461
      %v6669 = vsel %vm2672, %v6287, %v6465
      %v6671 = vld [vmem:[%s10] sm:$0xff]
      %v6672 = vld [vmem:[%s10 + $0x8] sm:$0xff]
      %v6673 = vld [vmem:[%s10 + $0x10] sm:$0xff]
      %v6674 = vld [vmem:[%s10 + $0x18] sm:$0xff]
      %v6675 = vld [vmem:[%s10 + $0x20] sm:$0xff]
      %v6676 = vld [vmem:[%s10 + $0x28] sm:$0xff]
      %v6677 = vld [vmem:[%s10 + $0x30] sm:$0xff]
      %v6678 = vld [vmem:[%s10 + $0x38] sm:$0xff]
      %v6679 = vld [vmem:[%s10 + $0x40] sm:$0xff]
      %v6680 = vld [vmem:[%s10 + $0x48] sm:$0xff]
      %v6681 = vld [vmem:[%s10 + $0x50] sm:$0xff]
      %v6682 = vld [vmem:[%s10 + $0x58] sm:$0xff]
      %v6683 = vld [vmem:[%s10 + $0x60] sm:$0xff]
      %v6684 = vld [vmem:[%s10 + $0x68] sm:$0xff]
      %v6685 = vld [vmem:[%s10 + $0x70] sm:$0xff]
      %v6686 = vld [vmem:[%s10 + $0x78] sm:$0xff]
      %v6687 = vld [vmem:[%s10 + $0x80] sm:$0xff]
      %v6688 = vld [vmem:[%s10 + $0x88] sm:$0xff]
      %v6689 = vld [vmem:[%s10 + $0x90] sm:$0xff]
      %v6690 = vld [vmem:[%s10 + $0x98] sm:$0xff]
      %v6691 = vld [vmem:[%s10 + $0xa0] sm:$0xff]
      %v6692 = vld [vmem:[%s10 + $0xa8] sm:$0xff]
      %v6693 = vld [vmem:[%s10 + $0xb0] sm:$0xff]
      %v6694 = vld [vmem:[%s10 + $0xb8] sm:$0xff]
      %v6695 = vld [vmem:[%s10 + $0xc0] sm:$0xff]
      %v6696 = vld [vmem:[%s10 + $0xc8] sm:$0xff]
      %v6697 = vld [vmem:[%s10 + $0xd0] sm:$0xff]
      %v6698 = vld [vmem:[%s10 + $0xd8] sm:$0xff]
      %v6699 = vld [vmem:[%s10 + $0xe0] sm:$0xff]
      %v6700 = vld [vmem:[%s10 + $0xe8] sm:$0xff]
      %v6701 = vld [vmem:[%s10 + $0xf0] sm:$0xff]
      %v6702 = vld [vmem:[%s10 + $0xf8] sm:$0xff]
      %v6703 = vld [vmem:[%s10 + $0x100] sm:$0xff]
      %v6704 = vld [vmem:[%s10 + $0x108] sm:$0xff]
      %v6705 = vld [vmem:[%s10 + $0x110] sm:$0xff]
      %v6706 = vld [vmem:[%s10 + $0x118] sm:$0xff]
      %v6707 = vld [vmem:[%s10 + $0x120] sm:$0xff]
      %v6708 = vld [vmem:[%s10 + $0x128] sm:$0xff]
      %v6709 = vld [vmem:[%s10 + $0x130] sm:$0xff]
      %v6710 = vld [vmem:[%s10 + $0x138] sm:$0xff]
      %v6711 = vld [vmem:[%s10 + $0x140] sm:$0xff]
      %v6712 = vld [vmem:[%s10 + $0x148] sm:$0xff]
      %v6713 = vld [vmem:[%s10 + $0x150] sm:$0xff]
      %v6714 = vld [vmem:[%s10 + $0x158] sm:$0xff]
      %v6715 = vld [vmem:[%s10 + $0x160] sm:$0xff]
      %v6716 = vld [vmem:[%s10 + $0x168] sm:$0xff]
      %v6717 = vld [vmem:[%s10 + $0x170] sm:$0xff]
      %v6718 = vld [vmem:[%s10 + $0x178] sm:$0xff]
      %v6719 = vld [vmem:[%s10 + $0x180] sm:$0xff]
      %v6720 = vld [vmem:[%s10 + $0x188] sm:$0xff]
      %v6721 = vld [vmem:[%s10 + $0x190] sm:$0xff]
      %v6722 = vld [vmem:[%s10 + $0x198] sm:$0xff]
      %v6723 = vld [vmem:[%s10 + $0x1a0] sm:$0xff]
      %v6724 = vld [vmem:[%s10 + $0x1a8] sm:$0xff]
      %v6725 = vld [vmem:[%s10 + $0x1b0] sm:$0xff]
      %v6726 = vld [vmem:[%s10 + $0x1b8] sm:$0xff]
      %v6727 = vld [vmem:[%s10 + $0x1c0] sm:$0xff]
      %v6728 = vld [vmem:[%s10 + $0x1c8] sm:$0xff]
      %v6729 = vld [vmem:[%s10 + $0x1d0] sm:$0xff]
      %v6730 = vld [vmem:[%s10 + $0x1d8] sm:$0xff]
      %v6731 = vld [vmem:[%s10 + $0x1e0] sm:$0xff]
      %v6732 = vld [vmem:[%s10 + $0x1e8] sm:$0xff]
      %v6733 = vld [vmem:[%s10 + $0x1f0] sm:$0xff]
      %v6734 = vld [vmem:[%s10 + $0x1f8] sm:$0xff]
      %v6735 = vld [vmem:[%s10 + $0x200] sm:$0xff]
      %v6736 = vld [vmem:[%s10 + $0x208] sm:$0xff]
      %v6737 = vld [vmem:[%s10 + $0x210] sm:$0xff]
      %v6738 = vld [vmem:[%s10 + $0x218] sm:$0xff]
      %v6739 = vld [vmem:[%s10 + $0x220] sm:$0xff]
      %v6740 = vld [vmem:[%s10 + $0x228] sm:$0xff]
      %v6741 = vld [vmem:[%s10 + $0x230] sm:$0xff]
      %v6742 = vld [vmem:[%s10 + $0x238] sm:$0xff]
      %v6743 = vld [vmem:[%s11] sm:$0x3]
      %v6745 = vlaneseq
      %v6746 = vshrl.u32 %v6745, 7
      %v6747 = vsub.s32 0, %v6746
      %v6748 = vrot.slane %v6743, %v6747
      %v6749 = vlaneseq
      %v6750 = vshrl.u32 %v6749, 7
      %v6751 = vsub.s32 1, %v6750
      %v6752 = vrot.slane %v6743, %v6751
      %v6827 = vunpack.c.l.b16 %v6671
      %v6828 = vunpack.c.h.b16 %v6671
      %v6829 = vunpack.c.l.b16 %v6672
      %v6830 = vunpack.c.h.b16 %v6672
      %v6831 = vunpack.c.l.b16 %v6673
      %v6832 = vunpack.c.h.b16 %v6673
      %v6833 = vunpack.c.l.b16 %v6674
      %v6834 = vunpack.c.h.b16 %v6674
      %v6835 = vunpack.c.l.b16 %v6675
      %v6836 = vunpack.c.h.b16 %v6675
      %v6837 = vunpack.c.l.b16 %v6676
      %v6838 = vunpack.c.h.b16 %v6676
      %v6839 = vunpack.c.l.b16 %v6677
      %v6840 = vunpack.c.h.b16 %v6677
      %v6841 = vunpack.c.l.b16 %v6678
      %v6842 = vunpack.c.h.b16 %v6678
      %v6843 = vunpack.c.l.b16 %v6679
      %v6844 = vunpack.c.h.b16 %v6679
      %v6845 = vunpack.c.l.b16 %v6680
      %v6846 = vunpack.c.h.b16 %v6680
      %v6847 = vunpack.c.l.b16 %v6681
      %v6848 = vunpack.c.h.b16 %v6681
      %v6849 = vunpack.c.l.b16 %v6682
      %v6850 = vunpack.c.h.b16 %v6682
      %v6851 = vunpack.c.l.b16 %v6683
      %v6852 = vunpack.c.h.b16 %v6683
      %v6853 = vunpack.c.l.b16 %v6684
      %v6854 = vunpack.c.h.b16 %v6684
      %v6855 = vunpack.c.l.b16 %v6685
      %v6856 = vunpack.c.h.b16 %v6685
      %v6857 = vunpack.c.l.b16 %v6686
      %v6858 = vunpack.c.h.b16 %v6686
      %v6859 = vunpack.c.l.b16 %v6687
      %v6860 = vunpack.c.h.b16 %v6687
      %v6861 = vunpack.c.l.b16 %v6688
      %v6862 = vunpack.c.h.b16 %v6688
      %v6863 = vunpack.c.l.b16 %v6689
      %v6864 = vunpack.c.h.b16 %v6689
      %v6865 = vunpack.c.l.b16 %v6690
      %v6866 = vunpack.c.h.b16 %v6690
      %v6867 = vunpack.c.l.b16 %v6691
      %v6868 = vunpack.c.h.b16 %v6691
      %v6869 = vunpack.c.l.b16 %v6692
      %v6870 = vunpack.c.h.b16 %v6692
      %v6871 = vunpack.c.l.b16 %v6693
      %v6872 = vunpack.c.h.b16 %v6693
      %v6873 = vunpack.c.l.b16 %v6694
      %v6874 = vunpack.c.h.b16 %v6694
      %v6875 = vunpack.c.l.b16 %v6695
      %v6876 = vunpack.c.h.b16 %v6695
      %v6877 = vunpack.c.l.b16 %v6696
      %v6878 = vunpack.c.h.b16 %v6696
      %v6879 = vunpack.c.l.b16 %v6697
      %v6880 = vunpack.c.h.b16 %v6697
      %v6881 = vunpack.c.l.b16 %v6698
      %v6882 = vunpack.c.h.b16 %v6698
      %v6883 = vunpack.c.l.b16 %v6699
      %v6884 = vunpack.c.h.b16 %v6699
      %v6885 = vunpack.c.l.b16 %v6700
      %v6886 = vunpack.c.h.b16 %v6700
      %v6887 = vunpack.c.l.b16 %v6701
      %v6888 = vunpack.c.h.b16 %v6701
      %v6889 = vunpack.c.l.b16 %v6702
      %v6890 = vunpack.c.h.b16 %v6702
      %v6891 = vunpack.c.l.b16 %v6703
      %v6892 = vunpack.c.h.b16 %v6703
      %v6893 = vunpack.c.l.b16 %v6704
      %v6894 = vunpack.c.h.b16 %v6704
      %v6895 = vunpack.c.l.b16 %v6705
      %v6896 = vunpack.c.h.b16 %v6705
      %v6897 = vunpack.c.l.b16 %v6706
      %v6898 = vunpack.c.h.b16 %v6706
      %v6899 = vunpack.c.l.b16 %v6707
      %v6900 = vunpack.c.h.b16 %v6707
      %v6901 = vunpack.c.l.b16 %v6708
      %v6902 = vunpack.c.h.b16 %v6708
      %v6903 = vunpack.c.l.b16 %v6709
      %v6904 = vunpack.c.h.b16 %v6709
      %v6905 = vunpack.c.l.b16 %v6710
      %v6906 = vunpack.c.h.b16 %v6710
      %v6907 = vunpack.c.l.b16 %v6711
      %v6908 = vunpack.c.h.b16 %v6711
      %v6909 = vunpack.c.l.b16 %v6712
      %v6910 = vunpack.c.h.b16 %v6712
      %v6911 = vunpack.c.l.b16 %v6713
      %v6912 = vunpack.c.h.b16 %v6713
      %v6913 = vunpack.c.l.b16 %v6714
      %v6914 = vunpack.c.h.b16 %v6714
      %v6915 = vunpack.c.l.b16 %v6715
      %v6916 = vunpack.c.h.b16 %v6715
      %v6917 = vunpack.c.l.b16 %v6716
      %v6918 = vunpack.c.h.b16 %v6716
      %v6919 = vunpack.c.l.b16 %v6717
      %v6920 = vunpack.c.h.b16 %v6717
      %v6921 = vunpack.c.l.b16 %v6718
      %v6922 = vunpack.c.h.b16 %v6718
      %v6923 = vunpack.c.l.b16 %v6719
      %v6924 = vunpack.c.h.b16 %v6719
      %v6925 = vunpack.c.l.b16 %v6720
      %v6926 = vunpack.c.h.b16 %v6720
      %v6927 = vunpack.c.l.b16 %v6721
      %v6928 = vunpack.c.h.b16 %v6721
      %v6929 = vunpack.c.l.b16 %v6722
      %v6930 = vunpack.c.h.b16 %v6722
      %v6931 = vunpack.c.l.b16 %v6723
      %v6932 = vunpack.c.h.b16 %v6723
      %v6933 = vunpack.c.l.b16 %v6724
      %v6934 = vunpack.c.h.b16 %v6724
      %v6935 = vunpack.c.l.b16 %v6725
      %v6936 = vunpack.c.h.b16 %v6725
      %v6937 = vunpack.c.l.b16 %v6726
      %v6938 = vunpack.c.h.b16 %v6726
      %v6939 = vunpack.c.l.b16 %v6727
      %v6940 = vunpack.c.h.b16 %v6727
      %v6941 = vunpack.c.l.b16 %v6728
      %v6942 = vunpack.c.h.b16 %v6728
      %v6943 = vunpack.c.l.b16 %v6729
      %v6944 = vunpack.c.h.b16 %v6729
      %v6945 = vunpack.c.l.b16 %v6730
      %v6946 = vunpack.c.h.b16 %v6730
      %v6947 = vunpack.c.l.b16 %v6731
      %v6948 = vunpack.c.h.b16 %v6731
      %v6949 = vunpack.c.l.b16 %v6732
      %v6950 = vunpack.c.h.b16 %v6732
      %v6951 = vunpack.c.l.b16 %v6733
      %v6952 = vunpack.c.h.b16 %v6733
      %v6953 = vunpack.c.l.b16 %v6734
      %v6954 = vunpack.c.h.b16 %v6734
      %v6955 = vunpack.c.l.b16 %v6735
      %v6956 = vunpack.c.h.b16 %v6735
      %v6957 = vunpack.c.l.b16 %v6736
      %v6958 = vunpack.c.h.b16 %v6736
      %v6959 = vunpack.c.l.b16 %v6737
      %v6960 = vunpack.c.h.b16 %v6737
      %v6961 = vunpack.c.l.b16 %v6738
      %v6962 = vunpack.c.h.b16 %v6738
      %v6963 = vunpack.c.l.b16 %v6739
      %v6964 = vunpack.c.h.b16 %v6739
      %v6965 = vunpack.c.l.b16 %v6740
      %v6966 = vunpack.c.h.b16 %v6740
      %v6967 = vunpack.c.l.b16 %v6741
      %v6968 = vunpack.c.h.b16 %v6741
      %v6969 = vunpack.c.l.b16 %v6742
      %v6970 = vunpack.c.h.b16 %v6742
      %v6971 = vpack.c.b16 %v6829, %v6827
      %v6972 = vpack.c.b16 %v6830, %v6828
      %v6973 = vpack.c.b16 %v6833, %v6831
      %v6974 = vpack.c.b16 %v6834, %v6832
      %v6975 = vpack.c.b16 %v6837, %v6835
      %v6976 = vpack.c.b16 %v6838, %v6836
      %v6977 = vpack.c.b16 %v6841, %v6839
      %v6978 = vpack.c.b16 %v6842, %v6840
      %v6979 = vpack.c.b16 %v6845, %v6843
      %v6980 = vpack.c.b16 %v6846, %v6844
      %v6981 = vpack.c.b16 %v6849, %v6847
      %v6982 = vpack.c.b16 %v6850, %v6848
      %v6983 = vpack.c.b16 %v6853, %v6851
      %v6984 = vpack.c.b16 %v6854, %v6852
      %v6985 = vpack.c.b16 %v6857, %v6855
      %v6986 = vpack.c.b16 %v6858, %v6856
      %v6987 = vpack.c.b16 %v6861, %v6859
      %v6988 = vpack.c.b16 %v6862, %v6860
      %v6989 = vpack.c.b16 %v6865, %v6863
      %v6990 = vpack.c.b16 %v6866, %v6864
      %v6991 = vpack.c.b16 %v6869, %v6867
      %v6992 = vpack.c.b16 %v6870, %v6868
      %v6993 = vpack.c.b16 %v6873, %v6871
      %v6994 = vpack.c.b16 %v6874, %v6872
      %v6995 = vpack.c.b16 %v6877, %v6875
      %v6996 = vpack.c.b16 %v6878, %v6876
      %v6997 = vpack.c.b16 %v6881, %v6879
      %v6998 = vpack.c.b16 %v6882, %v6880
      %v6999 = vpack.c.b16 %v6885, %v6883
      %v7000 = vpack.c.b16 %v6886, %v6884
      %v7001 = vpack.c.b16 %v6889, %v6887
      %v7002 = vpack.c.b16 %v6890, %v6888
      %v7003 = vpack.c.b16 %v6893, %v6891
      %v7004 = vpack.c.b16 %v6894, %v6892
      %v7005 = vpack.c.b16 %v6897, %v6895
      %v7006 = vpack.c.b16 %v6898, %v6896
      %v7007 = vpack.c.b16 %v6901, %v6899
      %v7008 = vpack.c.b16 %v6902, %v6900
      %v7009 = vpack.c.b16 %v6905, %v6903
      %v7010 = vpack.c.b16 %v6906, %v6904
      %v7011 = vpack.c.b16 %v6909, %v6907
      %v7012 = vpack.c.b16 %v6910, %v6908
      %v7013 = vpack.c.b16 %v6913, %v6911
      %v7014 = vpack.c.b16 %v6914, %v6912
      %v7015 = vpack.c.b16 %v6917, %v6915
      %v7016 = vpack.c.b16 %v6918, %v6916
      %v7017 = vpack.c.b16 %v6921, %v6919
      %v7018 = vpack.c.b16 %v6922, %v6920
      %v7019 = vpack.c.b16 %v6925, %v6923
      %v7020 = vpack.c.b16 %v6926, %v6924
      %v7021 = vpack.c.b16 %v6929, %v6927
      %v7022 = vpack.c.b16 %v6930, %v6928
      %v7023 = vpack.c.b16 %v6933, %v6931
      %v7024 = vpack.c.b16 %v6934, %v6932
      %v7025 = vpack.c.b16 %v6937, %v6935
      %v7026 = vpack.c.b16 %v6938, %v6936
      %v7027 = vpack.c.b16 %v6941, %v6939
      %v7028 = vpack.c.b16 %v6942, %v6940
      %v7029 = vpack.c.b16 %v6945, %v6943
      %v7030 = vpack.c.b16 %v6946, %v6944
      %v7031 = vpack.c.b16 %v6949, %v6947
      %v7032 = vpack.c.b16 %v6950, %v6948
      %v7033 = vpack.c.b16 %v6953, %v6951
      %v7034 = vpack.c.b16 %v6954, %v6952
      %v7035 = vpack.c.b16 %v6957, %v6955
      %v7036 = vpack.c.b16 %v6958, %v6956
      %v7037 = vpack.c.b16 %v6961, %v6959
      %v7038 = vpack.c.b16 %v6962, %v6960
      %v7039 = vpack.c.b16 %v6965, %v6963
      %v7040 = vpack.c.b16 %v6966, %v6964
      %v7041 = vpack.c.b16 %v6969, %v6967
      %v7042 = vpack.c.b16 %v6970, %v6968
      %v7116 = vsel %vm2672, %v6512, 0
      %v7119 = vsel %vm2672, %v6516, 0
      %v7122 = vsel %vm2672, %v6520, 0
      %v7125 = vsel %vm2672, %v6524, 0
      %v7128 = vsel %vm2672, %v6528, 0
      %v7131 = vsel %vm2672, %v6532, 0
      %v7134 = vsel %vm2672, %v6536, 0
      %v7137 = vsel %vm2672, %v6540, 0
      %v7140 = vsel %vm2672, %v6544, 0
      %v7143 = vsel %vm2672, %v6548, 0
      %v7146 = vsel %vm2672, %v6552, 0
      %v7149 = vsel %vm2672, %v6556, 0
      %v7152 = vsel %vm2672, %v6560, 0
      %v7155 = vsel %vm2672, %v6564, 0
      %v7158 = vsel %vm2672, %v6568, 0
      %v7161 = vsel %vm2672, %v6572, 0
      %v7164 = vsel %vm2672, %v6576, 0
      %v7167 = vsel %vm2672, %v6580, 0
      %7169 = vmatprep.subr.bf16.mxu0 %v6986
      %7170 = vmatpush1.bf16.msra.mxu0 %v6985
      %7171 = vmatprep.subr.bf16.mxu0 %v6984
      %7172 = vmatpush1.bf16.msra.mxu0 %v6983
      %7173 = vmatprep.subr.bf16.mxu0 %v6982
      %7174 = vmatpush1.bf16.msra.mxu0 %v6981
      %7175 = vmatprep.subr.bf16.mxu0 %v6980
      %7176 = vmatpush1.bf16.msra.mxu0 %v6979
      %7177 = vmatprep.subr.bf16.mxu0 %v6978
      %7178 = vmatpush1.bf16.msra.mxu0 %v6977
      %7179 = vmatprep.subr.bf16.mxu0 %v6976
      %7180 = vmatpush1.bf16.msra.mxu0 %v6975
      %7181 = vmatprep.subr.bf16.mxu0 %v6974
      %7182 = vmatpush1.bf16.msra.mxu0 %v6973
      %7183 = vmatprep.subr.bf16.mxu0 %v6972
      %7184 = vmatpush1.bf16.msra.mxu0 %v6971
      %7185 = vmatprep.subr.bf16.mxu0 %v7002
      %7186 = vmatpush2.bf16.msra.mxu0 %v7001
      %7187 = vmatprep.subr.bf16.mxu0 %v7000
      %7188 = vmatpush2.bf16.msra.mxu0 %v6999
      %7189 = vmatprep.subr.bf16.mxu0 %v6998
      %7190 = vmatpush2.bf16.msra.mxu0 %v6997
      %7191 = vmatprep.subr.bf16.mxu0 %v6996
      %7192 = vmatpush2.bf16.msra.mxu0 %v6995
      %7193 = vmatprep.subr.bf16.mxu0 %v6994
      %7194 = vmatpush2.bf16.msra.mxu0 %v6993
      %7195 = vmatprep.subr.bf16.mxu0 %v6992
      %7196 = vmatpush2.bf16.msra.mxu0 %v6991
      %7197 = vmatprep.subr.bf16.mxu0 %v6990
      %7198 = vmatpush2.bf16.msra.mxu0 %v6989
      %7199 = vmatprep.subr.bf16.mxu0 %v6988
      %7200 = vmatpush2.bf16.msra.mxu0 %v6987
      %7201 = vmatprep.mubr.bf16.mxu0 %v6601
      %7202 = vmatmul.mubr.bf16.gmra.mxu0 %v6252
      %v7203 = vpop.f32.mrf.mxu0
      %v7204 = vadd.f32 %v6748, %v7203
      %v7205 = vpop.f32.mrf.mxu0
      %v7206 = vadd.f32 %v6752, %v7205
      %v7207 = vpop.f32.mrf.mxu0
      %v7208 = vadd.f32 %v6748, %v7207
      %v7209 = vpop.f32.mrf.mxu0
      %v7210 = vadd.f32 %v6752, %v7209
      %7211 = vmatprep.mubr.bf16.mxu0 %v6605
      %7212 = vmatmul.mubr.bf16.gmra.mxu0 %v6254
      %v7213 = vpop.f32.mrf.mxu0
      %v7214 = vadd.f32 %v6748, %v7213
      %v7215 = vpop.f32.mrf.mxu0
      %v7216 = vadd.f32 %v6752, %v7215
      %v7217 = vpop.f32.mrf.mxu0
      %v7218 = vadd.f32 %v6748, %v7217
      %v7219 = vpop.f32.mrf.mxu0
      %v7220 = vadd.f32 %v6752, %v7219
      %7221 = vmatprep.mubr.bf16.mxu0 %v6609
      %7222 = vmatmul.mubr.bf16.gmra.mxu0 %v6256
      %v7223 = vpop.f32.mrf.mxu0
      %v7224 = vadd.f32 %v6748, %v7223
      %v7225 = vpop.f32.mrf.mxu0
      %v7226 = vadd.f32 %v6752, %v7225
      %v7227 = vpop.f32.mrf.mxu0
      %v7228 = vadd.f32 %v6748, %v7227
      %v7229 = vpop.f32.mrf.mxu0
      %v7230 = vadd.f32 %v6752, %v7229
      %7231 = vmatprep.mubr.bf16.mxu0 %v6613
      %7232 = vmatmul.mubr.bf16.gmra.mxu0 %v6258
      %v7233 = vpop.f32.mrf.mxu0
      %v7234 = vadd.f32 %v6748, %v7233
      %v7235 = vpop.f32.mrf.mxu0
      %v7236 = vadd.f32 %v6752, %v7235
      %v7237 = vpop.f32.mrf.mxu0
      %v7238 = vadd.f32 %v6748, %v7237
      %v7239 = vpop.f32.mrf.mxu0
      %v7240 = vadd.f32 %v6752, %v7239
      %7241 = vmatprep.mubr.bf16.mxu0 %v6617
      %7242 = vmatmul.mubr.bf16.gmra.mxu0 %v6260
      %v7243 = vpop.f32.mrf.mxu0
      %v7244 = vadd.f32 %v6748, %v7243
      %v7245 = vpop.f32.mrf.mxu0
      %v7246 = vadd.f32 %v6752, %v7245
      %v7247 = vpop.f32.mrf.mxu0
      %v7248 = vadd.f32 %v6748, %v7247
      %v7249 = vpop.f32.mrf.mxu0
      %v7250 = vadd.f32 %v6752, %v7249
      %7251 = vmatprep.mubr.bf16.mxu0 %v6621
      %7252 = vmatmul.mubr.bf16.gmra.mxu0 %v6262
      %v7253 = vpop.f32.mrf.mxu0
      %v7254 = vadd.f32 %v6748, %v7253
      %v7255 = vpop.f32.mrf.mxu0
      %v7256 = vadd.f32 %v6752, %v7255
      %v7257 = vpop.f32.mrf.mxu0
      %v7258 = vadd.f32 %v6748, %v7257
      %v7259 = vpop.f32.mrf.mxu0
      %v7260 = vadd.f32 %v6752, %v7259
      %7261 = vmatprep.mubr.bf16.mxu0 %v6625
      %7262 = vmatmul.mubr.bf16.gmra.mxu0 %v6264
      %v7263 = vpop.f32.mrf.mxu0
      %v7264 = vadd.f32 %v6748, %v7263
      %v7265 = vpop.f32.mrf.mxu0
      %v7266 = vadd.f32 %v6752, %v7265
      %v7267 = vpop.f32.mrf.mxu0
      %v7268 = vadd.f32 %v6748, %v7267
      %v7269 = vpop.f32.mrf.mxu0
      %v7270 = vadd.f32 %v6752, %v7269
      %7271 = vmatprep.mubr.bf16.mxu0 %v6629
      %7272 = vmatmul.mubr.bf16.gmra.mxu0 %v6266
      %v7273 = vpop.f32.mrf.mxu0
      %v7274 = vadd.f32 %v6748, %v7273
      %v7275 = vpop.f32.mrf.mxu0
      %v7276 = vadd.f32 %v6752, %v7275
      %v7277 = vpop.f32.mrf.mxu0
      %v7278 = vadd.f32 %v6748, %v7277
      %v7279 = vpop.f32.mrf.mxu0
      %v7280 = vadd.f32 %v6752, %v7279
      %7281 = vmatprep.mubr.bf16.mxu0 %v6633
      %7282 = vmatmul.mubr.bf16.gmra.mxu0 %v6268
      %v7283 = vpop.f32.mrf.mxu0
      %v7284 = vadd.f32 %v6748, %v7283
      %v7285 = vpop.f32.mrf.mxu0
      %v7286 = vadd.f32 %v6752, %v7285
      %v7287 = vpop.f32.mrf.mxu0
      %v7288 = vadd.f32 %v6748, %v7287
      %v7289 = vpop.f32.mrf.mxu0
      %v7290 = vadd.f32 %v6752, %v7289
      %7291 = vmatprep.mubr.bf16.mxu0 %v6637
      %7292 = vmatmul.mubr.bf16.gmra.mxu0 %v6270
      %v7293 = vpop.f32.mrf.mxu0
      %v7294 = vadd.f32 %v6748, %v7293
      %v7295 = vpop.f32.mrf.mxu0
      %v7296 = vadd.f32 %v6752, %v7295
      %v7297 = vpop.f32.mrf.mxu0
      %v7298 = vadd.f32 %v6748, %v7297
      %v7299 = vpop.f32.mrf.mxu0
      %v7300 = vadd.f32 %v6752, %v7299
      %7301 = vmatprep.mubr.bf16.mxu0 %v6641
      %7302 = vmatmul.mubr.bf16.gmra.mxu0 %v6272
      %v7303 = vpop.f32.mrf.mxu0
      %v7304 = vadd.f32 %v6748, %v7303
      %v7305 = vpop.f32.mrf.mxu0
      %v7306 = vadd.f32 %v6752, %v7305
      %v7307 = vpop.f32.mrf.mxu0
      %v7308 = vadd.f32 %v6748, %v7307
      %v7309 = vpop.f32.mrf.mxu0
      %v7310 = vadd.f32 %v6752, %v7309
      %7311 = vmatprep.mubr.bf16.mxu0 %v6645
      %7312 = vmatmul.mubr.bf16.gmra.mxu0 %v6274
      %v7313 = vpop.f32.mrf.mxu0
      %v7314 = vadd.f32 %v6748, %v7313
      %v7315 = vpop.f32.mrf.mxu0
      %v7316 = vadd.f32 %v6752, %v7315
      %v7317 = vpop.f32.mrf.mxu0
      %v7318 = vadd.f32 %v6748, %v7317
      %v7319 = vpop.f32.mrf.mxu0
      %v7320 = vadd.f32 %v6752, %v7319
      %7321 = vmatprep.mubr.bf16.mxu0 %v6649
      %7322 = vmatmul.mubr.bf16.gmra.mxu0 %v6276
      %v7323 = vpop.f32.mrf.mxu0
      %v7324 = vadd.f32 %v6748, %v7323
      %v7325 = vpop.f32.mrf.mxu0
      %v7326 = vadd.f32 %v6752, %v7325
      %v7327 = vpop.f32.mrf.mxu0
      %v7328 = vadd.f32 %v6748, %v7327
      %v7329 = vpop.f32.mrf.mxu0
      %v7330 = vadd.f32 %v6752, %v7329
      %7331 = vmatprep.mubr.bf16.mxu0 %v6653
      %7332 = vmatmul.mubr.bf16.gmra.mxu0 %v6278
      %v7333 = vpop.f32.mrf.mxu0
      %v7334 = vadd.f32 %v6748, %v7333
      %v7335 = vpop.f32.mrf.mxu0
      %v7336 = vadd.f32 %v6752, %v7335
      %v7337 = vpop.f32.mrf.mxu0
      %v7338 = vadd.f32 %v6748, %v7337
      %v7339 = vpop.f32.mrf.mxu0
      %v7340 = vadd.f32 %v6752, %v7339
      %7341 = vmatprep.mubr.bf16.mxu0 %v6657
      %7342 = vmatmul.mubr.bf16.gmra.mxu0 %v6280
      %v7343 = vpop.f32.mrf.mxu0
      %v7344 = vadd.f32 %v6748, %v7343
      %v7345 = vpop.f32.mrf.mxu0
      %v7346 = vadd.f32 %v6752, %v7345
      %v7347 = vpop.f32.mrf.mxu0
      %v7348 = vadd.f32 %v6748, %v7347
      %v7349 = vpop.f32.mrf.mxu0
      %v7350 = vadd.f32 %v6752, %v7349
      %7351 = vmatprep.mubr.bf16.mxu0 %v6661
      %7352 = vmatmul.mubr.bf16.gmra.mxu0 %v6282
      %v7353 = vpop.f32.mrf.mxu0
      %v7354 = vadd.f32 %v6748, %v7353
      %v7355 = vpop.f32.mrf.mxu0
      %v7356 = vadd.f32 %v6752, %v7355
      %v7357 = vpop.f32.mrf.mxu0
      %v7358 = vadd.f32 %v6748, %v7357
      %v7359 = vpop.f32.mrf.mxu0
      %v7360 = vadd.f32 %v6752, %v7359
      %7361 = vmatprep.mubr.bf16.mxu0 %v6665
      %7362 = vmatmul.mubr.bf16.gmra.mxu0 %v6284
      %v7363 = vpop.f32.mrf.mxu0
      %v7364 = vadd.f32 %v6748, %v7363
      %v7365 = vpop.f32.mrf.mxu0
      %v7366 = vadd.f32 %v6752, %v7365
      %v7367 = vpop.f32.mrf.mxu0
      %v7368 = vadd.f32 %v6748, %v7367
      %v7369 = vpop.f32.mrf.mxu0
      %v7370 = vadd.f32 %v6752, %v7369
      %7371 = vmatprep.mubr.bf16.mxu0 %v6669
      %7372 = vmatmul.mubr.bf16.gmra.mxu0 %v6286
      %v7373 = vpop.f32.mrf.mxu0
      %v7374 = vadd.f32 %v6748, %v7373
      %v7375 = vpop.f32.mrf.mxu0
      %v7376 = vadd.f32 %v6752, %v7375
      %v7377 = vpop.f32.mrf.mxu0
      %v7378 = vadd.f32 %v6748, %v7377
      %v7379 = vpop.f32.mrf.mxu0
      %v7380 = vadd.f32 %v6752, %v7379
      %7381 = vdwg.mxu0
      %7382 = vmatprep.subr.bf16.mxu0 %v7018
      %7383 = vmatpush1.bf16.msra.mxu0 %v7017
      %7384 = vmatprep.subr.bf16.mxu0 %v7016
      %7385 = vmatpush1.bf16.msra.mxu0 %v7015
      %7386 = vmatprep.subr.bf16.mxu0 %v7014
      %7387 = vmatpush1.bf16.msra.mxu0 %v7013
      %7388 = vmatprep.subr.bf16.mxu0 %v7012
      %7389 = vmatpush1.bf16.msra.mxu0 %v7011
      %7390 = vmatprep.subr.bf16.mxu0 %v7010
      %7391 = vmatpush1.bf16.msra.mxu0 %v7009
      %7392 = vmatprep.subr.bf16.mxu0 %v7008
      %7393 = vmatpush1.bf16.msra.mxu0 %v7007
      %7394 = vmatprep.subr.bf16.mxu0 %v7006
      %7395 = vmatpush1.bf16.msra.mxu0 %v7005
      %7396 = vmatprep.subr.bf16.mxu0 %v7004
      %7397 = vmatpush1.bf16.msra.mxu0 %v7003
      %7398 = vmatprep.subr.bf16.mxu0 %v7034
      %7399 = vmatpush2.bf16.msra.mxu0 %v7033
      %7400 = vmatprep.subr.bf16.mxu0 %v7032
      %7401 = vmatpush2.bf16.msra.mxu0 %v7031
      %7402 = vmatprep.subr.bf16.mxu0 %v7030
      %7403 = vmatpush2.bf16.msra.mxu0 %v7029
      %7404 = vmatprep.subr.bf16.mxu0 %v7028
      %7405 = vmatpush2.bf16.msra.mxu0 %v7027
      %7406 = vmatprep.subr.bf16.mxu0 %v7026
      %7407 = vmatpush2.bf16.msra.mxu0 %v7025
      %7408 = vmatprep.subr.bf16.mxu0 %v7024
      %7409 = vmatpush2.bf16.msra.mxu0 %v7023
      %7410 = vmatprep.subr.bf16.mxu0 %v7022
      %7411 = vmatpush2.bf16.msra.mxu0 %v7021
      %7412 = vmatprep.subr.bf16.mxu0 %v7020
      %7413 = vmatpush2.bf16.msra.mxu0 %v7019
      %7414 = vmatprep.mubr.bf16.mxu0 %v6509
      %7415 = vmatmul.mubr.bf16.gmra.mxu0 %v6469
      %v7416 = vpop.f32.mrf.mxu0
      %v7417 = vadd.f32 %v7204, %v7416
      %v7418 = vpop.f32.mrf.mxu0
      %v7419 = vadd.f32 %v7206, %v7418
      %v7420 = vpop.f32.mrf.mxu0
      %v7421 = vadd.f32 %v7208, %v7420
      %v7422 = vpop.f32.mrf.mxu0
      %v7423 = vadd.f32 %v7210, %v7422
      %7424 = vmatprep.mubr.bf16.mxu0 %v6514
      %7425 = vmatmul.mubr.bf16.gmra.mxu0 %v6470
      %v7426 = vpop.f32.mrf.mxu0
      %v7427 = vadd.f32 %v7214, %v7426
      %v7428 = vpop.f32.mrf.mxu0
      %v7429 = vadd.f32 %v7216, %v7428
      %v7430 = vpop.f32.mrf.mxu0
      %v7431 = vadd.f32 %v7218, %v7430
      %v7432 = vpop.f32.mrf.mxu0
      %v7433 = vadd.f32 %v7220, %v7432
      %7434 = vmatprep.mubr.bf16.mxu0 %v6518
      %7435 = vmatmul.mubr.bf16.gmra.mxu0 %v6471
      %v7436 = vpop.f32.mrf.mxu0
      %v7437 = vadd.f32 %v7224, %v7436
      %v7438 = vpop.f32.mrf.mxu0
      %v7439 = vadd.f32 %v7226, %v7438
      %v7440 = vpop.f32.mrf.mxu0
      %v7441 = vadd.f32 %v7228, %v7440
      %v7442 = vpop.f32.mrf.mxu0
      %v7443 = vadd.f32 %v7230, %v7442
      %7444 = vmatprep.mubr.bf16.mxu0 %v6522
      %7445 = vmatmul.mubr.bf16.gmra.mxu0 %v6472
      %v7446 = vpop.f32.mrf.mxu0
      %v7447 = vadd.f32 %v7234, %v7446
      %v7448 = vpop.f32.mrf.mxu0
      %v7449 = vadd.f32 %v7236, %v7448
      %v7450 = vpop.f32.mrf.mxu0
      %v7451 = vadd.f32 %v7238, %v7450
      %v7452 = vpop.f32.mrf.mxu0
      %v7453 = vadd.f32 %v7240, %v7452
      %7454 = vmatprep.mubr.bf16.mxu0 %v6526
      %7455 = vmatmul.mubr.bf16.gmra.mxu0 %v6473
      %v7456 = vpop.f32.mrf.mxu0
      %v7457 = vadd.f32 %v7244, %v7456
      %v7458 = vpop.f32.mrf.mxu0
      %v7459 = vadd.f32 %v7246, %v7458
      %v7460 = vpop.f32.mrf.mxu0
      %v7461 = vadd.f32 %v7248, %v7460
      %v7462 = vpop.f32.mrf.mxu0
      %v7463 = vadd.f32 %v7250, %v7462
      %7464 = vmatprep.mubr.bf16.mxu0 %v6530
      %7465 = vmatmul.mubr.bf16.gmra.mxu0 %v6474
      %v7466 = vpop.f32.mrf.mxu0
      %v7467 = vadd.f32 %v7254, %v7466
      %v7468 = vpop.f32.mrf.mxu0
      %v7469 = vadd.f32 %v7256, %v7468
      %v7470 = vpop.f32.mrf.mxu0
      %v7471 = vadd.f32 %v7258, %v7470
      %v7472 = vpop.f32.mrf.mxu0
      %v7473 = vadd.f32 %v7260, %v7472
      %7474 = vmatprep.mubr.bf16.mxu0 %v6534
      %7475 = vmatmul.mubr.bf16.gmra.mxu0 %v6475
      %v7476 = vpop.f32.mrf.mxu0
      %v7477 = vadd.f32 %v7264, %v7476
      %v7478 = vpop.f32.mrf.mxu0
      %v7479 = vadd.f32 %v7266, %v7478
      %v7480 = vpop.f32.mrf.mxu0
      %v7481 = vadd.f32 %v7268, %v7480
      %v7482 = vpop.f32.mrf.mxu0
      %v7483 = vadd.f32 %v7270, %v7482
      %7484 = vmatprep.mubr.bf16.mxu0 %v6538
      %7485 = vmatmul.mubr.bf16.gmra.mxu0 %v6476
      %v7486 = vpop.f32.mrf.mxu0
      %v7487 = vadd.f32 %v7274, %v7486
      %v7488 = vpop.f32.mrf.mxu0
      %v7489 = vadd.f32 %v7276, %v7488
      %v7490 = vpop.f32.mrf.mxu0
      %v7491 = vadd.f32 %v7278, %v7490
      %v7492 = vpop.f32.mrf.mxu0
      %v7493 = vadd.f32 %v7280, %v7492
      %7494 = vmatprep.mubr.bf16.mxu0 %v6542
      %7495 = vmatmul.mubr.bf16.gmra.mxu0 %v6477
      %v7496 = vpop.f32.mrf.mxu0
      %v7497 = vadd.f32 %v7284, %v7496
      %v7498 = vpop.f32.mrf.mxu0
      %v7499 = vadd.f32 %v7286, %v7498
      %v7500 = vpop.f32.mrf.mxu0
      %v7501 = vadd.f32 %v7288, %v7500
      %v7502 = vpop.f32.mrf.mxu0
      %v7503 = vadd.f32 %v7290, %v7502
      %7504 = vmatprep.mubr.bf16.mxu0 %v6546
      %7505 = vmatmul.mubr.bf16.gmra.mxu0 %v6478
      %v7506 = vpop.f32.mrf.mxu0
      %v7507 = vadd.f32 %v7294, %v7506
      %v7508 = vpop.f32.mrf.mxu0
      %v7509 = vadd.f32 %v7296, %v7508
      %v7510 = vpop.f32.mrf.mxu0
      %v7511 = vadd.f32 %v7298, %v7510
      %v7512 = vpop.f32.mrf.mxu0
      %v7513 = vadd.f32 %v7300, %v7512
      %7514 = vmatprep.mubr.bf16.mxu0 %v6550
      %7515 = vmatmul.mubr.bf16.gmra.mxu0 %v6479
      %v7516 = vpop.f32.mrf.mxu0
      %v7517 = vadd.f32 %v7304, %v7516
      %v7518 = vpop.f32.mrf.mxu0
      %v7519 = vadd.f32 %v7306, %v7518
      %v7520 = vpop.f32.mrf.mxu0
      %v7521 = vadd.f32 %v7308, %v7520
      %v7522 = vpop.f32.mrf.mxu0
      %v7523 = vadd.f32 %v7310, %v7522
      %7524 = vmatprep.mubr.bf16.mxu0 %v6554
      %7525 = vmatmul.mubr.bf16.gmra.mxu0 %v6480
      %v7526 = vpop.f32.mrf.mxu0
      %v7527 = vadd.f32 %v7314, %v7526
      %v7528 = vpop.f32.mrf.mxu0
      %v7529 = vadd.f32 %v7316, %v7528
      %v7530 = vpop.f32.mrf.mxu0
      %v7531 = vadd.f32 %v7318, %v7530
      %v7532 = vpop.f32.mrf.mxu0
      %v7533 = vadd.f32 %v7320, %v7532
      %7534 = vmatprep.mubr.bf16.mxu0 %v6558
      %7535 = vmatmul.mubr.bf16.gmra.mxu0 %v6481
      %v7536 = vpop.f32.mrf.mxu0
      %v7537 = vadd.f32 %v7324, %v7536
      %v7538 = vpop.f32.mrf.mxu0
      %v7539 = vadd.f32 %v7326, %v7538
      %v7540 = vpop.f32.mrf.mxu0
      %v7541 = vadd.f32 %v7328, %v7540
      %v7542 = vpop.f32.mrf.mxu0
      %v7543 = vadd.f32 %v7330, %v7542
      %7544 = vmatprep.mubr.bf16.mxu0 %v6562
      %7545 = vmatmul.mubr.bf16.gmra.mxu0 %v6482
      %v7546 = vpop.f32.mrf.mxu0
      %v7547 = vadd.f32 %v7334, %v7546
      %v7548 = vpop.f32.mrf.mxu0
      %v7549 = vadd.f32 %v7336, %v7548
      %v7550 = vpop.f32.mrf.mxu0
      %v7551 = vadd.f32 %v7338, %v7550
      %v7552 = vpop.f32.mrf.mxu0
      %v7553 = vadd.f32 %v7340, %v7552
      %7554 = vmatprep.mubr.bf16.mxu0 %v6566
      %7555 = vmatmul.mubr.bf16.gmra.mxu0 %v6483
      %v7556 = vpop.f32.mrf.mxu0
      %v7557 = vadd.f32 %v7344, %v7556
      %v7558 = vpop.f32.mrf.mxu0
      %v7559 = vadd.f32 %v7346, %v7558
      %v7560 = vpop.f32.mrf.mxu0
      %v7561 = vadd.f32 %v7348, %v7560
      %v7562 = vpop.f32.mrf.mxu0
      %v7563 = vadd.f32 %v7350, %v7562
      %7564 = vmatprep.mubr.bf16.mxu0 %v6570
      %7565 = vmatmul.mubr.bf16.gmra.mxu0 %v6484
      %v7566 = vpop.f32.mrf.mxu0
      %v7567 = vadd.f32 %v7354, %v7566
      %v7568 = vpop.f32.mrf.mxu0
      %v7569 = vadd.f32 %v7356, %v7568
      %v7570 = vpop.f32.mrf.mxu0
      %v7571 = vadd.f32 %v7358, %v7570
      %v7572 = vpop.f32.mrf.mxu0
      %v7573 = vadd.f32 %v7360, %v7572
      %7574 = vmatprep.mubr.bf16.mxu0 %v6574
      %7575 = vmatmul.mubr.bf16.gmra.mxu0 %v6485
      %v7576 = vpop.f32.mrf.mxu0
      %v7577 = vadd.f32 %v7364, %v7576
      %v7578 = vpop.f32.mrf.mxu0
      %v7579 = vadd.f32 %v7366, %v7578
      %v7580 = vpop.f32.mrf.mxu0
      %v7581 = vadd.f32 %v7368, %v7580
      %v7582 = vpop.f32.mrf.mxu0
      %v7583 = vadd.f32 %v7370, %v7582
      %7584 = vmatprep.mubr.bf16.mxu0 %v6578
      %7585 = vmatmul.mubr.bf16.gmra.mxu0 %v6486
      %v7586 = vpop.f32.mrf.mxu0
      %v7587 = vadd.f32 %v7374, %v7586
      %v7588 = vpop.f32.mrf.mxu0
      %v7589 = vadd.f32 %v7376, %v7588
      %v7590 = vpop.f32.mrf.mxu0
      %v7591 = vadd.f32 %v7378, %v7590
      %v7592 = vpop.f32.mrf.mxu0
      %v7593 = vadd.f32 %v7380, %v7592
      %7594 = vdwg.mxu0
      %7595 = vmatprep.subr.bf16.mxu0 0
      %7596 = vmatpush1.bf16.msra.mxu0 0
      %7597 = vmatprep.subr.bf16.mxu0 0
      %7598 = vmatpush1.bf16.msra.mxu0 0
      %7599 = vmatprep.subr.bf16.mxu0 0
      %7600 = vmatpush1.bf16.msra.mxu0 0
      %7601 = vmatprep.subr.bf16.mxu0 0
      %7602 = vmatpush1.bf16.msra.mxu0 0
      %7603 = vmatprep.subr.bf16.mxu0 %v7042
      %7604 = vmatpush1.bf16.msra.mxu0 %v7041
      %7605 = vmatprep.subr.bf16.mxu0 %v7040
      %7606 = vmatpush1.bf16.msra.mxu0 %v7039
      %7607 = vmatprep.subr.bf16.mxu0 %v7038
      %7608 = vmatpush1.bf16.msra.mxu0 %v7037
      %7609 = vmatprep.subr.bf16.mxu0 %v7036
      %7610 = vmatpush1.bf16.msra.mxu0 %v7035
      %7611 = vmatprep.subr.bf16.mxu0 0
      %7612 = vmatpush2.bf16.msra.mxu0 0
      %7613 = vmatprep.subr.bf16.mxu0 0
      %7614 = vmatpush2.bf16.msra.mxu0 0
      %7615 = vmatprep.subr.bf16.mxu0 0
      %7616 = vmatpush2.bf16.msra.mxu0 0
      %7617 = vmatprep.subr.bf16.mxu0 0
      %7618 = vmatpush2.bf16.msra.mxu0 0
      %7619 = vmatprep.subr.bf16.mxu0 0
      %7620 = vmatpush2.bf16.msra.mxu0 0
      %7621 = vmatprep.subr.bf16.mxu0 0
      %7622 = vmatpush2.bf16.msra.mxu0 0
      %7623 = vmatprep.subr.bf16.mxu0 0
      %7624 = vmatpush2.bf16.msra.mxu0 0
      %7625 = vmatprep.subr.bf16.mxu0 0
      %7626 = vmatpush2.bf16.msra.mxu0 0
      %7627 = vmatprep.mubr.bf16.mxu0 0
      %7628 = vmatmul.mubr.bf16.gmra.mxu0 %v7116
      %v7629 = vpop.f32.mrf.mxu0
      %v7630 = vadd.f32 %v7417, %v7629
      %v7631 = vpop.f32.mrf.mxu0
      %v7632 = vadd.f32 %v7419, %v7631
      %v7633 = vpop.f32.mrf.mxu0
      %v7634 = vadd.f32 %v7421, %v7633
      %v7635 = vpop.f32.mrf.mxu0
      %v7636 = vadd.f32 %v7423, %v7635
      %7637 = vmatprep.mubr.bf16.mxu0 0
      %7638 = vmatmul.mubr.bf16.gmra.mxu0 %v7119
      %v7639 = vpop.f32.mrf.mxu0
      %v7640 = vadd.f32 %v7427, %v7639
      %v7641 = vpop.f32.mrf.mxu0
      %v7642 = vadd.f32 %v7429, %v7641
      %v7643 = vpop.f32.mrf.mxu0
      %v7644 = vadd.f32 %v7431, %v7643
      %v7645 = vpop.f32.mrf.mxu0
      %v7646 = vadd.f32 %v7433, %v7645
      %7647 = vmatprep.mubr.bf16.mxu0 0
      %7648 = vmatmul.mubr.bf16.gmra.mxu0 %v7122
      %v7649 = vpop.f32.mrf.mxu0
      %v7650 = vadd.f32 %v7437, %v7649
      %v7651 = vpop.f32.mrf.mxu0
      %v7652 = vadd.f32 %v7439, %v7651
      %v7653 = vpop.f32.mrf.mxu0
      %v7654 = vadd.f32 %v7441, %v7653
      %v7655 = vpop.f32.mrf.mxu0
      %v7656 = vadd.f32 %v7443, %v7655
      %7657 = vmatprep.mubr.bf16.mxu0 0
      %7658 = vmatmul.mubr.bf16.gmra.mxu0 %v7125
      %v7659 = vpop.f32.mrf.mxu0
      %v7660 = vadd.f32 %v7447, %v7659
      %v7661 = vpop.f32.mrf.mxu0
      %v7662 = vadd.f32 %v7449, %v7661
      %v7663 = vpop.f32.mrf.mxu0
      %v7664 = vadd.f32 %v7451, %v7663
      %v7665 = vpop.f32.mrf.mxu0
      %v7666 = vadd.f32 %v7453, %v7665
      %7667 = vmatprep.mubr.bf16.mxu0 0
      %7668 = vmatmul.mubr.bf16.gmra.mxu0 %v7128
      %v7669 = vpop.f32.mrf.mxu0
      %v7670 = vadd.f32 %v7457, %v7669
      %v7671 = vpop.f32.mrf.mxu0
      %v7672 = vadd.f32 %v7459, %v7671
      %v7673 = vpop.f32.mrf.mxu0
      %v7674 = vadd.f32 %v7461, %v7673
      %v7675 = vpop.f32.mrf.mxu0
      %v7676 = vadd.f32 %v7463, %v7675
      %7677 = vmatprep.mubr.bf16.mxu0 0
      %7678 = vmatmul.mubr.bf16.gmra.mxu0 %v7131
      %v7679 = vpop.f32.mrf.mxu0
      %v7680 = vadd.f32 %v7467, %v7679
      %v7681 = vpop.f32.mrf.mxu0
      %v7682 = vadd.f32 %v7469, %v7681
      %v7683 = vpop.f32.mrf.mxu0
      %v7684 = vadd.f32 %v7471, %v7683
      %v7685 = vpop.f32.mrf.mxu0
      %v7686 = vadd.f32 %v7473, %v7685
      %7687 = vmatprep.mubr.bf16.mxu0 0
      %7688 = vmatmul.mubr.bf16.gmra.mxu0 %v7134
      %v7689 = vpop.f32.mrf.mxu0
      %v7690 = vadd.f32 %v7477, %v7689
      %v7691 = vpop.f32.mrf.mxu0
      %v7692 = vadd.f32 %v7479, %v7691
      %v7693 = vpop.f32.mrf.mxu0
      %v7694 = vadd.f32 %v7481, %v7693
      %v7695 = vpop.f32.mrf.mxu0
      %v7696 = vadd.f32 %v7483, %v7695
      %7697 = vmatprep.mubr.bf16.mxu0 0
      %7698 = vmatmul.mubr.bf16.gmra.mxu0 %v7137
      %v7699 = vpop.f32.mrf.mxu0
      %v7700 = vadd.f32 %v7487, %v7699
      %v7701 = vpop.f32.mrf.mxu0
      %v7702 = vadd.f32 %v7489, %v7701
      %v7703 = vpop.f32.mrf.mxu0
      %v7704 = vadd.f32 %v7491, %v7703
      %v7705 = vpop.f32.mrf.mxu0
      %v7706 = vadd.f32 %v7493, %v7705
      %7707 = vmatprep.mubr.bf16.mxu0 0
      %7708 = vmatmul.mubr.bf16.gmra.mxu0 %v7140
      %v7709 = vpop.f32.mrf.mxu0
      %v7710 = vadd.f32 %v7497, %v7709
      %v7711 = vpop.f32.mrf.mxu0
      %v7712 = vadd.f32 %v7499, %v7711
      %v7713 = vpop.f32.mrf.mxu0
      %v7714 = vadd.f32 %v7501, %v7713
      %v7715 = vpop.f32.mrf.mxu0
      %v7716 = vadd.f32 %v7503, %v7715
      %7717 = vmatprep.mubr.bf16.mxu0 0
      %7718 = vmatmul.mubr.bf16.gmra.mxu0 %v7143
      %v7719 = vpop.f32.mrf.mxu0
      %v7720 = vadd.f32 %v7507, %v7719
      %v7721 = vpop.f32.mrf.mxu0
      %v7722 = vadd.f32 %v7509, %v7721
      %v7723 = vpop.f32.mrf.mxu0
      %v7724 = vadd.f32 %v7511, %v7723
      %v7725 = vpop.f32.mrf.mxu0
      %v7726 = vadd.f32 %v7513, %v7725
      %7727 = vmatprep.mubr.bf16.mxu0 0
      %7728 = vmatmul.mubr.bf16.gmra.mxu0 %v7146
      %v7729 = vpop.f32.mrf.mxu0
      %v7730 = vadd.f32 %v7517, %v7729
      %v7731 = vpop.f32.mrf.mxu0
      %v7732 = vadd.f32 %v7519, %v7731
      %v7733 = vpop.f32.mrf.mxu0
      %v7734 = vadd.f32 %v7521, %v7733
      %v7735 = vpop.f32.mrf.mxu0
      %v7736 = vadd.f32 %v7523, %v7735
      %7737 = vmatprep.mubr.bf16.mxu0 0
      %7738 = vmatmul.mubr.bf16.gmra.mxu0 %v7149
      %v7739 = vpop.f32.mrf.mxu0
      %v7740 = vadd.f32 %v7527, %v7739
      %v7741 = vpop.f32.mrf.mxu0
      %v7742 = vadd.f32 %v7529, %v7741
      %v7743 = vpop.f32.mrf.mxu0
      %v7744 = vadd.f32 %v7531, %v7743
      %v7745 = vpop.f32.mrf.mxu0
      %v7746 = vadd.f32 %v7533, %v7745
      %7747 = vmatprep.mubr.bf16.mxu0 0
      %7748 = vmatmul.mubr.bf16.gmra.mxu0 %v7152
      %v7749 = vpop.f32.mrf.mxu0
      %v7750 = vadd.f32 %v7537, %v7749
      %v7751 = vpop.f32.mrf.mxu0
      %v7752 = vadd.f32 %v7539, %v7751
      %v7753 = vpop.f32.mrf.mxu0
      %v7754 = vadd.f32 %v7541, %v7753
      %v7755 = vpop.f32.mrf.mxu0
      %v7756 = vadd.f32 %v7543, %v7755
      %7757 = vmatprep.mubr.bf16.mxu0 0
      %7758 = vmatmul.mubr.bf16.gmra.mxu0 %v7155
      %v7759 = vpop.f32.mrf.mxu0
      %v7760 = vadd.f32 %v7547, %v7759
      %v7761 = vpop.f32.mrf.mxu0
      %v7762 = vadd.f32 %v7549, %v7761
      %v7763 = vpop.f32.mrf.mxu0
      %v7764 = vadd.f32 %v7551, %v7763
      %v7765 = vpop.f32.mrf.mxu0
      %v7766 = vadd.f32 %v7553, %v7765
      %7767 = vmatprep.mubr.bf16.mxu0 0
      %7768 = vmatmul.mubr.bf16.gmra.mxu0 %v7158
      %v7769 = vpop.f32.mrf.mxu0
      %v7770 = vadd.f32 %v7557, %v7769
      %v7771 = vpop.f32.mrf.mxu0
      %v7772 = vadd.f32 %v7559, %v7771
      %v7773 = vpop.f32.mrf.mxu0
      %v7774 = vadd.f32 %v7561, %v7773
      %v7775 = vpop.f32.mrf.mxu0
      %v7776 = vadd.f32 %v7563, %v7775
      %7777 = vmatprep.mubr.bf16.mxu0 0
      %7778 = vmatmul.mubr.bf16.gmra.mxu0 %v7161
      %v7779 = vpop.f32.mrf.mxu0
      %v7780 = vadd.f32 %v7567, %v7779
      %v7781 = vpop.f32.mrf.mxu0
      %v7782 = vadd.f32 %v7569, %v7781
      %v7783 = vpop.f32.mrf.mxu0
      %v7784 = vadd.f32 %v7571, %v7783
      %v7785 = vpop.f32.mrf.mxu0
      %v7786 = vadd.f32 %v7573, %v7785
      %7787 = vmatprep.mubr.bf16.mxu0 0
      %7788 = vmatmul.mubr.bf16.gmra.mxu0 %v7164
      %v7789 = vpop.f32.mrf.mxu0
      %v7790 = vadd.f32 %v7577, %v7789
      %v7791 = vpop.f32.mrf.mxu0
      %v7792 = vadd.f32 %v7579, %v7791
      %v7793 = vpop.f32.mrf.mxu0
      %v7794 = vadd.f32 %v7581, %v7793
      %v7795 = vpop.f32.mrf.mxu0
      %v7796 = vadd.f32 %v7583, %v7795
      %7797 = vmatprep.mubr.bf16.mxu0 0
      %7798 = vmatmul.mubr.bf16.gmra.mxu0 %v7167
      %v7799 = vpop.f32.mrf.mxu0
      %v7800 = vadd.f32 %v7587, %v7799
      %v7801 = vpop.f32.mrf.mxu0
      %v7802 = vadd.f32 %v7589, %v7801
      %v7803 = vpop.f32.mrf.mxu0
      %v7804 = vadd.f32 %v7591, %v7803
      %v7805 = vpop.f32.mrf.mxu0
      %v7806 = vadd.f32 %v7593, %v7805
      %7807 = vdwg.mxu0
      %v7808 = vmax.f32 %v7630, 0.0
      %v7809 = vmax.f32 %v7632, 0.0
      %v7810 = vmax.f32 %v7634, 0.0
      %v7811 = vmax.f32 %v7636, 0.0
      %v7812 = vmax.f32 %v7640, 0.0
      %v7813 = vmax.f32 %v7642, 0.0
      %v7814 = vmax.f32 %v7644, 0.0
      %v7815 = vmax.f32 %v7646, 0.0
      %v7816 = vmax.f32 %v7650, 0.0
      %v7817 = vmax.f32 %v7652, 0.0
      %v7818 = vmax.f32 %v7654, 0.0
      %v7819 = vmax.f32 %v7656, 0.0
      %v7820 = vmax.f32 %v7660, 0.0
      %v7821 = vmax.f32 %v7662, 0.0
      %v7822 = vmax.f32 %v7664, 0.0
      %v7823 = vmax.f32 %v7666, 0.0
      %v7824 = vmax.f32 %v7670, 0.0
      %v7825 = vmax.f32 %v7672, 0.0
      %v7826 = vmax.f32 %v7674, 0.0
      %v7827 = vmax.f32 %v7676, 0.0
      %v7828 = vmax.f32 %v7680, 0.0
      %v7829 = vmax.f32 %v7682, 0.0
      %v7830 = vmax.f32 %v7684, 0.0
      %v7831 = vmax.f32 %v7686, 0.0
      %v7832 = vmax.f32 %v7690, 0.0
      %v7833 = vmax.f32 %v7692, 0.0
      %v7834 = vmax.f32 %v7694, 0.0
      %v7835 = vmax.f32 %v7696, 0.0
      %v7836 = vmax.f32 %v7700, 0.0
      %v7837 = vmax.f32 %v7702, 0.0
      %v7838 = vmax.f32 %v7704, 0.0
      %v7839 = vmax.f32 %v7706, 0.0
      %v7840 = vmax.f32 %v7710, 0.0
      %v7841 = vmax.f32 %v7712, 0.0
      %v7842 = vmax.f32 %v7714, 0.0
      %v7843 = vmax.f32 %v7716, 0.0
      %v7844 = vmax.f32 %v7720, 0.0
      %v7845 = vmax.f32 %v7722, 0.0
      %v7846 = vmax.f32 %v7724, 0.0
      %v7847 = vmax.f32 %v7726, 0.0
      %v7848 = vmax.f32 %v7730, 0.0
      %v7849 = vmax.f32 %v7732, 0.0
      %v7850 = vmax.f32 %v7734, 0.0
      %v7851 = vmax.f32 %v7736, 0.0
      %v7852 = vmax.f32 %v7740, 0.0
      %v7853 = vmax.f32 %v7742, 0.0
      %v7854 = vmax.f32 %v7744, 0.0
      %v7855 = vmax.f32 %v7746, 0.0
      %v7856 = vmax.f32 %v7750, 0.0
      %v7857 = vmax.f32 %v7752, 0.0
      %v7858 = vmax.f32 %v7754, 0.0
      %v7859 = vmax.f32 %v7756, 0.0
      %v7860 = vmax.f32 %v7760, 0.0
      %v7861 = vmax.f32 %v7762, 0.0
      %v7862 = vmax.f32 %v7764, 0.0
      %v7863 = vmax.f32 %v7766, 0.0
      %v7864 = vmax.f32 %v7770, 0.0
      %v7865 = vmax.f32 %v7772, 0.0
      %v7866 = vmax.f32 %v7774, 0.0
      %v7867 = vmax.f32 %v7776, 0.0
      %v7868 = vmax.f32 %v7780, 0.0
      %v7869 = vmax.f32 %v7782, 0.0
      %v7870 = vmax.f32 %v7784, 0.0
      %v7871 = vmax.f32 %v7786, 0.0
      %v7872 = vmax.f32 %v7790, 0.0
      %v7873 = vmax.f32 %v7792, 0.0
      %v7874 = vmax.f32 %v7794, 0.0
      %v7875 = vmax.f32 %v7796, 0.0
      %v7876 = vmax.f32 %v7800, 0.0
      %v7877 = vmax.f32 %v7802, 0.0
      %v7878 = vmax.f32 %v7804, 0.0
      %v7879 = vmax.f32 %v7806, 0.0
      %v7880 = vpack.c.bf16 %v7810, %v7808
      %v7881 = vpack.c.bf16 %v7811, %v7809
      %v7882 = vpack.c.bf16 %v7814, %v7812
      %v7883 = vpack.c.bf16 %v7815, %v7813
      %v7884 = vpack.c.bf16 %v7818, %v7816
      %v7885 = vpack.c.bf16 %v7819, %v7817
      %v7886 = vpack.c.bf16 %v7822, %v7820
      %v7887 = vpack.c.bf16 %v7823, %v7821
      %v7888 = vpack.c.bf16 %v7826, %v7824
      %v7889 = vpack.c.bf16 %v7827, %v7825
      %v7890 = vpack.c.bf16 %v7830, %v7828
      %v7891 = vpack.c.bf16 %v7831, %v7829
      %v7892 = vpack.c.bf16 %v7834, %v7832
      %v7893 = vpack.c.bf16 %v7835, %v7833
      %v7894 = vpack.c.bf16 %v7838, %v7836
      %v7895 = vpack.c.bf16 %v7839, %v7837
      %v7896 = vpack.c.bf16 %v7842, %v7840
      %v7897 = vpack.c.bf16 %v7843, %v7841
      %v7898 = vpack.c.bf16 %v7846, %v7844
      %v7899 = vpack.c.bf16 %v7847, %v7845
      %v7900 = vpack.c.bf16 %v7850, %v7848
      %v7901 = vpack.c.bf16 %v7851, %v7849
      %v7902 = vpack.c.bf16 %v7854, %v7852
      %v7903 = vpack.c.bf16 %v7855, %v7853
      %v7904 = vpack.c.bf16 %v7858, %v7856
      %v7905 = vpack.c.bf16 %v7859, %v7857
      %v7906 = vpack.c.bf16 %v7862, %v7860
      %v7907 = vpack.c.bf16 %v7863, %v7861
      %v7908 = vpack.c.bf16 %v7866, %v7864
      %v7909 = vpack.c.bf16 %v7867, %v7865
      %v7910 = vpack.c.bf16 %v7870, %v7868
      %v7911 = vpack.c.bf16 %v7871, %v7869
      %v7912 = vpack.c.bf16 %v7874, %v7872
      %v7913 = vpack.c.bf16 %v7875, %v7873
      %v7914 = vpack.c.bf16 %v7878, %v7876
      %v7915 = vpack.c.bf16 %v7879, %v7877
      %7952 = vrot.lane.b32.xlu0 %v7880, 112
      %v7953 = vpop.permute.xlu0 %7952
      %7954 = vrot.lane.b32.xlu0 %v7881, 112
      %v7955 = vpop.permute.xlu0 %7954
      %7956 = vrot.lane.b32.xlu0 %v7882, 112
      %v7957 = vpop.permute.xlu0 %7956
      %7958 = vrot.lane.b32.xlu0 %v7883, 112
      %v7959 = vpop.permute.xlu0 %7958
      %7960 = vrot.lane.b32.xlu0 %v7884, 112
      %v7961 = vpop.permute.xlu0 %7960
      %7962 = vrot.lane.b32.xlu0 %v7885, 112
      %v7963 = vpop.permute.xlu0 %7962
      %7964 = vrot.lane.b32.xlu0 %v7886, 112
      %v7965 = vpop.permute.xlu0 %7964
      %7966 = vrot.lane.b32.xlu0 %v7887, 112
      %v7967 = vpop.permute.xlu0 %7966
      %7968 = vrot.lane.b32.xlu0 %v7888, 112
      %v7969 = vpop.permute.xlu0 %7968
      %7970 = vrot.lane.b32.xlu0 %v7889, 112
      %v7971 = vpop.permute.xlu0 %7970
      %7972 = vrot.lane.b32.xlu0 %v7890, 112
      %v7973 = vpop.permute.xlu0 %7972
      %7974 = vrot.lane.b32.xlu0 %v7891, 112
      %v7975 = vpop.permute.xlu0 %7974
      %7976 = vrot.lane.b32.xlu0 %v7892, 112
      %v7977 = vpop.permute.xlu0 %7976
      %7978 = vrot.lane.b32.xlu0 %v7893, 112
      %v7979 = vpop.permute.xlu0 %7978
      %7980 = vrot.lane.b32.xlu0 %v7894, 112
      %v7981 = vpop.permute.xlu0 %7980
      %7982 = vrot.lane.b32.xlu0 %v7895, 112
      %v7983 = vpop.permute.xlu0 %7982
      %7984 = vrot.lane.b32.xlu0 %v7896, 112
      %v7985 = vpop.permute.xlu0 %7984
      %7986 = vrot.lane.b32.xlu0 %v7897, 112
      %v7987 = vpop.permute.xlu0 %7986
      %7988 = vrot.lane.b32.xlu0 %v7898, 112
      %v7989 = vpop.permute.xlu0 %7988
      %7990 = vrot.lane.b32.xlu0 %v7899, 112
      %v7991 = vpop.permute.xlu0 %7990
      %7992 = vrot.lane.b32.xlu0 %v7900, 112
      %v7993 = vpop.permute.xlu0 %7992
      %7994 = vrot.lane.b32.xlu0 %v7901, 112
      %v7995 = vpop.permute.xlu0 %7994
      %7996 = vrot.lane.b32.xlu0 %v7902, 112
      %v7997 = vpop.permute.xlu0 %7996
      %7998 = vrot.lane.b32.xlu0 %v7903, 112
      %v7999 = vpop.permute.xlu0 %7998
      %8000 = vrot.lane.b32.xlu0 %v7904, 112
      %v8001 = vpop.permute.xlu0 %8000
      %8002 = vrot.lane.b32.xlu0 %v7905, 112
      %v8003 = vpop.permute.xlu0 %8002
      %8004 = vrot.lane.b32.xlu0 %v7906, 112
      %v8005 = vpop.permute.xlu0 %8004
      %8006 = vrot.lane.b32.xlu0 %v7907, 112
      %v8007 = vpop.permute.xlu0 %8006
      %8008 = vrot.lane.b32.xlu0 %v7908, 112
      %v8009 = vpop.permute.xlu0 %8008
      %8010 = vrot.lane.b32.xlu0 %v7909, 112
      %v8011 = vpop.permute.xlu0 %8010
      %8012 = vrot.lane.b32.xlu0 %v7910, 112
      %v8013 = vpop.permute.xlu0 %8012
      %8014 = vrot.lane.b32.xlu0 %v7911, 112
      %v8015 = vpop.permute.xlu0 %8014
      %8016 = vrot.lane.b32.xlu0 %v7912, 112
      %v8017 = vpop.permute.xlu0 %8016
      %8018 = vrot.lane.b32.xlu0 %v7913, 112
      %v8019 = vpop.permute.xlu0 %8018
      %8020 = vrot.lane.b32.xlu0 %v7914, 112
      %v8021 = vpop.permute.xlu0 %8020
      %8022 = vrot.lane.b32.xlu0 %v7915, 112
      %v8023 = vpop.permute.xlu0 %8022
      %vm8024 = vcmask 916480
      %v8025 = vsel %vm8024, %v7953, %v7955
      %v8026 = vsel %vm8024, %v7957, %v7959
      %v8027 = vsel %vm8024, %v7961, %v7963
      %v8028 = vsel %vm8024, %v7965, %v7967
      %v8029 = vsel %vm8024, %v7969, %v7971
      %v8030 = vsel %vm8024, %v7973, %v7975
      %v8031 = vsel %vm8024, %v7977, %v7979
      %v8032 = vsel %vm8024, %v7981, %v7983
      %v8033 = vsel %vm8024, %v7985, %v7987
      %v8034 = vsel %vm8024, %v7989, %v7991
      %v8035 = vsel %vm8024, %v7993, %v7995
      %v8036 = vsel %vm8024, %v7997, %v7999
      %v8037 = vsel %vm8024, %v8001, %v8003
      %v8038 = vsel %vm8024, %v8005, %v8007
      %v8039 = vsel %vm8024, %v8009, %v8011
      %v8040 = vsel %vm8024, %v8013, %v8015
      %v8041 = vsel %vm8024, %v8017, %v8019
      %v8042 = vsel %vm8024, %v8021, %v8023
      %8061 = vrot.lane.b32.xlu0 %v7880, 16
      %v8062 = vpop.permute.xlu0 %8061
      %8063 = vrot.lane.b32.xlu0 %v7882, 16
      %v8064 = vpop.permute.xlu0 %8063
      %8065 = vrot.lane.b32.xlu0 %v7884, 16
      %v8066 = vpop.permute.xlu0 %8065
      %8067 = vrot.lane.b32.xlu0 %v7886, 16
      %v8068 = vpop.permute.xlu0 %8067
      %8069 = vrot.lane.b32.xlu0 %v7888, 16
      %v8070 = vpop.permute.xlu0 %8069
      %8071 = vrot.lane.b32.xlu0 %v7890, 16
      %v8072 = vpop.permute.xlu0 %8071
      %8073 = vrot.lane.b32.xlu0 %v7892, 16
      %v8074 = vpop.permute.xlu0 %8073
      %8075 = vrot.lane.b32.xlu0 %v7894, 16
      %v8076 = vpop.permute.xlu0 %8075
      %8077 = vrot.lane.b32.xlu0 %v7896, 16
      %v8078 = vpop.permute.xlu0 %8077
      %8079 = vrot.lane.b32.xlu0 %v7898, 16
      %v8080 = vpop.permute.xlu0 %8079
      %8081 = vrot.lane.b32.xlu0 %v7900, 16
      %v8082 = vpop.permute.xlu0 %8081
      %8083 = vrot.lane.b32.xlu0 %v7902, 16
      %v8084 = vpop.permute.xlu0 %8083
      %8085 = vrot.lane.b32.xlu0 %v7904, 16
      %v8086 = vpop.permute.xlu0 %8085
      %8087 = vrot.lane.b32.xlu0 %v7906, 16
      %v8088 = vpop.permute.xlu0 %8087
      %8089 = vrot.lane.b32.xlu0 %v7908, 16
      %v8090 = vpop.permute.xlu0 %8089
      %8091 = vrot.lane.b32.xlu0 %v7910, 16
      %v8092 = vpop.permute.xlu0 %8091
      %8093 = vrot.lane.b32.xlu0 %v7912, 16
      %v8094 = vpop.permute.xlu0 %8093
      %8095 = vrot.lane.b32.xlu0 %v7914, 16
      %v8096 = vpop.permute.xlu0 %8095
      %vm8097 = vcmask 130048
      %v8100 = vsel %vm8097, %v7955, %v8062
      %v8104 = vsel %vm8097, %v7959, %v8064
      %v8108 = vsel %vm8097, %v7963, %v8066
      %v8112 = vsel %vm8097, %v7967, %v8068
      %v8116 = vsel %vm8097, %v7971, %v8070
      %v8120 = vsel %vm8097, %v7975, %v8072
      %v8124 = vsel %vm8097, %v7979, %v8074
      %v8128 = vsel %vm8097, %v7983, %v8076
      %v8132 = vsel %vm8097, %v7987, %v8078
      %v8136 = vsel %vm8097, %v7991, %v8080
      %v8140 = vsel %vm8097, %v7995, %v8082
      %v8144 = vsel %vm8097, %v7999, %v8084
      %v8148 = vsel %vm8097, %v8003, %v8086
      %v8152 = vsel %vm8097, %v8007, %v8088
      %v8156 = vsel %vm8097, %v8011, %v8090
      %v8160 = vsel %vm8097, %v8015, %v8092
      %v8164 = vsel %vm8097, %v8019, %v8094
      %v8168 = vsel %vm8097, %v8023, %v8096
      %v8170 = vmax.bf16 %v7880, %v8025
      %v8171 = vmax.bf16 %v7881, %v8100
      %v8172 = vmax.bf16 %v7882, %v8026
      %v8173 = vmax.bf16 %v7883, %v8104
      %v8174 = vmax.bf16 %v7884, %v8027
      %v8175 = vmax.bf16 %v7885, %v8108
      %v8176 = vmax.bf16 %v7886, %v8028
      %v8177 = vmax.bf16 %v7887, %v8112
      %v8178 = vmax.bf16 %v7888, %v8029
      %v8179 = vmax.bf16 %v7889, %v8116
      %v8180 = vmax.bf16 %v7890, %v8030
      %v8181 = vmax.bf16 %v7891, %v8120
      %v8182 = vmax.bf16 %v7892, %v8031
      %v8183 = vmax.bf16 %v7893, %v8124
      %v8184 = vmax.bf16 %v7894, %v8032
      %v8185 = vmax.bf16 %v7895, %v8128
      %v8186 = vmax.bf16 %v7896, %v8033
      %v8187 = vmax.bf16 %v7897, %v8132
      %v8188 = vmax.bf16 %v7898, %v8034
      %v8189 = vmax.bf16 %v7899, %v8136
      %v8190 = vmax.bf16 %v7900, %v8035
      %v8191 = vmax.bf16 %v7901, %v8140
      %v8192 = vmax.bf16 %v7902, %v8036
      %v8193 = vmax.bf16 %v7903, %v8144
      %v8194 = vmax.bf16 %v7904, %v8037
      %v8195 = vmax.bf16 %v7905, %v8148
      %v8196 = vmax.bf16 %v7906, %v8038
      %v8197 = vmax.bf16 %v7907, %v8152
      %v8198 = vmax.bf16 %v7908, %v8039
      %v8199 = vmax.bf16 %v7909, %v8156
      %v8200 = vmax.bf16 %v7910, %v8040
      %v8201 = vmax.bf16 %v7911, %v8160
      %v8202 = vmax.bf16 %v7912, %v8041
      %v8203 = vmax.bf16 %v7913, %v8164
      %v8204 = vmax.bf16 %v7914, %v8042
      %v8205 = vmax.bf16 %v7915, %v8168
      %v8242 = vrot.slane %v8170, 1
      %v8243 = vrot.slane %v8172, 1
      %v8244 = vsel %vm1044, %v8242, %v8243
      %v8245 = vrot.slane %v8171, 1
      %v8246 = vrot.slane %v8173, 1
      %v8247 = vsel %vm1044, %v8245, %v8246
      %v8248 = vrot.slane %v8174, 1
      %v8249 = vsel %vm1044, %v8243, %v8248
      %v8250 = vrot.slane %v8175, 1
      %v8251 = vsel %vm1044, %v8246, %v8250
      %v8252 = vrot.slane %v8176, 1
      %v8253 = vsel %vm1044, %v8248, %v8252
      %v8254 = vrot.slane %v8177, 1
      %v8255 = vsel %vm1044, %v8250, %v8254
      %v8256 = vrot.slane %v8178, 1
      %v8257 = vsel %vm1044, %v8252, %v8256
      %v8258 = vrot.slane %v8179, 1
      %v8259 = vsel %vm1044, %v8254, %v8258
      %v8260 = vrot.slane %v8180, 1
      %v8261 = vsel %vm1044, %v8256, %v8260
      %v8262 = vrot.slane %v8181, 1
      %v8263 = vsel %vm1044, %v8258, %v8262
      %v8264 = vrot.slane %v8182, 1
      %v8265 = vsel %vm1044, %v8260, %v8264
      %v8266 = vrot.slane %v8183, 1
      %v8267 = vsel %vm1044, %v8262, %v8266
      %v8268 = vrot.slane %v8184, 1
      %v8269 = vsel %vm1044, %v8264, %v8268
      %v8270 = vrot.slane %v8185, 1
      %v8271 = vsel %vm1044, %v8266, %v8270
      %v8272 = vrot.slane %v8186, 1
      %v8273 = vsel %vm1044, %v8268, %v8272
      %v8274 = vrot.slane %v8187, 1
      %v8275 = vsel %vm1044, %v8270, %v8274
      %v8276 = vrot.slane %v8188, 1
      %v8277 = vsel %vm1044, %v8272, %v8276
      %v8278 = vrot.slane %v8189, 1
      %v8279 = vsel %vm1044, %v8274, %v8278
      %v8280 = vrot.slane %v8190, 1
      %v8281 = vsel %vm1044, %v8276, %v8280
      %v8282 = vrot.slane %v8191, 1
      %v8283 = vsel %vm1044, %v8278, %v8282
      %v8284 = vrot.slane %v8192, 1
      %v8285 = vsel %vm1044, %v8280, %v8284
      %v8286 = vrot.slane %v8193, 1
      %v8287 = vsel %vm1044, %v8282, %v8286
      %v8288 = vrot.slane %v8194, 1
      %v8289 = vsel %vm1044, %v8284, %v8288
      %v8290 = vrot.slane %v8195, 1
      %v8291 = vsel %vm1044, %v8286, %v8290
      %v8292 = vrot.slane %v8196, 1
      %v8293 = vsel %vm1044, %v8288, %v8292
      %v8294 = vrot.slane %v8197, 1
      %v8295 = vsel %vm1044, %v8290, %v8294
      %v8296 = vrot.slane %v8198, 1
      %v8297 = vsel %vm1044, %v8292, %v8296
      %v8298 = vrot.slane %v8199, 1
      %v8299 = vsel %vm1044, %v8294, %v8298
      %v8300 = vrot.slane %v8200, 1
      %v8301 = vsel %vm1044, %v8296, %v8300
      %v8302 = vrot.slane %v8201, 1
      %v8303 = vsel %vm1044, %v8298, %v8302
      %v8304 = vrot.slane %v8202, 1
      %v8305 = vsel %vm1044, %v8300, %v8304
      %v8306 = vrot.slane %v8203, 1
      %v8307 = vsel %vm1044, %v8302, %v8306
      %v8308 = vrot.slane %v8204, 1
      %v8309 = vsel %vm1044, %v8304, %v8308
      %v8310 = vrot.slane %v8205, 1
      %v8311 = vsel %vm1044, %v8306, %v8310
      %v8348 = vmax.bf16 %v8170, %v8244
      %v8349 = vmax.bf16 %v8171, %v8247
      %v8350 = vmax.bf16 %v8172, %v8249
      %v8351 = vmax.bf16 %v8173, %v8251
      %v8352 = vmax.bf16 %v8174, %v8253
      %v8353 = vmax.bf16 %v8175, %v8255
      %v8354 = vmax.bf16 %v8176, %v8257
      %v8355 = vmax.bf16 %v8177, %v8259
      %v8356 = vmax.bf16 %v8178, %v8261
      %v8357 = vmax.bf16 %v8179, %v8263
      %v8358 = vmax.bf16 %v8180, %v8265
      %v8359 = vmax.bf16 %v8181, %v8267
      %v8360 = vmax.bf16 %v8182, %v8269
      %v8361 = vmax.bf16 %v8183, %v8271
      %v8362 = vmax.bf16 %v8184, %v8273
      %v8363 = vmax.bf16 %v8185, %v8275
      %v8364 = vmax.bf16 %v8186, %v8277
      %v8365 = vmax.bf16 %v8187, %v8279
      %v8366 = vmax.bf16 %v8188, %v8281
      %v8367 = vmax.bf16 %v8189, %v8283
      %v8368 = vmax.bf16 %v8190, %v8285
      %v8369 = vmax.bf16 %v8191, %v8287
      %v8370 = vmax.bf16 %v8192, %v8289
      %v8371 = vmax.bf16 %v8193, %v8291
      %v8372 = vmax.bf16 %v8194, %v8293
      %v8373 = vmax.bf16 %v8195, %v8295
      %v8374 = vmax.bf16 %v8196, %v8297
      %v8375 = vmax.bf16 %v8197, %v8299
      %v8376 = vmax.bf16 %v8198, %v8301
      %v8377 = vmax.bf16 %v8199, %v8303
      %v8378 = vmax.bf16 %v8200, %v8305
      %v8379 = vmax.bf16 %v8201, %v8307
      %v8380 = vmax.bf16 %v8202, %v8309
      %v8381 = vmax.bf16 %v8203, %v8311
      %v8382 = vmax.bf16 %v8204, %v8308
      %v8383 = vmax.bf16 %v8205, %v8310
      %v8384 = vunpack.c.l.bf16 %v8348
      %v8385 = vunpack.c.l.bf16 %v8349
      %v8386 = vunpack.c.h.bf16 %v8348
      %v8387 = vunpack.c.h.bf16 %v8349
      %v8388 = vunpack.c.l.bf16 %v8350
      %v8389 = vunpack.c.l.bf16 %v8351
      %v8390 = vunpack.c.h.bf16 %v8350
      %v8391 = vunpack.c.h.bf16 %v8351
      %v8392 = vunpack.c.l.bf16 %v8352
      %v8393 = vunpack.c.l.bf16 %v8353
      %v8394 = vunpack.c.h.bf16 %v8352
      %v8395 = vunpack.c.h.bf16 %v8353
      %v8396 = vunpack.c.l.bf16 %v8354
      %v8397 = vunpack.c.l.bf16 %v8355
      %v8398 = vunpack.c.h.bf16 %v8354
      %v8399 = vunpack.c.h.bf16 %v8355
      %v8400 = vunpack.c.l.bf16 %v8356
      %v8401 = vunpack.c.l.bf16 %v8357
      %v8402 = vunpack.c.h.bf16 %v8356
      %v8403 = vunpack.c.h.bf16 %v8357
      %v8404 = vunpack.c.l.bf16 %v8358
      %v8405 = vunpack.c.l.bf16 %v8359
      %v8406 = vunpack.c.h.bf16 %v8358
      %v8407 = vunpack.c.h.bf16 %v8359
      %v8408 = vunpack.c.l.bf16 %v8360
      %v8409 = vunpack.c.l.bf16 %v8361
      %v8410 = vunpack.c.h.bf16 %v8360
      %v8411 = vunpack.c.h.bf16 %v8361
      %v8412 = vunpack.c.l.bf16 %v8362
      %v8413 = vunpack.c.l.bf16 %v8363
      %v8414 = vunpack.c.h.bf16 %v8362
      %v8415 = vunpack.c.h.bf16 %v8363
      %v8416 = vunpack.c.l.bf16 %v8364
      %v8417 = vunpack.c.l.bf16 %v8365
      %v8418 = vunpack.c.h.bf16 %v8364
      %v8419 = vunpack.c.h.bf16 %v8365
      %v8420 = vunpack.c.l.bf16 %v8366
      %v8421 = vunpack.c.l.bf16 %v8367
      %v8422 = vunpack.c.h.bf16 %v8366
      %v8423 = vunpack.c.h.bf16 %v8367
      %v8424 = vunpack.c.l.bf16 %v8368
      %v8425 = vunpack.c.l.bf16 %v8369
      %v8426 = vunpack.c.h.bf16 %v8368
      %v8427 = vunpack.c.h.bf16 %v8369
      %v8428 = vunpack.c.l.bf16 %v8370
      %v8429 = vunpack.c.l.bf16 %v8371
      %v8430 = vunpack.c.h.bf16 %v8370
      %v8431 = vunpack.c.h.bf16 %v8371
      %v8432 = vunpack.c.l.bf16 %v8372
      %v8433 = vunpack.c.l.bf16 %v8373
      %v8434 = vunpack.c.h.bf16 %v8372
      %v8435 = vunpack.c.h.bf16 %v8373
      %v8436 = vunpack.c.l.bf16 %v8374
      %v8437 = vunpack.c.l.bf16 %v8375
      %v8438 = vunpack.c.h.bf16 %v8374
      %v8439 = vunpack.c.h.bf16 %v8375
      %v8440 = vunpack.c.l.bf16 %v8376
      %v8441 = vunpack.c.l.bf16 %v8377
      %v8442 = vunpack.c.h.bf16 %v8376
      %v8443 = vunpack.c.h.bf16 %v8377
      %v8444 = vunpack.c.l.bf16 %v8378
      %v8445 = vunpack.c.l.bf16 %v8379
      %v8446 = vunpack.c.h.bf16 %v8378
      %v8447 = vunpack.c.h.bf16 %v8379
      %v8448 = vunpack.c.l.bf16 %v8380
      %v8449 = vunpack.c.l.bf16 %v8381
      %v8450 = vunpack.c.h.bf16 %v8380
      %v8451 = vunpack.c.h.bf16 %v8381
      %v8452 = vunpack.c.l.bf16 %v8382
      %v8453 = vunpack.c.l.bf16 %v8383
      %v8454 = vunpack.c.h.bf16 %v8382
      %v8455 = vunpack.c.h.bf16 %v8383
      %v8456 = vld [vmem:[%s12] ss:$2 sm:$0x3]
      %v8458 = vlaneseq
      %v8459 = vshrl.u32 %v8458, 7
      %v8460 = vsub.s32 0, %v8459
      %v8461 = vrot.slane %v8456, %v8460
      %v8462 = vlaneseq
      %v8463 = vshrl.u32 %v8462, 7
      %v8464 = vsub.s32 1, %v8463
      %v8465 = vrot.slane %v8456, %v8464
      %v8468 = vmul.f32 %v8384, %v8461
      %v8469 = vmul.f32 %v8385, %v8465
      %v8470 = vmul.f32 %v8386, %v8461
      %v8471 = vmul.f32 %v8387, %v8465
      %v8472 = vmul.f32 %v8388, %v8461
      %v8473 = vmul.f32 %v8389, %v8465
      %v8474 = vmul.f32 %v8390, %v8461
      %v8475 = vmul.f32 %v8391, %v8465
      %v8476 = vmul.f32 %v8392, %v8461
      %v8477 = vmul.f32 %v8393, %v8465
      %v8478 = vmul.f32 %v8394, %v8461
      %v8479 = vmul.f32 %v8395, %v8465
      %v8480 = vmul.f32 %v8396, %v8461
      %v8481 = vmul.f32 %v8397, %v8465
      %v8482 = vmul.f32 %v8398, %v8461
      %v8483 = vmul.f32 %v8399, %v8465
      %v8484 = vmul.f32 %v8400, %v8461
      %v8485 = vmul.f32 %v8401, %v8465
      %v8486 = vmul.f32 %v8402, %v8461
      %v8487 = vmul.f32 %v8403, %v8465
      %v8488 = vmul.f32 %v8404, %v8461
      %v8489 = vmul.f32 %v8405, %v8465
      %v8490 = vmul.f32 %v8406, %v8461
      %v8491 = vmul.f32 %v8407, %v8465
      %v8492 = vmul.f32 %v8408, %v8461
      %v8493 = vmul.f32 %v8409, %v8465
      %v8494 = vmul.f32 %v8410, %v8461
      %v8495 = vmul.f32 %v8411, %v8465
      %v8496 = vmul.f32 %v8412, %v8461
      %v8497 = vmul.f32 %v8413, %v8465
      %v8498 = vmul.f32 %v8414, %v8461
      %v8499 = vmul.f32 %v8415, %v8465
      %v8500 = vmul.f32 %v8416, %v8461
      %v8501 = vmul.f32 %v8417, %v8465
      %v8502 = vmul.f32 %v8418, %v8461
      %v8503 = vmul.f32 %v8419, %v8465
      %v8504 = vmul.f32 %v8420, %v8461
      %v8505 = vmul.f32 %v8421, %v8465
      %v8506 = vmul.f32 %v8422, %v8461
      %v8507 = vmul.f32 %v8423, %v8465
      %v8508 = vmul.f32 %v8424, %v8461
      %v8509 = vmul.f32 %v8425, %v8465
      %v8510 = vmul.f32 %v8426, %v8461
      %v8511 = vmul.f32 %v8427, %v8465
      %v8512 = vmul.f32 %v8428, %v8461
      %v8513 = vmul.f32 %v8429, %v8465
      %v8514 = vmul.f32 %v8430, %v8461
      %v8515 = vmul.f32 %v8431, %v8465
      %v8516 = vmul.f32 %v8432, %v8461
      %v8517 = vmul.f32 %v8433, %v8465
      %v8518 = vmul.f32 %v8434, %v8461
      %v8519 = vmul.f32 %v8435, %v8465
      %v8520 = vmul.f32 %v8436, %v8461
      %v8521 = vmul.f32 %v8437, %v8465
      %v8522 = vmul.f32 %v8438, %v8461
      %v8523 = vmul.f32 %v8439, %v8465
      %v8524 = vmul.f32 %v8440, %v8461
      %v8525 = vmul.f32 %v8441, %v8465
      %v8526 = vmul.f32 %v8442, %v8461
      %v8527 = vmul.f32 %v8443, %v8465
      %v8528 = vmul.f32 %v8444, %v8461
      %v8529 = vmul.f32 %v8445, %v8465
      %v8530 = vmul.f32 %v8446, %v8461
      %v8531 = vmul.f32 %v8447, %v8465
      %v8532 = vmul.f32 %v8448, %v8461
      %v8533 = vmul.f32 %v8449, %v8465
      %v8534 = vmul.f32 %v8450, %v8461
      %v8535 = vmul.f32 %v8451, %v8465
      %v8536 = vmul.f32 %v8452, %v8461
      %v8537 = vmul.f32 %v8453, %v8465
      %v8538 = vmul.f32 %v8454, %v8461
      %v8539 = vmul.f32 %v8455, %v8465
      %s8540 = scalar_lea.vmem %s12, 1
      %v8541 = vld [vmem:[%s8540] ss:$2 sm:$0x3]
      %v8543 = vlaneseq
      %v8544 = vshrl.u32 %v8543, 7
      %v8545 = vsub.s32 0, %v8544
      %v8546 = vrot.slane %v8541, %v8545
      %v8547 = vlaneseq
      %v8548 = vshrl.u32 %v8547, 7
      %v8549 = vsub.s32 1, %v8548
      %v8550 = vrot.slane %v8541, %v8549
      %v8553 = vadd.f32 %v8468, %v8546
      %v8554 = vadd.f32 %v8469, %v8550
      %v8555 = vadd.f32 %v8470, %v8546
      %v8556 = vadd.f32 %v8471, %v8550
      %v8557 = vadd.f32 %v8472, %v8546
      %v8558 = vadd.f32 %v8473, %v8550
      %v8559 = vadd.f32 %v8474, %v8546
      %v8560 = vadd.f32 %v8475, %v8550
      %v8561 = vadd.f32 %v8476, %v8546
      %v8562 = vadd.f32 %v8477, %v8550
      %v8563 = vadd.f32 %v8478, %v8546
      %v8564 = vadd.f32 %v8479, %v8550
      %v8565 = vadd.f32 %v8480, %v8546
      %v8566 = vadd.f32 %v8481, %v8550
      %v8567 = vadd.f32 %v8482, %v8546
      %v8568 = vadd.f32 %v8483, %v8550
      %v8569 = vadd.f32 %v8484, %v8546
      %v8570 = vadd.f32 %v8485, %v8550
      %v8571 = vadd.f32 %v8486, %v8546
      %v8572 = vadd.f32 %v8487, %v8550
      %v8573 = vadd.f32 %v8488, %v8546
      %v8574 = vadd.f32 %v8489, %v8550
      %v8575 = vadd.f32 %v8490, %v8546
      %v8576 = vadd.f32 %v8491, %v8550
      %v8577 = vadd.f32 %v8492, %v8546
      %v8578 = vadd.f32 %v8493, %v8550
      %v8579 = vadd.f32 %v8494, %v8546
      %v8580 = vadd.f32 %v8495, %v8550
      %v8581 = vadd.f32 %v8496, %v8546
      %v8582 = vadd.f32 %v8497, %v8550
      %v8583 = vadd.f32 %v8498, %v8546
      %v8584 = vadd.f32 %v8499, %v8550
      %v8585 = vadd.f32 %v8500, %v8546
      %v8586 = vadd.f32 %v8501, %v8550
      %v8587 = vadd.f32 %v8502, %v8546
      %v8588 = vadd.f32 %v8503, %v8550
      %v8589 = vadd.f32 %v8504, %v8546
      %v8590 = vadd.f32 %v8505, %v8550
      %v8591 = vadd.f32 %v8506, %v8546
      %v8592 = vadd.f32 %v8507, %v8550
      %v8593 = vadd.f32 %v8508, %v8546
      %v8594 = vadd.f32 %v8509, %v8550
      %v8595 = vadd.f32 %v8510, %v8546
      %v8596 = vadd.f32 %v8511, %v8550
      %v8597 = vadd.f32 %v8512, %v8546
      %v8598 = vadd.f32 %v8513, %v8550
      %v8599 = vadd.f32 %v8514, %v8546
      %v8600 = vadd.f32 %v8515, %v8550
      %v8601 = vadd.f32 %v8516, %v8546
      %v8602 = vadd.f32 %v8517, %v8550
      %v8603 = vadd.f32 %v8518, %v8546
      %v8604 = vadd.f32 %v8519, %v8550
      %v8605 = vadd.f32 %v8520, %v8546
      %v8606 = vadd.f32 %v8521, %v8550
      %v8607 = vadd.f32 %v8522, %v8546
      %v8608 = vadd.f32 %v8523, %v8550
      %v8609 = vadd.f32 %v8524, %v8546
      %v8610 = vadd.f32 %v8525, %v8550
      %v8611 = vadd.f32 %v8526, %v8546
      %v8612 = vadd.f32 %v8527, %v8550
      %v8613 = vadd.f32 %v8528, %v8546
      %v8614 = vadd.f32 %v8529, %v8550
      %v8615 = vadd.f32 %v8530, %v8546
      %v8616 = vadd.f32 %v8531, %v8550
      %v8617 = vadd.f32 %v8532, %v8546
      %v8618 = vadd.f32 %v8533, %v8550
      %v8619 = vadd.f32 %v8534, %v8546
      %v8620 = vadd.f32 %v8535, %v8550
      %v8621 = vadd.f32 %v8536, %v8546
      %v8622 = vadd.f32 %v8537, %v8550
      %v8623 = vadd.f32 %v8538, %v8546
      %v8624 = vadd.f32 %v8539, %v8550
      %v8625 = vmax.f32 %v8553, 0.0
      %v8626 = vmax.f32 %v8554, 0.0
      %v8627 = vmax.f32 %v8555, 0.0
      %v8628 = vmax.f32 %v8556, 0.0
      %v8629 = vmax.f32 %v8557, 0.0
      %v8630 = vmax.f32 %v8558, 0.0
      %v8631 = vmax.f32 %v8559, 0.0
      %v8632 = vmax.f32 %v8560, 0.0
      %v8633 = vmax.f32 %v8561, 0.0
      %v8634 = vmax.f32 %v8562, 0.0
      %v8635 = vmax.f32 %v8563, 0.0
      %v8636 = vmax.f32 %v8564, 0.0
      %v8637 = vmax.f32 %v8565, 0.0
      %v8638 = vmax.f32 %v8566, 0.0
      %v8639 = vmax.f32 %v8567, 0.0
      %v8640 = vmax.f32 %v8568, 0.0
      %v8641 = vmax.f32 %v8569, 0.0
      %v8642 = vmax.f32 %v8570, 0.0
      %v8643 = vmax.f32 %v8571, 0.0
      %v8644 = vmax.f32 %v8572, 0.0
      %v8645 = vmax.f32 %v8573, 0.0
      %v8646 = vmax.f32 %v8574, 0.0
      %v8647 = vmax.f32 %v8575, 0.0
      %v8648 = vmax.f32 %v8576, 0.0
      %v8649 = vmax.f32 %v8577, 0.0
      %v8650 = vmax.f32 %v8578, 0.0
      %v8651 = vmax.f32 %v8579, 0.0
      %v8652 = vmax.f32 %v8580, 0.0
      %v8653 = vmax.f32 %v8581, 0.0
      %v8654 = vmax.f32 %v8582, 0.0
      %v8655 = vmax.f32 %v8583, 0.0
      %v8656 = vmax.f32 %v8584, 0.0
      %v8657 = vmax.f32 %v8585, 0.0
      %v8658 = vmax.f32 %v8586, 0.0
      %v8659 = vmax.f32 %v8587, 0.0
      %v8660 = vmax.f32 %v8588, 0.0
      %v8661 = vmax.f32 %v8589, 0.0
      %v8662 = vmax.f32 %v8590, 0.0
      %v8663 = vmax.f32 %v8591, 0.0
      %v8664 = vmax.f32 %v8592, 0.0
      %v8665 = vmax.f32 %v8593, 0.0
      %v8666 = vmax.f32 %v8594, 0.0
      %v8667 = vmax.f32 %v8595, 0.0
      %v8668 = vmax.f32 %v8596, 0.0
      %v8669 = vmax.f32 %v8597, 0.0
      %v8670 = vmax.f32 %v8598, 0.0
      %v8671 = vmax.f32 %v8599, 0.0
      %v8672 = vmax.f32 %v8600, 0.0
      %v8673 = vmax.f32 %v8601, 0.0
      %v8674 = vmax.f32 %v8602, 0.0
      %v8675 = vmax.f32 %v8603, 0.0
      %v8676 = vmax.f32 %v8604, 0.0
      %v8677 = vmax.f32 %v8605, 0.0
      %v8678 = vmax.f32 %v8606, 0.0
      %v8679 = vmax.f32 %v8607, 0.0
      %v8680 = vmax.f32 %v8608, 0.0
      %v8681 = vmax.f32 %v8609, 0.0
      %v8682 = vmax.f32 %v8610, 0.0
      %v8683 = vmax.f32 %v8611, 0.0
      %v8684 = vmax.f32 %v8612, 0.0
      %v8685 = vmax.f32 %v8613, 0.0
      %v8686 = vmax.f32 %v8614, 0.0
      %v8687 = vmax.f32 %v8615, 0.0
      %v8688 = vmax.f32 %v8616, 0.0
      %v8689 = vmax.f32 %v8617, 0.0
      %v8690 = vmax.f32 %v8618, 0.0
      %v8691 = vmax.f32 %v8619, 0.0
      %v8692 = vmax.f32 %v8620, 0.0
      %v8693 = vmax.f32 %v8621, 0.0
      %v8694 = vmax.f32 %v8622, 0.0
      %v8695 = vmax.f32 %v8623, 0.0
      %v8696 = vmax.f32 %v8624, 0.0
      %v8697 = vpack.c.bf16 %v8627, %v8625
      %v8698 = vpack.c.bf16 %v8628, %v8626
      %v8699 = vpack.c.bf16 %v8631, %v8629
      %v8700 = vpack.c.bf16 %v8632, %v8630
      %v8701 = vpack.c.bf16 %v8635, %v8633
      %v8702 = vpack.c.bf16 %v8636, %v8634
      %v8703 = vpack.c.bf16 %v8639, %v8637
      %v8704 = vpack.c.bf16 %v8640, %v8638
      %v8705 = vpack.c.bf16 %v8643, %v8641
      %v8706 = vpack.c.bf16 %v8644, %v8642
      %v8707 = vpack.c.bf16 %v8647, %v8645
      %v8708 = vpack.c.bf16 %v8648, %v8646
      %v8709 = vpack.c.bf16 %v8651, %v8649
      %v8710 = vpack.c.bf16 %v8652, %v8650
      %v8711 = vpack.c.bf16 %v8655, %v8653
      %v8712 = vpack.c.bf16 %v8656, %v8654
      %v8713 = vpack.c.bf16 %v8659, %v8657
      %v8714 = vpack.c.bf16 %v8660, %v8658
      %v8715 = vpack.c.bf16 %v8663, %v8661
      %v8716 = vpack.c.bf16 %v8664, %v8662
      %v8717 = vpack.c.bf16 %v8667, %v8665
      %v8718 = vpack.c.bf16 %v8668, %v8666
      %v8719 = vpack.c.bf16 %v8671, %v8669
      %v8720 = vpack.c.bf16 %v8672, %v8670
      %v8721 = vpack.c.bf16 %v8675, %v8673
      %v8722 = vpack.c.bf16 %v8676, %v8674
      %v8723 = vpack.c.bf16 %v8679, %v8677
      %v8724 = vpack.c.bf16 %v8680, %v8678
      %v8725 = vpack.c.bf16 %v8683, %v8681
      %v8726 = vpack.c.bf16 %v8684, %v8682
      %v8727 = vpack.c.bf16 %v8687, %v8685
      %v8728 = vpack.c.bf16 %v8688, %v8686
      %v8729 = vpack.c.bf16 %v8691, %v8689
      %v8730 = vpack.c.bf16 %v8692, %v8690
      %v8731 = vpack.c.bf16 %v8695, %v8693
      %v8732 = vpack.c.bf16 %v8696, %v8694
      %v8769 = vrot.slane %v8697, 2
      %v8770 = vrot.slane %v8699, 2
      %v8771 = vsel %vm1234, %v8769, %v8770
      %v8772 = vrot.slane %v8698, 2
      %v8773 = vrot.slane %v8700, 2
      %v8774 = vsel %vm1234, %v8772, %v8773
      %v8775 = vrot.slane %v8701, 2
      %v8776 = vsel %vm1234, %v8770, %v8775
      %v8777 = vrot.slane %v8702, 2
      %v8778 = vsel %vm1234, %v8773, %v8777
      %v8779 = vrot.slane %v8703, 2
      %v8780 = vsel %vm1234, %v8775, %v8779
      %v8781 = vrot.slane %v8704, 2
      %v8782 = vsel %vm1234, %v8777, %v8781
      %v8783 = vrot.slane %v8705, 2
      %v8784 = vsel %vm1234, %v8779, %v8783
      %v8785 = vrot.slane %v8706, 2
      %v8786 = vsel %vm1234, %v8781, %v8785
      %v8787 = vrot.slane %v8707, 2
      %v8788 = vsel %vm1234, %v8783, %v8787
      %v8789 = vrot.slane %v8708, 2
      %v8790 = vsel %vm1234, %v8785, %v8789
      %v8791 = vrot.slane %v8709, 2
      %v8792 = vsel %vm1234, %v8787, %v8791
      %v8793 = vrot.slane %v8710, 2
      %v8794 = vsel %vm1234, %v8789, %v8793
      %v8795 = vrot.slane %v8711, 2
      %v8796 = vsel %vm1234, %v8791, %v8795
      %v8797 = vrot.slane %v8712, 2
      %v8798 = vsel %vm1234, %v8793, %v8797
      %v8799 = vrot.slane %v8713, 2
      %v8800 = vsel %vm1234, %v8795, %v8799
      %v8801 = vrot.slane %v8714, 2
      %v8802 = vsel %vm1234, %v8797, %v8801
      %v8803 = vrot.slane %v8715, 2
      %v8804 = vsel %vm1234, %v8799, %v8803
      %v8805 = vrot.slane %v8716, 2
      %v8806 = vsel %vm1234, %v8801, %v8805
      %v8807 = vrot.slane %v8717, 2
      %v8808 = vsel %vm1234, %v8803, %v8807
      %v8809 = vrot.slane %v8718, 2
      %v8810 = vsel %vm1234, %v8805, %v8809
      %v8811 = vrot.slane %v8719, 2
      %v8812 = vsel %vm1234, %v8807, %v8811
      %v8813 = vrot.slane %v8720, 2
      %v8814 = vsel %vm1234, %v8809, %v8813
      %v8815 = vrot.slane %v8721, 2
      %v8816 = vsel %vm1234, %v8811, %v8815
      %v8817 = vrot.slane %v8722, 2
      %v8818 = vsel %vm1234, %v8813, %v8817
      %v8819 = vrot.slane %v8723, 2
      %v8820 = vsel %vm1234, %v8815, %v8819
      %v8821 = vrot.slane %v8724, 2
      %v8822 = vsel %vm1234, %v8817, %v8821
      %v8823 = vrot.slane %v8725, 2
      %v8824 = vsel %vm1234, %v8819, %v8823
      %v8825 = vrot.slane %v8726, 2
      %v8826 = vsel %vm1234, %v8821, %v8825
      %v8827 = vrot.slane %v8727, 2
      %v8828 = vsel %vm1234, %v8823, %v8827
      %v8829 = vrot.slane %v8728, 2
      %v8830 = vsel %vm1234, %v8825, %v8829
      %v8831 = vrot.slane %v8729, 2
      %v8832 = vsel %vm1234, %v8827, %v8831
      %v8833 = vrot.slane %v8730, 2
      %v8834 = vsel %vm1234, %v8829, %v8833
      %v8835 = vrot.slane %v8731, 2
      %v8836 = vsel %vm1234, %v8831, %v8835
      %v8837 = vrot.slane %v8732, 2
      %v8838 = vsel %vm1234, %v8833, %v8837
      %8839 = vrot.lane.b32.xlu0 %v8771, 32
      %v8840 = vpop.permute.xlu0 %8839
      %8841 = vrot.lane.b32.xlu0 %v8774, 32
      %v8842 = vpop.permute.xlu0 %8841
      %8843 = vrot.lane.b32.xlu0 %v8776, 32
      %v8844 = vpop.permute.xlu0 %8843
      %8845 = vrot.lane.b32.xlu0 %v8778, 32
      %v8846 = vpop.permute.xlu0 %8845
      %8847 = vrot.lane.b32.xlu0 %v8780, 32
      %v8848 = vpop.permute.xlu0 %8847
      %8849 = vrot.lane.b32.xlu0 %v8782, 32
      %v8850 = vpop.permute.xlu0 %8849
      %8851 = vrot.lane.b32.xlu0 %v8784, 32
      %v8852 = vpop.permute.xlu0 %8851
      %8853 = vrot.lane.b32.xlu0 %v8786, 32
      %v8854 = vpop.permute.xlu0 %8853
      %8855 = vrot.lane.b32.xlu0 %v8788, 32
      %v8856 = vpop.permute.xlu0 %8855
      %8857 = vrot.lane.b32.xlu0 %v8790, 32
      %v8858 = vpop.permute.xlu0 %8857
      %8859 = vrot.lane.b32.xlu0 %v8792, 32
      %v8860 = vpop.permute.xlu0 %8859
      %8861 = vrot.lane.b32.xlu0 %v8794, 32
      %v8862 = vpop.permute.xlu0 %8861
      %8863 = vrot.lane.b32.xlu0 %v8796, 32
      %v8864 = vpop.permute.xlu0 %8863
      %8865 = vrot.lane.b32.xlu0 %v8798, 32
      %v8866 = vpop.permute.xlu0 %8865
      %8867 = vrot.lane.b32.xlu0 %v8800, 32
      %v8868 = vpop.permute.xlu0 %8867
      %8869 = vrot.lane.b32.xlu0 %v8802, 32
      %v8870 = vpop.permute.xlu0 %8869
      %8871 = vrot.lane.b32.xlu0 %v8804, 32
      %v8872 = vpop.permute.xlu0 %8871
      %8873 = vrot.lane.b32.xlu0 %v8806, 32
      %v8874 = vpop.permute.xlu0 %8873
      %8875 = vrot.lane.b32.xlu0 %v8808, 32
      %v8876 = vpop.permute.xlu0 %8875
      %8877 = vrot.lane.b32.xlu0 %v8810, 32
      %v8878 = vpop.permute.xlu0 %8877
      %8879 = vrot.lane.b32.xlu0 %v8812, 32
      %v8880 = vpop.permute.xlu0 %8879
      %8881 = vrot.lane.b32.xlu0 %v8814, 32
      %v8882 = vpop.permute.xlu0 %8881
      %8883 = vrot.lane.b32.xlu0 %v8816, 32
      %v8884 = vpop.permute.xlu0 %8883
      %8885 = vrot.lane.b32.xlu0 %v8818, 32
      %v8886 = vpop.permute.xlu0 %8885
      %8887 = vrot.lane.b32.xlu0 %v8820, 32
      %v8888 = vpop.permute.xlu0 %8887
      %8889 = vrot.lane.b32.xlu0 %v8822, 32
      %v8890 = vpop.permute.xlu0 %8889
      %8891 = vrot.lane.b32.xlu0 %v8824, 32
      %v8892 = vpop.permute.xlu0 %8891
      %8893 = vrot.lane.b32.xlu0 %v8826, 32
      %v8894 = vpop.permute.xlu0 %8893
      %8895 = vrot.lane.b32.xlu0 %v8828, 32
      %v8896 = vpop.permute.xlu0 %8895
      %8897 = vrot.lane.b32.xlu0 %v8830, 32
      %v8898 = vpop.permute.xlu0 %8897
      %8899 = vrot.lane.b32.xlu0 %v8832, 32
      %v8900 = vpop.permute.xlu0 %8899
      %8901 = vrot.lane.b32.xlu0 %v8834, 32
      %v8902 = vpop.permute.xlu0 %8901
      %8903 = vrot.lane.b32.xlu0 %v8836, 32
      %v8904 = vpop.permute.xlu0 %8903
      %8905 = vrot.lane.b32.xlu0 %v8838, 32
      %v8906 = vpop.permute.xlu0 %8905
      %8907 = vrot.lane.b32.xlu0 %v8835, 32
      %v8908 = vpop.permute.xlu0 %8907
      %8909 = vrot.lane.b32.xlu0 %v8837, 32
      %v8910 = vpop.permute.xlu0 %8909
      %vm8911 = vcmask 261120
      %v8912 = vsel %vm8911, %v8840, %v8842
      %v8913 = vsel %vm8911, %v8844, %v8846
      %v8914 = vsel %vm8911, %v8848, %v8850
      %v8915 = vsel %vm8911, %v8852, %v8854
      %v8916 = vsel %vm8911, %v8856, %v8858
      %v8917 = vsel %vm8911, %v8860, %v8862
      %v8918 = vsel %vm8911, %v8864, %v8866
      %v8919 = vsel %vm8911, %v8868, %v8870
      %v8920 = vsel %vm8911, %v8872, %v8874
      %v8921 = vsel %vm8911, %v8876, %v8878
      %v8922 = vsel %vm8911, %v8880, %v8882
      %v8923 = vsel %vm8911, %v8884, %v8886
      %v8924 = vsel %vm8911, %v8888, %v8890
      %v8925 = vsel %vm8911, %v8892, %v8894
      %v8926 = vsel %vm8911, %v8896, %v8898
      %v8927 = vsel %vm8911, %v8900, %v8902
      %v8928 = vsel %vm8911, %v8904, %v8906
      %v8929 = vsel %vm8911, %v8908, %v8910
      %vm8930 = vcmask 1043456
      %v8931 = vrot.slane %v8697, 4
      %v8932 = vrot.slane %v8699, 4
      %v8933 = vsel %vm8930, %v8931, %v8932
      %v8934 = vrot.slane %v8698, 4
      %v8935 = vrot.slane %v8700, 4
      %v8936 = vsel %vm8930, %v8934, %v8935
      %v8937 = vrot.slane %v8701, 4
      %v8938 = vsel %vm8930, %v8932, %v8937
      %v8939 = vrot.slane %v8702, 4
      %v8940 = vsel %vm8930, %v8935, %v8939
      %v8941 = vrot.slane %v8703, 4
      %v8942 = vsel %vm8930, %v8937, %v8941
      %v8943 = vrot.slane %v8704, 4
      %v8944 = vsel %vm8930, %v8939, %v8943
      %v8945 = vrot.slane %v8705, 4
      %v8946 = vsel %vm8930, %v8941, %v8945
      %v8947 = vrot.slane %v8706, 4
      %v8948 = vsel %vm8930, %v8943, %v8947
      %v8949 = vrot.slane %v8707, 4
      %v8950 = vsel %vm8930, %v8945, %v8949
      %v8951 = vrot.slane %v8708, 4
      %v8952 = vsel %vm8930, %v8947, %v8951
      %v8953 = vrot.slane %v8709, 4
      %v8954 = vsel %vm8930, %v8949, %v8953
      %v8955 = vrot.slane %v8710, 4
      %v8956 = vsel %vm8930, %v8951, %v8955
      %v8957 = vrot.slane %v8711, 4
      %v8958 = vsel %vm8930, %v8953, %v8957
      %v8959 = vrot.slane %v8712, 4
      %v8960 = vsel %vm8930, %v8955, %v8959
      %v8961 = vrot.slane %v8713, 4
      %v8962 = vsel %vm8930, %v8957, %v8961
      %v8963 = vrot.slane %v8714, 4
      %v8964 = vsel %vm8930, %v8959, %v8963
      %v8965 = vrot.slane %v8715, 4
      %v8966 = vsel %vm8930, %v8961, %v8965
      %v8967 = vrot.slane %v8716, 4
      %v8968 = vsel %vm8930, %v8963, %v8967
      %v8969 = vrot.slane %v8717, 4
      %v8970 = vsel %vm8930, %v8965, %v8969
      %v8971 = vrot.slane %v8718, 4
      %v8972 = vsel %vm8930, %v8967, %v8971
      %v8973 = vrot.slane %v8719, 4
      %v8974 = vsel %vm8930, %v8969, %v8973
      %v8975 = vrot.slane %v8720, 4
      %v8976 = vsel %vm8930, %v8971, %v8975
      %v8977 = vrot.slane %v8721, 4
      %v8978 = vsel %vm8930, %v8973, %v8977
      %v8979 = vrot.slane %v8722, 4
      %v8980 = vsel %vm8930, %v8975, %v8979
      %v8981 = vrot.slane %v8723, 4
      %v8982 = vsel %vm8930, %v8977, %v8981
      %v8983 = vrot.slane %v8724, 4
      %v8984 = vsel %vm8930, %v8979, %v8983
      %v8985 = vrot.slane %v8725, 4
      %v8986 = vsel %vm8930, %v8981, %v8985
      %v8987 = vrot.slane %v8726, 4
      %v8988 = vsel %vm8930, %v8983, %v8987
      %v8989 = vrot.slane %v8727, 4
      %v8990 = vsel %vm8930, %v8985, %v8989
      %v8991 = vrot.slane %v8728, 4
      %v8992 = vsel %vm8930, %v8987, %v8991
      %v8993 = vrot.slane %v8729, 4
      %v8994 = vsel %vm8930, %v8989, %v8993
      %v8995 = vrot.slane %v8730, 4
      %v8996 = vsel %vm8930, %v8991, %v8995
      %v8997 = vrot.slane %v8731, 4
      %v8998 = vsel %vm8930, %v8993, %v8997
      %v8999 = vrot.slane %v8732, 4
      %v9000 = vsel %vm8930, %v8995, %v8999
      %9001 = vrot.lane.b32.xlu0 %v8933, 64
      %v9002 = vpop.permute.xlu0 %9001
      %9003 = vrot.lane.b32.xlu0 %v8936, 64
      %v9004 = vpop.permute.xlu0 %9003
      %9005 = vrot.lane.b32.xlu0 %v8938, 64
      %v9006 = vpop.permute.xlu0 %9005
      %9007 = vrot.lane.b32.xlu0 %v8940, 64
      %v9008 = vpop.permute.xlu0 %9007
      %9009 = vrot.lane.b32.xlu0 %v8942, 64
      %v9010 = vpop.permute.xlu0 %9009
      %9011 = vrot.lane.b32.xlu0 %v8944, 64
      %v9012 = vpop.permute.xlu0 %9011
      %9013 = vrot.lane.b32.xlu0 %v8946, 64
      %v9014 = vpop.permute.xlu0 %9013
      %9015 = vrot.lane.b32.xlu0 %v8948, 64
      %v9016 = vpop.permute.xlu0 %9015
      %9017 = vrot.lane.b32.xlu0 %v8950, 64
      %v9018 = vpop.permute.xlu0 %9017
      %9019 = vrot.lane.b32.xlu0 %v8952, 64
      %v9020 = vpop.permute.xlu0 %9019
      %9021 = vrot.lane.b32.xlu0 %v8954, 64
      %v9022 = vpop.permute.xlu0 %9021
      %9023 = vrot.lane.b32.xlu0 %v8956, 64
      %v9024 = vpop.permute.xlu0 %9023
      %9025 = vrot.lane.b32.xlu0 %v8958, 64
      %v9026 = vpop.permute.xlu0 %9025
      %9027 = vrot.lane.b32.xlu0 %v8960, 64
      %v9028 = vpop.permute.xlu0 %9027
      %9029 = vrot.lane.b32.xlu0 %v8962, 64
      %v9030 = vpop.permute.xlu0 %9029
      %9031 = vrot.lane.b32.xlu0 %v8964, 64
      %v9032 = vpop.permute.xlu0 %9031
      %9033 = vrot.lane.b32.xlu0 %v8966, 64
      %v9034 = vpop.permute.xlu0 %9033
      %9035 = vrot.lane.b32.xlu0 %v8968, 64
      %v9036 = vpop.permute.xlu0 %9035
      %9037 = vrot.lane.b32.xlu0 %v8970, 64
      %v9038 = vpop.permute.xlu0 %9037
      %9039 = vrot.lane.b32.xlu0 %v8972, 64
      %v9040 = vpop.permute.xlu0 %9039
      %9041 = vrot.lane.b32.xlu0 %v8974, 64
      %v9042 = vpop.permute.xlu0 %9041
      %9043 = vrot.lane.b32.xlu0 %v8976, 64
      %v9044 = vpop.permute.xlu0 %9043
      %9045 = vrot.lane.b32.xlu0 %v8978, 64
      %v9046 = vpop.permute.xlu0 %9045
      %9047 = vrot.lane.b32.xlu0 %v8980, 64
      %v9048 = vpop.permute.xlu0 %9047
      %9049 = vrot.lane.b32.xlu0 %v8982, 64
      %v9050 = vpop.permute.xlu0 %9049
      %9051 = vrot.lane.b32.xlu0 %v8984, 64
      %v9052 = vpop.permute.xlu0 %9051
      %9053 = vrot.lane.b32.xlu0 %v8986, 64
      %v9054 = vpop.permute.xlu0 %9053
      %9055 = vrot.lane.b32.xlu0 %v8988, 64
      %v9056 = vpop.permute.xlu0 %9055
      %9057 = vrot.lane.b32.xlu0 %v8990, 64
      %v9058 = vpop.permute.xlu0 %9057
      %9059 = vrot.lane.b32.xlu0 %v8992, 64
      %v9060 = vpop.permute.xlu0 %9059
      %9061 = vrot.lane.b32.xlu0 %v8994, 64
      %v9062 = vpop.permute.xlu0 %9061
      %9063 = vrot.lane.b32.xlu0 %v8996, 64
      %v9064 = vpop.permute.xlu0 %9063
      %9065 = vrot.lane.b32.xlu0 %v8998, 64
      %v9066 = vpop.permute.xlu0 %9065
      %9067 = vrot.lane.b32.xlu0 %v9000, 64
      %v9068 = vpop.permute.xlu0 %9067
      %9069 = vrot.lane.b32.xlu0 %v8997, 64
      %v9070 = vpop.permute.xlu0 %9069
      %9071 = vrot.lane.b32.xlu0 %v8999, 64
      %v9072 = vpop.permute.xlu0 %9071
      %v9073 = vsel %vm6468, %v9002, %v9004
      %v9074 = vsel %vm6468, %v9006, %v9008
      %v9075 = vsel %vm6468, %v9010, %v9012
      %v9076 = vsel %vm6468, %v9014, %v9016
      %v9077 = vsel %vm6468, %v9018, %v9020
      %v9078 = vsel %vm6468, %v9022, %v9024
      %v9079 = vsel %vm6468, %v9026, %v9028
      %v9080 = vsel %vm6468, %v9030, %v9032
      %v9081 = vsel %vm6468, %v9034, %v9036
      %v9082 = vsel %vm6468, %v9038, %v9040
      %v9083 = vsel %vm6468, %v9042, %v9044
      %v9084 = vsel %vm6468, %v9046, %v9048
      %v9085 = vsel %vm6468, %v9050, %v9052
      %v9086 = vsel %vm6468, %v9054, %v9056
      %v9087 = vsel %vm6468, %v9058, %v9060
      %v9088 = vsel %vm6468, %v9062, %v9064
      %v9089 = vsel %vm6468, %v9066, %v9068
      %v9090 = vsel %vm6468, %v9070, %v9072
      %v9093 = vsel %vm2573, %v8698, %v8840
      %v9097 = vsel %vm2573, %v8700, %v8844
      %v9101 = vsel %vm2573, %v8702, %v8848
      %v9105 = vsel %vm2573, %v8704, %v8852
      %v9109 = vsel %vm2573, %v8706, %v8856
      %v9113 = vsel %vm2573, %v8708, %v8860
      %v9117 = vsel %vm2573, %v8710, %v8864
      %v9121 = vsel %vm2573, %v8712, %v8868
      %v9125 = vsel %vm2573, %v8714, %v8872
      %v9129 = vsel %vm2573, %v8716, %v8876
      %v9133 = vsel %vm2573, %v8718, %v8880
      %v9137 = vsel %vm2573, %v8720, %v8884
      %v9141 = vsel %vm2573, %v8722, %v8888
      %v9145 = vsel %vm2573, %v8724, %v8892
      %v9149 = vsel %vm2573, %v8726, %v8896
      %v9153 = vsel %vm2573, %v8728, %v8900
      %v9157 = vsel %vm2573, %v8730, %v8904
      %v9161 = vsel %vm2573, %v8732, %v8908
      %v9165 = vsel %vm2672, %v8912, %v9002
      %v9169 = vsel %vm2672, %v8913, %v9006
      %v9173 = vsel %vm2672, %v8914, %v9010
      %v9177 = vsel %vm2672, %v8915, %v9014
      %v9181 = vsel %vm2672, %v8916, %v9018
      %v9185 = vsel %vm2672, %v8917, %v9022
      %v9189 = vsel %vm2672, %v8918, %v9026
      %v9193 = vsel %vm2672, %v8919, %v9030
      %v9197 = vsel %vm2672, %v8920, %v9034
      %v9201 = vsel %vm2672, %v8921, %v9038
      %v9205 = vsel %vm2672, %v8922, %v9042
      %v9209 = vsel %vm2672, %v8923, %v9046
      %v9213 = vsel %vm2672, %v8924, %v9050
      %v9217 = vsel %vm2672, %v8925, %v9054
      %v9221 = vsel %vm2672, %v8926, %v9058
      %v9225 = vsel %vm2672, %v8927, %v9062
      %v9229 = vsel %vm2672, %v8928, %v9066
      %v9233 = vsel %vm2672, %v8929, %v9070
      %v9235 = vld [vmem:[%s13] sm:$0xf]
      %v9236 = vld [vmem:[%s13 + $0x4] sm:$0xf]
      %v9237 = vld [vmem:[%s13 + $0x8] sm:$0xf]
      %v9238 = vld [vmem:[%s13 + $0xc] sm:$0xf]
      %v9239 = vld [vmem:[%s13 + $0x10] sm:$0xf]
      %v9240 = vld [vmem:[%s13 + $0x14] sm:$0xf]
      %v9241 = vld [vmem:[%s13 + $0x18] sm:$0xf]
      %v9242 = vld [vmem:[%s13 + $0x1c] sm:$0xf]
      %v9243 = vld [vmem:[%s13 + $0x20] sm:$0xf]
      %v9244 = vld [vmem:[%s13 + $0x24] sm:$0xf]
      %v9245 = vld [vmem:[%s13 + $0x28] sm:$0xf]
      %v9246 = vld [vmem:[%s13 + $0x2c] sm:$0xf]
      %v9247 = vld [vmem:[%s13 + $0x30] sm:$0xf]
      %v9248 = vld [vmem:[%s13 + $0x34] sm:$0xf]
      %v9249 = vld [vmem:[%s13 + $0x38] sm:$0xf]
      %v9250 = vld [vmem:[%s13 + $0x3c] sm:$0xf]
      %v9251 = vld [vmem:[%s13 + $0x40] sm:$0xf]
      %v9252 = vld [vmem:[%s13 + $0x44] sm:$0xf]
      %v9253 = vld [vmem:[%s13 + $0x48] sm:$0xf]
      %v9254 = vld [vmem:[%s13 + $0x4c] sm:$0xf]
      %v9255 = vld [vmem:[%s13 + $0x50] sm:$0xf]
      %v9256 = vld [vmem:[%s13 + $0x54] sm:$0xf]
      %v9257 = vld [vmem:[%s13 + $0x58] sm:$0xf]
      %v9258 = vld [vmem:[%s13 + $0x5c] sm:$0xf]
      %v9259 = vld [vmem:[%s13 + $0x60] sm:$0xf]
      %v9260 = vld [vmem:[%s13 + $0x64] sm:$0xf]
      %v9261 = vld [vmem:[%s13 + $0x68] sm:$0xf]
      %v9262 = vld [vmem:[%s13 + $0x6c] sm:$0xf]
      %v9263 = vld [vmem:[%s13 + $0x70] sm:$0xf]
      %v9264 = vld [vmem:[%s13 + $0x74] sm:$0xf]
      %v9265 = vld [vmem:[%s13 + $0x78] sm:$0xf]
      %v9266 = vld [vmem:[%s13 + $0x7c] sm:$0xf]
      %v9267 = vld [vmem:[%s13 + $0x80] sm:$0xf]
      %v9268 = vld [vmem:[%s13 + $0x84] sm:$0xf]
      %v9269 = vld [vmem:[%s13 + $0x88] sm:$0xf]
      %v9270 = vld [vmem:[%s13 + $0x8c] sm:$0xf]
      %v9271 = vld [vmem:[%s13 + $0x90] sm:$0xf]
      %v9272 = vld [vmem:[%s13 + $0x94] sm:$0xf]
      %v9273 = vld [vmem:[%s13 + $0x98] sm:$0xf]
      %v9274 = vld [vmem:[%s13 + $0x9c] sm:$0xf]
      %v9275 = vld [vmem:[%s13 + $0xa0] sm:$0xf]
      %v9276 = vld [vmem:[%s13 + $0xa4] sm:$0xf]
      %v9277 = vld [vmem:[%s13 + $0xa8] sm:$0xf]
      %v9278 = vld [vmem:[%s13 + $0xac] sm:$0xf]
      %v9279 = vld [vmem:[%s13 + $0xb0] sm:$0xf]
      %v9280 = vld [vmem:[%s13 + $0xb4] sm:$0xf]
      %v9281 = vld [vmem:[%s13 + $0xb8] sm:$0xf]
      %v9282 = vld [vmem:[%s13 + $0xbc] sm:$0xf]
      %v9283 = vld [vmem:[%s13 + $0xc0] sm:$0xf]
      %v9284 = vld [vmem:[%s13 + $0xc4] sm:$0xf]
      %v9285 = vld [vmem:[%s13 + $0xc8] sm:$0xf]
      %v9286 = vld [vmem:[%s13 + $0xcc] sm:$0xf]
      %v9287 = vld [vmem:[%s13 + $0xd0] sm:$0xf]
      %v9288 = vld [vmem:[%s13 + $0xd4] sm:$0xf]
      %v9289 = vld [vmem:[%s13 + $0xd8] sm:$0xf]
      %v9290 = vld [vmem:[%s13 + $0xdc] sm:$0xf]
      %v9291 = vld [vmem:[%s13 + $0xe0] sm:$0xf]
      %v9292 = vld [vmem:[%s13 + $0xe4] sm:$0xf]
      %v9293 = vld [vmem:[%s13 + $0xe8] sm:$0xf]
      %v9294 = vld [vmem:[%s13 + $0xec] sm:$0xf]
      %v9295 = vld [vmem:[%s14] sm:$0x1]
      %v9297 = vlaneseq
      %v9298 = vshrl.u32 %v9297, 7
      %v9299 = vsub.s32 0, %v9298
      %v9300 = vrot.slane %v9295, %v9299
      %v9362 = vunpack.c.l.b16 %v9235
      %v9363 = vunpack.c.l.b16 %v9236
      %v9364 = vunpack.c.l.b16 %v9237
      %v9365 = vunpack.c.l.b16 %v9238
      %v9366 = vunpack.c.l.b16 %v9239
      %v9367 = vunpack.c.l.b16 %v9240
      %v9368 = vunpack.c.l.b16 %v9241
      %v9369 = vunpack.c.l.b16 %v9242
      %v9370 = vunpack.c.l.b16 %v9243
      %v9371 = vunpack.c.l.b16 %v9244
      %v9372 = vunpack.c.l.b16 %v9245
      %v9373 = vunpack.c.l.b16 %v9246
      %v9374 = vunpack.c.l.b16 %v9247
      %v9375 = vunpack.c.l.b16 %v9248
      %v9376 = vunpack.c.l.b16 %v9249
      %v9377 = vunpack.c.l.b16 %v9250
      %v9378 = vunpack.c.l.b16 %v9251
      %v9379 = vunpack.c.l.b16 %v9252
      %v9380 = vunpack.c.l.b16 %v9253
      %v9381 = vunpack.c.l.b16 %v9254
      %v9382 = vunpack.c.l.b16 %v9255
      %v9383 = vunpack.c.l.b16 %v9256
      %v9384 = vunpack.c.l.b16 %v9257
      %v9385 = vunpack.c.l.b16 %v9258
      %v9386 = vunpack.c.l.b16 %v9259
      %v9387 = vunpack.c.l.b16 %v9260
      %v9388 = vunpack.c.l.b16 %v9261
      %v9389 = vunpack.c.l.b16 %v9262
      %v9390 = vunpack.c.l.b16 %v9263
      %v9391 = vunpack.c.l.b16 %v9264
      %v9392 = vunpack.c.l.b16 %v9265
      %v9393 = vunpack.c.l.b16 %v9266
      %v9394 = vunpack.c.l.b16 %v9267
      %v9395 = vunpack.c.l.b16 %v9268
      %v9396 = vunpack.c.l.b16 %v9269
      %v9397 = vunpack.c.l.b16 %v9270
      %v9398 = vunpack.c.l.b16 %v9271
      %v9399 = vunpack.c.l.b16 %v9272
      %v9400 = vunpack.c.l.b16 %v9273
      %v9401 = vunpack.c.l.b16 %v9274
      %v9402 = vunpack.c.l.b16 %v9275
      %v9403 = vunpack.c.l.b16 %v9276
      %v9404 = vunpack.c.l.b16 %v9277
      %v9405 = vunpack.c.l.b16 %v9278
      %v9406 = vunpack.c.l.b16 %v9279
      %v9407 = vunpack.c.l.b16 %v9280
      %v9408 = vunpack.c.l.b16 %v9281
      %v9409 = vunpack.c.l.b16 %v9282
      %v9410 = vunpack.c.l.b16 %v9283
      %v9411 = vunpack.c.l.b16 %v9284
      %v9412 = vunpack.c.l.b16 %v9285
      %v9413 = vunpack.c.l.b16 %v9286
      %v9414 = vunpack.c.l.b16 %v9287
      %v9415 = vunpack.c.l.b16 %v9288
      %v9416 = vunpack.c.l.b16 %v9289
      %v9417 = vunpack.c.l.b16 %v9290
      %v9418 = vunpack.c.l.b16 %v9291
      %v9419 = vunpack.c.l.b16 %v9292
      %v9420 = vunpack.c.l.b16 %v9293
      %v9421 = vunpack.c.l.b16 %v9294
      %v9422 = vpack.c.b16 %v9363, %v9362
      %v9423 = vpack.c.b16 %v9365, %v9364
      %v9424 = vpack.c.b16 %v9367, %v9366
      %v9425 = vpack.c.b16 %v9369, %v9368
      %v9426 = vpack.c.b16 %v9371, %v9370
      %v9427 = vpack.c.b16 %v9373, %v9372
      %v9428 = vpack.c.b16 %v9375, %v9374
      %v9429 = vpack.c.b16 %v9377, %v9376
      %v9430 = vpack.c.b16 %v9379, %v9378
      %v9431 = vpack.c.b16 %v9381, %v9380
      %v9432 = vpack.c.b16 %v9383, %v9382
      %v9433 = vpack.c.b16 %v9385, %v9384
      %v9434 = vpack.c.b16 %v9387, %v9386
      %v9435 = vpack.c.b16 %v9389, %v9388
      %v9436 = vpack.c.b16 %v9391, %v9390
      %v9437 = vpack.c.b16 %v9393, %v9392
      %v9438 = vpack.c.b16 %v9395, %v9394
      %v9439 = vpack.c.b16 %v9397, %v9396
      %v9440 = vpack.c.b16 %v9399, %v9398
      %v9441 = vpack.c.b16 %v9401, %v9400
      %v9442 = vpack.c.b16 %v9403, %v9402
      %v9443 = vpack.c.b16 %v9405, %v9404
      %v9444 = vpack.c.b16 %v9407, %v9406
      %v9445 = vpack.c.b16 %v9409, %v9408
      %v9446 = vpack.c.b16 %v9411, %v9410
      %v9447 = vpack.c.b16 %v9413, %v9412
      %v9448 = vpack.c.b16 %v9415, %v9414
      %v9449 = vpack.c.b16 %v9417, %v9416
      %v9450 = vpack.c.b16 %v9419, %v9418
      %v9451 = vpack.c.b16 %v9421, %v9420
      %v9483 = vsel %vm5375, %v9073, 0
      %v9486 = vsel %vm5375, %v9074, 0
      %v9489 = vsel %vm5375, %v9075, 0
      %v9492 = vsel %vm5375, %v9076, 0
      %v9495 = vsel %vm5375, %v9077, 0
      %v9498 = vsel %vm5375, %v9078, 0
      %v9501 = vsel %vm5375, %v9079, 0
      %v9504 = vsel %vm5375, %v9080, 0
      %v9507 = vsel %vm5375, %v9081, 0
      %v9510 = vsel %vm5375, %v9082, 0
      %v9513 = vsel %vm5375, %v9083, 0
      %v9516 = vsel %vm5375, %v9084, 0
      %v9519 = vsel %vm5375, %v9085, 0
      %v9522 = vsel %vm5375, %v9086, 0
      %v9525 = vsel %vm5375, %v9087, 0
      %v9528 = vsel %vm5375, %v9088, 0
      %v9531 = vsel %vm5375, %v9089, 0
      %v9534 = vsel %vm5375, %v9090, 0
      %9536 = vmatprep.subr.bf16.mxu0 0
      %9537 = vmatpush1.bf16.msra.mxu0 %v9429
      %9538 = vmatprep.subr.bf16.mxu0 0
      %9539 = vmatpush1.bf16.msra.mxu0 %v9428
      %9540 = vmatprep.subr.bf16.mxu0 0
      %9541 = vmatpush1.bf16.msra.mxu0 %v9427
      %9542 = vmatprep.subr.bf16.mxu0 0
      %9543 = vmatpush1.bf16.msra.mxu0 %v9426
      %9544 = vmatprep.subr.bf16.mxu0 0
      %9545 = vmatpush1.bf16.msra.mxu0 %v9425
      %9546 = vmatprep.subr.bf16.mxu0 0
      %9547 = vmatpush1.bf16.msra.mxu0 %v9424
      %9548 = vmatprep.subr.bf16.mxu0 0
      %9549 = vmatpush1.bf16.msra.mxu0 %v9423
      %9550 = vmatprep.subr.bf16.mxu0 0
      %9551 = vmatpush1.bf16.msra.mxu0 %v9422
      %9552 = vmatprep.subr.bf16.mxu0 0
      %9553 = vmatpush2.bf16.msra.mxu0 %v9437
      %9554 = vmatprep.subr.bf16.mxu0 0
      %9555 = vmatpush2.bf16.msra.mxu0 %v9436
      %9556 = vmatprep.subr.bf16.mxu0 0
      %9557 = vmatpush2.bf16.msra.mxu0 %v9435
      %9558 = vmatprep.subr.bf16.mxu0 0
      %9559 = vmatpush2.bf16.msra.mxu0 %v9434
      %9560 = vmatprep.subr.bf16.mxu0 0
      %9561 = vmatpush2.bf16.msra.mxu0 %v9433
      %9562 = vmatprep.subr.bf16.mxu0 0
      %9563 = vmatpush2.bf16.msra.mxu0 %v9432
      %9564 = vmatprep.subr.bf16.mxu0 0
      %9565 = vmatpush2.bf16.msra.mxu0 %v9431
      %9566 = vmatprep.subr.bf16.mxu0 0
      %9567 = vmatpush2.bf16.msra.mxu0 %v9430
      %9568 = vmatprep.mubr.bf16.mxu0 %v9093
      %9569 = vmatmul.mubr.bf16.gmra.mxu0 %v8697
      %v9570 = vpop.f32.mrf.mxu0
      %v9571 = vadd.f32 %v9300, %v9570
      %v9572 = vpop.f32.mrf.mxu0
      %v9573 = vpop.f32.mrf.mxu0
      %v9574 = vadd.f32 %v9300, %v9573
      %v9575 = vpop.f32.mrf.mxu0
      %9576 = vmatprep.mubr.bf16.mxu0 %v9097
      %9577 = vmatmul.mubr.bf16.gmra.mxu0 %v8699
      %v9578 = vpop.f32.mrf.mxu0
      %v9579 = vadd.f32 %v9300, %v9578
      %v9580 = vpop.f32.mrf.mxu0
      %v9581 = vpop.f32.mrf.mxu0
      %v9582 = vadd.f32 %v9300, %v9581
      %v9583 = vpop.f32.mrf.mxu0
      %9584 = vmatprep.mubr.bf16.mxu0 %v9101
      %9585 = vmatmul.mubr.bf16.gmra.mxu0 %v8701
      %v9586 = vpop.f32.mrf.mxu0
      %v9587 = vadd.f32 %v9300, %v9586
      %v9588 = vpop.f32.mrf.mxu0
      %v9589 = vpop.f32.mrf.mxu0
      %v9590 = vadd.f32 %v9300, %v9589
      %v9591 = vpop.f32.mrf.mxu0
      %9592 = vmatprep.mubr.bf16.mxu0 %v9105
      %9593 = vmatmul.mubr.bf16.gmra.mxu0 %v8703
      %v9594 = vpop.f32.mrf.mxu0
      %v9595 = vadd.f32 %v9300, %v9594
      %v9596 = vpop.f32.mrf.mxu0
      %v9597 = vpop.f32.mrf.mxu0
      %v9598 = vadd.f32 %v9300, %v9597
      %v9599 = vpop.f32.mrf.mxu0
      %9600 = vmatprep.mubr.bf16.mxu0 %v9109
      %9601 = vmatmul.mubr.bf16.gmra.mxu0 %v8705
      %v9602 = vpop.f32.mrf.mxu0
      %v9603 = vadd.f32 %v9300, %v9602
      %v9604 = vpop.f32.mrf.mxu0
      %v9605 = vpop.f32.mrf.mxu0
      %v9606 = vadd.f32 %v9300, %v9605
      %v9607 = vpop.f32.mrf.mxu0
      %9608 = vmatprep.mubr.bf16.mxu0 %v9113
      %9609 = vmatmul.mubr.bf16.gmra.mxu0 %v8707
      %v9610 = vpop.f32.mrf.mxu0
      %v9611 = vadd.f32 %v9300, %v9610
      %v9612 = vpop.f32.mrf.mxu0
      %v9613 = vpop.f32.mrf.mxu0
      %v9614 = vadd.f32 %v9300, %v9613
      %v9615 = vpop.f32.mrf.mxu0
      %9616 = vmatprep.mubr.bf16.mxu0 %v9117
      %9617 = vmatmul.mubr.bf16.gmra.mxu0 %v8709
      %v9618 = vpop.f32.mrf.mxu0
      %v9619 = vadd.f32 %v9300, %v9618
      %v9620 = vpop.f32.mrf.mxu0
      %v9621 = vpop.f32.mrf.mxu0
      %v9622 = vadd.f32 %v9300, %v9621
      %v9623 = vpop.f32.mrf.mxu0
      %9624 = vmatprep.mubr.bf16.mxu0 %v9121
      %9625 = vmatmul.mubr.bf16.gmra.mxu0 %v8711
      %v9626 = vpop.f32.mrf.mxu0
      %v9627 = vadd.f32 %v9300, %v9626
      %v9628 = vpop.f32.mrf.mxu0
      %v9629 = vpop.f32.mrf.mxu0
      %v9630 = vadd.f32 %v9300, %v9629
      %v9631 = vpop.f32.mrf.mxu0
      %9632 = vmatprep.mubr.bf16.mxu0 %v9125
      %9633 = vmatmul.mubr.bf16.gmra.mxu0 %v8713
      %v9634 = vpop.f32.mrf.mxu0
      %v9635 = vadd.f32 %v9300, %v9634
      %v9636 = vpop.f32.mrf.mxu0
      %v9637 = vpop.f32.mrf.mxu0
      %v9638 = vadd.f32 %v9300, %v9637
      %v9639 = vpop.f32.mrf.mxu0
      %9640 = vmatprep.mubr.bf16.mxu0 %v9129
      %9641 = vmatmul.mubr.bf16.gmra.mxu0 %v8715
      %v9642 = vpop.f32.mrf.mxu0
      %v9643 = vadd.f32 %v9300, %v9642
      %v9644 = vpop.f32.mrf.mxu0
      %v9645 = vpop.f32.mrf.mxu0
      %v9646 = vadd.f32 %v9300, %v9645
      %v9647 = vpop.f32.mrf.mxu0
      %9648 = vmatprep.mubr.bf16.mxu0 %v9133
      %9649 = vmatmul.mubr.bf16.gmra.mxu0 %v8717
      %v9650 = vpop.f32.mrf.mxu0
      %v9651 = vadd.f32 %v9300, %v9650
      %v9652 = vpop.f32.mrf.mxu0
      %v9653 = vpop.f32.mrf.mxu0
      %v9654 = vadd.f32 %v9300, %v9653
      %v9655 = vpop.f32.mrf.mxu0
      %9656 = vmatprep.mubr.bf16.mxu0 %v9137
      %9657 = vmatmul.mubr.bf16.gmra.mxu0 %v8719
      %v9658 = vpop.f32.mrf.mxu0
      %v9659 = vadd.f32 %v9300, %v9658
      %v9660 = vpop.f32.mrf.mxu0
      %v9661 = vpop.f32.mrf.mxu0
      %v9662 = vadd.f32 %v9300, %v9661
      %v9663 = vpop.f32.mrf.mxu0
      %9664 = vmatprep.mubr.bf16.mxu0 %v9141
      %9665 = vmatmul.mubr.bf16.gmra.mxu0 %v8721
      %v9666 = vpop.f32.mrf.mxu0
      %v9667 = vadd.f32 %v9300, %v9666
      %v9668 = vpop.f32.mrf.mxu0
      %v9669 = vpop.f32.mrf.mxu0
      %v9670 = vadd.f32 %v9300, %v9669
      %v9671 = vpop.f32.mrf.mxu0
      %9672 = vmatprep.mubr.bf16.mxu0 %v9145
      %9673 = vmatmul.mubr.bf16.gmra.mxu0 %v8723
      %v9674 = vpop.f32.mrf.mxu0
      %v9675 = vadd.f32 %v9300, %v9674
      %v9676 = vpop.f32.mrf.mxu0
      %v9677 = vpop.f32.mrf.mxu0
      %v9678 = vadd.f32 %v9300, %v9677
      %v9679 = vpop.f32.mrf.mxu0
      %9680 = vmatprep.mubr.bf16.mxu0 %v9149
      %9681 = vmatmul.mubr.bf16.gmra.mxu0 %v8725
      %v9682 = vpop.f32.mrf.mxu0
      %v9683 = vadd.f32 %v9300, %v9682
      %v9684 = vpop.f32.mrf.mxu0
      %v9685 = vpop.f32.mrf.mxu0
      %v9686 = vadd.f32 %v9300, %v9685
      %v9687 = vpop.f32.mrf.mxu0
      %9688 = vmatprep.mubr.bf16.mxu0 %v9153
      %9689 = vmatmul.mubr.bf16.gmra.mxu0 %v8727
      %v9690 = vpop.f32.mrf.mxu0
      %v9691 = vadd.f32 %v9300, %v9690
      %v9692 = vpop.f32.mrf.mxu0
      %v9693 = vpop.f32.mrf.mxu0
      %v9694 = vadd.f32 %v9300, %v9693
      %v9695 = vpop.f32.mrf.mxu0
      %9696 = vmatprep.mubr.bf16.mxu0 %v9157
      %9697 = vmatmul.mubr.bf16.gmra.mxu0 %v8729
      %v9698 = vpop.f32.mrf.mxu0
      %v9699 = vadd.f32 %v9300, %v9698
      %v9700 = vpop.f32.mrf.mxu0
      %v9701 = vpop.f32.mrf.mxu0
      %v9702 = vadd.f32 %v9300, %v9701
      %v9703 = vpop.f32.mrf.mxu0
      %9704 = vmatprep.mubr.bf16.mxu0 %v9161
      %9705 = vmatmul.mubr.bf16.gmra.mxu0 %v8731
      %v9706 = vpop.f32.mrf.mxu0
      %v9707 = vadd.f32 %v9300, %v9706
      %v9708 = vpop.f32.mrf.mxu0
      %v9709 = vpop.f32.mrf.mxu0
      %v9710 = vpop.f32.mrf.mxu0
      %9711 = vdwg.mxu0
      %9712 = vmatprep.subr.bf16.mxu0 0
      %9713 = vmatpush1.bf16.msra.mxu0 %v9445
      %9714 = vmatprep.subr.bf16.mxu0 0
      %9715 = vmatpush1.bf16.msra.mxu0 %v9444
      %9716 = vmatprep.subr.bf16.mxu0 0
      %9717 = vmatpush1.bf16.msra.mxu0 %v9443
      %9718 = vmatprep.subr.bf16.mxu0 0
      %9719 = vmatpush1.bf16.msra.mxu0 %v9442
      %9720 = vmatprep.subr.bf16.mxu0 0
      %9721 = vmatpush1.bf16.msra.mxu0 %v9441
      %9722 = vmatprep.subr.bf16.mxu0 0
      %9723 = vmatpush1.bf16.msra.mxu0 %v9440
      %9724 = vmatprep.subr.bf16.mxu0 0
      %9725 = vmatpush1.bf16.msra.mxu0 %v9439
      %9726 = vmatprep.subr.bf16.mxu0 0
      %9727 = vmatpush1.bf16.msra.mxu0 %v9438
      %9728 = vmatprep.subr.bf16.mxu0 0
      %9729 = vmatpush2.bf16.msra.mxu0 0
      %9730 = vmatprep.subr.bf16.mxu0 0
      %9731 = vmatpush2.bf16.msra.mxu0 0
      %9732 = vmatprep.subr.bf16.mxu0 0
      %9733 = vmatpush2.bf16.msra.mxu0 %v9451
      %9734 = vmatprep.subr.bf16.mxu0 0
      %9735 = vmatpush2.bf16.msra.mxu0 %v9450
      %9736 = vmatprep.subr.bf16.mxu0 0
      %9737 = vmatpush2.bf16.msra.mxu0 %v9449
      %9738 = vmatprep.subr.bf16.mxu0 0
      %9739 = vmatpush2.bf16.msra.mxu0 %v9448
      %9740 = vmatprep.subr.bf16.mxu0 0
      %9741 = vmatpush2.bf16.msra.mxu0 %v9447
      %9742 = vmatprep.subr.bf16.mxu0 0
      %9743 = vmatpush2.bf16.msra.mxu0 %v9446
      %9744 = vmatprep.mubr.bf16.mxu0 %v9483
      %9745 = vmatmul.mubr.bf16.gmra.mxu0 %v9165
      %v9746 = vpop.f32.mrf.mxu0
      %v9747 = vadd.f32 %v9571, %v9746
      %v9748 = vpop.f32.mrf.mxu0
      %v9749 = vpop.f32.mrf.mxu0
      %v9750 = vadd.f32 %v9574, %v9749
      %v9751 = vpop.f32.mrf.mxu0
      %9752 = vmatprep.mubr.bf16.mxu0 %v9486
      %9753 = vmatmul.mubr.bf16.gmra.mxu0 %v9169
      %v9754 = vpop.f32.mrf.mxu0
      %v9755 = vadd.f32 %v9579, %v9754
      %v9756 = vpop.f32.mrf.mxu0
      %v9757 = vpop.f32.mrf.mxu0
      %v9758 = vadd.f32 %v9582, %v9757
      %v9759 = vpop.f32.mrf.mxu0
      %9760 = vmatprep.mubr.bf16.mxu0 %v9489
      %9761 = vmatmul.mubr.bf16.gmra.mxu0 %v9173
      %v9762 = vpop.f32.mrf.mxu0
      %v9763 = vadd.f32 %v9587, %v9762
      %v9764 = vpop.f32.mrf.mxu0
      %v9765 = vpop.f32.mrf.mxu0
      %v9766 = vadd.f32 %v9590, %v9765
      %v9767 = vpop.f32.mrf.mxu0
      %9768 = vmatprep.mubr.bf16.mxu0 %v9492
      %9769 = vmatmul.mubr.bf16.gmra.mxu0 %v9177
      %v9770 = vpop.f32.mrf.mxu0
      %v9771 = vadd.f32 %v9595, %v9770
      %v9772 = vpop.f32.mrf.mxu0
      %v9773 = vpop.f32.mrf.mxu0
      %v9774 = vadd.f32 %v9598, %v9773
      %v9775 = vpop.f32.mrf.mxu0
      %9776 = vmatprep.mubr.bf16.mxu0 %v9495
      %9777 = vmatmul.mubr.bf16.gmra.mxu0 %v9181
      %v9778 = vpop.f32.mrf.mxu0
      %v9779 = vadd.f32 %v9603, %v9778
      %v9780 = vpop.f32.mrf.mxu0
      %v9781 = vpop.f32.mrf.mxu0
      %v9782 = vadd.f32 %v9606, %v9781
      %v9783 = vpop.f32.mrf.mxu0
      %9784 = vmatprep.mubr.bf16.mxu0 %v9498
      %9785 = vmatmul.mubr.bf16.gmra.mxu0 %v9185
      %v9786 = vpop.f32.mrf.mxu0
      %v9787 = vadd.f32 %v9611, %v9786
      %v9788 = vpop.f32.mrf.mxu0
      %v9789 = vpop.f32.mrf.mxu0
      %v9790 = vadd.f32 %v9614, %v9789
      %v9791 = vpop.f32.mrf.mxu0
      %9792 = vmatprep.mubr.bf16.mxu0 %v9501
      %9793 = vmatmul.mubr.bf16.gmra.mxu0 %v9189
      %v9794 = vpop.f32.mrf.mxu0
      %v9795 = vadd.f32 %v9619, %v9794
      %v9796 = vpop.f32.mrf.mxu0
      %v9797 = vpop.f32.mrf.mxu0
      %v9798 = vadd.f32 %v9622, %v9797
      %v9799 = vpop.f32.mrf.mxu0
      %9800 = vmatprep.mubr.bf16.mxu0 %v9504
      %9801 = vmatmul.mubr.bf16.gmra.mxu0 %v9193
      %v9802 = vpop.f32.mrf.mxu0
      %v9803 = vadd.f32 %v9627, %v9802
      %v9804 = vpop.f32.mrf.mxu0
      %v9805 = vpop.f32.mrf.mxu0
      %v9806 = vadd.f32 %v9630, %v9805
      %v9807 = vpop.f32.mrf.mxu0
      %9808 = vmatprep.mubr.bf16.mxu0 %v9507
      %9809 = vmatmul.mubr.bf16.gmra.mxu0 %v9197
      %v9810 = vpop.f32.mrf.mxu0
      %v9811 = vadd.f32 %v9635, %v9810
      %v9812 = vpop.f32.mrf.mxu0
      %v9813 = vpop.f32.mrf.mxu0
      %v9814 = vadd.f32 %v9638, %v9813
      %v9815 = vpop.f32.mrf.mxu0
      %9816 = vmatprep.mubr.bf16.mxu0 %v9510
      %9817 = vmatmul.mubr.bf16.gmra.mxu0 %v9201
      %v9818 = vpop.f32.mrf.mxu0
      %v9819 = vadd.f32 %v9643, %v9818
      %v9820 = vpop.f32.mrf.mxu0
      %v9821 = vpop.f32.mrf.mxu0
      %v9822 = vadd.f32 %v9646, %v9821
      %v9823 = vpop.f32.mrf.mxu0
      %9824 = vmatprep.mubr.bf16.mxu0 %v9513
      %9825 = vmatmul.mubr.bf16.gmra.mxu0 %v9205
      %v9826 = vpop.f32.mrf.mxu0
      %v9827 = vadd.f32 %v9651, %v9826
      %v9828 = vpop.f32.mrf.mxu0
      %v9829 = vpop.f32.mrf.mxu0
      %v9830 = vadd.f32 %v9654, %v9829
      %v9831 = vpop.f32.mrf.mxu0
      %9832 = vmatprep.mubr.bf16.mxu0 %v9516
      %9833 = vmatmul.mubr.bf16.gmra.mxu0 %v9209
      %v9834 = vpop.f32.mrf.mxu0
      %v9835 = vadd.f32 %v9659, %v9834
      %v9836 = vpop.f32.mrf.mxu0
      %v9837 = vpop.f32.mrf.mxu0
      %v9838 = vadd.f32 %v9662, %v9837
      %v9839 = vpop.f32.mrf.mxu0
      %9840 = vmatprep.mubr.bf16.mxu0 %v9519
      %9841 = vmatmul.mubr.bf16.gmra.mxu0 %v9213
      %v9842 = vpop.f32.mrf.mxu0
      %v9843 = vadd.f32 %v9667, %v9842
      %v9844 = vpop.f32.mrf.mxu0
      %v9845 = vpop.f32.mrf.mxu0
      %v9846 = vadd.f32 %v9670, %v9845
      %v9847 = vpop.f32.mrf.mxu0
      %9848 = vmatprep.mubr.bf16.mxu0 %v9522
      %9849 = vmatmul.mubr.bf16.gmra.mxu0 %v9217
      %v9850 = vpop.f32.mrf.mxu0
      %v9851 = vadd.f32 %v9675, %v9850
      %v9852 = vpop.f32.mrf.mxu0
      %v9853 = vpop.f32.mrf.mxu0
      %v9854 = vadd.f32 %v9678, %v9853
      %v9855 = vpop.f32.mrf.mxu0
      %9856 = vmatprep.mubr.bf16.mxu0 %v9525
      %9857 = vmatmul.mubr.bf16.gmra.mxu0 %v9221
      %v9858 = vpop.f32.mrf.mxu0
      %v9859 = vadd.f32 %v9683, %v9858
      %v9860 = vpop.f32.mrf.mxu0
      %v9861 = vpop.f32.mrf.mxu0
      %v9862 = vadd.f32 %v9686, %v9861
      %v9863 = vpop.f32.mrf.mxu0
      %9864 = vmatprep.mubr.bf16.mxu0 %v9528
      %9865 = vmatmul.mubr.bf16.gmra.mxu0 %v9225
      %v9866 = vpop.f32.mrf.mxu0
      %v9867 = vadd.f32 %v9691, %v9866
      %v9868 = vpop.f32.mrf.mxu0
      %v9869 = vpop.f32.mrf.mxu0
      %v9870 = vadd.f32 %v9694, %v9869
      %v9871 = vpop.f32.mrf.mxu0
      %9872 = vmatprep.mubr.bf16.mxu0 %v9531
      %9873 = vmatmul.mubr.bf16.gmra.mxu0 %v9229
      %v9874 = vpop.f32.mrf.mxu0
      %v9875 = vadd.f32 %v9699, %v9874
      %v9876 = vpop.f32.mrf.mxu0
      %v9877 = vpop.f32.mrf.mxu0
      %v9878 = vadd.f32 %v9702, %v9877
      %v9879 = vpop.f32.mrf.mxu0
      %9880 = vmatprep.mubr.bf16.mxu0 %v9534
      %9881 = vmatmul.mubr.bf16.gmra.mxu0 %v9233
      %v9882 = vpop.f32.mrf.mxu0
      %v9883 = vadd.f32 %v9707, %v9882
      %v9884 = vpop.f32.mrf.mxu0
      %v9885 = vpop.f32.mrf.mxu0
      %v9886 = vpop.f32.mrf.mxu0
      %9887 = vdwg.mxu0
      %v9888 = vmax.f32 %v9747, 0.0
      %v9889 = vmax.f32 %v9750, 0.0
      %v9890 = vmax.f32 %v9755, 0.0
      %v9891 = vmax.f32 %v9758, 0.0
      %v9892 = vmax.f32 %v9763, 0.0
      %v9893 = vmax.f32 %v9766, 0.0
      %v9894 = vmax.f32 %v9771, 0.0
      %v9895 = vmax.f32 %v9774, 0.0
      %v9896 = vmax.f32 %v9779, 0.0
      %v9897 = vmax.f32 %v9782, 0.0
      %v9898 = vmax.f32 %v9787, 0.0
      %v9899 = vmax.f32 %v9790, 0.0
      %v9900 = vmax.f32 %v9795, 0.0
      %v9901 = vmax.f32 %v9798, 0.0
      %v9902 = vmax.f32 %v9803, 0.0
      %v9903 = vmax.f32 %v9806, 0.0
      %v9904 = vmax.f32 %v9811, 0.0
      %v9905 = vmax.f32 %v9814, 0.0
      %v9906 = vmax.f32 %v9819, 0.0
      %v9907 = vmax.f32 %v9822, 0.0
      %v9908 = vmax.f32 %v9827, 0.0
      %v9909 = vmax.f32 %v9830, 0.0
      %v9910 = vmax.f32 %v9835, 0.0
      %v9911 = vmax.f32 %v9838, 0.0
      %v9912 = vmax.f32 %v9843, 0.0
      %v9913 = vmax.f32 %v9846, 0.0
      %v9914 = vmax.f32 %v9851, 0.0
      %v9915 = vmax.f32 %v9854, 0.0
      %v9916 = vmax.f32 %v9859, 0.0
      %v9917 = vmax.f32 %v9862, 0.0
      %v9918 = vmax.f32 %v9867, 0.0
      %v9919 = vmax.f32 %v9870, 0.0
      %v9920 = vmax.f32 %v9875, 0.0
      %v9921 = vmax.f32 %v9878, 0.0
      %v9922 = vmax.f32 %v9883, 0.0
      %v9923 = vpack.c.bf16 %v9889, %v9888
      %v9924 = vpack.c.bf16 %v9891, %v9890
      %v9925 = vpack.c.bf16 %v9893, %v9892
      %v9926 = vpack.c.bf16 %v9895, %v9894
      %v9927 = vpack.c.bf16 %v9897, %v9896
      %v9928 = vpack.c.bf16 %v9899, %v9898
      %v9929 = vpack.c.bf16 %v9901, %v9900
      %v9930 = vpack.c.bf16 %v9903, %v9902
      %v9931 = vpack.c.bf16 %v9905, %v9904
      %v9932 = vpack.c.bf16 %v9907, %v9906
      %v9933 = vpack.c.bf16 %v9909, %v9908
      %v9934 = vpack.c.bf16 %v9911, %v9910
      %v9935 = vpack.c.bf16 %v9913, %v9912
      %v9936 = vpack.c.bf16 %v9915, %v9914
      %v9937 = vpack.c.bf16 %v9917, %v9916
      %v9938 = vpack.c.bf16 %v9919, %v9918
      %v9939 = vpack.c.bf16 %v9921, %v9920
      %v9940 = vpack.c.bf16 %v9922, %v9922
      %v9958 = vrot.slane %v9923, 2
      %v9959 = vrot.slane %v9924, 2
      %v9960 = vsel %vm1234, %v9958, %v9959
      %v9961 = vrot.slane %v9925, 2
      %v9962 = vsel %vm1234, %v9959, %v9961
      %v9963 = vrot.slane %v9926, 2
      %v9964 = vsel %vm1234, %v9961, %v9963
      %v9965 = vrot.slane %v9927, 2
      %v9966 = vsel %vm1234, %v9963, %v9965
      %v9967 = vrot.slane %v9928, 2
      %v9968 = vsel %vm1234, %v9965, %v9967
      %v9969 = vrot.slane %v9929, 2
      %v9970 = vsel %vm1234, %v9967, %v9969
      %v9971 = vrot.slane %v9930, 2
      %v9972 = vsel %vm1234, %v9969, %v9971
      %v9973 = vrot.slane %v9931, 2
      %v9974 = vsel %vm1234, %v9971, %v9973
      %v9975 = vrot.slane %v9932, 2
      %v9976 = vsel %vm1234, %v9973, %v9975
      %v9977 = vrot.slane %v9933, 2
      %v9978 = vsel %vm1234, %v9975, %v9977
      %v9979 = vrot.slane %v9934, 2
      %v9980 = vsel %vm1234, %v9977, %v9979
      %v9981 = vrot.slane %v9935, 2
      %v9982 = vsel %vm1234, %v9979, %v9981
      %v9983 = vrot.slane %v9936, 2
      %v9984 = vsel %vm1234, %v9981, %v9983
      %v9985 = vrot.slane %v9937, 2
      %v9986 = vsel %vm1234, %v9983, %v9985
      %v9987 = vrot.slane %v9938, 2
      %v9988 = vsel %vm1234, %v9985, %v9987
      %v9989 = vrot.slane %v9939, 2
      %v9990 = vsel %vm1234, %v9987, %v9989
      %9991 = vrot.lane.b32.xlu0 %v9960, 3
      %v9992 = vpop.permute.xlu0 %9991
      %9993 = vrot.lane.b32.xlu0 %v9962, 3
      %v9994 = vpop.permute.xlu0 %9993
      %9995 = vrot.lane.b32.xlu0 %v9964, 3
      %v9996 = vpop.permute.xlu0 %9995
      %9997 = vrot.lane.b32.xlu0 %v9966, 3
      %v9998 = vpop.permute.xlu0 %9997
      %9999 = vrot.lane.b32.xlu0 %v9968, 3
      %v10000 = vpop.permute.xlu0 %9999
      %10001 = vrot.lane.b32.xlu0 %v9970, 3
      %v10002 = vpop.permute.xlu0 %10001
      %10003 = vrot.lane.b32.xlu0 %v9972, 3
      %v10004 = vpop.permute.xlu0 %10003
      %10005 = vrot.lane.b32.xlu0 %v9974, 3
      %v10006 = vpop.permute.xlu0 %10005
      %10007 = vrot.lane.b32.xlu0 %v9976, 3
      %v10008 = vpop.permute.xlu0 %10007
      %10009 = vrot.lane.b32.xlu0 %v9978, 3
      %v10010 = vpop.permute.xlu0 %10009
      %10011 = vrot.lane.b32.xlu0 %v9980, 3
      %v10012 = vpop.permute.xlu0 %10011
      %10013 = vrot.lane.b32.xlu0 %v9982, 3
      %v10014 = vpop.permute.xlu0 %10013
      %10015 = vrot.lane.b32.xlu0 %v9984, 3
      %v10016 = vpop.permute.xlu0 %10015
      %10017 = vrot.lane.b32.xlu0 %v9986, 3
      %v10018 = vpop.permute.xlu0 %10017
      %10019 = vrot.lane.b32.xlu0 %v9988, 3
      %v10020 = vpop.permute.xlu0 %10019
      %10021 = vrot.lane.b32.xlu0 %v9990, 3
      %v10022 = vpop.permute.xlu0 %10021
      %10023 = vrot.lane.b32.xlu0 %v9989, 3
      %v10024 = vpop.permute.xlu0 %10023
      %v10026 = vrot.slane %v9923, 4
      %v10027 = vrot.slane %v9924, 4
      %v10028 = vsel %vm8930, %v10026, %v10027
      %v10029 = vrot.slane %v9925, 4
      %v10030 = vsel %vm8930, %v10027, %v10029
      %v10031 = vrot.slane %v9926, 4
      %v10032 = vsel %vm8930, %v10029, %v10031
      %v10033 = vrot.slane %v9927, 4
      %v10034 = vsel %vm8930, %v10031, %v10033
      %v10035 = vrot.slane %v9928, 4
      %v10036 = vsel %vm8930, %v10033, %v10035
      %v10037 = vrot.slane %v9929, 4
      %v10038 = vsel %vm8930, %v10035, %v10037
      %v10039 = vrot.slane %v9930, 4
      %v10040 = vsel %vm8930, %v10037, %v10039
      %v10041 = vrot.slane %v9931, 4
      %v10042 = vsel %vm8930, %v10039, %v10041
      %v10043 = vrot.slane %v9932, 4
      %v10044 = vsel %vm8930, %v10041, %v10043
      %v10045 = vrot.slane %v9933, 4
      %v10046 = vsel %vm8930, %v10043, %v10045
      %v10047 = vrot.slane %v9934, 4
      %v10048 = vsel %vm8930, %v10045, %v10047
      %v10049 = vrot.slane %v9935, 4
      %v10050 = vsel %vm8930, %v10047, %v10049
      %v10051 = vrot.slane %v9936, 4
      %v10052 = vsel %vm8930, %v10049, %v10051
      %v10053 = vrot.slane %v9937, 4
      %v10054 = vsel %vm8930, %v10051, %v10053
      %v10055 = vrot.slane %v9938, 4
      %v10056 = vsel %vm8930, %v10053, %v10055
      %v10057 = vrot.slane %v9939, 4
      %v10058 = vsel %vm8930, %v10055, %v10057
      %v10059 = vrot.slane %v9940, 4
      %v10060 = vsel %vm8930, %v10057, %v10059
      %10061 = vrot.lane.b32.xlu0 %v10028, 6
      %v10062 = vpop.permute.xlu0 %10061
      %10063 = vrot.lane.b32.xlu0 %v10030, 6
      %v10064 = vpop.permute.xlu0 %10063
      %10065 = vrot.lane.b32.xlu0 %v10032, 6
      %v10066 = vpop.permute.xlu0 %10065
      %10067 = vrot.lane.b32.xlu0 %v10034, 6
      %v10068 = vpop.permute.xlu0 %10067
      %10069 = vrot.lane.b32.xlu0 %v10036, 6
      %v10070 = vpop.permute.xlu0 %10069
      %10071 = vrot.lane.b32.xlu0 %v10038, 6
      %v10072 = vpop.permute.xlu0 %10071
      %10073 = vrot.lane.b32.xlu0 %v10040, 6
      %v10074 = vpop.permute.xlu0 %10073
      %10075 = vrot.lane.b32.xlu0 %v10042, 6
      %v10076 = vpop.permute.xlu0 %10075
      %10077 = vrot.lane.b32.xlu0 %v10044, 6
      %v10078 = vpop.permute.xlu0 %10077
      %10079 = vrot.lane.b32.xlu0 %v10046, 6
      %v10080 = vpop.permute.xlu0 %10079
      %10081 = vrot.lane.b32.xlu0 %v10048, 6
      %v10082 = vpop.permute.xlu0 %10081
      %10083 = vrot.lane.b32.xlu0 %v10050, 6
      %v10084 = vpop.permute.xlu0 %10083
      %10085 = vrot.lane.b32.xlu0 %v10052, 6
      %v10086 = vpop.permute.xlu0 %10085
      %10087 = vrot.lane.b32.xlu0 %v10054, 6
      %v10088 = vpop.permute.xlu0 %10087
      %10089 = vrot.lane.b32.xlu0 %v10056, 6
      %v10090 = vpop.permute.xlu0 %10089
      %10091 = vrot.lane.b32.xlu0 %v10058, 6
      %v10092 = vpop.permute.xlu0 %10091
      %10093 = vrot.lane.b32.xlu0 %v10060, 6
      %v10094 = vpop.permute.xlu0 %10093
      %vm10095 = vcmask 23552
      %v10098 = vsel %vm10095, %v9923, %v9992
      %v10101 = vsel %vm10095, %v9924, %v9994
      %v10104 = vsel %vm10095, %v9925, %v9996
      %v10107 = vsel %vm10095, %v9926, %v9998
      %v10110 = vsel %vm10095, %v9927, %v10000
      %v10113 = vsel %vm10095, %v9928, %v10002
      %v10116 = vsel %vm10095, %v9929, %v10004
      %v10119 = vsel %vm10095, %v9930, %v10006
      %v10122 = vsel %vm10095, %v9931, %v10008
      %v10125 = vsel %vm10095, %v9932, %v10010
      %v10128 = vsel %vm10095, %v9933, %v10012
      %v10131 = vsel %vm10095, %v9934, %v10014
      %v10134 = vsel %vm10095, %v9935, %v10016
      %v10137 = vsel %vm10095, %v9936, %v10018
      %v10140 = vsel %vm10095, %v9937, %v10020
      %v10143 = vsel %vm10095, %v9938, %v10022
      %v10146 = vsel %vm10095, %v9939, %v10024
      %vm10147 = vcmask 48128
      %v10149 = vsel %vm10147, %v10098, %v10062
      %v10151 = vsel %vm10147, %v10101, %v10064
      %v10153 = vsel %vm10147, %v10104, %v10066
      %v10155 = vsel %vm10147, %v10107, %v10068
      %v10157 = vsel %vm10147, %v10110, %v10070
      %v10159 = vsel %vm10147, %v10113, %v10072
      %v10161 = vsel %vm10147, %v10116, %v10074
      %v10163 = vsel %vm10147, %v10119, %v10076
      %v10165 = vsel %vm10147, %v10122, %v10078
      %v10167 = vsel %vm10147, %v10125, %v10080
      %v10169 = vsel %vm10147, %v10128, %v10082
      %v10171 = vsel %vm10147, %v10131, %v10084
      %v10173 = vsel %vm10147, %v10134, %v10086
      %v10175 = vsel %vm10147, %v10137, %v10088
      %v10177 = vsel %vm10147, %v10140, %v10090
      %v10179 = vsel %vm10147, %v10143, %v10092
      %v10181 = vsel %vm10147, %v10146, %v10094
      %v10182 = vld [vmem:[%s15] sm:$0xf]
      %v10183 = vld [vmem:[%s15 + $0x4] sm:$0x1]
      %v10184 = vld [vmem:[%s16] sm:$0x1]
      %v10186 = vlaneseq
      %v10187 = vshrl.u32 %v10186, 7
      %v10188 = vsub.s32 0, %v10187
      %v10189 = vrot.slane %v10184, %v10188
      %v10193 = vunpack.c.l.b16 %v10182
      %v10194 = vunpack.c.l.b16 %v10183
      %v10195 = vpack.c.b16 %v10194, %v10193
      %vm10196 = vcmask 72704
      %v10197 = vsel %vm10196, %v10149, 0
      %v10199 = vsel %vm10196, %v10151, 0
      %v10201 = vsel %vm10196, %v10153, 0
      %v10203 = vsel %vm10196, %v10155, 0
      %v10205 = vsel %vm10196, %v10157, 0
      %v10207 = vsel %vm10196, %v10159, 0
      %v10209 = vsel %vm10196, %v10161, 0
      %v10211 = vsel %vm10196, %v10163, 0
      %v10213 = vsel %vm10196, %v10165, 0
      %v10215 = vsel %vm10196, %v10167, 0
      %v10217 = vsel %vm10196, %v10169, 0
      %v10219 = vsel %vm10196, %v10171, 0
      %v10221 = vsel %vm10196, %v10173, 0
      %v10223 = vsel %vm10196, %v10175, 0
      %v10225 = vsel %vm10196, %v10177, 0
      %v10227 = vsel %vm10196, %v10179, 0
      %v10229 = vsel %vm10196, %v10181, 0
      %vm10231 = vcmask 1043456
      %v10232 = vsel %vm10231, 4294967295, 65535
      %v10233 = vsel %vm1953, %v10232, 0
      %v10235 = vand.u32 %v10195, %v10233
      %10237 = vmatprep.subr.bf16.mxu0 0
      %10238 = vmatpush1.bf16.msra.mxu0 0
      %10239 = vmatprep.subr.bf16.mxu0 0
      %10240 = vmatpush1.bf16.msra.mxu0 0
      %10241 = vmatprep.subr.bf16.mxu0 0
      %10242 = vmatpush1.bf16.msra.mxu0 0
      %10243 = vmatprep.subr.bf16.mxu0 0
      %10244 = vmatpush1.bf16.msra.mxu0 0
      %10245 = vmatprep.subr.bf16.mxu0 0
      %10246 = vmatpush1.bf16.msra.mxu0 0
      %10247 = vmatprep.subr.bf16.mxu0 0
      %10248 = vmatpush1.bf16.msra.mxu0 0
      %10249 = vmatprep.subr.bf16.mxu0 0
      %10250 = vmatpush1.bf16.msra.mxu0 0
      %10251 = vmatprep.subr.bf16.mxu0 0
      %10252 = vmatpush1.bf16.msra.mxu0 %v10235
      %10253 = vmatprep.subr.bf16.mxu0 0
      %10254 = vmatpush2.bf16.msra.mxu0 0
      %10255 = vmatprep.subr.bf16.mxu0 0
      %10256 = vmatpush2.bf16.msra.mxu0 0
      %10257 = vmatprep.subr.bf16.mxu0 0
      %10258 = vmatpush2.bf16.msra.mxu0 0
      %10259 = vmatprep.subr.bf16.mxu0 0
      %10260 = vmatpush2.bf16.msra.mxu0 0
      %10261 = vmatprep.subr.bf16.mxu0 0
      %10262 = vmatpush2.bf16.msra.mxu0 0
      %10263 = vmatprep.subr.bf16.mxu0 0
      %10264 = vmatpush2.bf16.msra.mxu0 0
      %10265 = vmatprep.subr.bf16.mxu0 0
      %10266 = vmatpush2.bf16.msra.mxu0 0
      %10267 = vmatprep.subr.bf16.mxu0 0
      %10268 = vmatpush2.bf16.msra.mxu0 0
      %10269 = vmatprep.mubr.bf16.mxu0 0
      %10270 = vmatmul.mubr.bf16.gmra.mxu0 %v10197
      %v10271 = vpop.f32.mrf.mxu0
      %v10272 = vadd.f32 %v10189, %v10271
      %v10273 = vpop.f32.mrf.mxu0
      %v10274 = vpop.f32.mrf.mxu0
      %v10275 = vadd.f32 %v10189, %v10274
      %v10276 = vpop.f32.mrf.mxu0
      %10277 = vmatprep.mubr.bf16.mxu0 0
      %10278 = vmatmul.mubr.bf16.gmra.mxu0 %v10199
      %v10279 = vpop.f32.mrf.mxu0
      %v10280 = vadd.f32 %v10189, %v10279
      %v10281 = vpop.f32.mrf.mxu0
      %v10282 = vpop.f32.mrf.mxu0
      %v10283 = vadd.f32 %v10189, %v10282
      %v10284 = vpop.f32.mrf.mxu0
      %10285 = vmatprep.mubr.bf16.mxu0 0
      %10286 = vmatmul.mubr.bf16.gmra.mxu0 %v10201
      %v10287 = vpop.f32.mrf.mxu0
      %v10288 = vadd.f32 %v10189, %v10287
      %v10289 = vpop.f32.mrf.mxu0
      %v10290 = vpop.f32.mrf.mxu0
      %v10291 = vadd.f32 %v10189, %v10290
      %v10292 = vpop.f32.mrf.mxu0
      %10293 = vmatprep.mubr.bf16.mxu0 0
      %10294 = vmatmul.mubr.bf16.gmra.mxu0 %v10203
      %v10295 = vpop.f32.mrf.mxu0
      %v10296 = vadd.f32 %v10189, %v10295
      %v10297 = vpop.f32.mrf.mxu0
      %v10298 = vpop.f32.mrf.mxu0
      %v10299 = vadd.f32 %v10189, %v10298
      %v10300 = vpop.f32.mrf.mxu0
      %10301 = vmatprep.mubr.bf16.mxu0 0
      %10302 = vmatmul.mubr.bf16.gmra.mxu0 %v10205
      %v10303 = vpop.f32.mrf.mxu0
      %v10304 = vadd.f32 %v10189, %v10303
      %v10305 = vpop.f32.mrf.mxu0
      %v10306 = vpop.f32.mrf.mxu0
      %v10307 = vadd.f32 %v10189, %v10306
      %v10308 = vpop.f32.mrf.mxu0
      %10309 = vmatprep.mubr.bf16.mxu0 0
      %10310 = vmatmul.mubr.bf16.gmra.mxu0 %v10207
      %v10311 = vpop.f32.mrf.mxu0
      %v10312 = vadd.f32 %v10189, %v10311
      %v10313 = vpop.f32.mrf.mxu0
      %v10314 = vpop.f32.mrf.mxu0
      %v10315 = vadd.f32 %v10189, %v10314
      %v10316 = vpop.f32.mrf.mxu0
      %10317 = vmatprep.mubr.bf16.mxu0 0
      %10318 = vmatmul.mubr.bf16.gmra.mxu0 %v10209
      %v10319 = vpop.f32.mrf.mxu0
      %v10320 = vadd.f32 %v10189, %v10319
      %v10321 = vpop.f32.mrf.mxu0
      %v10322 = vpop.f32.mrf.mxu0
      %v10323 = vadd.f32 %v10189, %v10322
      %v10324 = vpop.f32.mrf.mxu0
      %10325 = vmatprep.mubr.bf16.mxu0 0
      %10326 = vmatmul.mubr.bf16.gmra.mxu0 %v10211
      %v10327 = vpop.f32.mrf.mxu0
      %v10328 = vadd.f32 %v10189, %v10327
      %v10329 = vpop.f32.mrf.mxu0
      %v10330 = vpop.f32.mrf.mxu0
      %v10331 = vadd.f32 %v10189, %v10330
      %v10332 = vpop.f32.mrf.mxu0
      %10333 = vmatprep.mubr.bf16.mxu0 0
      %10334 = vmatmul.mubr.bf16.gmra.mxu0 %v10213
      %v10335 = vpop.f32.mrf.mxu0
      %v10336 = vadd.f32 %v10189, %v10335
      %v10337 = vpop.f32.mrf.mxu0
      %v10338 = vpop.f32.mrf.mxu0
      %v10339 = vadd.f32 %v10189, %v10338
      %v10340 = vpop.f32.mrf.mxu0
      %10341 = vmatprep.mubr.bf16.mxu0 0
      %10342 = vmatmul.mubr.bf16.gmra.mxu0 %v10215
      %v10343 = vpop.f32.mrf.mxu0
      %v10344 = vadd.f32 %v10189, %v10343
      %v10345 = vpop.f32.mrf.mxu0
      %v10346 = vpop.f32.mrf.mxu0
      %v10347 = vadd.f32 %v10189, %v10346
      %v10348 = vpop.f32.mrf.mxu0
      %10349 = vmatprep.mubr.bf16.mxu0 0
      %10350 = vmatmul.mubr.bf16.gmra.mxu0 %v10217
      %v10351 = vpop.f32.mrf.mxu0
      %v10352 = vadd.f32 %v10189, %v10351
      %v10353 = vpop.f32.mrf.mxu0
      %v10354 = vpop.f32.mrf.mxu0
      %v10355 = vadd.f32 %v10189, %v10354
      %v10356 = vpop.f32.mrf.mxu0
      %10357 = vmatprep.mubr.bf16.mxu0 0
      %10358 = vmatmul.mubr.bf16.gmra.mxu0 %v10219
      %v10359 = vpop.f32.mrf.mxu0
      %v10360 = vadd.f32 %v10189, %v10359
      %v10361 = vpop.f32.mrf.mxu0
      %v10362 = vpop.f32.mrf.mxu0
      %v10363 = vadd.f32 %v10189, %v10362
      %v10364 = vpop.f32.mrf.mxu0
      %10365 = vmatprep.mubr.bf16.mxu0 0
      %10366 = vmatmul.mubr.bf16.gmra.mxu0 %v10221
      %v10367 = vpop.f32.mrf.mxu0
      %v10368 = vadd.f32 %v10189, %v10367
      %v10369 = vpop.f32.mrf.mxu0
      %v10370 = vpop.f32.mrf.mxu0
      %v10371 = vadd.f32 %v10189, %v10370
      %v10372 = vpop.f32.mrf.mxu0
      %10373 = vmatprep.mubr.bf16.mxu0 0
      %10374 = vmatmul.mubr.bf16.gmra.mxu0 %v10223
      %v10375 = vpop.f32.mrf.mxu0
      %v10376 = vadd.f32 %v10189, %v10375
      %v10377 = vpop.f32.mrf.mxu0
      %v10378 = vpop.f32.mrf.mxu0
      %v10379 = vadd.f32 %v10189, %v10378
      %v10380 = vpop.f32.mrf.mxu0
      %10381 = vmatprep.mubr.bf16.mxu0 0
      %10382 = vmatmul.mubr.bf16.gmra.mxu0 %v10225
      %v10383 = vpop.f32.mrf.mxu0
      %v10384 = vadd.f32 %v10189, %v10383
      %v10385 = vpop.f32.mrf.mxu0
      %v10386 = vpop.f32.mrf.mxu0
      %v10387 = vadd.f32 %v10189, %v10386
      %v10388 = vpop.f32.mrf.mxu0
      %10389 = vmatprep.mubr.bf16.mxu0 0
      %10390 = vmatmul.mubr.bf16.gmra.mxu0 %v10227
      %v10391 = vpop.f32.mrf.mxu0
      %v10392 = vadd.f32 %v10189, %v10391
      %v10393 = vpop.f32.mrf.mxu0
      %v10394 = vpop.f32.mrf.mxu0
      %v10395 = vadd.f32 %v10189, %v10394
      %v10396 = vpop.f32.mrf.mxu0
      %10397 = vmatprep.mubr.bf16.mxu0 0
      %10398 = vmatmul.mubr.bf16.gmra.mxu0 %v10229
      %v10399 = vpop.f32.mrf.mxu0
      %v10400 = vadd.f32 %v10189, %v10399
      %v10401 = vpop.f32.mrf.mxu0
      %v10402 = vpop.f32.mrf.mxu0
      %v10403 = vadd.f32 %v10189, %v10402
      %v10404 = vpop.f32.mrf.mxu0
      %10405 = vdwg.mxu0
      %v10406 = vmax.f32 %v10272, 0.0
      %v10407 = vmax.f32 %v10275, 0.0
      %v10408 = vmax.f32 %v10280, 0.0
      %v10409 = vmax.f32 %v10283, 0.0
      %v10410 = vmax.f32 %v10288, 0.0
      %v10411 = vmax.f32 %v10291, 0.0
      %v10412 = vmax.f32 %v10296, 0.0
      %v10413 = vmax.f32 %v10299, 0.0
      %v10414 = vmax.f32 %v10304, 0.0
      %v10415 = vmax.f32 %v10307, 0.0
      %v10416 = vmax.f32 %v10312, 0.0
      %v10417 = vmax.f32 %v10315, 0.0
      %v10418 = vmax.f32 %v10320, 0.0
      %v10419 = vmax.f32 %v10323, 0.0
      %v10420 = vmax.f32 %v10328, 0.0
      %v10421 = vmax.f32 %v10331, 0.0
      %v10422 = vmax.f32 %v10336, 0.0
      %v10423 = vmax.f32 %v10339, 0.0
      %v10424 = vmax.f32 %v10344, 0.0
      %v10425 = vmax.f32 %v10347, 0.0
      %v10426 = vmax.f32 %v10352, 0.0
      %v10427 = vmax.f32 %v10355, 0.0
      %v10428 = vmax.f32 %v10360, 0.0
      %v10429 = vmax.f32 %v10363, 0.0
      %v10430 = vmax.f32 %v10368, 0.0
      %v10431 = vmax.f32 %v10371, 0.0
      %v10432 = vmax.f32 %v10376, 0.0
      %v10433 = vmax.f32 %v10379, 0.0
      %v10434 = vmax.f32 %v10384, 0.0
      %v10435 = vmax.f32 %v10387, 0.0
      %v10436 = vmax.f32 %v10392, 0.0
      %v10437 = vmax.f32 %v10395, 0.0
      %v10438 = vmax.f32 %v10400, 0.0
      %v10439 = vmax.f32 %v10403, 0.0
      %v10440 = vpack.c.bf16 %v10407, %v10406
      %v10441 = vpack.c.bf16 %v10409, %v10408
      %v10442 = vpack.c.bf16 %v10411, %v10410
      %v10443 = vpack.c.bf16 %v10413, %v10412
      %v10444 = vpack.c.bf16 %v10415, %v10414
      %v10445 = vpack.c.bf16 %v10417, %v10416
      %v10446 = vpack.c.bf16 %v10419, %v10418
      %v10447 = vpack.c.bf16 %v10421, %v10420
      %v10448 = vpack.c.bf16 %v10423, %v10422
      %v10449 = vpack.c.bf16 %v10425, %v10424
      %v10450 = vpack.c.bf16 %v10427, %v10426
      %v10451 = vpack.c.bf16 %v10429, %v10428
      %v10452 = vpack.c.bf16 %v10431, %v10430
      %v10453 = vpack.c.bf16 %v10433, %v10432
      %v10454 = vpack.c.bf16 %v10435, %v10434
      %v10455 = vpack.c.bf16 %v10437, %v10436
      %v10456 = vpack.c.bf16 %v10439, %v10438
      %v10457 = vld [vmem:[%s17] sm:$0xff]
      %v10458 = vld [vmem:[%s17 + $0x8] sm:$0xf]
      %v10461 = vunpack.c.l.b16 %v10457
      %v10462 = vunpack.c.h.b16 %v10457
      %v10463 = vunpack.c.l.b16 %v10458
      %v10464 = vpack.c.b16 %v10461, %v10461
      %v10465 = vpack.c.b16 %v10462, %v10462
      %v10466 = vpack.c.b16 %v10463, %v10463
      %vm10469 = vcmask 97280
      %v10471 = vsel %vm10469, %v10466, 0
      %vm10473 = vcmask 1045504
      %v10475 = vsel %vm10473, %v10456, 0
      %10477 = vmatprep.subr.bf16.mxu0 0
      %10478 = vmatpush1.bf16.msra.mxu0 %v10447
      %10479 = vmatprep.subr.bf16.mxu0 0
      %10480 = vmatpush1.bf16.msra.mxu0 %v10446
      %10481 = vmatprep.subr.bf16.mxu0 0
      %10482 = vmatpush1.bf16.msra.mxu0 %v10445
      %10483 = vmatprep.subr.bf16.mxu0 0
      %10484 = vmatpush1.bf16.msra.mxu0 %v10444
      %10485 = vmatprep.subr.bf16.mxu0 0
      %10486 = vmatpush1.bf16.msra.mxu0 %v10443
      %10487 = vmatprep.subr.bf16.mxu0 0
      %10488 = vmatpush1.bf16.msra.mxu0 %v10442
      %10489 = vmatprep.subr.bf16.mxu0 0
      %10490 = vmatpush1.bf16.msra.mxu0 %v10441
      %10491 = vmatprep.subr.bf16.mxu0 0
      %10492 = vmatpush1.bf16.msra.mxu0 %v10440
      %10493 = vmatprep.subr.bf16.mxu0 0
      %10494 = vmatpush2.bf16.msra.mxu0 %v10455
      %10495 = vmatprep.subr.bf16.mxu0 0
      %10496 = vmatpush2.bf16.msra.mxu0 %v10454
      %10497 = vmatprep.subr.bf16.mxu0 0
      %10498 = vmatpush2.bf16.msra.mxu0 %v10453
      %10499 = vmatprep.subr.bf16.mxu0 0
      %10500 = vmatpush2.bf16.msra.mxu0 %v10452
      %10501 = vmatprep.subr.bf16.mxu0 0
      %10502 = vmatpush2.bf16.msra.mxu0 %v10451
      %10503 = vmatprep.subr.bf16.mxu0 0
      %10504 = vmatpush2.bf16.msra.mxu0 %v10450
      %10505 = vmatprep.subr.bf16.mxu0 0
      %10506 = vmatpush2.bf16.msra.mxu0 %v10449
      %10507 = vmatprep.subr.bf16.mxu0 0
      %10508 = vmatpush2.bf16.msra.mxu0 %v10448
      %10509 = vmatprep.mubr.bf16.mxu0 %v10465
      %10510 = vmatmul.mubr.bf16.gmra.mxu0 %v10464
      %v10511 = vpop.f32.mrf.mxu0
      %v10512 = vadd.f32 0.0, %v10511
      %v10513 = vpop.f32.mrf.mxu0
      %v10514 = vpop.f32.mrf.mxu0
      %v10515 = vpop.f32.mrf.mxu0
      %10516 = vdwg.mxu0
      %10517 = vmatprep.subr.bf16.mxu0 0
      %10518 = vmatpush1.bf16.msra.mxu0 0
      %10519 = vmatprep.subr.bf16.mxu0 0
      %10520 = vmatpush1.bf16.msra.mxu0 0
      %10521 = vmatprep.subr.bf16.mxu0 0
      %10522 = vmatpush1.bf16.msra.mxu0 0
      %10523 = vmatprep.subr.bf16.mxu0 0
      %10524 = vmatpush1.bf16.msra.mxu0 0
      %10525 = vmatprep.subr.bf16.mxu0 0
      %10526 = vmatpush1.bf16.msra.mxu0 0
      %10527 = vmatprep.subr.bf16.mxu0 0
      %10528 = vmatpush1.bf16.msra.mxu0 0
      %10529 = vmatprep.subr.bf16.mxu0 0
      %10530 = vmatpush1.bf16.msra.mxu0 0
      %10531 = vmatprep.subr.bf16.mxu0 0
      %10532 = vmatpush1.bf16.msra.mxu0 %v10475
      %10533 = vmatprep.subr.bf16.mxu0 0
      %10534 = vmatpush2.bf16.msra.mxu0 0
      %10535 = vmatprep.subr.bf16.mxu0 0
      %10536 = vmatpush2.bf16.msra.mxu0 0
      %10537 = vmatprep.subr.bf16.mxu0 0
      %10538 = vmatpush2.bf16.msra.mxu0 0
      %10539 = vmatprep.subr.bf16.mxu0 0
      %10540 = vmatpush2.bf16.msra.mxu0 0
      %10541 = vmatprep.subr.bf16.mxu0 0
      %10542 = vmatpush2.bf16.msra.mxu0 0
      %10543 = vmatprep.subr.bf16.mxu0 0
      %10544 = vmatpush2.bf16.msra.mxu0 0
      %10545 = vmatprep.subr.bf16.mxu0 0
      %10546 = vmatpush2.bf16.msra.mxu0 0
      %10547 = vmatprep.subr.bf16.mxu0 0
      %10548 = vmatpush2.bf16.msra.mxu0 0
      %10549 = vmatprep.mubr.bf16.mxu0 0
      %10550 = vmatmul.mubr.bf16.gmra.mxu0 %v10471
      %v10551 = vpop.f32.mrf.mxu0
      %v10552 = vadd.f32 %v10512, %v10551
      %v10553 = vpop.f32.mrf.mxu0
      %v10554 = vpop.f32.mrf.mxu0
      %v10555 = vpop.f32.mrf.mxu0
      %10556 = vdwg.mxu0
      %vm10557 = vcmask 56320
      %10558 = vst.msk [vmem:[%s719] sm:$0xff] %vm10557, %v10552
      %v10559 = vpack.c.bf16 %v10552, %v10552
      %v10560 = vld [vmem:[%s18] sm:$0xf]
      %v10561 = vld [vmem:[%s19] sm:$0x1]
      %v10563 = vlaneseq
      %v10564 = vshrl.u32 %v10563, 7
      %v10565 = vsub.s32 0, %v10564
      %v10566 = vrot.slane %v10561, %v10565
      %v10569 = vsel %vm10557, %v10559, 0
      %vm10571 = vcmask 1042432
      %v10572 = vsel %vm10571, 4294967295, 65535
      %v10573 = vsel %vm10231, %v10572, 0
      %v10575 = vand.u32 %v10560, %v10573
      %10577 = vmatprep.subr.bf16.mxu0 0
      %10578 = vmatpush1.bf16.msra.mxu0 0
      %10579 = vmatprep.subr.bf16.mxu0 0
      %10580 = vmatpush1.bf16.msra.mxu0 0
      %10581 = vmatprep.subr.bf16.mxu0 0
      %10582 = vmatpush1.bf16.msra.mxu0 0
      %10583 = vmatprep.subr.bf16.mxu0 0
      %10584 = vmatpush1.bf16.msra.mxu0 0
      %10585 = vmatprep.subr.bf16.mxu0 0
      %10586 = vmatpush1.bf16.msra.mxu0 0
      %10587 = vmatprep.subr.bf16.mxu0 0
      %10588 = vmatpush1.bf16.msra.mxu0 0
      %10589 = vmatprep.subr.bf16.mxu0 0
      %10590 = vmatpush1.bf16.msra.mxu0 0
      %10591 = vmatprep.subr.bf16.mxu0 0
      %10592 = vmatpush1.bf16.msra.mxu0 %v10575
      %10593 = vmatprep.subr.bf16.mxu0 0
      %10594 = vmatpush2.bf16.msra.mxu0 0
      %10595 = vmatprep.subr.bf16.mxu0 0
      %10596 = vmatpush2.bf16.msra.mxu0 0
      %10597 = vmatprep.subr.bf16.mxu0 0
      %10598 = vmatpush2.bf16.msra.mxu0 0
      %10599 = vmatprep.subr.bf16.mxu0 0
      %10600 = vmatpush2.bf16.msra.mxu0 0
      %10601 = vmatprep.subr.bf16.mxu0 0
      %10602 = vmatpush2.bf16.msra.mxu0 0
      %10603 = vmatprep.subr.bf16.mxu0 0
      %10604 = vmatpush2.bf16.msra.mxu0 0
      %10605 = vmatprep.subr.bf16.mxu0 0
      %10606 = vmatpush2.bf16.msra.mxu0 0
      %10607 = vmatprep.subr.bf16.mxu0 0
      %10608 = vmatpush2.bf16.msra.mxu0 0
      %10609 = vmatprep.mubr.bf16.mxu0 0
      %10610 = vmatmul.mubr.bf16.gmra.mxu0 %v10569
      %v10611 = vpop.f32.mrf.mxu0
      %v10612 = vadd.f32 %v10566, %v10611
      %v10613 = vpop.f32.mrf.mxu0
      %v10614 = vpop.f32.mrf.mxu0
      %v10615 = vpop.f32.mrf.mxu0
      %10616 = vdwg.mxu0
      %v10617 = vmax.f32 %v10612, 0.0
      %v10618 = vpack.c.bf16 %v10617, %v10617
      %v10619 = vld [vmem:[%s20] sm:$0xf]
      %v10620 = vld [vmem:[%s21] sm:$0x1]
      %v10622 = vlaneseq
      %v10623 = vshrl.u32 %v10622, 7
      %v10624 = vsub.s32 0, %v10623
      %v10625 = vrot.slane %v10620, %v10624
      %v10628 = vsel %vm10557, %v10618, 0
      %v10631 = vand.u32 %v10619, %v10573
      %10633 = vmatprep.subr.bf16.mxu0 0
      %10634 = vmatpush1.bf16.msra.mxu0 0
      %10635 = vmatprep.subr.bf16.mxu0 0
      %10636 = vmatpush1.bf16.msra.mxu0 0
      %10637 = vmatprep.subr.bf16.mxu0 0
      %10638 = vmatpush1.bf16.msra.mxu0 0
      %10639 = vmatprep.subr.bf16.mxu0 0
      %10640 = vmatpush1.bf16.msra.mxu0 0
      %10641 = vmatprep.subr.bf16.mxu0 0
      %10642 = vmatpush1.bf16.msra.mxu0 0
      %10643 = vmatprep.subr.bf16.mxu0 0
      %10644 = vmatpush1.bf16.msra.mxu0 0
      %10645 = vmatprep.subr.bf16.mxu0 0
      %10646 = vmatpush1.bf16.msra.mxu0 0
      %10647 = vmatprep.subr.bf16.mxu0 0
      %10648 = vmatpush1.bf16.msra.mxu0 %v10631
      %10649 = vmatprep.subr.bf16.mxu0 0
      %10650 = vmatpush2.bf16.msra.mxu0 0
      %10651 = vmatprep.subr.bf16.mxu0 0
      %10652 = vmatpush2.bf16.msra.mxu0 0
      %10653 = vmatprep.subr.bf16.mxu0 0
      %10654 = vmatpush2.bf16.msra.mxu0 0
      %10655 = vmatprep.subr.bf16.mxu0 0
      %10656 = vmatpush2.bf16.msra.mxu0 0
      %10657 = vmatprep.subr.bf16.mxu0 0
      %10658 = vmatpush2.bf16.msra.mxu0 0
      %10659 = vmatprep.subr.bf16.mxu0 0
      %10660 = vmatpush2.bf16.msra.mxu0 0
      %10661 = vmatprep.subr.bf16.mxu0 0
      %10662 = vmatpush2.bf16.msra.mxu0 0
      %10663 = vmatprep.subr.bf16.mxu0 0
      %10664 = vmatpush2.bf16.msra.mxu0 0
      %10665 = vmatprep.mubr.bf16.mxu0 0
      %10666 = vmatmul.mubr.bf16.gmra.mxu0 %v10628
      %v10667 = vpop.f32.mrf.mxu0
      %v10668 = vadd.f32 %v10625, %v10667
      %v10669 = vpop.f32.mrf.mxu0
      %v10670 = vpop.f32.mrf.mxu0
      %v10671 = vpop.f32.mrf.mxu0
      %10672 = vdwg.mxu0
      %10673 = vmax.xlane.f32.xlu0 %v10668
      %v10674 = vpop.xlane.xlu0 %10673
      %v10675 = vsub.f32 %v10668, %v10674
      %v10676 = vmul.f32 %v10675, 1.442695
      %v10677 = vpow.pop %v10676
      %10678 = vadd.xlane.f32.xlu0 %v10677
      %v10679 = vpop.xlane.xlu0 %10678
      %v10680 = vrcp.pop %v10679
      %v10681 = vmul.f32 %v10677, %v10680
      %10682 = vst [vmem:[%s715] sm:$0xff] %v10681
      %p10683 = scmp.lt.s32.totalorder %s35, 1
      %s10684 = scalar_select %p10683, %s35, 1
      %s10685 = smul.addr %s10684, 8
      %s10686 = scalar_lea.vmem %s22, %s10685
      %p10687 = scmp.lt.s32.totalorder %s35, 1
      %s10688 = scalar_select %p10687, %s35, 1
      %s10689 = smul.addr %s10688, 8
      %s10690 = scalar_lea.vmem %s23, %s10689
      // Predicated region
      $region109: #{_lambda_.1} parent=107 // pred_check
        %p10691 = pneg %p520
      $region110: #{_lambda_.1} parent=107 // pred_check_branch
        %10693 = sbr.rel (%p10691) target = $region112
      $region111: #{_lambda_.1} parent=107 // pred_region
        _
      $region112: #{_lambda_.1} parent=107 // pred_fallthru
        _
      // Predicated region
      $region113: #{_lambda_.1} parent=107 // pred_check
        %p10694 = pneg %p546
      $region114: #{_lambda_.1} parent=107 // pred_check_branch
        %10696 = sbr.rel (%p10694) target = $region116
      $region115: #{_lambda_.1} parent=107 // pred_region
        _
      $region116: #{_lambda_.1} parent=107 // pred_fallthru
        _
    $region108: #{_lambda_.1} parent=5 // pred_fallthru
      _
    %p10697 = scmp.le.s32.totalorder 2, %s30
    // Predicated region
    $region117: #{_lambda_.1} parent=5 // pred_check
      %p10698 = pneg %p10697
    $region118: #{_lambda_.1} parent=5 // pred_check_branch
      %10700 = sbr.rel (%p10698) target = $region120
    $region119: #{_lambda_.1} parent=5 // pred_region
      %s10701 = ssub.s32 %s30, 2
      // Predicated region
      $region121: #{_lambda_.1} parent=119 // pred_check
        %p10702 = pneg %p526
      $region122: #{_lambda_.1} parent=119 // pred_check_branch
        %10704 = sbr.rel (%p10702) target = $region124
      $region123: #{_lambda_.1} parent=119 // pred_region
        %p10705 = scmp.lt.s32.totalorder %s36, 1
        %s10706 = scalar_select %p10705, %s36, 1
        %s10707 = smul.addr %s10706, 8
        %s10708 = scalar_lea.vmem %s22, %s10707
      $region124: #{_lambda_.1} parent=119 // pred_fallthru
        _
      // Predicated region
      $region125: #{_lambda_.1} parent=119 // pred_check
        %p10709 = pneg %p552
      $region126: #{_lambda_.1} parent=119 // pred_check_branch
        %10711 = sbr.rel (%p10709) target = $region128
      $region127: #{_lambda_.1} parent=119 // pred_region
        %p10712 = scmp.lt.s32.totalorder %s36, 1
        %s10713 = scalar_select %p10712, %s36, 1
        %s10714 = smul.addr %s10713, 8
        %s10715 = scalar_lea.vmem %s23, %s10714
      $region128: #{_lambda_.1} parent=119 // pred_fallthru
        _
    $region120: #{_lambda_.1} parent=5 // pred_fallthru
      _
  $region6: #{_lambda_.1} parent=0 // loop_footer
    %s34 = sadd.s32 1, %s30
  $region7: #{_lambda_.1} parent=0 // loop_footer_branch
    %29 = sbr.rel target = $region3
  $region8: #{_lambda_.1} parent=0 // loop_exit
    _

</llo_original>
